<compile_context>
chip_gen: v5e
topology: v5e:2x2
jax: 0.10.0
libtpu: 0.0.40
codegen_flags: <defaults>
</compile_context>

<pallas_src>
import functools

import jax
import jax.numpy as jnp
from jax.experimental import pallas as pl
from jax.experimental.pallas import tpu as pltpu


# ----------------------------------------------------------------------------
# Generation-aware policy helpers
# ----------------------------------------------------------------------------
def _round_up(x, m):
    return (x + m - 1) // m * m


def _pad_seq_len(L):
    # Lane-dense (L, L) score/softmax slabs + sublane-aligned (Bt*L, D) merges.
    # Real CLIP: 77 -> 128.  For tiny L, sublane alignment is enough.
    if L > 64:
        return _round_up(L, 128)
    return _round_up(L, 8)


def _device_policy():
    kind = ""
    try:
        kind = jax.devices()[0].device_kind.lower()
    except Exception:
        pass
    is_v7x = "v7" in kind
    phys = None
    try:
        info = pltpu.get_tpu_info()
        phys = getattr(info, "vmem_capacity_bytes", None)
    except Exception:
        phys = None
    if not phys:
        if is_v7x:
            phys = 64 * 2**20
        elif ("v5" in kind) or ("v6" in kind) or ("v4" in kind):
            phys = 128 * 2**20
    vmem_limit = None
    if phys:
        # Leave headroom for Mosaic internal scratch; never exceed 120 MiB.
        vmem_limit = int(min(max(phys - 16 * 2**20, phys // 2), 120 * 2**20))
    return {"is_v7x": is_v7x, "vmem_limit_bytes": vmem_limit}


def _choose_batch_block(B, Lp, is_v7x):
    # Weights stream from HBM once per batch block -> keep nb minimal:
    # nb=1 on v5e/v6e, nb=2 (one block per TensorCore) on v7x.
    nb_min = 2 if (is_v7x and B % 2 == 0) else 1
    # Cap resident rows per block so fp32 intermediates (qkv/fc/scores) fit
    # VMEM (tighter on v7x's 64 MiB).
    row_cap = 512 if is_v7x else 2048
    for Bt in range(max(B // nb_min, 1), 0, -1):
        if B % Bt == 0 and (B // Bt) % nb_min == 0 and Bt * Lp <= row_cap:
            return Bt
    return max(B // nb_min, 1)


def _build_mask(L, Lp):
    m = jnp.triu(jnp.full((Lp, Lp), -jnp.inf, jnp.float32), k=1)
    if Lp != L:
        key_pad = jnp.where(jnp.arange(Lp) >= L, -jnp.inf, 0.0).astype(jnp.float32)
        m = m + key_pad[None, :]
    return m


# ----------------------------------------------------------------------------
# Kernel math
# ----------------------------------------------------------------------------
def _layernorm(x, gamma, beta, eps=1e-5):
    # CLIP LayerNorm runs in fp32.
    x32 = x.astype(jnp.float32)
    mu = jnp.mean(x32, axis=-1, keepdims=True)
    var = jnp.mean((x32 - mu) ** 2, axis=-1, keepdims=True)
    return (x32 - mu) * jax.lax.rsqrt(var + eps) * gamma + beta


def _mha(qkv, mask, Bt, Lp, D, n_head, head_batched):
    """Multi-head attention core.  1/sqrt(Hd) is pre-folded into the q weights."""
    Hd = D // n_head
    if head_batched:
        # Head-batched einsums: no 64-lane per-head slices, no lane-dim concat,
        # mask broadcast + added exactly once.
        q = qkv[:, :D].reshape(Bt, Lp, n_head, Hd)
        k = qkv[:, D:2 * D].reshape(Bt, Lp, n_head, Hd)
        v = qkv[:, 2 * D:].reshape(Bt, Lp, n_head, Hd)
        s = jnp.einsum("bqhc,bkhc->bhqk", q, k,
                       preferred_element_type=jnp.float32) + mask
        s = s - jnp.max(s, axis=-1, keepdims=True)
        p = jnp.exp(s)
        p = p * pl.reciprocal(jnp.sum(p, axis=-1, keepdims=True), approx=True)
        ctx = jnp.einsum("bhqk,bkhc->bqhc", p, v,
                         preferred_element_type=jnp.float32)
        return ctx.reshape(Bt * Lp, D)

    # Fallback path: per-head static loop with single-batch-dim einsums only
    # (kept for Mosaic versions that reject the multi-batch dot_general).
    q = qkv[:, :D].reshape(Bt, Lp, D)
    k = qkv[:, D:2 * D].reshape(Bt, Lp, D)
    v = qkv[:, 2 * D:].reshape(Bt, Lp, D)
    mask_b = jnp.broadcast_to(mask, (Bt, Lp, Lp))   # hoisted: one broadcast total
    outs = []
    for hh in range(n_head):
        sl = slice(hh * Hd, (hh + 1) * Hd)
        s = jnp.einsum("bqc,bkc->bqk", q[:, :, sl], k[:, :, sl],
                       preferred_element_type=jnp.float32) + mask_b
        s = s - jnp.max(s, axis=-1, keepdims=True)
        p = jnp.exp(s)
        p = p * pl.reciprocal(jnp.sum(p, axis=-1, keepdims=True), approx=True)
        outs.append(jnp.einsum("bqk,bkc->bqc", p, v[:, :, sl],
                               preferred_element_type=jnp.float32))
    return jnp.concatenate(outs, axis=-1).reshape(Bt * Lp, D)


# ----------------------------------------------------------------------------
# One grid step = one ResidualAttentionBlock applied to one batch block.
# Grid = (batch_blocks [parallel/core_parallel], num_layers [arbitrary]).
# o_ref is the resident residual stream across the layer axis.
# ----------------------------------------------------------------------------
def transformer_kernel(x0_ref, mask_ref,
                       ln1g_ref, ln1b_ref, wqkv_ref, bqkv_ref, wo_ref, bo_ref,
                       ln2g_ref, ln2b_ref, wfc_ref, bfc_ref, wproj_ref, bproj_ref,
                       o_ref, *, n_head, head_batched):
    layer = pl.program_id(1)

    @pl.when(layer == 0)
    def _():
        o_ref[...] = x0_ref[...]          # load residual stream for this batch block

    Bt, Lp, D = o_ref.shape
    w_dt = wqkv_ref.dtype                 # bf16 compute dtype for the big GEMMs
    mask = mask_ref[...]                  # (Lp, Lp): causal + key-padding (-inf)

    # Residual stream, fp32, packed batch*seq rows for MXU-friendly M.
    x = o_ref[...].astype(jnp.float32).reshape(Bt * Lp, D)

    # --- self-attention branch: x + W_o(MHA(ln_1(x))) -------------------------
    h = _layernorm(x, ln1g_ref[0], ln1b_ref[0])
    qkv = jnp.dot(h.astype(w_dt), wqkv_ref[0],
                  preferred_element_type=jnp.float32) + bqkv_ref[0]
    ctx = _mha(qkv, mask, Bt, Lp, D, n_head, head_batched)
    attn = jnp.dot(ctx.astype(w_dt), wo_ref[0],
                   preferred_element_type=jnp.float32) + bo_ref[0]
    x = x + attn

    # --- MLP branch: x + c_proj(QuickGELU(c_fc(ln_2(x)))) ----------------------
    # TODO(synk): on v7x at large Bt, chunk c_fc/c_proj over the 4D hidden dim
    # to halve the peak fp32 `fc` intermediate if VMEM gets tight.
    h2 = _layernorm(x, ln2g_ref[0], ln2b_ref[0])
    fc = jnp.dot(h2.astype(w_dt), wfc_ref[0],
                 preferred_element_type=jnp.float32) + bfc_ref[0]
    fc = fc * jax.nn.sigmoid(1.702 * fc)   # QuickGELU (fp32)
    mlp = jnp.dot(fc.astype(w_dt), wproj_ref[0],
                  preferred_element_type=jnp.float32) + bproj_ref[0]
    x = x + mlp

    o_ref[...] = x.reshape(Bt, Lp, D).astype(o_ref.dtype)


def _run_transformer_once(x, mask, params, n_head, Bt, policy,
                          head_batched, use_v7x_extras):
    B, Lp, D = x.shape
    num_layers = params["wqkv"].shape[0]
    nb = B // Bt

    x_block = (Bt, Lp, D)
    x_index = lambda b, l: (b, 0, 0)
    if use_v7x_extras and policy["is_v7x"] and hasattr(pl, "Buffered"):
        # x0 is only read at layer 0 -> single-buffer it to save VMEM on v7x.
        x_in_spec = pl.BlockSpec(x_block, x_index, pipeline_mode=pl.Buffered(1))
    else:
        x_in_spec = pl.BlockSpec(x_block, x_index)

    def layer_spec(arr):  # stacked (num_layers, ...) param -> one layer per step
        return pl.BlockSpec((1,) + arr.shape[1:], lambda b, l: (l, 0, 0))

    in_specs = [
        x_in_spec,
        pl.BlockSpec((Lp, Lp), lambda b, l: (0, 0)),
        layer_spec(params["ln1_g"]), layer_spec(params["ln1_b"]),
        layer_spec(params["wqkv"]), layer_spec(params["bqkv"]),
        layer_spec(params["wo"]), layer_spec(params["bo"]),
        layer_spec(params["ln2_g"]), layer_spec(params["ln2_b"]),
        layer_spec(params["wfc"]), layer_spec(params["bfc"]),
        layer_spec(params["wproj"]), layer_spec(params["bproj"]),
    ]

    if (use_v7x_extras and policy["is_v7x"] and nb % 2 == 0
            and hasattr(pltpu, "CORE_PARALLEL")):
        batch_sem = pltpu.CORE_PARALLEL      # actually splits across v7x's 2 TCs
    else:
        batch_sem = "parallel"
    cp_kwargs = dict(dimension_semantics=(batch_sem, "arbitrary"))
    if policy["vmem_limit_bytes"]:
        cp_kwargs["vmem_limit_bytes"] = policy["vmem_limit_bytes"]

    return pl.pallas_call(
        functools.partial(transformer_kernel, n_head=n_head,
                          head_batched=head_batched),
        out_shape=jax.ShapeDtypeStruct((B, Lp, D), jnp.float32),
        grid=(nb, num_layers),
        in_specs=in_specs,
        out_specs=pl.BlockSpec(x_block, x_index),
        compiler_params=pltpu.CompilerParams(**cp_kwargs),
    )(x, mask,
      params["ln1_g"], params["ln1_b"],
      params["wqkv"], params["bqkv"], params["wo"], params["bo"],
      params["ln2_g"], params["ln2_b"],
      params["wfc"], params["bfc"], params["wproj"], params["bproj"])


def run_transformer(x, mask, params, n_head, batch_block=None):
    B, Lp, D = x.shape
    policy = _device_policy()
    Bt = batch_block or _choose_batch_block(B, Lp, policy["is_v7x"])
    assert B % Bt == 0, (B, Bt)
    try:
        # Preferred: head-batched attention einsums (+ v7x-only extras).
        return _run_transformer_once(x, mask, params, n_head, Bt, policy,
                                     head_batched=True, use_v7x_extras=True)
    except Exception:
        # Compile-safe fallback if this Mosaic version rejects the multi-batch
        # dot_general / Buffered(1) / CORE_PARALLEL path.
        return _run_transformer_once(x, mask, params, n_head, Bt, policy,
                                     head_batched=False, use_v7x_extras=False)


# ----------------------------------------------------------------------------
# ln_final + text_projection on the gathered EOT tokens.
# ----------------------------------------------------------------------------
def final_kernel(x_ref, lnf_g_ref, lnf_b_ref, proj_ref, o_ref):
    h = _layernorm(x_ref[...], lnf_g_ref[...], lnf_b_ref[...])
    o_ref[...] = jnp.dot(h, proj_ref[...],
                         preferred_element_type=jnp.float32).astype(o_ref.dtype)


def run_final(x_eot, lnf_g, lnf_b, proj):
    B, D = x_eot.shape
    E = proj.shape[1]

    def full(shape):
        return pl.BlockSpec(shape, lambda _s=shape: (0,) * len(_s))

    return pl.pallas_call(
        final_kernel,
        out_shape=jax.ShapeDtypeStruct((B, E), jnp.float32),
        in_specs=[full(x_eot.shape), full(lnf_g.shape), full(lnf_b.shape), full(proj.shape)],
        out_specs=full((B, E)),
    )(x_eot, lnf_g, lnf_b, proj)


# ----------------------------------------------------------------------------
# Full CLIPTextEncoder forward (prompts already embedded, as in the torch code).
# ----------------------------------------------------------------------------
def clip_text_encoder(prompts, tokenized_prompts, params, n_head, batch_block=None):
    # TODO(synk): maple_prompts branch (per-layer prompt-token splicing) not implemented.
    B, L, D = prompts.shape
    x = (prompts + params["pos"]).astype(jnp.float32)     # (B, L, D)
    Lp = _pad_seq_len(L)
    if Lp != L:
        x = jnp.pad(x, ((0, 0), (0, Lp - L), (0, 0)))      # zero-pad tokens
    mask = _build_mask(L, Lp)                              # causal + key padding
    x = run_transformer(x, mask, params, n_head, batch_block=batch_block)
    x = x[:, :L]                                           # drop padded positions
    eot_idx = jnp.argmax(tokenized_prompts, axis=-1)       # (B,)
    x_eot = x[jnp.arange(B), eot_idx]                      # (B, D) glue gather
    return run_final(x_eot, params["lnf_g"], params["lnf_b"], params["proj"])


# ----------------------------------------------------------------------------
# Parameter construction / preparation
# ----------------------------------------------------------------------------
def make_params(key, L, D, layers, E, param_dtype=jnp.bfloat16):
    ks = iter(jax.random.split(key, 2 + 8 * layers))
    params = {
        "pos": 0.02 * jax.random.normal(next(ks), (L, D), jnp.float32),
        "mask": jnp.triu(jnp.full((L, L), -jnp.inf, jnp.float32), k=1),
        "lnf_g": jnp.ones((1, D), jnp.float32),
        "lnf_b": jnp.zeros((1, D), jnp.float32),
        "proj": 0.05 * jax.random.normal(next(ks), (D, E), jnp.float32),
        "ln1_g": jnp.ones((layers, 1, D), jnp.float32),
        "ln1_b": jnp.zeros((layers, 1, D), jnp.float32),
        "ln2_g": jnp.ones((layers, 1, D), jnp.float32),
        "ln2_b": jnp.zeros((layers, 1, D), jnp.float32),
    }
    wqkv, bqkv, wo, bo, wfc, bfc, wproj, bproj = ([] for _ in range(8))
    for _ in range(layers):
        wqkv.append(0.05 * jax.random.normal(next(ks), (D, 3 * D), jnp.float32))
        bqkv.append(0.01 * jax.random.normal(next(ks), (1, 3 * D), jnp.float32))
        wo.append(0.05 * jax.random.normal(next(ks), (D, D), jnp.float32))
        bo.append(0.01 * jax.random.normal(next(ks), (1, D), jnp.float32))
        wfc.append(0.05 * jax.random.normal(next(ks), (D, 4 * D), jnp.float32))
        bfc.append(0.01 * jax.random.normal(next(ks), (1, 4 * D), jnp.float32))
        wproj.append(0.05 * jax.random.normal(next(ks), (4 * D, D), jnp.float32))
        bproj.append(0.01 * jax.random.normal(next(ks), (1, D), jnp.float32))
    params.update(
        wqkv=jnp.stack(wqkv).astype(param_dtype), bqkv=jnp.stack(bqkv),
        wo=jnp.stack(wo).astype(param_dtype), bo=jnp.stack(bo),
        wfc=jnp.stack(wfc).astype(param_dtype), bfc=jnp.stack(bfc),
        wproj=jnp.stack(wproj).astype(param_dtype), bproj=jnp.stack(bproj),
    )
    return params


def prepare_params(params, n_head):
    """One-time weight prep: fold 1/sqrt(Hd) into the q columns of wqkv/bqkv."""
    D = params["wqkv"].shape[1]
    Hd = D // n_head
    scale = 1.0 / (Hd ** 0.5)
    col_scale = jnp.concatenate([jnp.full((D,), scale, jnp.float32),
                                 jnp.ones((2 * D,), jnp.float32)])
    p = dict(params)
    p["wqkv"] = (params["wqkv"].astype(jnp.float32) * col_scale).astype(params["wqkv"].dtype)
    p["bqkv"] = params["bqkv"] * col_scale
    return p


# ----------------------------------------------------------------------------
# Pure-JAX reference (torch semantics; explicit q scaling, unpadded sequence).
# ----------------------------------------------------------------------------
def reference(prompts, tokenized_prompts, params, n_head):
    x = (prompts + params["pos"]).astype(jnp.float32)
    B, L, D = x.shape
    Hd = D // n_head
    mask = params["mask"]
    w_dt = params["wqkv"].dtype
    num_layers = params["wqkv"].shape[0]

    def mm(a, w):
        return jnp.dot(a.astype(w_dt).reshape(B * L, a.shape[-1]), w,
                       preferred_element_type=jnp.float32).reshape(B, L, w.shape[-1])

    for i in range(num_layers):
        h = _layernorm(x, params["ln1_g"][i], params["ln1_b"][i])
        qkv = mm(h, params["wqkv"][i]) + params["bqkv"][i]
        q, k, v = jnp.split(qkv, 3, axis=-1)
        q = q.reshape(B, L, n_head, Hd).transpose(0, 2, 1, 3) / (Hd ** 0.5)
        k = k.reshape(B, L, n_head, Hd).transpose(0, 2, 1, 3)
        v = v.reshape(B, L, n_head, Hd).transpose(0, 2, 1, 3)
        s = jnp.einsum("bhqd,bhkd->bhqk", q, k) + mask
        p = jax.nn.softmax(s, axis=-1)
        ctx = jnp.einsum("bhqk,bhkd->bhqd", p, v).transpose(0, 2, 1, 3).reshape(B, L, D)
        x = x + mm(ctx, params["wo"][i]) + params["bo"][i]
        h2 = _layernorm(x, params["ln2_g"][i], params["ln2_b"][i])
        fc = mm(h2, params["wfc"][i]) + params["bfc"][i]
        fc = fc * jax.nn.sigmoid(1.702 * fc)
        x = x + mm(fc, params["wproj"][i]) + params["bproj"][i]

    eot_idx = jnp.argmax(tokenized_prompts, axis=-1)
    x_eot = x[jnp.arange(B), eot_idx]
    return jnp.dot(_layernorm(x_eot, params["lnf_g"], params["lnf_b"]), params["proj"],
                   preferred_element_type=jnp.float32)


if __name__ == "__main__":
    # Small but forward-consistent shapes: batch=2, context_length=77 (real CLIP
    # context length -> exercises the 77 -> 128 padding path), width=32, heads=4,
    # layers=2, embed_dim=16.
    B, L, D, H, LAYERS, E = 2, 77, 32, 4, 2, 16
    key = jax.random.PRNGKey(0)
    kp, kx, kt = jax.random.split(key, 3)

    params = make_params(kp, L, D, LAYERS, E, param_dtype=jnp.bfloat16)
    prompts = jax.random.normal(kx, (B, L, D), jnp.float32)            # already-embedded prompts
    tokenized_prompts = jax.random.randint(kt, (B, L), 1, 49408, jnp.int32)

    prepared = prepare_params(params, H)                               # one-time scale folding
    out = jax.block_until_ready(clip_text_encoder(prompts, tokenized_prompts, prepared, H))

    ref = jax.block_until_ready(reference(prompts, tokenized_prompts, params, H))
    assert out.shape == (B, E), out.shape
    max_err = float(jnp.max(jnp.abs(out - ref)))
    assert jnp.allclose(out, ref, rtol=2e-2, atol=2e-2), max_err
    print("KERNEL_OK")
</pallas_src>

<mosaic_0001>
module attributes {stable_mosaic.version = 11 : i64} {
  func.func @transformer_kernel(%arg0: i32, %arg1: i32, %arg2: memref<2x128x32xf32, #tpu.memory_space<vmem>>, %arg3: memref<128x128xf32, #tpu.memory_space<vmem>>, %arg4: memref<1x1x32xf32, #tpu.memory_space<vmem>>, %arg5: memref<1x1x32xf32, #tpu.memory_space<vmem>>, %arg6: memref<1x32x96xbf16, #tpu.memory_space<vmem>>, %arg7: memref<1x1x96xf32, #tpu.memory_space<vmem>>, %arg8: memref<1x32x32xbf16, #tpu.memory_space<vmem>>, %arg9: memref<1x1x32xf32, #tpu.memory_space<vmem>>, %arg10: memref<1x1x32xf32, #tpu.memory_space<vmem>>, %arg11: memref<1x1x32xf32, #tpu.memory_space<vmem>>, %arg12: memref<1x32x128xbf16, #tpu.memory_space<vmem>>, %arg13: memref<1x1x128xf32, #tpu.memory_space<vmem>>, %arg14: memref<1x128x32xbf16, #tpu.memory_space<vmem>>, %arg15: memref<1x1x32xf32, #tpu.memory_space<vmem>>, %arg16: memref<2x128x32xf32, #tpu.memory_space<vmem>>) attributes {dimension_semantics = [#tpu.dimension_semantics<parallel>, #tpu.dimension_semantics<arbitrary>], iteration_bounds = array<i64: 1, 2>, scalar_prefetch = 0 : i64, scratch_operands = 0 : i64, tpu.core_type = #tpu.core_type<tc>, window_params = [{transform_indices = @transform_0, window_bounds = array<i64: 2, 128, 32>}, {pipeline_mode = #tpu.pipeline_mode<synchronous>, transform_indices = @transform_1, window_bounds = array<i64: 128, 128>}, {transform_indices = @transform_2, window_bounds = array<i64: 1, 1, 32>}, {transform_indices = @transform_3, window_bounds = array<i64: 1, 1, 32>}, {transform_indices = @transform_4, window_bounds = array<i64: 1, 32, 96>}, {transform_indices = @transform_5, window_bounds = array<i64: 1, 1, 96>}, {transform_indices = @transform_6, window_bounds = array<i64: 1, 32, 32>}, {transform_indices = @transform_7, window_bounds = array<i64: 1, 1, 32>}, {transform_indices = @transform_8, window_bounds = array<i64: 1, 1, 32>}, {transform_indices = @transform_9, window_bounds = array<i64: 1, 1, 32>}, {transform_indices = @transform_10, window_bounds = array<i64: 1, 32, 128>}, {transform_indices = @transform_11, window_bounds = array<i64: 1, 1, 128>}, {transform_indices = @transform_12, window_bounds = array<i64: 1, 128, 32>}, {transform_indices = @transform_13, window_bounds = array<i64: 1, 1, 32>}, {transform_indices = @transform_14, window_bounds = array<i64: 2, 128, 32>}]} {
    %c0_i32 = arith.constant 0 : i32
    %0 = arith.cmpi eq, %arg1, %c0_i32 : i32
    %1 = arith.extui %0 : i1 to i32
    %c0_i32_0 = arith.constant 0 : i32
    %2 = arith.cmpi ne, %1, %c0_i32_0 : i32
    scf.if %2 {
      %c0_75 = arith.constant 0 : index
      %c0_76 = arith.constant 0 : index
      %c0_77 = arith.constant 0 : index
      %176 = vector.load %arg2[%c0_75, %c0_76, %c0_77] : memref<2x128x32xf32, #tpu.memory_space<vmem>>, vector<2x128x32xf32>
      %c0_78 = arith.constant 0 : index
      %c0_79 = arith.constant 0 : index
      %c0_80 = arith.constant 0 : index
      %177 = vector.load %arg16[%c0_78, %c0_79, %c0_80] : memref<2x128x32xf32, #tpu.memory_space<vmem>>, vector<2x128x32xf32>
      tpu.vector_store %arg16[%c0_78, %c0_79, %c0_80], %176 {strides = array<i32>} : memref<2x128x32xf32, #tpu.memory_space<vmem>>, vector<2x128x32xf32>,
    } else {
    }
    %c0 = arith.constant 0 : index
    %c0_1 = arith.constant 0 : index
    %3 = vector.load %arg3[%c0, %c0_1] : memref<128x128xf32, #tpu.memory_space<vmem>>, vector<128x128xf32>
    %c0_2 = arith.constant 0 : index
    %c0_3 = arith.constant 0 : index
    %c0_4 = arith.constant 0 : index
    %4 = vector.load %arg16[%c0_2, %c0_3, %c0_4] : memref<2x128x32xf32, #tpu.memory_space<vmem>>, vector<2x128x32xf32>
    %5 = vector.shape_cast %4 : vector<2x128x32xf32> to vector<256x32xf32>
    %c0_5 = arith.constant 0 : index
    %c0_6 = arith.constant 0 : index
    %c0_7 = arith.constant 0 : index
    %6 = vector.load %arg4[%c0_5, %c0_6, %c0_7] : memref<1x1x32xf32, #tpu.memory_space<vmem>>, vector<1x1x32xf32>
    %7 = vector.shape_cast %6 : vector<1x1x32xf32> to vector<1x32xf32>
    %c0_8 = arith.constant 0 : index
    %c0_9 = arith.constant 0 : index
    %c0_10 = arith.constant 0 : index
    %8 = vector.load %arg5[%c0_8, %c0_9, %c0_10] : memref<1x1x32xf32, #tpu.memory_space<vmem>>, vector<1x1x32xf32>
    %9 = vector.shape_cast %8 : vector<1x1x32xf32> to vector<1x32xf32>
    %cst = arith.constant dense<0.000000e+00> : vector<256xf32>
    %10 = vector.multi_reduction <add>, %5, %cst [1] : vector<256x32xf32> to vector<256xf32>
    %11 = vector.shape_cast %10 : vector<256xf32> to vector<256x1xf32>
    %cst_11 = arith.constant 3.200000e+01 : f32
    %12 = vector.broadcast %cst_11 : f32 to vector<256x1xf32>
    %13 = arith.divf %11, %12 : vector<256x1xf32>
    %14 = vector.broadcast %13 : vector<256x1xf32> to vector<256x32xf32>
    %15 = arith.subf %5, %14 : vector<256x32xf32>
    %16 = arith.mulf %15, %15 : vector<256x32xf32>
    %cst_12 = arith.constant dense<0.000000e+00> : vector<256xf32>
    %17 = vector.multi_reduction <add>, %16, %cst_12 [1] : vector<256x32xf32> to vector<256xf32>
    %18 = vector.shape_cast %17 : vector<256xf32> to vector<256x1xf32>
    %cst_13 = arith.constant 3.200000e+01 : f32
    %19 = vector.broadcast %cst_13 : f32 to vector<256x1xf32>
    %20 = arith.divf %18, %19 : vector<256x1xf32>
    %21 = vector.broadcast %13 : vector<256x1xf32> to vector<256x32xf32>
    %22 = arith.subf %5, %21 : vector<256x32xf32>
    %cst_14 = arith.constant 9.99999974E-6 : f32
    %23 = vector.broadcast %cst_14 : f32 to vector<256x1xf32>
    %24 = arith.addf %20, %23 : vector<256x1xf32>
    %25 = math.rsqrt %24 : vector<256x1xf32>
    %26 = vector.broadcast %25 : vector<256x1xf32> to vector<256x32xf32>
    %27 = arith.mulf %22, %26 : vector<256x32xf32>
    %28 = vector.broadcast %7 : vector<1x32xf32> to vector<256x32xf32>
    %29 = arith.mulf %27, %28 : vector<256x32xf32>
    %30 = vector.broadcast %9 : vector<1x32xf32> to vector<256x32xf32>
    %31 = arith.addf %29, %30 : vector<256x32xf32>
    %32 = arith.truncf %31 : vector<256x32xf32> to vector<256x32xbf16>
    %c0_15 = arith.constant 0 : index
    %c0_16 = arith.constant 0 : index
    %c0_17 = arith.constant 0 : index
    %33 = vector.load %arg6[%c0_15, %c0_16, %c0_17] : memref<1x32x96xbf16, #tpu.memory_space<vmem>>, vector<1x32x96xbf16>
    %34 = vector.shape_cast %33 : vector<1x32x96xbf16> to vector<32x96xbf16>
    %cst_18 = arith.constant dense<0.000000e+00> : vector<256x96xf32>
    %35 = tpu.matmul %32, %34, %cst_18 {dimension_numbers = #tpu.dot_dimension_numbers<[1], [0], [0], [1], [0, 0, 1, 1], [], []>} : vector<256x32xbf16>, vector<32x96xbf16>, vector<256x96xf32> -> vector<256x96xf32>
    %c0_19 = arith.constant 0 : index
    %c0_20 = arith.constant 0 : index
    %c0_21 = arith.constant 0 : index
    %36 = vector.load %arg7[%c0_19, %c0_20, %c0_21] : memref<1x1x96xf32, #tpu.memory_space<vmem>>, vector<1x1x96xf32>
    %37 = vector.shape_cast %36 : vector<1x1x96xf32> to vector<1x96xf32>
    %38 = vector.broadcast %37 : vector<1x96xf32> to vector<256x96xf32>
    %39 = arith.addf %35, %38 : vector<256x96xf32>
    %40 = vector.extract_strided_slice %39 {offsets = [0, 0], sizes = [256, 32], strides = [1, 1]} : vector<256x96xf32> to vector<256x32xf32>
    %41 = vector.shape_cast %40 : vector<256x32xf32> to vector<2x128x32xf32>
    %42 = vector.extract_strided_slice %39 {offsets = [0, 32], sizes = [256, 32], strides = [1, 1]} : vector<256x96xf32> to vector<256x32xf32>
    %43 = vector.shape_cast %42 : vector<256x32xf32> to vector<2x128x32xf32>
    %44 = vector.extract_strided_slice %39 {offsets = [0, 64], sizes = [256, 32], strides = [1, 1]} : vector<256x96xf32> to vector<256x32xf32>
    %45 = vector.shape_cast %44 : vector<256x32xf32> to vector<2x128x32xf32>
    %46 = vector.shape_cast %3 : vector<128x128xf32> to vector<1x128x128xf32>
    %47 = vector.broadcast %46 : vector<1x128x128xf32> to vector<2x128x128xf32>
    %48 = vector.extract_strided_slice %41 {offsets = [0, 0, 0], sizes = [2, 128, 8], strides = [1, 1, 1]} : vector<2x128x32xf32> to vector<2x128x8xf32>
    %49 = vector.extract_strided_slice %43 {offsets = [0, 0, 0], sizes = [2, 128, 8], strides = [1, 1, 1]} : vector<2x128x32xf32> to vector<2x128x8xf32>
    "tpu.trace_start"() <{level = 10 : i32, message = "bqc,bkc->bqk"}> : () -> ()
    %cst_22 = arith.constant dense<0.000000e+00> : vector<2x128x128xf32>
    %50 = tpu.matmul %48, %49, %cst_22 {dimension_numbers = #tpu.dot_dimension_numbers<[2], [2], [1], [1], [0, 0, 0, 1, 1, 1], [0], [0]>} : vector<2x128x8xf32>, vector<2x128x8xf32>, vector<2x128x128xf32> -> vector<2x128x128xf32>
    "tpu.trace_stop"() : () -> ()
    %51 = arith.addf %50, %47 : vector<2x128x128xf32>
    %cst_23 = arith.constant dense<0xFF800000> : vector<2x128xf32>
    %52 = vector.multi_reduction <maximumf>, %51, %cst_23 [2] : vector<2x128x128xf32> to vector<2x128xf32>
    %53 = vector.shape_cast %52 : vector<2x128xf32> to vector<2x128x1xf32>
    %54 = vector.broadcast %53 : vector<2x128x1xf32> to vector<2x128x128xf32>
    %55 = arith.subf %51, %54 : vector<2x128x128xf32>
    %56 = math.exp %55 : vector<2x128x128xf32>
    %cst_24 = arith.constant dense<0.000000e+00> : vector<2x128xf32>
    %57 = vector.multi_reduction <add>, %56, %cst_24 [2] : vector<2x128x128xf32> to vector<2x128xf32>
    %58 = vector.shape_cast %57 : vector<2x128xf32> to vector<2x128x1xf32>
    %59 = tpu.reciprocal %58 {approx = true} : vector<2x128x1xf32> -> vector<2x128x1xf32>
    %60 = vector.broadcast %59 : vector<2x128x1xf32> to vector<2x128x128xf32>
    %61 = arith.mulf %56, %60 : vector<2x128x128xf32>
    %62 = vector.extract_strided_slice %45 {offsets = [0, 0, 0], sizes = [2, 128, 8], strides = [1, 1, 1]} : vector<2x128x32xf32> to vector<2x128x8xf32>
    "tpu.trace_start"() <{level = 10 : i32, message = "bqk,bkc->bqc"}> : () -> ()
    %cst_25 = arith.constant dense<0.000000e+00> : vector<2x128x8xf32>
    %63 = tpu.matmul %61, %62, %cst_25 {dimension_numbers = #tpu.dot_dimension_numbers<[2], [1], [1], [2], [0, 0, 0, 1, 1, 2], [0], [0]>} : vector<2x128x128xf32>, vector<2x128x8xf32>, vector<2x128x8xf32> -> vector<2x128x8xf32>
    "tpu.trace_stop"() : () -> ()
    %64 = vector.extract_strided_slice %41 {offsets = [0, 0, 8], sizes = [2, 128, 8], strides = [1, 1, 1]} : vector<2x128x32xf32> to vector<2x128x8xf32>
    %65 = vector.extract_strided_slice %43 {offsets = [0, 0, 8], sizes = [2, 128, 8], strides = [1, 1, 1]} : vector<2x128x32xf32> to vector<2x128x8xf32>
    "tpu.trace_start"() <{level = 10 : i32, message = "bqc,bkc->bqk"}> : () -> ()
    %cst_26 = arith.constant dense<0.000000e+00> : vector<2x128x128xf32>
    %66 = tpu.matmul %64, %65, %cst_26 {dimension_numbers = #tpu.dot_dimension_numbers<[2], [2], [1], [1], [0, 0, 0, 1, 1, 1], [0], [0]>} : vector<2x128x8xf32>, vector<2x128x8xf32>, vector<2x128x128xf32> -> vector<2x128x128xf32>
    "tpu.trace_stop"() : () -> ()
    %67 = arith.addf %66, %47 : vector<2x128x128xf32>
    %cst_27 = arith.constant dense<0xFF800000> : vector<2x128xf32>
    %68 = vector.multi_reduction <maximumf>, %67, %cst_27 [2] : vector<2x128x128xf32> to vector<2x128xf32>
    %69 = vector.shape_cast %68 : vector<2x128xf32> to vector<2x128x1xf32>
    %70 = vector.broadcast %69 : vector<2x128x1xf32> to vector<2x128x128xf32>
    %71 = arith.subf %67, %70 : vector<2x128x128xf32>
    %72 = math.exp %71 : vector<2x128x128xf32>
    %cst_28 = arith.constant dense<0.000000e+00> : vector<2x128xf32>
    %73 = vector.multi_reduction <add>, %72, %cst_28 [2] : vector<2x128x128xf32> to vector<2x128xf32>
    %74 = vector.shape_cast %73 : vector<2x128xf32> to vector<2x128x1xf32>
    %75 = tpu.reciprocal %74 {approx = true} : vector<2x128x1xf32> -> vector<2x128x1xf32>
    %76 = vector.broadcast %75 : vector<2x128x1xf32> to vector<2x128x128xf32>
    %77 = arith.mulf %72, %76 : vector<2x128x128xf32>
    %78 = vector.extract_strided_slice %45 {offsets = [0, 0, 8], sizes = [2, 128, 8], strides = [1, 1, 1]} : vector<2x128x32xf32> to vector<2x128x8xf32>
    "tpu.trace_start"() <{level = 10 : i32, message = "bqk,bkc->bqc"}> : () -> ()
    %cst_29 = arith.constant dense<0.000000e+00> : vector<2x128x8xf32>
    %79 = tpu.matmul %77, %78, %cst_29 {dimension_numbers = #tpu.dot_dimension_numbers<[2], [1], [1], [2], [0, 0, 0, 1, 1, 2], [0], [0]>} : vector<2x128x128xf32>, vector<2x128x8xf32>, vector<2x128x8xf32> -> vector<2x128x8xf32>
    "tpu.trace_stop"() : () -> ()
    %80 = vector.extract_strided_slice %41 {offsets = [0, 0, 16], sizes = [2, 128, 8], strides = [1, 1, 1]} : vector<2x128x32xf32> to vector<2x128x8xf32>
    %81 = vector.extract_strided_slice %43 {offsets = [0, 0, 16], sizes = [2, 128, 8], strides = [1, 1, 1]} : vector<2x128x32xf32> to vector<2x128x8xf32>
    "tpu.trace_start"() <{level = 10 : i32, message = "bqc,bkc->bqk"}> : () -> ()
    %cst_30 = arith.constant dense<0.000000e+00> : vector<2x128x128xf32>
    %82 = tpu.matmul %80, %81, %cst_30 {dimension_numbers = #tpu.dot_dimension_numbers<[2], [2], [1], [1], [0, 0, 0, 1, 1, 1], [0], [0]>} : vector<2x128x8xf32>, vector<2x128x8xf32>, vector<2x128x128xf32> -> vector<2x128x128xf32>
    "tpu.trace_stop"() : () -> ()
    %83 = arith.addf %82, %47 : vector<2x128x128xf32>
    %cst_31 = arith.constant dense<0xFF800000> : vector<2x128xf32>
    %84 = vector.multi_reduction <maximumf>, %83, %cst_31 [2] : vector<2x128x128xf32> to vector<2x128xf32>
    %85 = vector.shape_cast %84 : vector<2x128xf32> to vector<2x128x1xf32>
    %86 = vector.broadcast %85 : vector<2x128x1xf32> to vector<2x128x128xf32>
    %87 = arith.subf %83, %86 : vector<2x128x128xf32>
    %88 = math.exp %87 : vector<2x128x128xf32>
    %cst_32 = arith.constant dense<0.000000e+00> : vector<2x128xf32>
    %89 = vector.multi_reduction <add>, %88, %cst_32 [2] : vector<2x128x128xf32> to vector<2x128xf32>
    %90 = vector.shape_cast %89 : vector<2x128xf32> to vector<2x128x1xf32>
    %91 = tpu.reciprocal %90 {approx = true} : vector<2x128x1xf32> -> vector<2x128x1xf32>
    %92 = vector.broadcast %91 : vector<2x128x1xf32> to vector<2x128x128xf32>
    %93 = arith.mulf %88, %92 : vector<2x128x128xf32>
    %94 = vector.extract_strided_slice %45 {offsets = [0, 0, 16], sizes = [2, 128, 8], strides = [1, 1, 1]} : vector<2x128x32xf32> to vector<2x128x8xf32>
    "tpu.trace_start"() <{level = 10 : i32, message = "bqk,bkc->bqc"}> : () -> ()
    %cst_33 = arith.constant dense<0.000000e+00> : vector<2x128x8xf32>
    %95 = tpu.matmul %93, %94, %cst_33 {dimension_numbers = #tpu.dot_dimension_numbers<[2], [1], [1], [2], [0, 0, 0, 1, 1, 2], [0], [0]>} : vector<2x128x128xf32>, vector<2x128x8xf32>, vector<2x128x8xf32> -> vector<2x128x8xf32>
    "tpu.trace_stop"() : () -> ()
    %96 = vector.extract_strided_slice %41 {offsets = [0, 0, 24], sizes = [2, 128, 8], strides = [1, 1, 1]} : vector<2x128x32xf32> to vector<2x128x8xf32>
    %97 = vector.extract_strided_slice %43 {offsets = [0, 0, 24], sizes = [2, 128, 8], strides = [1, 1, 1]} : vector<2x128x32xf32> to vector<2x128x8xf32>
    "tpu.trace_start"() <{level = 10 : i32, message = "bqc,bkc->bqk"}> : () -> ()
    %cst_34 = arith.constant dense<0.000000e+00> : vector<2x128x128xf32>
    %98 = tpu.matmul %96, %97, %cst_34 {dimension_numbers = #tpu.dot_dimension_numbers<[2], [2], [1], [1], [0, 0, 0, 1, 1, 1], [0], [0]>} : vector<2x128x8xf32>, vector<2x128x8xf32>, vector<2x128x128xf32> -> vector<2x128x128xf32>
    "tpu.trace_stop"() : () -> ()
    %99 = arith.addf %98, %47 : vector<2x128x128xf32>
    %cst_35 = arith.constant dense<0xFF800000> : vector<2x128xf32>
    %100 = vector.multi_reduction <maximumf>, %99, %cst_35 [2] : vector<2x128x128xf32> to vector<2x128xf32>
    %101 = vector.shape_cast %100 : vector<2x128xf32> to vector<2x128x1xf32>
    %102 = vector.broadcast %101 : vector<2x128x1xf32> to vector<2x128x128xf32>
    %103 = arith.subf %99, %102 : vector<2x128x128xf32>
    %104 = math.exp %103 : vector<2x128x128xf32>
    %cst_36 = arith.constant dense<0.000000e+00> : vector<2x128xf32>
    %105 = vector.multi_reduction <add>, %104, %cst_36 [2] : vector<2x128x128xf32> to vector<2x128xf32>
    %106 = vector.shape_cast %105 : vector<2x128xf32> to vector<2x128x1xf32>
    %107 = tpu.reciprocal %106 {approx = true} : vector<2x128x1xf32> -> vector<2x128x1xf32>
    %108 = vector.broadcast %107 : vector<2x128x1xf32> to vector<2x128x128xf32>
    %109 = arith.mulf %104, %108 : vector<2x128x128xf32>
    %110 = vector.extract_strided_slice %45 {offsets = [0, 0, 24], sizes = [2, 128, 8], strides = [1, 1, 1]} : vector<2x128x32xf32> to vector<2x128x8xf32>
    "tpu.trace_start"() <{level = 10 : i32, message = "bqk,bkc->bqc"}> : () -> ()
    %cst_37 = arith.constant dense<0.000000e+00> : vector<2x128x8xf32>
    %111 = tpu.matmul %109, %110, %cst_37 {dimension_numbers = #tpu.dot_dimension_numbers<[2], [1], [1], [2], [0, 0, 0, 1, 1, 2], [0], [0]>} : vector<2x128x128xf32>, vector<2x128x8xf32>, vector<2x128x8xf32> -> vector<2x128x8xf32>
    "tpu.trace_stop"() : () -> ()
    %112 = tpu.concatenate %63, %79, %95, %111 in 2 : vector<2x128x8xf32>, vector<2x128x8xf32>, vector<2x128x8xf32>, vector<2x128x8xf32> -> vector<2x128x32xf32>
    %113 = vector.shape_cast %112 : vector<2x128x32xf32> to vector<256x32xf32>
    %114 = arith.truncf %113 : vector<256x32xf32> to vector<256x32xbf16>
    %c0_38 = arith.constant 0 : index
    %c0_39 = arith.constant 0 : index
    %c0_40 = arith.constant 0 : index
    %115 = vector.load %arg8[%c0_38, %c0_39, %c0_40] : memref<1x32x32xbf16, #tpu.memory_space<vmem>>, vector<1x32x32xbf16>
    %116 = vector.shape_cast %115 : vector<1x32x32xbf16> to vector<32x32xbf16>
    %cst_41 = arith.constant dense<0.000000e+00> : vector<256x32xf32>
    %117 = tpu.matmul %114, %116, %cst_41 {dimension_numbers = #tpu.dot_dimension_numbers<[1], [0], [0], [1], [0, 0, 1, 1], [], []>} : vector<256x32xbf16>, vector<32x32xbf16>, vector<256x32xf32> -> vector<256x32xf32>
    %c0_42 = arith.constant 0 : index
    %c0_43 = arith.constant 0 : index
    %c0_44 = arith.constant 0 : index
    %118 = vector.load %arg9[%c0_42, %c0_43, %c0_44] : memref<1x1x32xf32, #tpu.memory_space<vmem>>, vector<1x1x32xf32>
    %119 = vector.shape_cast %118 : vector<1x1x32xf32> to vector<1x32xf32>
    %120 = vector.broadcast %119 : vector<1x32xf32> to vector<256x32xf32>
    %121 = arith.addf %117, %120 : vector<256x32xf32>
    %122 = arith.addf %5, %121 : vector<256x32xf32>
    %c0_45 = arith.constant 0 : index
    %c0_46 = arith.constant 0 : index
    %c0_47 = arith.constant 0 : index
    %123 = vector.load %arg10[%c0_45, %c0_46, %c0_47] : memref<1x1x32xf32, #tpu.memory_space<vmem>>, vector<1x1x32xf32>
    %124 = vector.shape_cast %123 : vector<1x1x32xf32> to vector<1x32xf32>
    %c0_48 = arith.constant 0 : index
    %c0_49 = arith.constant 0 : index
    %c0_50 = arith.constant 0 : index
    %125 = vector.load %arg11[%c0_48, %c0_49, %c0_50] : memref<1x1x32xf32, #tpu.memory_space<vmem>>, vector<1x1x32xf32>
    %126 = vector.shape_cast %125 : vector<1x1x32xf32> to vector<1x32xf32>
    %cst_51 = arith.constant dense<0.000000e+00> : vector<256xf32>
    %127 = vector.multi_reduction <add>, %122, %cst_51 [1] : vector<256x32xf32> to vector<256xf32>
    %128 = vector.shape_cast %127 : vector<256xf32> to vector<256x1xf32>
    %cst_52 = arith.constant 3.200000e+01 : f32
    %129 = vector.broadcast %cst_52 : f32 to vector<256x1xf32>
    %130 = arith.divf %128, %129 : vector<256x1xf32>
    %131 = vector.broadcast %130 : vector<256x1xf32> to vector<256x32xf32>
    %132 = arith.subf %122, %131 : vector<256x32xf32>
    %133 = arith.mulf %132, %132 : vector<256x32xf32>
    %cst_53 = arith.constant dense<0.000000e+00> : vector<256xf32>
    %134 = vector.multi_reduction <add>, %133, %cst_53 [1] : vector<256x32xf32> to vector<256xf32>
    %135 = vector.shape_cast %134 : vector<256xf32> to vector<256x1xf32>
    %cst_54 = arith.constant 3.200000e+01 : f32
    %136 = vector.broadcast %cst_54 : f32 to vector<256x1xf32>
    %137 = arith.divf %135, %136 : vector<256x1xf32>
    %138 = vector.broadcast %130 : vector<256x1xf32> to vector<256x32xf32>
    %139 = arith.subf %122, %138 : vector<256x32xf32>
    %cst_55 = arith.constant 9.99999974E-6 : f32
    %140 = vector.broadcast %cst_55 : f32 to vector<256x1xf32>
    %141 = arith.addf %137, %140 : vector<256x1xf32>
    %142 = math.rsqrt %141 : vector<256x1xf32>
    %143 = vector.broadcast %142 : vector<256x1xf32> to vector<256x32xf32>
    %144 = arith.mulf %139, %143 : vector<256x32xf32>
    %145 = vector.broadcast %124 : vector<1x32xf32> to vector<256x32xf32>
    %146 = arith.mulf %144, %145 : vector<256x32xf32>
    %147 = vector.broadcast %126 : vector<1x32xf32> to vector<256x32xf32>
    %148 = arith.addf %146, %147 : vector<256x32xf32>
    %149 = arith.truncf %148 : vector<256x32xf32> to vector<256x32xbf16>
    %c0_56 = arith.constant 0 : index
    %c0_57 = arith.constant 0 : index
    %c0_58 = arith.constant 0 : index
    %150 = vector.load %arg12[%c0_56, %c0_57, %c0_58] : memref<1x32x128xbf16, #tpu.memory_space<vmem>>, vector<1x32x128xbf16>
    %151 = vector.shape_cast %150 : vector<1x32x128xbf16> to vector<32x128xbf16>
    %cst_59 = arith.constant dense<0.000000e+00> : vector<256x128xf32>
    %152 = tpu.matmul %149, %151, %cst_59 {dimension_numbers = #tpu.dot_dimension_numbers<[1], [0], [0], [1], [0, 0, 1, 1], [], []>} : vector<256x32xbf16>, vector<32x128xbf16>, vector<256x128xf32> -> vector<256x128xf32>
    %c0_60 = arith.constant 0 : index
    %c0_61 = arith.constant 0 : index
    %c0_62 = arith.constant 0 : index
    %153 = vector.load %arg13[%c0_60, %c0_61, %c0_62] : memref<1x1x128xf32, #tpu.memory_space<vmem>>, vector<1x1x128xf32>
    %154 = vector.shape_cast %153 : vector<1x1x128xf32> to vector<1x128xf32>
    %155 = vector.broadcast %154 : vector<1x128xf32> to vector<256x128xf32>
    %156 = arith.addf %152, %155 : vector<256x128xf32>
    %cst_63 = arith.constant 1.702000e+00 : f32
    %157 = vector.broadcast %cst_63 : f32 to vector<256x128xf32>
    %158 = arith.mulf %157, %156 : vector<256x128xf32>
    %159 = arith.negf %158 : vector<256x128xf32>
    %160 = math.exp %159 : vector<256x128xf32>
    %cst_64 = arith.constant 1.000000e+00 : f32
    %161 = vector.broadcast %cst_64 : f32 to vector<256x128xf32>
    %162 = arith.addf %161, %160 : vector<256x128xf32>
    %163 = arith.divf %161, %162 : vector<256x128xf32>
    %164 = arith.mulf %156, %163 : vector<256x128xf32>
    %165 = arith.truncf %164 : vector<256x128xf32> to vector<256x128xbf16>
    %c0_65 = arith.constant 0 : index
    %c0_66 = arith.constant 0 : index
    %c0_67 = arith.constant 0 : index
    %166 = vector.load %arg14[%c0_65, %c0_66, %c0_67] : memref<1x128x32xbf16, #tpu.memory_space<vmem>>, vector<1x128x32xbf16>
    %167 = vector.shape_cast %166 : vector<1x128x32xbf16> to vector<128x32xbf16>
    %cst_68 = arith.constant dense<0.000000e+00> : vector<256x32xf32>
    %168 = tpu.matmul %165, %167, %cst_68 {dimension_numbers = #tpu.dot_dimension_numbers<[1], [0], [0], [1], [0, 0, 1, 1], [], []>} : vector<256x128xbf16>, vector<128x32xbf16>, vector<256x32xf32> -> vector<256x32xf32>
    %c0_69 = arith.constant 0 : index
    %c0_70 = arith.constant 0 : index
    %c0_71 = arith.constant 0 : index
    %169 = vector.load %arg15[%c0_69, %c0_70, %c0_71] : memref<1x1x32xf32, #tpu.memory_space<vmem>>, vector<1x1x32xf32>
    %170 = vector.shape_cast %169 : vector<1x1x32xf32> to vector<1x32xf32>
    %171 = vector.broadcast %170 : vector<1x32xf32> to vector<256x32xf32>
    %172 = arith.addf %168, %171 : vector<256x32xf32>
    %173 = arith.addf %122, %172 : vector<256x32xf32>
    %174 = vector.shape_cast %173 : vector<256x32xf32> to vector<2x128x32xf32>
    %c0_72 = arith.constant 0 : index
    %c0_73 = arith.constant 0 : index
    %c0_74 = arith.constant 0 : index
    %175 = vector.load %arg16[%c0_72, %c0_73, %c0_74] : memref<2x128x32xf32, #tpu.memory_space<vmem>>, vector<2x128x32xf32>
    tpu.vector_store %arg16[%c0_72, %c0_73, %c0_74], %174 {strides = array<i32>} : memref<2x128x32xf32, #tpu.memory_space<vmem>>, vector<2x128x32xf32>,
    return
  }
  func.func @transform_0(%arg0: i32, %arg1: i32) -> (i32, i32, i32) {
    %c0_i32 = arith.constant 0 : i32
    %c0_i32_0 = arith.constant 0 : i32
    %c0_i32_1 = arith.constant 0 : i32
    return %arg0, %c0_i32, %c0_i32_0 : i32, i32, i32
  }
  func.func @transform_1(%arg0: i32, %arg1: i32) -> (i32, i32) {
    %c0_i32 = arith.constant 0 : i32
    %c0_i32_0 = arith.constant 0 : i32
    %c0_i32_1 = arith.constant 0 : i32
    return %c0_i32, %c0_i32_0 : i32, i32
  }
  func.func @transform_2(%arg0: i32, %arg1: i32) -> (i32, i32, i32) {
    %c0_i32 = arith.constant 0 : i32
    %c0_i32_0 = arith.constant 0 : i32
    %c0_i32_1 = arith.constant 0 : i32
    return %arg1, %c0_i32, %c0_i32_0 : i32, i32, i32
  }
  func.func @transform_3(%arg0: i32, %arg1: i32) -> (i32, i32, i32) {
    %c0_i32 = arith.constant 0 : i32
    %c0_i32_0 = arith.constant 0 : i32
    %c0_i32_1 = arith.constant 0 : i32
    return %arg1, %c0_i32, %c0_i32_0 : i32, i32, i32
  }
  func.func @transform_4(%arg0: i32, %arg1: i32) -> (i32, i32, i32) {
    %c0_i32 = arith.constant 0 : i32
    %c0_i32_0 = arith.constant 0 : i32
    %c0_i32_1 = arith.constant 0 : i32
    return %arg1, %c0_i32, %c0_i32_0 : i32, i32, i32
  }
  func.func @transform_5(%arg0: i32, %arg1: i32) -> (i32, i32, i32) {
    %c0_i32 = arith.constant 0 : i32
    %c0_i32_0 = arith.constant 0 : i32
    %c0_i32_1 = arith.constant 0 : i32
    return %arg1, %c0_i32, %c0_i32_0 : i32, i32, i32
  }
  func.func @transform_6(%arg0: i32, %arg1: i32) -> (i32, i32, i32) {
    %c0_i32 = arith.constant 0 : i32
    %c0_i32_0 = arith.constant 0 : i32
    %c0_i32_1 = arith.constant 0 : i32
    return %arg1, %c0_i32, %c0_i32_0 : i32, i32, i32
  }
  func.func @transform_7(%arg0: i32, %arg1: i32) -> (i32, i32, i32) {
    %c0_i32 = arith.constant 0 : i32
    %c0_i32_0 = arith.constant 0 : i32
    %c0_i32_1 = arith.constant 0 : i32
    return %arg1, %c0_i32, %c0_i32_0 : i32, i32, i32
  }
  func.func @transform_8(%arg0: i32, %arg1: i32) -> (i32, i32, i32) {
    %c0_i32 = arith.constant 0 : i32
    %c0_i32_0 = arith.constant 0 : i32
    %c0_i32_1 = arith.constant 0 : i32
    return %arg1, %c0_i32, %c0_i32_0 : i32, i32, i32
  }
  func.func @transform_9(%arg0: i32, %arg1: i32) -> (i32, i32, i32) {
    %c0_i32 = arith.constant 0 : i32
    %c0_i32_0 = arith.constant 0 : i32
    %c0_i32_1 = arith.constant 0 : i32
    return %arg1, %c0_i32, %c0_i32_0 : i32, i32, i32
  }
  func.func @transform_10(%arg0: i32, %arg1: i32) -> (i32, i32, i32) {
    %c0_i32 = arith.constant 0 : i32
    %c0_i32_0 = arith.constant 0 : i32
    %c0_i32_1 = arith.constant 0 : i32
    return %arg1, %c0_i32, %c0_i32_0 : i32, i32, i32
  }
  func.func @transform_11(%arg0: i32, %arg1: i32) -> (i32, i32, i32) {
    %c0_i32 = arith.constant 0 : i32
    %c0_i32_0 = arith.constant 0 : i32
    %c0_i32_1 = arith.constant 0 : i32
    return %arg1, %c0_i32, %c0_i32_0 : i32, i32, i32
  }
  func.func @transform_12(%arg0: i32, %arg1: i32) -> (i32, i32, i32) {
    %c0_i32 = arith.constant 0 : i32
    %c0_i32_0 = arith.constant 0 : i32
    %c0_i32_1 = arith.constant 0 : i32
    return %arg1, %c0_i32, %c0_i32_0 : i32, i32, i32
  }
  func.func @transform_13(%arg0: i32, %arg1: i32) -> (i32, i32, i32) {
    %c0_i32 = arith.constant 0 : i32
    %c0_i32_0 = arith.constant 0 : i32
    %c0_i32_1 = arith.constant 0 : i32
    return %arg1, %c0_i32, %c0_i32_0 : i32, i32, i32
  }
  func.func @transform_14(%arg0: i32, %arg1: i32) -> (i32, i32, i32) {
    %c0_i32 = arith.constant 0 : i32
    %c0_i32_0 = arith.constant 0 : i32
    %c0_i32_1 = arith.constant 0 : i32
    return %arg0, %c0_i32, %c0_i32_0 : i32, i32, i32
  }
}

</mosaic_0001>

<llo_original>
// kernel: tpu_custom_call.1
$region0: #{tpu_custom_call.1}
  #allocation0 [shape = 'u32[]', space=smem, size = 0x4, offset = 0x4, fixed_abs, tag = 'smem constant byte address 0x4 - core index']
  #allocation1 [shape = 'u32[72,128]{1,0:T(1,128)}', space=vmem, size = 0x9000, scoped, tag = 'internal scratch']
  %s0 = inlined_call_operand.vmem [shape: f32[2,128,32], index: 0, kind: input, shape index: {}]
  %s1 = inlined_call_operand.vmem [shape: f32[128,128], index: 1, kind: input, shape index: {}]
  %s2 = inlined_call_operand.vmem [shape: f32[2,1,32], index: 2, kind: input, shape index: {}]
  %s3 = inlined_call_operand.vmem [shape: f32[2,1,32], index: 3, kind: input, shape index: {}]
  %s4 = inlined_call_operand.vmem [shape: bf16[2,32,96], index: 4, kind: input, shape index: {}]
  %s5 = inlined_call_operand.vmem [shape: f32[2,1,96], index: 5, kind: input, shape index: {}]
  %s6 = inlined_call_operand.vmem [shape: bf16[2,32,32], index: 6, kind: input, shape index: {}]
  %s7 = inlined_call_operand.vmem [shape: f32[2,1,32], index: 7, kind: input, shape index: {}]
  %s8 = inlined_call_operand.vmem [shape: f32[2,1,32], index: 8, kind: input, shape index: {}]
  %s9 = inlined_call_operand.vmem [shape: f32[2,1,32], index: 9, kind: input, shape index: {}]
  %s10 = inlined_call_operand.vmem [shape: bf16[2,32,128], index: 10, kind: input, shape index: {}]
  %s11 = inlined_call_operand.vmem [shape: f32[2,1,128], index: 11, kind: input, shape index: {}]
  %s12 = inlined_call_operand.vmem [shape: bf16[2,128,32], index: 12, kind: input, shape index: {}]
  %s13 = inlined_call_operand.vmem [shape: f32[2,1,32], index: 13, kind: input, shape index: {}]
  %s14 = inlined_call_operand.vmem [shape: f32[2,128,32], index: 14, kind: output, shape index: {}]
  %s15 = sld [smem:[#allocation0]]
  $region93: #{tpu_custom_call.1} parent=0
    _
  %s17 = ssub.s32 1, %s15
  %s18 = scalar_select 0, %s17, %s15
  loop: start=0, step=1, limit=4
  $region2: #{tpu_custom_call.1} parent=0 // loop_pre_header
    _
  $region3: #{tpu_custom_call.1} parent=0 // loop_header
    %s20 = sphi 0, %s24
    %p21 = scmp.ge.s32.totalorder %s20, 4
    %s27 = sphi 0, %s39
    %s28 = sphi 0, %s35
    %s29 = sphi 0, %s27
    %s30 = sphi 0, %s28
    %s31 = sphi 0, %s29
    %s32 = sphi 0, %s30
    %s42 = sphi 0, %s44
    %s45 = sphi 0, %s42
    %s46 = sphi 0, %s45
    %s62 = sphi 0, %s46
    %s66 = sphi 0, %s66
    %s68 = sphi 0, %s66
    %s69 = sphi 0, %s68
    %s83 = sphi 0, %s69
    %s89 = sphi 0, %s91
    %s92 = sphi 0, %s89
    %s93 = sphi 0, %s92
    %s109 = sphi 0, %s93
    %s115 = sphi 0, %s117
    %s118 = sphi 0, %s115
    %s119 = sphi 0, %s118
    %s135 = sphi 0, %s119
    %s141 = sphi 0, %s143
    %s144 = sphi 0, %s141
    %s145 = sphi 0, %s144
    %s161 = sphi 0, %s145
    %s167 = sphi 0, %s169
    %s170 = sphi 0, %s167
    %s171 = sphi 0, %s170
    %s187 = sphi 0, %s171
    %s193 = sphi 0, %s195
    %s196 = sphi 0, %s193
    %s197 = sphi 0, %s196
    %s213 = sphi 0, %s197
    %s219 = sphi 0, %s221
    %s222 = sphi 0, %s219
    %s223 = sphi 0, %s222
    %s239 = sphi 0, %s223
    %s245 = sphi 0, %s247
    %s248 = sphi 0, %s245
    %s249 = sphi 0, %s248
    %s265 = sphi 0, %s249
    %s271 = sphi 0, %s273
    %s274 = sphi 0, %s271
    %s275 = sphi 0, %s274
    %s291 = sphi 0, %s275
    %s297 = sphi 0, %s299
    %s300 = sphi 0, %s297
    %s301 = sphi 0, %s300
    %s317 = sphi 0, %s301
    %s323 = sphi 0, %s325
    %s326 = sphi 0, %s323
    %s327 = sphi 0, %s326
    %s343 = sphi 0, %s327
    %s349 = sphi 0, %s351
    %s352 = sphi 0, %s349
    %s353 = sphi 0, %s352
    %s369 = sphi 0, %s353
    %s375 = sphi 0, %s377
    %s378 = sphi 0, %s375
    %s379 = sphi 0, %s378
    %s395 = sphi 0, %s379
    %s401 = sphi 0, %s403
    %s404 = sphi 0, %s401
    %s405 = sphi 0, %s404
    %s421 = sphi 0, %s405
  $region4: #{tpu_custom_call.1} parent=0 // loop_header_branch
    %23 = sbr.rel (%p21) target = $region8
  $region5: #{tpu_custom_call.1} parent=0 // loop_body
    %s25 = ssub.s32 %s20, 1
    %s26 = ssub.s32 %s20, 2
    %s33 = sadd.s32 1, %s28
    %p34 = scmp.ge.s32.totalorder %s33, 2
    %s35 = scalar_select %p34, 0, %s33
    %s36 = sadd.s32 1, %s27
    %s37 = scalar_select %p34, %s36, %s27
    %p38 = scmp.ge.s32.totalorder %s37, 1
    %s39 = scalar_select %p38, 0, %s37
    %s40 = ssub.s32 %s27, %s39
    %p41 = scmp.eq.s32.totalorder %s40, 0
    %s43 = sadd.s32 %s42, 1
    %s44 = scalar_select %p41, %s42, %s43
    %p47 = pneg %p41
    %p48 = scmp.eq.s32.totalorder %s20, 1
    %p49 = por %p47, %p48
    %p50 = scmp.ne.s32.totalorder %s42, %s45
    %p51 = scmp.eq.s32.totalorder %s20, 0
    %p52 = por %p50, %p51
    %p53 = scmp.ne.s32.totalorder %s42, %s45
    %p54 = scmp.eq.s32.totalorder %s25, 1
    %p55 = por %p53, %p54
    %p56 = scmp.ne.s32.totalorder %s45, %s46
    %p57 = scmp.eq.s32.totalorder %s25, 0
    %p58 = por %p56, %p57
    %p59 = scmp.ne.s32.totalorder %s45, %s46
    %p60 = scmp.eq.s32.totalorder %s26, 1
    %p61 = por %p59, %p60
    %p63 = scmp.ne.s32.totalorder %s46, %s62
    %p64 = scmp.eq.s32.totalorder %s26, 0
    %p65 = por %p63, %p64
    %s67 = sadd.s32 %s66, 1
    %p70 = scmp.eq.s32.totalorder %s20, 1
    %p71 = scmp.ne.s32.totalorder %s66, %s68
    %p72 = scmp.eq.s32.totalorder %s20, 0
    %p73 = por %p71, %p72
    %p74 = scmp.ne.s32.totalorder %s66, %s68
    %p75 = scmp.eq.s32.totalorder %s25, 1
    %p76 = por %p74, %p75
    %p77 = scmp.ne.s32.totalorder %s68, %s69
    %p78 = scmp.eq.s32.totalorder %s25, 0
    %p79 = por %p77, %p78
    %p80 = scmp.ne.s32.totalorder %s68, %s69
    %p81 = scmp.eq.s32.totalorder %s26, 1
    %p82 = por %p80, %p81
    %p84 = scmp.ne.s32.totalorder %s69, %s83
    %p85 = scmp.eq.s32.totalorder %s26, 0
    %p86 = por %p84, %p85
    %s87 = ssub.s32 %s28, %s35
    %p88 = scmp.eq.s32.totalorder %s87, 0
    %s90 = sadd.s32 %s89, 1
    %s91 = scalar_select %p88, %s89, %s90
    %p94 = pneg %p88
    %p95 = scmp.eq.s32.totalorder %s20, 1
    %p96 = por %p94, %p95
    %p97 = scmp.ne.s32.totalorder %s89, %s92
    %p98 = scmp.eq.s32.totalorder %s20, 0
    %p99 = por %p97, %p98
    %p100 = scmp.ne.s32.totalorder %s89, %s92
    %p101 = scmp.eq.s32.totalorder %s25, 1
    %p102 = por %p100, %p101
    %p103 = scmp.ne.s32.totalorder %s92, %s93
    %p104 = scmp.eq.s32.totalorder %s25, 0
    %p105 = por %p103, %p104
    %p106 = scmp.ne.s32.totalorder %s92, %s93
    %p107 = scmp.eq.s32.totalorder %s26, 1
    %p108 = por %p106, %p107
    %p110 = scmp.ne.s32.totalorder %s93, %s109
    %p111 = scmp.eq.s32.totalorder %s26, 0
    %p112 = por %p110, %p111
    %s113 = ssub.s32 %s28, %s35
    %p114 = scmp.eq.s32.totalorder %s113, 0
    %s116 = sadd.s32 %s115, 1
    %s117 = scalar_select %p114, %s115, %s116
    %p120 = pneg %p114
    %p121 = scmp.eq.s32.totalorder %s20, 1
    %p122 = por %p120, %p121
    %p123 = scmp.ne.s32.totalorder %s115, %s118
    %p124 = scmp.eq.s32.totalorder %s20, 0
    %p125 = por %p123, %p124
    %p126 = scmp.ne.s32.totalorder %s115, %s118
    %p127 = scmp.eq.s32.totalorder %s25, 1
    %p128 = por %p126, %p127
    %p129 = scmp.ne.s32.totalorder %s118, %s119
    %p130 = scmp.eq.s32.totalorder %s25, 0
    %p131 = por %p129, %p130
    %p132 = scmp.ne.s32.totalorder %s118, %s119
    %p133 = scmp.eq.s32.totalorder %s26, 1
    %p134 = por %p132, %p133
    %p136 = scmp.ne.s32.totalorder %s119, %s135
    %p137 = scmp.eq.s32.totalorder %s26, 0
    %p138 = por %p136, %p137
    %s139 = ssub.s32 %s28, %s35
    %p140 = scmp.eq.s32.totalorder %s139, 0
    %s142 = sadd.s32 %s141, 1
    %s143 = scalar_select %p140, %s141, %s142
    %p146 = pneg %p140
    %p147 = scmp.eq.s32.totalorder %s20, 1
    %p148 = por %p146, %p147
    %p149 = scmp.ne.s32.totalorder %s141, %s144
    %p150 = scmp.eq.s32.totalorder %s20, 0
    %p151 = por %p149, %p150
    %p152 = scmp.ne.s32.totalorder %s141, %s144
    %p153 = scmp.eq.s32.totalorder %s25, 1
    %p154 = por %p152, %p153
    %p155 = scmp.ne.s32.totalorder %s144, %s145
    %p156 = scmp.eq.s32.totalorder %s25, 0
    %p157 = por %p155, %p156
    %p158 = scmp.ne.s32.totalorder %s144, %s145
    %p159 = scmp.eq.s32.totalorder %s26, 1
    %p160 = por %p158, %p159
    %p162 = scmp.ne.s32.totalorder %s145, %s161
    %p163 = scmp.eq.s32.totalorder %s26, 0
    %p164 = por %p162, %p163
    %s165 = ssub.s32 %s28, %s35
    %p166 = scmp.eq.s32.totalorder %s165, 0
    %s168 = sadd.s32 %s167, 1
    %s169 = scalar_select %p166, %s167, %s168
    %p172 = pneg %p166
    %p173 = scmp.eq.s32.totalorder %s20, 1
    %p174 = por %p172, %p173
    %p175 = scmp.ne.s32.totalorder %s167, %s170
    %p176 = scmp.eq.s32.totalorder %s20, 0
    %p177 = por %p175, %p176
    %p178 = scmp.ne.s32.totalorder %s167, %s170
    %p179 = scmp.eq.s32.totalorder %s25, 1
    %p180 = por %p178, %p179
    %p181 = scmp.ne.s32.totalorder %s170, %s171
    %p182 = scmp.eq.s32.totalorder %s25, 0
    %p183 = por %p181, %p182
    %p184 = scmp.ne.s32.totalorder %s170, %s171
    %p185 = scmp.eq.s32.totalorder %s26, 1
    %p186 = por %p184, %p185
    %p188 = scmp.ne.s32.totalorder %s171, %s187
    %p189 = scmp.eq.s32.totalorder %s26, 0
    %p190 = por %p188, %p189
    %s191 = ssub.s32 %s28, %s35
    %p192 = scmp.eq.s32.totalorder %s191, 0
    %s194 = sadd.s32 %s193, 1
    %s195 = scalar_select %p192, %s193, %s194
    %p198 = pneg %p192
    %p199 = scmp.eq.s32.totalorder %s20, 1
    %p200 = por %p198, %p199
    %p201 = scmp.ne.s32.totalorder %s193, %s196
    %p202 = scmp.eq.s32.totalorder %s20, 0
    %p203 = por %p201, %p202
    %p204 = scmp.ne.s32.totalorder %s193, %s196
    %p205 = scmp.eq.s32.totalorder %s25, 1
    %p206 = por %p204, %p205
    %p207 = scmp.ne.s32.totalorder %s196, %s197
    %p208 = scmp.eq.s32.totalorder %s25, 0
    %p209 = por %p207, %p208
    %p210 = scmp.ne.s32.totalorder %s196, %s197
    %p211 = scmp.eq.s32.totalorder %s26, 1
    %p212 = por %p210, %p211
    %p214 = scmp.ne.s32.totalorder %s197, %s213
    %p215 = scmp.eq.s32.totalorder %s26, 0
    %p216 = por %p214, %p215
    %s217 = ssub.s32 %s28, %s35
    %p218 = scmp.eq.s32.totalorder %s217, 0
    %s220 = sadd.s32 %s219, 1
    %s221 = scalar_select %p218, %s219, %s220
    %p224 = pneg %p218
    %p225 = scmp.eq.s32.totalorder %s20, 1
    %p226 = por %p224, %p225
    %p227 = scmp.ne.s32.totalorder %s219, %s222
    %p228 = scmp.eq.s32.totalorder %s20, 0
    %p229 = por %p227, %p228
    %p230 = scmp.ne.s32.totalorder %s219, %s222
    %p231 = scmp.eq.s32.totalorder %s25, 1
    %p232 = por %p230, %p231
    %p233 = scmp.ne.s32.totalorder %s222, %s223
    %p234 = scmp.eq.s32.totalorder %s25, 0
    %p235 = por %p233, %p234
    %p236 = scmp.ne.s32.totalorder %s222, %s223
    %p237 = scmp.eq.s32.totalorder %s26, 1
    %p238 = por %p236, %p237
    %p240 = scmp.ne.s32.totalorder %s223, %s239
    %p241 = scmp.eq.s32.totalorder %s26, 0
    %p242 = por %p240, %p241
    %s243 = ssub.s32 %s28, %s35
    %p244 = scmp.eq.s32.totalorder %s243, 0
    %s246 = sadd.s32 %s245, 1
    %s247 = scalar_select %p244, %s245, %s246
    %p250 = pneg %p244
    %p251 = scmp.eq.s32.totalorder %s20, 1
    %p252 = por %p250, %p251
    %p253 = scmp.ne.s32.totalorder %s245, %s248
    %p254 = scmp.eq.s32.totalorder %s20, 0
    %p255 = por %p253, %p254
    %p256 = scmp.ne.s32.totalorder %s245, %s248
    %p257 = scmp.eq.s32.totalorder %s25, 1
    %p258 = por %p256, %p257
    %p259 = scmp.ne.s32.totalorder %s248, %s249
    %p260 = scmp.eq.s32.totalorder %s25, 0
    %p261 = por %p259, %p260
    %p262 = scmp.ne.s32.totalorder %s248, %s249
    %p263 = scmp.eq.s32.totalorder %s26, 1
    %p264 = por %p262, %p263
    %p266 = scmp.ne.s32.totalorder %s249, %s265
    %p267 = scmp.eq.s32.totalorder %s26, 0
    %p268 = por %p266, %p267
    %s269 = ssub.s32 %s28, %s35
    %p270 = scmp.eq.s32.totalorder %s269, 0
    %s272 = sadd.s32 %s271, 1
    %s273 = scalar_select %p270, %s271, %s272
    %p276 = pneg %p270
    %p277 = scmp.eq.s32.totalorder %s20, 1
    %p278 = por %p276, %p277
    %p279 = scmp.ne.s32.totalorder %s271, %s274
    %p280 = scmp.eq.s32.totalorder %s20, 0
    %p281 = por %p279, %p280
    %p282 = scmp.ne.s32.totalorder %s271, %s274
    %p283 = scmp.eq.s32.totalorder %s25, 1
    %p284 = por %p282, %p283
    %p285 = scmp.ne.s32.totalorder %s274, %s275
    %p286 = scmp.eq.s32.totalorder %s25, 0
    %p287 = por %p285, %p286
    %p288 = scmp.ne.s32.totalorder %s274, %s275
    %p289 = scmp.eq.s32.totalorder %s26, 1
    %p290 = por %p288, %p289
    %p292 = scmp.ne.s32.totalorder %s275, %s291
    %p293 = scmp.eq.s32.totalorder %s26, 0
    %p294 = por %p292, %p293
    %s295 = ssub.s32 %s28, %s35
    %p296 = scmp.eq.s32.totalorder %s295, 0
    %s298 = sadd.s32 %s297, 1
    %s299 = scalar_select %p296, %s297, %s298
    %p302 = pneg %p296
    %p303 = scmp.eq.s32.totalorder %s20, 1
    %p304 = por %p302, %p303
    %p305 = scmp.ne.s32.totalorder %s297, %s300
    %p306 = scmp.eq.s32.totalorder %s20, 0
    %p307 = por %p305, %p306
    %p308 = scmp.ne.s32.totalorder %s297, %s300
    %p309 = scmp.eq.s32.totalorder %s25, 1
    %p310 = por %p308, %p309
    %p311 = scmp.ne.s32.totalorder %s300, %s301
    %p312 = scmp.eq.s32.totalorder %s25, 0
    %p313 = por %p311, %p312
    %p314 = scmp.ne.s32.totalorder %s300, %s301
    %p315 = scmp.eq.s32.totalorder %s26, 1
    %p316 = por %p314, %p315
    %p318 = scmp.ne.s32.totalorder %s301, %s317
    %p319 = scmp.eq.s32.totalorder %s26, 0
    %p320 = por %p318, %p319
    %s321 = ssub.s32 %s28, %s35
    %p322 = scmp.eq.s32.totalorder %s321, 0
    %s324 = sadd.s32 %s323, 1
    %s325 = scalar_select %p322, %s323, %s324
    %p328 = pneg %p322
    %p329 = scmp.eq.s32.totalorder %s20, 1
    %p330 = por %p328, %p329
    %p331 = scmp.ne.s32.totalorder %s323, %s326
    %p332 = scmp.eq.s32.totalorder %s20, 0
    %p333 = por %p331, %p332
    %p334 = scmp.ne.s32.totalorder %s323, %s326
    %p335 = scmp.eq.s32.totalorder %s25, 1
    %p336 = por %p334, %p335
    %p337 = scmp.ne.s32.totalorder %s326, %s327
    %p338 = scmp.eq.s32.totalorder %s25, 0
    %p339 = por %p337, %p338
    %p340 = scmp.ne.s32.totalorder %s326, %s327
    %p341 = scmp.eq.s32.totalorder %s26, 1
    %p342 = por %p340, %p341
    %p344 = scmp.ne.s32.totalorder %s327, %s343
    %p345 = scmp.eq.s32.totalorder %s26, 0
    %p346 = por %p344, %p345
    %s347 = ssub.s32 %s28, %s35
    %p348 = scmp.eq.s32.totalorder %s347, 0
    %s350 = sadd.s32 %s349, 1
    %s351 = scalar_select %p348, %s349, %s350
    %p354 = pneg %p348
    %p355 = scmp.eq.s32.totalorder %s20, 1
    %p356 = por %p354, %p355
    %p357 = scmp.ne.s32.totalorder %s349, %s352
    %p358 = scmp.eq.s32.totalorder %s20, 0
    %p359 = por %p357, %p358
    %p360 = scmp.ne.s32.totalorder %s349, %s352
    %p361 = scmp.eq.s32.totalorder %s25, 1
    %p362 = por %p360, %p361
    %p363 = scmp.ne.s32.totalorder %s352, %s353
    %p364 = scmp.eq.s32.totalorder %s25, 0
    %p365 = por %p363, %p364
    %p366 = scmp.ne.s32.totalorder %s352, %s353
    %p367 = scmp.eq.s32.totalorder %s26, 1
    %p368 = por %p366, %p367
    %p370 = scmp.ne.s32.totalorder %s353, %s369
    %p371 = scmp.eq.s32.totalorder %s26, 0
    %p372 = por %p370, %p371
    %s373 = ssub.s32 %s28, %s35
    %p374 = scmp.eq.s32.totalorder %s373, 0
    %s376 = sadd.s32 %s375, 1
    %s377 = scalar_select %p374, %s375, %s376
    %p380 = pneg %p374
    %p381 = scmp.eq.s32.totalorder %s20, 1
    %p382 = por %p380, %p381
    %p383 = scmp.ne.s32.totalorder %s375, %s378
    %p384 = scmp.eq.s32.totalorder %s20, 0
    %p385 = por %p383, %p384
    %p386 = scmp.ne.s32.totalorder %s375, %s378
    %p387 = scmp.eq.s32.totalorder %s25, 1
    %p388 = por %p386, %p387
    %p389 = scmp.ne.s32.totalorder %s378, %s379
    %p390 = scmp.eq.s32.totalorder %s25, 0
    %p391 = por %p389, %p390
    %p392 = scmp.ne.s32.totalorder %s378, %s379
    %p393 = scmp.eq.s32.totalorder %s26, 1
    %p394 = por %p392, %p393
    %p396 = scmp.ne.s32.totalorder %s379, %s395
    %p397 = scmp.eq.s32.totalorder %s26, 0
    %p398 = por %p396, %p397
    %s399 = ssub.s32 %s27, %s39
    %p400 = scmp.eq.s32.totalorder %s399, 0
    %s402 = sadd.s32 %s401, 1
    %s403 = scalar_select %p400, %s401, %s402
    %p406 = pneg %p400
    %p407 = scmp.eq.s32.totalorder %s20, 1
    %p408 = por %p406, %p407
    %p409 = scmp.ne.s32.totalorder %s401, %s404
    %p410 = scmp.eq.s32.totalorder %s20, 0
    %p411 = por %p409, %p410
    %p412 = scmp.ne.s32.totalorder %s401, %s404
    %p413 = scmp.eq.s32.totalorder %s25, 1
    %p414 = por %p412, %p413
    %p415 = scmp.ne.s32.totalorder %s404, %s405
    %p416 = scmp.eq.s32.totalorder %s25, 0
    %p417 = por %p415, %p416
    %p418 = scmp.ne.s32.totalorder %s404, %s405
    %p419 = scmp.eq.s32.totalorder %s26, 1
    %p420 = por %p418, %p419
    %p422 = scmp.ne.s32.totalorder %s405, %s421
    %p423 = scmp.eq.s32.totalorder %s26, 0
    %p424 = por %p422, %p423
    %p425 = scmp.le.s32.totalorder 1, %s20
    %p426 = scmp.lt.s32.totalorder %s20, 3
    %p427 = pnand %p425, %p426
    %p428 = pneg %p427
    // Predicated region
    $region9: #{tpu_custom_call.1} parent=5 // pred_check
      _
    $region10: #{tpu_custom_call.1} parent=5 // pred_check_branch
      %430 = sbr.rel (%p427) target = $region12
    $region11: #{tpu_custom_call.1} parent=5 // pred_region
      %s431 = ssub.s32 %s20, 1
      // Predicated region
      $region13: #{tpu_custom_call.1} parent=11 // pred_check
        %p432 = pneg %p58
      $region14: #{tpu_custom_call.1} parent=11 // pred_check_branch
        %434 = sbr.rel (%p432) target = $region16
      $region15: #{tpu_custom_call.1} parent=11 // pred_region
        %s435 = smul.u32 2, %s29
        %p436 = scmp.lt.s32.totalorder %s435, 1
        %s437 = scalar_select %p436, %s435, 1
        %s438 = smul.addr %s437, 16
        %s439 = smul.addr %s438, 8
        %s440 = scalar_lea.vmem %s0, %s439
        %s441 = smul.u32 2, %s29
      $region16: #{tpu_custom_call.1} parent=11 // pred_fallthru
        _
      // Predicated region
      $region17: #{tpu_custom_call.1} parent=11 // pred_check
        %p442 = pneg %p79
      $region18: #{tpu_custom_call.1} parent=11 // pred_check_branch
        %444 = sbr.rel (%p442) target = $region20
      $region19: #{tpu_custom_call.1} parent=11 // pred_region
        _
      $region20: #{tpu_custom_call.1} parent=11 // pred_fallthru
        _
    $region12: #{tpu_custom_call.1} parent=5 // pred_fallthru
      _
    %p445 = scmp.lt.s32.totalorder %s20, 2
    // Predicated region
    $region21: #{tpu_custom_call.1} parent=5 // pred_check
      %p446 = pneg %p445
    $region22: #{tpu_custom_call.1} parent=5 // pred_check_branch
      %448 = sbr.rel (%p446) target = $region24
    $region23: #{tpu_custom_call.1} parent=5 // pred_region
      // Predicated region
      $region25: #{tpu_custom_call.1} parent=23 // pred_check
        %p449 = pneg %p99
      $region26: #{tpu_custom_call.1} parent=23 // pred_check_branch
        %451 = sbr.rel (%p449) target = $region28
      $region27: #{tpu_custom_call.1} parent=23 // pred_region
        %p452 = scmp.lt.s32.totalorder %s28, 1
        %s453 = scalar_select %p452, %s28, 1
        %s454 = scalar_lea.vmem %s2, %s453
      $region28: #{tpu_custom_call.1} parent=23 // pred_fallthru
        _
      // Predicated region
      $region29: #{tpu_custom_call.1} parent=23 // pred_check
        %p455 = pneg %p125
      $region30: #{tpu_custom_call.1} parent=23 // pred_check_branch
        %457 = sbr.rel (%p455) target = $region32
      $region31: #{tpu_custom_call.1} parent=23 // pred_region
        %p458 = scmp.lt.s32.totalorder %s28, 1
        %s459 = scalar_select %p458, %s28, 1
        %s460 = scalar_lea.vmem %s3, %s459
      $region32: #{tpu_custom_call.1} parent=23 // pred_fallthru
        _
      // Predicated region
      $region33: #{tpu_custom_call.1} parent=23 // pred_check
        %p461 = pneg %p151
      $region34: #{tpu_custom_call.1} parent=23 // pred_check_branch
        %463 = sbr.rel (%p461) target = $region36
      $region35: #{tpu_custom_call.1} parent=23 // pred_region
        %p464 = scmp.lt.s32.totalorder %s28, 1
        %s465 = scalar_select %p464, %s28, 1
        %s466 = smul.addr %s465, 4
        %s467 = smul.addr %s466, 4
        %s468 = scalar_lea.vmem %s4, %s467
      $region36: #{tpu_custom_call.1} parent=23 // pred_fallthru
        _
      // Predicated region
      $region37: #{tpu_custom_call.1} parent=23 // pred_check
        %p469 = pneg %p177
      $region38: #{tpu_custom_call.1} parent=23 // pred_check_branch
        %471 = sbr.rel (%p469) target = $region40
      $region39: #{tpu_custom_call.1} parent=23 // pred_region
        %p472 = scmp.lt.s32.totalorder %s28, 1
        %s473 = scalar_select %p472, %s28, 1
        %s474 = scalar_lea.vmem %s5, %s473
      $region40: #{tpu_custom_call.1} parent=23 // pred_fallthru
        _
      // Predicated region
      $region41: #{tpu_custom_call.1} parent=23 // pred_check
        %p475 = pneg %p203
      $region42: #{tpu_custom_call.1} parent=23 // pred_check_branch
        %477 = sbr.rel (%p475) target = $region44
      $region43: #{tpu_custom_call.1} parent=23 // pred_region
        %p478 = scmp.lt.s32.totalorder %s28, 1
        %s479 = scalar_select %p478, %s28, 1
        %s480 = smul.addr %s479, 4
        %s481 = smul.addr %s480, 4
        %s482 = scalar_lea.vmem %s6, %s481
      $region44: #{tpu_custom_call.1} parent=23 // pred_fallthru
        _
      // Predicated region
      $region45: #{tpu_custom_call.1} parent=23 // pred_check
        %p483 = pneg %p229
      $region46: #{tpu_custom_call.1} parent=23 // pred_check_branch
        %485 = sbr.rel (%p483) target = $region48
      $region47: #{tpu_custom_call.1} parent=23 // pred_region
        %p486 = scmp.lt.s32.totalorder %s28, 1
        %s487 = scalar_select %p486, %s28, 1
        %s488 = scalar_lea.vmem %s7, %s487
      $region48: #{tpu_custom_call.1} parent=23 // pred_fallthru
        _
      // Predicated region
      $region49: #{tpu_custom_call.1} parent=23 // pred_check
        %p489 = pneg %p255
      $region50: #{tpu_custom_call.1} parent=23 // pred_check_branch
        %491 = sbr.rel (%p489) target = $region52
      $region51: #{tpu_custom_call.1} parent=23 // pred_region
        %p492 = scmp.lt.s32.totalorder %s28, 1
        %s493 = scalar_select %p492, %s28, 1
        %s494 = scalar_lea.vmem %s8, %s493
      $region52: #{tpu_custom_call.1} parent=23 // pred_fallthru
        _
      // Predicated region
      $region53: #{tpu_custom_call.1} parent=23 // pred_check
        %p495 = pneg %p281
      $region54: #{tpu_custom_call.1} parent=23 // pred_check_branch
        %497 = sbr.rel (%p495) target = $region56
      $region55: #{tpu_custom_call.1} parent=23 // pred_region
        %p498 = scmp.lt.s32.totalorder %s28, 1
        %s499 = scalar_select %p498, %s28, 1
        %s500 = scalar_lea.vmem %s9, %s499
      $region56: #{tpu_custom_call.1} parent=23 // pred_fallthru
        _
      // Predicated region
      $region57: #{tpu_custom_call.1} parent=23 // pred_check
        %p501 = pneg %p307
      $region58: #{tpu_custom_call.1} parent=23 // pred_check_branch
        %503 = sbr.rel (%p501) target = $region60
      $region59: #{tpu_custom_call.1} parent=23 // pred_region
        %p504 = scmp.lt.s32.totalorder %s28, 1
        %s505 = scalar_select %p504, %s28, 1
        %s506 = smul.addr %s505, 4
        %s507 = smul.addr %s506, 4
        %s508 = scalar_lea.vmem %s10, %s507
      $region60: #{tpu_custom_call.1} parent=23 // pred_fallthru
        _
      // Predicated region
      $region61: #{tpu_custom_call.1} parent=23 // pred_check
        %p509 = pneg %p333
      $region62: #{tpu_custom_call.1} parent=23 // pred_check_branch
        %511 = sbr.rel (%p509) target = $region64
      $region63: #{tpu_custom_call.1} parent=23 // pred_region
        %p512 = scmp.lt.s32.totalorder %s28, 1
        %s513 = scalar_select %p512, %s28, 1
        %s514 = scalar_lea.vmem %s11, %s513
      $region64: #{tpu_custom_call.1} parent=23 // pred_fallthru
        _
      // Predicated region
      $region65: #{tpu_custom_call.1} parent=23 // pred_check
        %p515 = pneg %p359
      $region66: #{tpu_custom_call.1} parent=23 // pred_check_branch
        %517 = sbr.rel (%p515) target = $region68
      $region67: #{tpu_custom_call.1} parent=23 // pred_region
        %p518 = scmp.lt.s32.totalorder %s28, 1
        %s519 = scalar_select %p518, %s28, 1
        %s520 = smul.addr %s519, 16
        %s521 = smul.addr %s520, 4
        %s522 = scalar_lea.vmem %s12, %s521
      $region68: #{tpu_custom_call.1} parent=23 // pred_fallthru
        _
      // Predicated region
      $region69: #{tpu_custom_call.1} parent=23 // pred_check
        %p523 = pneg %p385
      $region70: #{tpu_custom_call.1} parent=23 // pred_check_branch
        %525 = sbr.rel (%p523) target = $region72
      $region71: #{tpu_custom_call.1} parent=23 // pred_region
        %p526 = scmp.lt.s32.totalorder %s28, 1
        %s527 = scalar_select %p526, %s28, 1
        %s528 = scalar_lea.vmem %s13, %s527
      $region72: #{tpu_custom_call.1} parent=23 // pred_fallthru
        _
    $region24: #{tpu_custom_call.1} parent=5 // pred_fallthru
      _
    %p529 = scmp.le.s32.totalorder 1, %s20
    %p530 = scmp.lt.s32.totalorder %s20, 3
    %p531 = pnand %p529, %p530
    %p532 = pneg %p531
    // Predicated region
    $region73: #{tpu_custom_call.1} parent=5 // pred_check
      _
    $region74: #{tpu_custom_call.1} parent=5 // pred_check_branch
      %534 = sbr.rel (%p531) target = $region76
    $region75: #{tpu_custom_call.1} parent=5 // pred_region
      %s535 = ssub.s32 %s20, 1
      %s536 = smul.u32 2, %s29
      %p537 = scmp.lt.s32.totalorder %s536, 1
      %s538 = scalar_select %p537, %s536, 1
      %s539 = smul.addr %s538, 16
      %s540 = smul.addr %s539, 8
      %s541 = scalar_lea.vmem %s0, %s540
      %p542 = pneg %p58
      %p543 = pneg %p55
      %p544 = pneg %p79
      %p545 = pneg %p76
      %p546 = scmp.lt.s32.totalorder %s30, 1
      %s547 = scalar_select %p546, %s30, 1
      %s548 = scalar_lea.vmem %s2, %s547
      %p549 = pneg %p105
      %p550 = pneg %p102
      %p551 = scmp.lt.s32.totalorder %s30, 1
      %s552 = scalar_select %p551, %s30, 1
      %s553 = scalar_lea.vmem %s3, %s552
      %p554 = pneg %p131
      %p555 = pneg %p128
      %p556 = scmp.lt.s32.totalorder %s30, 1
      %s557 = scalar_select %p556, %s30, 1
      %s558 = smul.addr %s557, 4
      %s559 = smul.addr %s558, 4
      %s560 = scalar_lea.vmem %s4, %s559
      %p561 = pneg %p157
      %p562 = pneg %p154
      %p563 = scmp.lt.s32.totalorder %s30, 1
      %s564 = scalar_select %p563, %s30, 1
      %s565 = scalar_lea.vmem %s5, %s564
      %p566 = pneg %p183
      %p567 = pneg %p180
      %p568 = scmp.lt.s32.totalorder %s30, 1
      %s569 = scalar_select %p568, %s30, 1
      %s570 = smul.addr %s569, 4
      %s571 = smul.addr %s570, 4
      %s572 = scalar_lea.vmem %s6, %s571
      %p573 = pneg %p209
      %p574 = pneg %p206
      %p575 = scmp.lt.s32.totalorder %s30, 1
      %s576 = scalar_select %p575, %s30, 1
      %s577 = scalar_lea.vmem %s7, %s576
      %p578 = pneg %p235
      %p579 = pneg %p232
      %p580 = scmp.lt.s32.totalorder %s30, 1
      %s581 = scalar_select %p580, %s30, 1
      %s582 = scalar_lea.vmem %s8, %s581
      %p583 = pneg %p261
      %p584 = pneg %p258
      %p585 = scmp.lt.s32.totalorder %s30, 1
      %s586 = scalar_select %p585, %s30, 1
      %s587 = scalar_lea.vmem %s9, %s586
      %p588 = pneg %p287
      %p589 = pneg %p284
      %p590 = scmp.lt.s32.totalorder %s30, 1
      %s591 = scalar_select %p590, %s30, 1
      %s592 = smul.addr %s591, 4
      %s593 = smul.addr %s592, 4
      %s594 = scalar_lea.vmem %s10, %s593
      %p595 = pneg %p313
      %p596 = pneg %p310
      %p597 = scmp.lt.s32.totalorder %s30, 1
      %s598 = scalar_select %p597, %s30, 1
      %s599 = scalar_lea.vmem %s11, %s598
      %p600 = pneg %p339
      %p601 = pneg %p336
      %p602 = scmp.lt.s32.totalorder %s30, 1
      %s603 = scalar_select %p602, %s30, 1
      %s604 = smul.addr %s603, 16
      %s605 = smul.addr %s604, 4
      %s606 = scalar_lea.vmem %s12, %s605
      %p607 = pneg %p365
      %p608 = pneg %p362
      %p609 = scmp.lt.s32.totalorder %s30, 1
      %s610 = scalar_select %p609, %s30, 1
      %s611 = scalar_lea.vmem %s13, %s610
      %p612 = pneg %p391
      %p613 = pneg %p388
      %p614 = pneg %p417
      %p615 = pneg %p414
      %s616 = smul.u32 2, %s29
      %p617 = scmp.lt.s32.totalorder %s616, 1
      %s618 = scalar_select %p617, %s616, 1
      %s619 = smul.addr %s618, 16
      %s620 = smul.addr %s619, 8
      %s621 = scalar_lea.vmem %s14, %s620
      %s622 = smul.u32 2, %s29
      %p623 = scmp.lt.s32.totalorder %s622, 1
      %s624 = scalar_select %p623, %s622, 1
      %s625 = smul.addr %s624, 16
      %s626 = smul.addr %s625, 8
      %s627 = scalar_lea.vmem %s0, %s626
      %s628 = smul.u32 2, %s29
      %p629 = scmp.lt.s32.totalorder %s30, 1
      %s630 = scalar_select %p629, %s30, 1
      %s631 = scalar_lea.vmem %s2, %s630
      %p632 = scmp.lt.s32.totalorder %s30, 1
      %s633 = scalar_select %p632, %s30, 1
      %s634 = scalar_lea.vmem %s3, %s633
      %p635 = scmp.lt.s32.totalorder %s30, 1
      %s636 = scalar_select %p635, %s30, 1
      %s637 = smul.addr %s636, 4
      %s638 = smul.addr %s637, 4
      %s639 = scalar_lea.vmem %s4, %s638
      %p640 = scmp.lt.s32.totalorder %s30, 1
      %s641 = scalar_select %p640, %s30, 1
      %s642 = scalar_lea.vmem %s5, %s641
      %p643 = scmp.lt.s32.totalorder %s30, 1
      %s644 = scalar_select %p643, %s30, 1
      %s645 = smul.addr %s644, 4
      %s646 = smul.addr %s645, 4
      %s647 = scalar_lea.vmem %s6, %s646
      %p648 = scmp.lt.s32.totalorder %s30, 1
      %s649 = scalar_select %p648, %s30, 1
      %s650 = scalar_lea.vmem %s7, %s649
      %p651 = scmp.lt.s32.totalorder %s30, 1
      %s652 = scalar_select %p651, %s30, 1
      %s653 = scalar_lea.vmem %s8, %s652
      %p654 = scmp.lt.s32.totalorder %s30, 1
      %s655 = scalar_select %p654, %s30, 1
      %s656 = scalar_lea.vmem %s9, %s655
      %p657 = scmp.lt.s32.totalorder %s30, 1
      %s658 = scalar_select %p657, %s30, 1
      %s659 = smul.addr %s658, 4
      %s660 = smul.addr %s659, 4
      %s661 = scalar_lea.vmem %s10, %s660
      %p662 = scmp.lt.s32.totalorder %s30, 1
      %s663 = scalar_select %p662, %s30, 1
      %s664 = scalar_lea.vmem %s11, %s663
      %p665 = scmp.lt.s32.totalorder %s30, 1
      %s666 = scalar_select %p665, %s30, 1
      %s667 = smul.addr %s666, 16
      %s668 = smul.addr %s667, 4
      %s669 = scalar_lea.vmem %s12, %s668
      %p670 = scmp.lt.s32.totalorder %s30, 1
      %s671 = scalar_select %p670, %s30, 1
      %s672 = scalar_lea.vmem %s13, %s671
      %s673 = smul.u32 2, %s29
      %p674 = scmp.lt.s32.totalorder %s673, 1
      %s675 = scalar_select %p674, %s673, 1
      %s676 = smul.addr %s675, 16
      %s677 = smul.addr %s676, 8
      %s678 = scalar_lea.vmem %s14, %s677
      %s679 = smul.u32 2, %s29
      %p681 = scmp.eq.s32.totalorder %s30, 0
      // Predicated region
      $region77: #{tpu_custom_call.1} parent=75 // pred_check
        %p682 = pneg %p681
      $region78: #{tpu_custom_call.1} parent=75 // pred_check_branch
        %684 = sbr.rel (%p682) target = $region80
      $region79: #{tpu_custom_call.1} parent=75 // pred_region
        %v685 = vld [vmem:[%s627] sm:$0xff]
        %v686 = vld [vmem:[%s627 + $0x8] sm:$0xff]
        %v687 = vld [vmem:[%s627 + $0x10] sm:$0xff]
        %v688 = vld [vmem:[%s627 + $0x18] sm:$0xff]
        %v689 = vld [vmem:[%s627 + $0x20] sm:$0xff]
        %v690 = vld [vmem:[%s627 + $0x28] sm:$0xff]
        %v691 = vld [vmem:[%s627 + $0x30] sm:$0xff]
        %v692 = vld [vmem:[%s627 + $0x38] sm:$0xff]
        %v693 = vld [vmem:[%s627 + $0x40] sm:$0xff]
        %v694 = vld [vmem:[%s627 + $0x48] sm:$0xff]
        %v695 = vld [vmem:[%s627 + $0x50] sm:$0xff]
        %v696 = vld [vmem:[%s627 + $0x58] sm:$0xff]
        %v697 = vld [vmem:[%s627 + $0x60] sm:$0xff]
        %v698 = vld [vmem:[%s627 + $0x68] sm:$0xff]
        %v699 = vld [vmem:[%s627 + $0x70] sm:$0xff]
        %v700 = vld [vmem:[%s627 + $0x78] sm:$0xff]
        %v701 = vld [vmem:[%s627 + $0x80] sm:$0xff]
        %v702 = vld [vmem:[%s627 + $0x88] sm:$0xff]
        %v703 = vld [vmem:[%s627 + $0x90] sm:$0xff]
        %v704 = vld [vmem:[%s627 + $0x98] sm:$0xff]
        %v705 = vld [vmem:[%s627 + $0xa0] sm:$0xff]
        %v706 = vld [vmem:[%s627 + $0xa8] sm:$0xff]
        %v707 = vld [vmem:[%s627 + $0xb0] sm:$0xff]
        %v708 = vld [vmem:[%s627 + $0xb8] sm:$0xff]
        %v709 = vld [vmem:[%s627 + $0xc0] sm:$0xff]
        %v710 = vld [vmem:[%s627 + $0xc8] sm:$0xff]
        %v711 = vld [vmem:[%s627 + $0xd0] sm:$0xff]
        %v712 = vld [vmem:[%s627 + $0xd8] sm:$0xff]
        %v713 = vld [vmem:[%s627 + $0xe0] sm:$0xff]
        %v714 = vld [vmem:[%s627 + $0xe8] sm:$0xff]
        %v715 = vld [vmem:[%s627 + $0xf0] sm:$0xff]
        %v716 = vld [vmem:[%s627 + $0xf8] sm:$0xff]
        %vm717 = vcmask 261120
        %718 = vst.msk [vmem:[%s678] sm:$0xff] %vm717, %v685
        %719 = vst.msk [vmem:[%s678 + $0x8] sm:$0xff] %vm717, %v686
        %720 = vst.msk [vmem:[%s678 + $0x10] sm:$0xff] %vm717, %v687
        %721 = vst.msk [vmem:[%s678 + $0x18] sm:$0xff] %vm717, %v688
        %722 = vst.msk [vmem:[%s678 + $0x20] sm:$0xff] %vm717, %v689
        %723 = vst.msk [vmem:[%s678 + $0x28] sm:$0xff] %vm717, %v690
        %724 = vst.msk [vmem:[%s678 + $0x30] sm:$0xff] %vm717, %v691
        %725 = vst.msk [vmem:[%s678 + $0x38] sm:$0xff] %vm717, %v692
        %726 = vst.msk [vmem:[%s678 + $0x40] sm:$0xff] %vm717, %v693
        %727 = vst.msk [vmem:[%s678 + $0x48] sm:$0xff] %vm717, %v694
        %728 = vst.msk [vmem:[%s678 + $0x50] sm:$0xff] %vm717, %v695
        %729 = vst.msk [vmem:[%s678 + $0x58] sm:$0xff] %vm717, %v696
        %730 = vst.msk [vmem:[%s678 + $0x60] sm:$0xff] %vm717, %v697
        %731 = vst.msk [vmem:[%s678 + $0x68] sm:$0xff] %vm717, %v698
        %732 = vst.msk [vmem:[%s678 + $0x70] sm:$0xff] %vm717, %v699
        %733 = vst.msk [vmem:[%s678 + $0x78] sm:$0xff] %vm717, %v700
        %734 = vst.msk [vmem:[%s678 + $0x80] sm:$0xff] %vm717, %v701
        %735 = vst.msk [vmem:[%s678 + $0x88] sm:$0xff] %vm717, %v702
        %736 = vst.msk [vmem:[%s678 + $0x90] sm:$0xff] %vm717, %v703
        %737 = vst.msk [vmem:[%s678 + $0x98] sm:$0xff] %vm717, %v704
        %738 = vst.msk [vmem:[%s678 + $0xa0] sm:$0xff] %vm717, %v705
        %739 = vst.msk [vmem:[%s678 + $0xa8] sm:$0xff] %vm717, %v706
        %740 = vst.msk [vmem:[%s678 + $0xb0] sm:$0xff] %vm717, %v707
        %741 = vst.msk [vmem:[%s678 + $0xb8] sm:$0xff] %vm717, %v708
        %742 = vst.msk [vmem:[%s678 + $0xc0] sm:$0xff] %vm717, %v709
        %743 = vst.msk [vmem:[%s678 + $0xc8] sm:$0xff] %vm717, %v710
        %744 = vst.msk [vmem:[%s678 + $0xd0] sm:$0xff] %vm717, %v711
        %745 = vst.msk [vmem:[%s678 + $0xd8] sm:$0xff] %vm717, %v712
        %746 = vst.msk [vmem:[%s678 + $0xe0] sm:$0xff] %vm717, %v713
        %747 = vst.msk [vmem:[%s678 + $0xe8] sm:$0xff] %vm717, %v714
        %748 = vst.msk [vmem:[%s678 + $0xf0] sm:$0xff] %vm717, %v715
        %749 = vst.msk [vmem:[%s678 + $0xf8] sm:$0xff] %vm717, %v716
      $region80: #{tpu_custom_call.1} parent=75 // pred_fallthru
        _
      %v750 = vld [vmem:[%s1] sm:$0xff]
      %v751 = vld [vmem:[%s1 + $0x8] sm:$0xff]
      %v752 = vld [vmem:[%s1 + $0x10] sm:$0xff]
      %v753 = vld [vmem:[%s1 + $0x18] sm:$0xff]
      %v754 = vld [vmem:[%s1 + $0x20] sm:$0xff]
      %v755 = vld [vmem:[%s1 + $0x28] sm:$0xff]
      %v756 = vld [vmem:[%s1 + $0x30] sm:$0xff]
      %v757 = vld [vmem:[%s1 + $0x38] sm:$0xff]
      %v758 = vld [vmem:[%s1 + $0x40] sm:$0xff]
      %v759 = vld [vmem:[%s1 + $0x48] sm:$0xff]
      %v760 = vld [vmem:[%s1 + $0x50] sm:$0xff]
      %v761 = vld [vmem:[%s1 + $0x58] sm:$0xff]
      %v762 = vld [vmem:[%s1 + $0x60] sm:$0xff]
      %v763 = vld [vmem:[%s1 + $0x68] sm:$0xff]
      %v764 = vld [vmem:[%s1 + $0x70] sm:$0xff]
      %v765 = vld [vmem:[%s1 + $0x78] sm:$0xff]
      %v766 = vld [vmem:[%s678] sm:$0xff]
      %v767 = vld [vmem:[%s678 + $0x8] sm:$0xff]
      %v768 = vld [vmem:[%s678 + $0x10] sm:$0xff]
      %v769 = vld [vmem:[%s678 + $0x18] sm:$0xff]
      %v770 = vld [vmem:[%s678 + $0x20] sm:$0xff]
      %v771 = vld [vmem:[%s678 + $0x28] sm:$0xff]
      %v772 = vld [vmem:[%s678 + $0x30] sm:$0xff]
      %v773 = vld [vmem:[%s678 + $0x38] sm:$0xff]
      %v774 = vld [vmem:[%s678 + $0x40] sm:$0xff]
      %v775 = vld [vmem:[%s678 + $0x48] sm:$0xff]
      %v776 = vld [vmem:[%s678 + $0x50] sm:$0xff]
      %v777 = vld [vmem:[%s678 + $0x58] sm:$0xff]
      %v778 = vld [vmem:[%s678 + $0x60] sm:$0xff]
      %v779 = vld [vmem:[%s678 + $0x68] sm:$0xff]
      %v780 = vld [vmem:[%s678 + $0x70] sm:$0xff]
      %v781 = vld [vmem:[%s678 + $0x78] sm:$0xff]
      %v782 = vld [vmem:[%s678 + $0x80] sm:$0xff]
      %v783 = vld [vmem:[%s678 + $0x88] sm:$0xff]
      %v784 = vld [vmem:[%s678 + $0x90] sm:$0xff]
      %v785 = vld [vmem:[%s678 + $0x98] sm:$0xff]
      %v786 = vld [vmem:[%s678 + $0xa0] sm:$0xff]
      %v787 = vld [vmem:[%s678 + $0xa8] sm:$0xff]
      %v788 = vld [vmem:[%s678 + $0xb0] sm:$0xff]
      %v789 = vld [vmem:[%s678 + $0xb8] sm:$0xff]
      %v790 = vld [vmem:[%s678 + $0xc0] sm:$0xff]
      %v791 = vld [vmem:[%s678 + $0xc8] sm:$0xff]
      %v792 = vld [vmem:[%s678 + $0xd0] sm:$0xff]
      %v793 = vld [vmem:[%s678 + $0xd8] sm:$0xff]
      %v794 = vld [vmem:[%s678 + $0xe0] sm:$0xff]
      %v795 = vld [vmem:[%s678 + $0xe8] sm:$0xff]
      %v796 = vld [vmem:[%s678 + $0xf0] sm:$0xff]
      %v797 = vld [vmem:[%s678 + $0xf8] sm:$0xff]
      %v798 = vld [vmem:[%s631] sm:$0x1]
      %v799 = vld [vmem:[%s634] sm:$0x1]
      %vm800 = vcmask 261120
      %v801 = vsel %vm800, %v766, 0.0
      %802 = vadd.xlane.f32.xlu0 %v801
      %v803 = vpop.xlane.xlu0 %802
      %v804 = vsel %vm800, %v767, 0.0
      %805 = vadd.xlane.f32.xlu0 %v804
      %v806 = vpop.xlane.xlu0 %805
      %v807 = vsel %vm800, %v768, 0.0
      %808 = vadd.xlane.f32.xlu0 %v807
      %v809 = vpop.xlane.xlu0 %808
      %v810 = vsel %vm800, %v769, 0.0
      %811 = vadd.xlane.f32.xlu0 %v810
      %v812 = vpop.xlane.xlu0 %811
      %v813 = vsel %vm800, %v770, 0.0
      %814 = vadd.xlane.f32.xlu0 %v813
      %v815 = vpop.xlane.xlu0 %814
      %v816 = vsel %vm800, %v771, 0.0
      %817 = vadd.xlane.f32.xlu0 %v816
      %v818 = vpop.xlane.xlu0 %817
      %v819 = vsel %vm800, %v772, 0.0
      %820 = vadd.xlane.f32.xlu0 %v819
      %v821 = vpop.xlane.xlu0 %820
      %v822 = vsel %vm800, %v773, 0.0
      %823 = vadd.xlane.f32.xlu0 %v822
      %v824 = vpop.xlane.xlu0 %823
      %v825 = vsel %vm800, %v774, 0.0
      %826 = vadd.xlane.f32.xlu0 %v825
      %v827 = vpop.xlane.xlu0 %826
      %v828 = vsel %vm800, %v775, 0.0
      %829 = vadd.xlane.f32.xlu0 %v828
      %v830 = vpop.xlane.xlu0 %829
      %v831 = vsel %vm800, %v776, 0.0
      %832 = vadd.xlane.f32.xlu0 %v831
      %v833 = vpop.xlane.xlu0 %832
      %v834 = vsel %vm800, %v777, 0.0
      %835 = vadd.xlane.f32.xlu0 %v834
      %v836 = vpop.xlane.xlu0 %835
      %v837 = vsel %vm800, %v778, 0.0
      %838 = vadd.xlane.f32.xlu0 %v837
      %v839 = vpop.xlane.xlu0 %838
      %v840 = vsel %vm800, %v779, 0.0
      %841 = vadd.xlane.f32.xlu0 %v840
      %v842 = vpop.xlane.xlu0 %841
      %v843 = vsel %vm800, %v780, 0.0
      %844 = vadd.xlane.f32.xlu0 %v843
      %v845 = vpop.xlane.xlu0 %844
      %v846 = vsel %vm800, %v781, 0.0
      %847 = vadd.xlane.f32.xlu0 %v846
      %v848 = vpop.xlane.xlu0 %847
      %v849 = vsel %vm800, %v782, 0.0
      %850 = vadd.xlane.f32.xlu0 %v849
      %v851 = vpop.xlane.xlu0 %850
      %v852 = vsel %vm800, %v783, 0.0
      %853 = vadd.xlane.f32.xlu0 %v852
      %v854 = vpop.xlane.xlu0 %853
      %v855 = vsel %vm800, %v784, 0.0
      %856 = vadd.xlane.f32.xlu0 %v855
      %v857 = vpop.xlane.xlu0 %856
      %v858 = vsel %vm800, %v785, 0.0
      %859 = vadd.xlane.f32.xlu0 %v858
      %v860 = vpop.xlane.xlu0 %859
      %v861 = vsel %vm800, %v786, 0.0
      %862 = vadd.xlane.f32.xlu0 %v861
      %v863 = vpop.xlane.xlu0 %862
      %v864 = vsel %vm800, %v787, 0.0
      %865 = vadd.xlane.f32.xlu0 %v864
      %v866 = vpop.xlane.xlu0 %865
      %v867 = vsel %vm800, %v788, 0.0
      %868 = vadd.xlane.f32.xlu0 %v867
      %v869 = vpop.xlane.xlu0 %868
      %v870 = vsel %vm800, %v789, 0.0
      %871 = vadd.xlane.f32.xlu0 %v870
      %v872 = vpop.xlane.xlu0 %871
      %v873 = vsel %vm800, %v790, 0.0
      %874 = vadd.xlane.f32.xlu0 %v873
      %v875 = vpop.xlane.xlu0 %874
      %v876 = vsel %vm800, %v791, 0.0
      %877 = vadd.xlane.f32.xlu0 %v876
      %v878 = vpop.xlane.xlu0 %877
      %v879 = vsel %vm800, %v792, 0.0
      %880 = vadd.xlane.f32.xlu0 %v879
      %v881 = vpop.xlane.xlu0 %880
      %v882 = vsel %vm800, %v793, 0.0
      %883 = vadd.xlane.f32.xlu0 %v882
      %v884 = vpop.xlane.xlu0 %883
      %v885 = vsel %vm800, %v794, 0.0
      %886 = vadd.xlane.f32.xlu0 %v885
      %v887 = vpop.xlane.xlu0 %886
      %v888 = vsel %vm800, %v795, 0.0
      %889 = vadd.xlane.f32.xlu0 %v888
      %v890 = vpop.xlane.xlu0 %889
      %v891 = vsel %vm800, %v796, 0.0
      %892 = vadd.xlane.f32.xlu0 %v891
      %v893 = vpop.xlane.xlu0 %892
      %v894 = vsel %vm800, %v797, 0.0
      %895 = vadd.xlane.f32.xlu0 %v894
      %v896 = vpop.xlane.xlu0 %895
      %v897 = vrcp.pop 32.0
      %v898 = vmul.f32 32.0, %v897
      %v899 = vsub.f32 1.0, %v898
      %v900 = vmul.f32 %v897, %v899
      %v901 = vadd.f32 %v897, %v900
      %vm902 = vweird.f32 %v897
      %v903 = vsel %vm902, %v897, %v901
      %v904 = vmul.f32 %v803, %v903
      %v905 = vmul.f32 %v806, %v903
      %v906 = vmul.f32 %v809, %v903
      %v907 = vmul.f32 %v812, %v903
      %v908 = vmul.f32 %v815, %v903
      %v909 = vmul.f32 %v818, %v903
      %v910 = vmul.f32 %v821, %v903
      %v911 = vmul.f32 %v824, %v903
      %v912 = vmul.f32 %v827, %v903
      %v913 = vmul.f32 %v830, %v903
      %v914 = vmul.f32 %v833, %v903
      %v915 = vmul.f32 %v836, %v903
      %v916 = vmul.f32 %v839, %v903
      %v917 = vmul.f32 %v842, %v903
      %v918 = vmul.f32 %v845, %v903
      %v919 = vmul.f32 %v848, %v903
      %v920 = vmul.f32 %v851, %v903
      %v921 = vmul.f32 %v854, %v903
      %v922 = vmul.f32 %v857, %v903
      %v923 = vmul.f32 %v860, %v903
      %v924 = vmul.f32 %v863, %v903
      %v925 = vmul.f32 %v866, %v903
      %v926 = vmul.f32 %v869, %v903
      %v927 = vmul.f32 %v872, %v903
      %v928 = vmul.f32 %v875, %v903
      %v929 = vmul.f32 %v878, %v903
      %v930 = vmul.f32 %v881, %v903
      %v931 = vmul.f32 %v884, %v903
      %v932 = vmul.f32 %v887, %v903
      %v933 = vmul.f32 %v890, %v903
      %v934 = vmul.f32 %v893, %v903
      %v935 = vmul.f32 %v896, %v903
      %v936 = vsub.f32 %v766, %v904
      %v937 = vsub.f32 %v767, %v905
      %v938 = vsub.f32 %v768, %v906
      %v939 = vsub.f32 %v769, %v907
      %v940 = vsub.f32 %v770, %v908
      %v941 = vsub.f32 %v771, %v909
      %v942 = vsub.f32 %v772, %v910
      %v943 = vsub.f32 %v773, %v911
      %v944 = vsub.f32 %v774, %v912
      %v945 = vsub.f32 %v775, %v913
      %v946 = vsub.f32 %v776, %v914
      %v947 = vsub.f32 %v777, %v915
      %v948 = vsub.f32 %v778, %v916
      %v949 = vsub.f32 %v779, %v917
      %v950 = vsub.f32 %v780, %v918
      %v951 = vsub.f32 %v781, %v919
      %v952 = vsub.f32 %v782, %v920
      %v953 = vsub.f32 %v783, %v921
      %v954 = vsub.f32 %v784, %v922
      %v955 = vsub.f32 %v785, %v923
      %v956 = vsub.f32 %v786, %v924
      %v957 = vsub.f32 %v787, %v925
      %v958 = vsub.f32 %v788, %v926
      %v959 = vsub.f32 %v789, %v927
      %v960 = vsub.f32 %v790, %v928
      %v961 = vsub.f32 %v791, %v929
      %v962 = vsub.f32 %v792, %v930
      %v963 = vsub.f32 %v793, %v931
      %v964 = vsub.f32 %v794, %v932
      %v965 = vsub.f32 %v795, %v933
      %v966 = vsub.f32 %v796, %v934
      %v967 = vsub.f32 %v797, %v935
      %v968 = vmul.f32 %v936, %v936
      %v969 = vmul.f32 %v937, %v937
      %v970 = vmul.f32 %v938, %v938
      %v971 = vmul.f32 %v939, %v939
      %v972 = vmul.f32 %v940, %v940
      %v973 = vmul.f32 %v941, %v941
      %v974 = vmul.f32 %v942, %v942
      %v975 = vmul.f32 %v943, %v943
      %v976 = vmul.f32 %v944, %v944
      %v977 = vmul.f32 %v945, %v945
      %v978 = vmul.f32 %v946, %v946
      %v979 = vmul.f32 %v947, %v947
      %v980 = vmul.f32 %v948, %v948
      %v981 = vmul.f32 %v949, %v949
      %v982 = vmul.f32 %v950, %v950
      %v983 = vmul.f32 %v951, %v951
      %v984 = vmul.f32 %v952, %v952
      %v985 = vmul.f32 %v953, %v953
      %v986 = vmul.f32 %v954, %v954
      %v987 = vmul.f32 %v955, %v955
      %v988 = vmul.f32 %v956, %v956
      %v989 = vmul.f32 %v957, %v957
      %v990 = vmul.f32 %v958, %v958
      %v991 = vmul.f32 %v959, %v959
      %v992 = vmul.f32 %v960, %v960
      %v993 = vmul.f32 %v961, %v961
      %v994 = vmul.f32 %v962, %v962
      %v995 = vmul.f32 %v963, %v963
      %v996 = vmul.f32 %v964, %v964
      %v997 = vmul.f32 %v965, %v965
      %v998 = vmul.f32 %v966, %v966
      %v999 = vmul.f32 %v967, %v967
      %v1000 = vsel %vm800, %v968, 0.0
      %1001 = vadd.xlane.f32.xlu0 %v1000
      %v1002 = vpop.xlane.xlu0 %1001
      %v1003 = vsel %vm800, %v969, 0.0
      %1004 = vadd.xlane.f32.xlu0 %v1003
      %v1005 = vpop.xlane.xlu0 %1004
      %v1006 = vsel %vm800, %v970, 0.0
      %1007 = vadd.xlane.f32.xlu0 %v1006
      %v1008 = vpop.xlane.xlu0 %1007
      %v1009 = vsel %vm800, %v971, 0.0
      %1010 = vadd.xlane.f32.xlu0 %v1009
      %v1011 = vpop.xlane.xlu0 %1010
      %v1012 = vsel %vm800, %v972, 0.0
      %1013 = vadd.xlane.f32.xlu0 %v1012
      %v1014 = vpop.xlane.xlu0 %1013
      %v1015 = vsel %vm800, %v973, 0.0
      %1016 = vadd.xlane.f32.xlu0 %v1015
      %v1017 = vpop.xlane.xlu0 %1016
      %v1018 = vsel %vm800, %v974, 0.0
      %1019 = vadd.xlane.f32.xlu0 %v1018
      %v1020 = vpop.xlane.xlu0 %1019
      %v1021 = vsel %vm800, %v975, 0.0
      %1022 = vadd.xlane.f32.xlu0 %v1021
      %v1023 = vpop.xlane.xlu0 %1022
      %v1024 = vsel %vm800, %v976, 0.0
      %1025 = vadd.xlane.f32.xlu0 %v1024
      %v1026 = vpop.xlane.xlu0 %1025
      %v1027 = vsel %vm800, %v977, 0.0
      %1028 = vadd.xlane.f32.xlu0 %v1027
      %v1029 = vpop.xlane.xlu0 %1028
      %v1030 = vsel %vm800, %v978, 0.0
      %1031 = vadd.xlane.f32.xlu0 %v1030
      %v1032 = vpop.xlane.xlu0 %1031
      %v1033 = vsel %vm800, %v979, 0.0
      %1034 = vadd.xlane.f32.xlu0 %v1033
      %v1035 = vpop.xlane.xlu0 %1034
      %v1036 = vsel %vm800, %v980, 0.0
      %1037 = vadd.xlane.f32.xlu0 %v1036
      %v1038 = vpop.xlane.xlu0 %1037
      %v1039 = vsel %vm800, %v981, 0.0
      %1040 = vadd.xlane.f32.xlu0 %v1039
      %v1041 = vpop.xlane.xlu0 %1040
      %v1042 = vsel %vm800, %v982, 0.0
      %1043 = vadd.xlane.f32.xlu0 %v1042
      %v1044 = vpop.xlane.xlu0 %1043
      %v1045 = vsel %vm800, %v983, 0.0
      %1046 = vadd.xlane.f32.xlu0 %v1045
      %v1047 = vpop.xlane.xlu0 %1046
      %v1048 = vsel %vm800, %v984, 0.0
      %1049 = vadd.xlane.f32.xlu0 %v1048
      %v1050 = vpop.xlane.xlu0 %1049
      %v1051 = vsel %vm800, %v985, 0.0
      %1052 = vadd.xlane.f32.xlu0 %v1051
      %v1053 = vpop.xlane.xlu0 %1052
      %v1054 = vsel %vm800, %v986, 0.0
      %1055 = vadd.xlane.f32.xlu0 %v1054
      %v1056 = vpop.xlane.xlu0 %1055
      %v1057 = vsel %vm800, %v987, 0.0
      %1058 = vadd.xlane.f32.xlu0 %v1057
      %v1059 = vpop.xlane.xlu0 %1058
      %v1060 = vsel %vm800, %v988, 0.0
      %1061 = vadd.xlane.f32.xlu0 %v1060
      %v1062 = vpop.xlane.xlu0 %1061
      %v1063 = vsel %vm800, %v989, 0.0
      %1064 = vadd.xlane.f32.xlu0 %v1063
      %v1065 = vpop.xlane.xlu0 %1064
      %v1066 = vsel %vm800, %v990, 0.0
      %1067 = vadd.xlane.f32.xlu0 %v1066
      %v1068 = vpop.xlane.xlu0 %1067
      %v1069 = vsel %vm800, %v991, 0.0
      %1070 = vadd.xlane.f32.xlu0 %v1069
      %v1071 = vpop.xlane.xlu0 %1070
      %v1072 = vsel %vm800, %v992, 0.0
      %1073 = vadd.xlane.f32.xlu0 %v1072
      %v1074 = vpop.xlane.xlu0 %1073
      %v1075 = vsel %vm800, %v993, 0.0
      %1076 = vadd.xlane.f32.xlu0 %v1075
      %v1077 = vpop.xlane.xlu0 %1076
      %v1078 = vsel %vm800, %v994, 0.0
      %1079 = vadd.xlane.f32.xlu0 %v1078
      %v1080 = vpop.xlane.xlu0 %1079
      %v1081 = vsel %vm800, %v995, 0.0
      %1082 = vadd.xlane.f32.xlu0 %v1081
      %v1083 = vpop.xlane.xlu0 %1082
      %v1084 = vsel %vm800, %v996, 0.0
      %1085 = vadd.xlane.f32.xlu0 %v1084
      %v1086 = vpop.xlane.xlu0 %1085
      %v1087 = vsel %vm800, %v997, 0.0
      %1088 = vadd.xlane.f32.xlu0 %v1087
      %v1089 = vpop.xlane.xlu0 %1088
      %v1090 = vsel %vm800, %v998, 0.0
      %1091 = vadd.xlane.f32.xlu0 %v1090
      %v1092 = vpop.xlane.xlu0 %1091
      %v1093 = vsel %vm800, %v999, 0.0
      %1094 = vadd.xlane.f32.xlu0 %v1093
      %v1095 = vpop.xlane.xlu0 %1094
      %v1096 = vmul.f32 %v1002, %v903
      %v1097 = vmul.f32 %v1005, %v903
      %v1098 = vmul.f32 %v1008, %v903
      %v1099 = vmul.f32 %v1011, %v903
      %v1100 = vmul.f32 %v1014, %v903
      %v1101 = vmul.f32 %v1017, %v903
      %v1102 = vmul.f32 %v1020, %v903
      %v1103 = vmul.f32 %v1023, %v903
      %v1104 = vmul.f32 %v1026, %v903
      %v1105 = vmul.f32 %v1029, %v903
      %v1106 = vmul.f32 %v1032, %v903
      %v1107 = vmul.f32 %v1035, %v903
      %v1108 = vmul.f32 %v1038, %v903
      %v1109 = vmul.f32 %v1041, %v903
      %v1110 = vmul.f32 %v1044, %v903
      %v1111 = vmul.f32 %v1047, %v903
      %v1112 = vmul.f32 %v1050, %v903
      %v1113 = vmul.f32 %v1053, %v903
      %v1114 = vmul.f32 %v1056, %v903
      %v1115 = vmul.f32 %v1059, %v903
      %v1116 = vmul.f32 %v1062, %v903
      %v1117 = vmul.f32 %v1065, %v903
      %v1118 = vmul.f32 %v1068, %v903
      %v1119 = vmul.f32 %v1071, %v903
      %v1120 = vmul.f32 %v1074, %v903
      %v1121 = vmul.f32 %v1077, %v903
      %v1122 = vmul.f32 %v1080, %v903
      %v1123 = vmul.f32 %v1083, %v903
      %v1124 = vmul.f32 %v1086, %v903
      %v1125 = vmul.f32 %v1089, %v903
      %v1126 = vmul.f32 %v1092, %v903
      %v1127 = vmul.f32 %v1095, %v903
      %v1128 = vadd.f32 %v1096, 1e-05
      %v1129 = vadd.f32 %v1097, 1e-05
      %v1130 = vadd.f32 %v1098, 1e-05
      %v1131 = vadd.f32 %v1099, 1e-05
      %v1132 = vadd.f32 %v1100, 1e-05
      %v1133 = vadd.f32 %v1101, 1e-05
      %v1134 = vadd.f32 %v1102, 1e-05
      %v1135 = vadd.f32 %v1103, 1e-05
      %v1136 = vadd.f32 %v1104, 1e-05
      %v1137 = vadd.f32 %v1105, 1e-05
      %v1138 = vadd.f32 %v1106, 1e-05
      %v1139 = vadd.f32 %v1107, 1e-05
      %v1140 = vadd.f32 %v1108, 1e-05
      %v1141 = vadd.f32 %v1109, 1e-05
      %v1142 = vadd.f32 %v1110, 1e-05
      %v1143 = vadd.f32 %v1111, 1e-05
      %v1144 = vadd.f32 %v1112, 1e-05
      %v1145 = vadd.f32 %v1113, 1e-05
      %v1146 = vadd.f32 %v1114, 1e-05
      %v1147 = vadd.f32 %v1115, 1e-05
      %v1148 = vadd.f32 %v1116, 1e-05
      %v1149 = vadd.f32 %v1117, 1e-05
      %v1150 = vadd.f32 %v1118, 1e-05
      %v1151 = vadd.f32 %v1119, 1e-05
      %v1152 = vadd.f32 %v1120, 1e-05
      %v1153 = vadd.f32 %v1121, 1e-05
      %v1154 = vadd.f32 %v1122, 1e-05
      %v1155 = vadd.f32 %v1123, 1e-05
      %v1156 = vadd.f32 %v1124, 1e-05
      %v1157 = vadd.f32 %v1125, 1e-05
      %v1158 = vadd.f32 %v1126, 1e-05
      %v1159 = vadd.f32 %v1127, 1e-05
      %v1160 = vrsqrt.pop %v1128
      %v1161 = vmul.f32 %v1160, %v1128
      %v1162 = vmul.f32 %v1161, %v1160
      %v1163 = vmul.f32 0.5, %v1162
      %v1164 = vsub.f32 1.5, %v1163
      %v1165 = vmul.f32 %v1160, %v1164
      %vm1166 = vweird.f32 %v1128
      %vm1167 = vweird.f32 %v1160
      %vm1168 = vmor %vm1166, %vm1167
      %v1169 = vsel %vm1168, %v1160, %v1165
      %v1170 = vrsqrt.pop %v1129
      %v1171 = vmul.f32 %v1170, %v1129
      %v1172 = vmul.f32 %v1171, %v1170
      %v1173 = vmul.f32 0.5, %v1172
      %v1174 = vsub.f32 1.5, %v1173
      %v1175 = vmul.f32 %v1170, %v1174
      %vm1176 = vweird.f32 %v1129
      %vm1177 = vweird.f32 %v1170
      %vm1178 = vmor %vm1176, %vm1177
      %v1179 = vsel %vm1178, %v1170, %v1175
      %v1180 = vrsqrt.pop %v1130
      %v1181 = vmul.f32 %v1180, %v1130
      %v1182 = vmul.f32 %v1181, %v1180
      %v1183 = vmul.f32 0.5, %v1182
      %v1184 = vsub.f32 1.5, %v1183
      %v1185 = vmul.f32 %v1180, %v1184
      %vm1186 = vweird.f32 %v1130
      %vm1187 = vweird.f32 %v1180
      %vm1188 = vmor %vm1186, %vm1187
      %v1189 = vsel %vm1188, %v1180, %v1185
      %v1190 = vrsqrt.pop %v1131
      %v1191 = vmul.f32 %v1190, %v1131
      %v1192 = vmul.f32 %v1191, %v1190
      %v1193 = vmul.f32 0.5, %v1192
      %v1194 = vsub.f32 1.5, %v1193
      %v1195 = vmul.f32 %v1190, %v1194
      %vm1196 = vweird.f32 %v1131
      %vm1197 = vweird.f32 %v1190
      %vm1198 = vmor %vm1196, %vm1197
      %v1199 = vsel %vm1198, %v1190, %v1195
      %v1200 = vrsqrt.pop %v1132
      %v1201 = vmul.f32 %v1200, %v1132
      %v1202 = vmul.f32 %v1201, %v1200
      %v1203 = vmul.f32 0.5, %v1202
      %v1204 = vsub.f32 1.5, %v1203
      %v1205 = vmul.f32 %v1200, %v1204
      %vm1206 = vweird.f32 %v1132
      %vm1207 = vweird.f32 %v1200
      %vm1208 = vmor %vm1206, %vm1207
      %v1209 = vsel %vm1208, %v1200, %v1205
      %v1210 = vrsqrt.pop %v1133
      %v1211 = vmul.f32 %v1210, %v1133
      %v1212 = vmul.f32 %v1211, %v1210
      %v1213 = vmul.f32 0.5, %v1212
      %v1214 = vsub.f32 1.5, %v1213
      %v1215 = vmul.f32 %v1210, %v1214
      %vm1216 = vweird.f32 %v1133
      %vm1217 = vweird.f32 %v1210
      %vm1218 = vmor %vm1216, %vm1217
      %v1219 = vsel %vm1218, %v1210, %v1215
      %v1220 = vrsqrt.pop %v1134
      %v1221 = vmul.f32 %v1220, %v1134
      %v1222 = vmul.f32 %v1221, %v1220
      %v1223 = vmul.f32 0.5, %v1222
      %v1224 = vsub.f32 1.5, %v1223
      %v1225 = vmul.f32 %v1220, %v1224
      %vm1226 = vweird.f32 %v1134
      %vm1227 = vweird.f32 %v1220
      %vm1228 = vmor %vm1226, %vm1227
      %v1229 = vsel %vm1228, %v1220, %v1225
      %v1230 = vrsqrt.pop %v1135
      %v1231 = vmul.f32 %v1230, %v1135
      %v1232 = vmul.f32 %v1231, %v1230
      %v1233 = vmul.f32 0.5, %v1232
      %v1234 = vsub.f32 1.5, %v1233
      %v1235 = vmul.f32 %v1230, %v1234
      %vm1236 = vweird.f32 %v1135
      %vm1237 = vweird.f32 %v1230
      %vm1238 = vmor %vm1236, %vm1237
      %v1239 = vsel %vm1238, %v1230, %v1235
      %v1240 = vrsqrt.pop %v1136
      %v1241 = vmul.f32 %v1240, %v1136
      %v1242 = vmul.f32 %v1241, %v1240
      %v1243 = vmul.f32 0.5, %v1242
      %v1244 = vsub.f32 1.5, %v1243
      %v1245 = vmul.f32 %v1240, %v1244
      %vm1246 = vweird.f32 %v1136
      %vm1247 = vweird.f32 %v1240
      %vm1248 = vmor %vm1246, %vm1247
      %v1249 = vsel %vm1248, %v1240, %v1245
      %v1250 = vrsqrt.pop %v1137
      %v1251 = vmul.f32 %v1250, %v1137
      %v1252 = vmul.f32 %v1251, %v1250
      %v1253 = vmul.f32 0.5, %v1252
      %v1254 = vsub.f32 1.5, %v1253
      %v1255 = vmul.f32 %v1250, %v1254
      %vm1256 = vweird.f32 %v1137
      %vm1257 = vweird.f32 %v1250
      %vm1258 = vmor %vm1256, %vm1257
      %v1259 = vsel %vm1258, %v1250, %v1255
      %v1260 = vrsqrt.pop %v1138
      %v1261 = vmul.f32 %v1260, %v1138
      %v1262 = vmul.f32 %v1261, %v1260
      %v1263 = vmul.f32 0.5, %v1262
      %v1264 = vsub.f32 1.5, %v1263
      %v1265 = vmul.f32 %v1260, %v1264
      %vm1266 = vweird.f32 %v1138
      %vm1267 = vweird.f32 %v1260
      %vm1268 = vmor %vm1266, %vm1267
      %v1269 = vsel %vm1268, %v1260, %v1265
      %v1270 = vrsqrt.pop %v1139
      %v1271 = vmul.f32 %v1270, %v1139
      %v1272 = vmul.f32 %v1271, %v1270
      %v1273 = vmul.f32 0.5, %v1272
      %v1274 = vsub.f32 1.5, %v1273
      %v1275 = vmul.f32 %v1270, %v1274
      %vm1276 = vweird.f32 %v1139
      %vm1277 = vweird.f32 %v1270
      %vm1278 = vmor %vm1276, %vm1277
      %v1279 = vsel %vm1278, %v1270, %v1275
      %v1280 = vrsqrt.pop %v1140
      %v1281 = vmul.f32 %v1280, %v1140
      %v1282 = vmul.f32 %v1281, %v1280
      %v1283 = vmul.f32 0.5, %v1282
      %v1284 = vsub.f32 1.5, %v1283
      %v1285 = vmul.f32 %v1280, %v1284
      %vm1286 = vweird.f32 %v1140
      %vm1287 = vweird.f32 %v1280
      %vm1288 = vmor %vm1286, %vm1287
      %v1289 = vsel %vm1288, %v1280, %v1285
      %v1290 = vrsqrt.pop %v1141
      %v1291 = vmul.f32 %v1290, %v1141
      %v1292 = vmul.f32 %v1291, %v1290
      %v1293 = vmul.f32 0.5, %v1292
      %v1294 = vsub.f32 1.5, %v1293
      %v1295 = vmul.f32 %v1290, %v1294
      %vm1296 = vweird.f32 %v1141
      %vm1297 = vweird.f32 %v1290
      %vm1298 = vmor %vm1296, %vm1297
      %v1299 = vsel %vm1298, %v1290, %v1295
      %v1300 = vrsqrt.pop %v1142
      %v1301 = vmul.f32 %v1300, %v1142
      %v1302 = vmul.f32 %v1301, %v1300
      %v1303 = vmul.f32 0.5, %v1302
      %v1304 = vsub.f32 1.5, %v1303
      %v1305 = vmul.f32 %v1300, %v1304
      %vm1306 = vweird.f32 %v1142
      %vm1307 = vweird.f32 %v1300
      %vm1308 = vmor %vm1306, %vm1307
      %v1309 = vsel %vm1308, %v1300, %v1305
      %v1310 = vrsqrt.pop %v1143
      %v1311 = vmul.f32 %v1310, %v1143
      %v1312 = vmul.f32 %v1311, %v1310
      %v1313 = vmul.f32 0.5, %v1312
      %v1314 = vsub.f32 1.5, %v1313
      %v1315 = vmul.f32 %v1310, %v1314
      %vm1316 = vweird.f32 %v1143
      %vm1317 = vweird.f32 %v1310
      %vm1318 = vmor %vm1316, %vm1317
      %v1319 = vsel %vm1318, %v1310, %v1315
      %v1320 = vrsqrt.pop %v1144
      %v1321 = vmul.f32 %v1320, %v1144
      %v1322 = vmul.f32 %v1321, %v1320
      %v1323 = vmul.f32 0.5, %v1322
      %v1324 = vsub.f32 1.5, %v1323
      %v1325 = vmul.f32 %v1320, %v1324
      %vm1326 = vweird.f32 %v1144
      %vm1327 = vweird.f32 %v1320
      %vm1328 = vmor %vm1326, %vm1327
      %v1329 = vsel %vm1328, %v1320, %v1325
      %v1330 = vrsqrt.pop %v1145
      %v1331 = vmul.f32 %v1330, %v1145
      %v1332 = vmul.f32 %v1331, %v1330
      %v1333 = vmul.f32 0.5, %v1332
      %v1334 = vsub.f32 1.5, %v1333
      %v1335 = vmul.f32 %v1330, %v1334
      %vm1336 = vweird.f32 %v1145
      %vm1337 = vweird.f32 %v1330
      %vm1338 = vmor %vm1336, %vm1337
      %v1339 = vsel %vm1338, %v1330, %v1335
      %v1340 = vrsqrt.pop %v1146
      %v1341 = vmul.f32 %v1340, %v1146
      %v1342 = vmul.f32 %v1341, %v1340
      %v1343 = vmul.f32 0.5, %v1342
      %v1344 = vsub.f32 1.5, %v1343
      %v1345 = vmul.f32 %v1340, %v1344
      %vm1346 = vweird.f32 %v1146
      %vm1347 = vweird.f32 %v1340
      %vm1348 = vmor %vm1346, %vm1347
      %v1349 = vsel %vm1348, %v1340, %v1345
      %v1350 = vrsqrt.pop %v1147
      %v1351 = vmul.f32 %v1350, %v1147
      %v1352 = vmul.f32 %v1351, %v1350
      %v1353 = vmul.f32 0.5, %v1352
      %v1354 = vsub.f32 1.5, %v1353
      %v1355 = vmul.f32 %v1350, %v1354
      %vm1356 = vweird.f32 %v1147
      %vm1357 = vweird.f32 %v1350
      %vm1358 = vmor %vm1356, %vm1357
      %v1359 = vsel %vm1358, %v1350, %v1355
      %v1360 = vrsqrt.pop %v1148
      %v1361 = vmul.f32 %v1360, %v1148
      %v1362 = vmul.f32 %v1361, %v1360
      %v1363 = vmul.f32 0.5, %v1362
      %v1364 = vsub.f32 1.5, %v1363
      %v1365 = vmul.f32 %v1360, %v1364
      %vm1366 = vweird.f32 %v1148
      %vm1367 = vweird.f32 %v1360
      %vm1368 = vmor %vm1366, %vm1367
      %v1369 = vsel %vm1368, %v1360, %v1365
      %v1370 = vrsqrt.pop %v1149
      %v1371 = vmul.f32 %v1370, %v1149
      %v1372 = vmul.f32 %v1371, %v1370
      %v1373 = vmul.f32 0.5, %v1372
      %v1374 = vsub.f32 1.5, %v1373
      %v1375 = vmul.f32 %v1370, %v1374
      %vm1376 = vweird.f32 %v1149
      %vm1377 = vweird.f32 %v1370
      %vm1378 = vmor %vm1376, %vm1377
      %v1379 = vsel %vm1378, %v1370, %v1375
      %v1380 = vrsqrt.pop %v1150
      %v1381 = vmul.f32 %v1380, %v1150
      %v1382 = vmul.f32 %v1381, %v1380
      %v1383 = vmul.f32 0.5, %v1382
      %v1384 = vsub.f32 1.5, %v1383
      %v1385 = vmul.f32 %v1380, %v1384
      %vm1386 = vweird.f32 %v1150
      %vm1387 = vweird.f32 %v1380
      %vm1388 = vmor %vm1386, %vm1387
      %v1389 = vsel %vm1388, %v1380, %v1385
      %v1390 = vrsqrt.pop %v1151
      %v1391 = vmul.f32 %v1390, %v1151
      %v1392 = vmul.f32 %v1391, %v1390
      %v1393 = vmul.f32 0.5, %v1392
      %v1394 = vsub.f32 1.5, %v1393
      %v1395 = vmul.f32 %v1390, %v1394
      %vm1396 = vweird.f32 %v1151
      %vm1397 = vweird.f32 %v1390
      %vm1398 = vmor %vm1396, %vm1397
      %v1399 = vsel %vm1398, %v1390, %v1395
      %v1400 = vrsqrt.pop %v1152
      %v1401 = vmul.f32 %v1400, %v1152
      %v1402 = vmul.f32 %v1401, %v1400
      %v1403 = vmul.f32 0.5, %v1402
      %v1404 = vsub.f32 1.5, %v1403
      %v1405 = vmul.f32 %v1400, %v1404
      %vm1406 = vweird.f32 %v1152
      %vm1407 = vweird.f32 %v1400
      %vm1408 = vmor %vm1406, %vm1407
      %v1409 = vsel %vm1408, %v1400, %v1405
      %v1410 = vrsqrt.pop %v1153
      %v1411 = vmul.f32 %v1410, %v1153
      %v1412 = vmul.f32 %v1411, %v1410
      %v1413 = vmul.f32 0.5, %v1412
      %v1414 = vsub.f32 1.5, %v1413
      %v1415 = vmul.f32 %v1410, %v1414
      %vm1416 = vweird.f32 %v1153
      %vm1417 = vweird.f32 %v1410
      %vm1418 = vmor %vm1416, %vm1417
      %v1419 = vsel %vm1418, %v1410, %v1415
      %v1420 = vrsqrt.pop %v1154
      %v1421 = vmul.f32 %v1420, %v1154
      %v1422 = vmul.f32 %v1421, %v1420
      %v1423 = vmul.f32 0.5, %v1422
      %v1424 = vsub.f32 1.5, %v1423
      %v1425 = vmul.f32 %v1420, %v1424
      %vm1426 = vweird.f32 %v1154
      %vm1427 = vweird.f32 %v1420
      %vm1428 = vmor %vm1426, %vm1427
      %v1429 = vsel %vm1428, %v1420, %v1425
      %v1430 = vrsqrt.pop %v1155
      %v1431 = vmul.f32 %v1430, %v1155
      %v1432 = vmul.f32 %v1431, %v1430
      %v1433 = vmul.f32 0.5, %v1432
      %v1434 = vsub.f32 1.5, %v1433
      %v1435 = vmul.f32 %v1430, %v1434
      %vm1436 = vweird.f32 %v1155
      %vm1437 = vweird.f32 %v1430
      %vm1438 = vmor %vm1436, %vm1437
      %v1439 = vsel %vm1438, %v1430, %v1435
      %v1440 = vrsqrt.pop %v1156
      %v1441 = vmul.f32 %v1440, %v1156
      %v1442 = vmul.f32 %v1441, %v1440
      %v1443 = vmul.f32 0.5, %v1442
      %v1444 = vsub.f32 1.5, %v1443
      %v1445 = vmul.f32 %v1440, %v1444
      %vm1446 = vweird.f32 %v1156
      %vm1447 = vweird.f32 %v1440
      %vm1448 = vmor %vm1446, %vm1447
      %v1449 = vsel %vm1448, %v1440, %v1445
      %v1450 = vrsqrt.pop %v1157
      %v1451 = vmul.f32 %v1450, %v1157
      %v1452 = vmul.f32 %v1451, %v1450
      %v1453 = vmul.f32 0.5, %v1452
      %v1454 = vsub.f32 1.5, %v1453
      %v1455 = vmul.f32 %v1450, %v1454
      %vm1456 = vweird.f32 %v1157
      %vm1457 = vweird.f32 %v1450
      %vm1458 = vmor %vm1456, %vm1457
      %v1459 = vsel %vm1458, %v1450, %v1455
      %v1460 = vrsqrt.pop %v1158
      %v1461 = vmul.f32 %v1460, %v1158
      %v1462 = vmul.f32 %v1461, %v1460
      %v1463 = vmul.f32 0.5, %v1462
      %v1464 = vsub.f32 1.5, %v1463
      %v1465 = vmul.f32 %v1460, %v1464
      %vm1466 = vweird.f32 %v1158
      %vm1467 = vweird.f32 %v1460
      %vm1468 = vmor %vm1466, %vm1467
      %v1469 = vsel %vm1468, %v1460, %v1465
      %v1470 = vrsqrt.pop %v1159
      %v1471 = vmul.f32 %v1470, %v1159
      %v1472 = vmul.f32 %v1471, %v1470
      %v1473 = vmul.f32 0.5, %v1472
      %v1474 = vsub.f32 1.5, %v1473
      %v1475 = vmul.f32 %v1470, %v1474
      %vm1476 = vweird.f32 %v1159
      %vm1477 = vweird.f32 %v1470
      %vm1478 = vmor %vm1476, %vm1477
      %v1479 = vsel %vm1478, %v1470, %v1475
      %v1480 = vmul.f32 %v936, %v1169
      %v1481 = vmul.f32 %v937, %v1179
      %v1482 = vmul.f32 %v938, %v1189
      %v1483 = vmul.f32 %v939, %v1199
      %v1484 = vmul.f32 %v940, %v1209
      %v1485 = vmul.f32 %v941, %v1219
      %v1486 = vmul.f32 %v942, %v1229
      %v1487 = vmul.f32 %v943, %v1239
      %v1488 = vmul.f32 %v944, %v1249
      %v1489 = vmul.f32 %v945, %v1259
      %v1490 = vmul.f32 %v946, %v1269
      %v1491 = vmul.f32 %v947, %v1279
      %v1492 = vmul.f32 %v948, %v1289
      %v1493 = vmul.f32 %v949, %v1299
      %v1494 = vmul.f32 %v950, %v1309
      %v1495 = vmul.f32 %v951, %v1319
      %v1496 = vmul.f32 %v952, %v1329
      %v1497 = vmul.f32 %v953, %v1339
      %v1498 = vmul.f32 %v954, %v1349
      %v1499 = vmul.f32 %v955, %v1359
      %v1500 = vmul.f32 %v956, %v1369
      %v1501 = vmul.f32 %v957, %v1379
      %v1502 = vmul.f32 %v958, %v1389
      %v1503 = vmul.f32 %v959, %v1399
      %v1504 = vmul.f32 %v960, %v1409
      %v1505 = vmul.f32 %v961, %v1419
      %v1506 = vmul.f32 %v962, %v1429
      %v1507 = vmul.f32 %v963, %v1439
      %v1508 = vmul.f32 %v964, %v1449
      %v1509 = vmul.f32 %v965, %v1459
      %v1510 = vmul.f32 %v966, %v1469
      %v1511 = vmul.f32 %v967, %v1479
      %v1513 = vperm.slane %v798, 0
      %v1515 = vmul.f32 %v1480, %v1513
      %v1516 = vmul.f32 %v1481, %v1513
      %v1517 = vmul.f32 %v1482, %v1513
      %v1518 = vmul.f32 %v1483, %v1513
      %v1519 = vmul.f32 %v1484, %v1513
      %v1520 = vmul.f32 %v1485, %v1513
      %v1521 = vmul.f32 %v1486, %v1513
      %v1522 = vmul.f32 %v1487, %v1513
      %v1523 = vmul.f32 %v1488, %v1513
      %v1524 = vmul.f32 %v1489, %v1513
      %v1525 = vmul.f32 %v1490, %v1513
      %v1526 = vmul.f32 %v1491, %v1513
      %v1527 = vmul.f32 %v1492, %v1513
      %v1528 = vmul.f32 %v1493, %v1513
      %v1529 = vmul.f32 %v1494, %v1513
      %v1530 = vmul.f32 %v1495, %v1513
      %v1531 = vmul.f32 %v1496, %v1513
      %v1532 = vmul.f32 %v1497, %v1513
      %v1533 = vmul.f32 %v1498, %v1513
      %v1534 = vmul.f32 %v1499, %v1513
      %v1535 = vmul.f32 %v1500, %v1513
      %v1536 = vmul.f32 %v1501, %v1513
      %v1537 = vmul.f32 %v1502, %v1513
      %v1538 = vmul.f32 %v1503, %v1513
      %v1539 = vmul.f32 %v1504, %v1513
      %v1540 = vmul.f32 %v1505, %v1513
      %v1541 = vmul.f32 %v1506, %v1513
      %v1542 = vmul.f32 %v1507, %v1513
      %v1543 = vmul.f32 %v1508, %v1513
      %v1544 = vmul.f32 %v1509, %v1513
      %v1545 = vmul.f32 %v1510, %v1513
      %v1546 = vmul.f32 %v1511, %v1513
      %v1548 = vperm.slane %v799, 0
      %v1550 = vadd.f32 %v1515, %v1548
      %v1551 = vadd.f32 %v1516, %v1548
      %v1552 = vadd.f32 %v1517, %v1548
      %v1553 = vadd.f32 %v1518, %v1548
      %v1554 = vadd.f32 %v1519, %v1548
      %v1555 = vadd.f32 %v1520, %v1548
      %v1556 = vadd.f32 %v1521, %v1548
      %v1557 = vadd.f32 %v1522, %v1548
      %v1558 = vadd.f32 %v1523, %v1548
      %v1559 = vadd.f32 %v1524, %v1548
      %v1560 = vadd.f32 %v1525, %v1548
      %v1561 = vadd.f32 %v1526, %v1548
      %v1562 = vadd.f32 %v1527, %v1548
      %v1563 = vadd.f32 %v1528, %v1548
      %v1564 = vadd.f32 %v1529, %v1548
      %v1565 = vadd.f32 %v1530, %v1548
      %v1566 = vadd.f32 %v1531, %v1548
      %v1567 = vadd.f32 %v1532, %v1548
      %v1568 = vadd.f32 %v1533, %v1548
      %v1569 = vadd.f32 %v1534, %v1548
      %v1570 = vadd.f32 %v1535, %v1548
      %v1571 = vadd.f32 %v1536, %v1548
      %v1572 = vadd.f32 %v1537, %v1548
      %v1573 = vadd.f32 %v1538, %v1548
      %v1574 = vadd.f32 %v1539, %v1548
      %v1575 = vadd.f32 %v1540, %v1548
      %v1576 = vadd.f32 %v1541, %v1548
      %v1577 = vadd.f32 %v1542, %v1548
      %v1578 = vadd.f32 %v1543, %v1548
      %v1579 = vadd.f32 %v1544, %v1548
      %v1580 = vadd.f32 %v1545, %v1548
      %v1581 = vadd.f32 %v1546, %v1548
      %v1582 = vpack.c.bf16 %v1551, %v1550
      %v1583 = vpack.c.bf16 %v1553, %v1552
      %v1584 = vpack.c.bf16 %v1555, %v1554
      %v1585 = vpack.c.bf16 %v1557, %v1556
      %v1586 = vpack.c.bf16 %v1559, %v1558
      %v1587 = vpack.c.bf16 %v1561, %v1560
      %v1588 = vpack.c.bf16 %v1563, %v1562
      %v1589 = vpack.c.bf16 %v1565, %v1564
      %v1590 = vpack.c.bf16 %v1567, %v1566
      %v1591 = vpack.c.bf16 %v1569, %v1568
      %v1592 = vpack.c.bf16 %v1571, %v1570
      %v1593 = vpack.c.bf16 %v1573, %v1572
      %v1594 = vpack.c.bf16 %v1575, %v1574
      %v1595 = vpack.c.bf16 %v1577, %v1576
      %v1596 = vpack.c.bf16 %v1579, %v1578
      %v1597 = vpack.c.bf16 %v1581, %v1580
      %v1598 = vld [vmem:[%s639] sm:$0xf]
      %v1599 = vld [vmem:[%s639 + $0x4] sm:$0xf]
      %v1600 = vld [vmem:[%s639 + $0x8] sm:$0xf]
      %v1601 = vld [vmem:[%s639 + $0xc] sm:$0xf]
      %v1602 = vld [vmem:[%s642] sm:$0x1]
      %v1604 = vperm.slane %v1602, 0
      %v1610 = vunpack.c.l.b16 %v1598
      %v1611 = vunpack.c.l.b16 %v1599
      %v1612 = vunpack.c.l.b16 %v1600
      %v1613 = vunpack.c.l.b16 %v1601
      %v1614 = vpack.c.b16 %v1611, %v1610
      %v1615 = vpack.c.b16 %v1613, %v1612
      %v1619 = vsel %vm800, %v1582, 0
      %v1622 = vsel %vm800, %v1583, 0
      %v1625 = vsel %vm800, %v1584, 0
      %v1628 = vsel %vm800, %v1585, 0
      %v1631 = vsel %vm800, %v1586, 0
      %v1634 = vsel %vm800, %v1587, 0
      %v1637 = vsel %vm800, %v1588, 0
      %v1640 = vsel %vm800, %v1589, 0
      %v1643 = vsel %vm800, %v1590, 0
      %v1646 = vsel %vm800, %v1591, 0
      %v1649 = vsel %vm800, %v1592, 0
      %v1652 = vsel %vm800, %v1593, 0
      %v1655 = vsel %vm800, %v1594, 0
      %v1658 = vsel %vm800, %v1595, 0
      %v1661 = vsel %vm800, %v1596, 0
      %v1664 = vsel %vm800, %v1597, 0
      %1666 = vmatpush.bf16.msra.mxu0 0
      %1667 = vmatpush.bf16.msra.mxu0 0
      %1668 = vmatpush.bf16.msra.mxu0 0
      %1669 = vmatpush.bf16.msra.mxu0 0
      %1670 = vmatpush.bf16.msra.mxu0 0
      %1671 = vmatpush.bf16.msra.mxu0 0
      %1672 = vmatpush.bf16.msra.mxu0 %v1615
      %1673 = vmatpush.bf16.msra.mxu0 %v1614
      %1674 = vmatmul.bf16.gmra.mxu0 %v1619
      %v1675 = vpop.f32.mrf.mxu0
      %v1676 = vadd.f32 %v1604, %v1675
      %v1677 = vpop.f32.mrf.mxu0
      %v1678 = vadd.f32 %v1604, %v1677
      %1679 = vmatmul.bf16.gmra.mxu0 %v1622
      %v1680 = vpop.f32.mrf.mxu0
      %v1681 = vadd.f32 %v1604, %v1680
      %v1682 = vpop.f32.mrf.mxu0
      %v1683 = vadd.f32 %v1604, %v1682
      %1684 = vmatmul.bf16.gmra.mxu0 %v1625
      %v1685 = vpop.f32.mrf.mxu0
      %v1686 = vadd.f32 %v1604, %v1685
      %v1687 = vpop.f32.mrf.mxu0
      %v1688 = vadd.f32 %v1604, %v1687
      %1689 = vmatmul.bf16.gmra.mxu0 %v1628
      %v1690 = vpop.f32.mrf.mxu0
      %v1691 = vadd.f32 %v1604, %v1690
      %v1692 = vpop.f32.mrf.mxu0
      %v1693 = vadd.f32 %v1604, %v1692
      %1694 = vmatmul.bf16.gmra.mxu0 %v1631
      %v1695 = vpop.f32.mrf.mxu0
      %v1696 = vadd.f32 %v1604, %v1695
      %v1697 = vpop.f32.mrf.mxu0
      %v1698 = vadd.f32 %v1604, %v1697
      %1699 = vmatmul.bf16.gmra.mxu0 %v1634
      %v1700 = vpop.f32.mrf.mxu0
      %v1701 = vadd.f32 %v1604, %v1700
      %v1702 = vpop.f32.mrf.mxu0
      %v1703 = vadd.f32 %v1604, %v1702
      %1704 = vmatmul.bf16.gmra.mxu0 %v1637
      %v1705 = vpop.f32.mrf.mxu0
      %v1706 = vadd.f32 %v1604, %v1705
      %v1707 = vpop.f32.mrf.mxu0
      %v1708 = vadd.f32 %v1604, %v1707
      %1709 = vmatmul.bf16.gmra.mxu0 %v1640
      %v1710 = vpop.f32.mrf.mxu0
      %v1711 = vadd.f32 %v1604, %v1710
      %v1712 = vpop.f32.mrf.mxu0
      %v1713 = vadd.f32 %v1604, %v1712
      %1714 = vmatmul.bf16.gmra.mxu0 %v1643
      %v1715 = vpop.f32.mrf.mxu0
      %v1716 = vadd.f32 %v1604, %v1715
      %v1717 = vpop.f32.mrf.mxu0
      %v1718 = vadd.f32 %v1604, %v1717
      %1719 = vmatmul.bf16.gmra.mxu0 %v1646
      %v1720 = vpop.f32.mrf.mxu0
      %v1721 = vadd.f32 %v1604, %v1720
      %v1722 = vpop.f32.mrf.mxu0
      %v1723 = vadd.f32 %v1604, %v1722
      %1724 = vmatmul.bf16.gmra.mxu0 %v1649
      %v1725 = vpop.f32.mrf.mxu0
      %v1726 = vadd.f32 %v1604, %v1725
      %v1727 = vpop.f32.mrf.mxu0
      %v1728 = vadd.f32 %v1604, %v1727
      %1729 = vmatmul.bf16.gmra.mxu0 %v1652
      %v1730 = vpop.f32.mrf.mxu0
      %v1731 = vadd.f32 %v1604, %v1730
      %v1732 = vpop.f32.mrf.mxu0
      %v1733 = vadd.f32 %v1604, %v1732
      %1734 = vmatmul.bf16.gmra.mxu0 %v1655
      %v1735 = vpop.f32.mrf.mxu0
      %v1736 = vadd.f32 %v1604, %v1735
      %v1737 = vpop.f32.mrf.mxu0
      %v1738 = vadd.f32 %v1604, %v1737
      %1739 = vmatmul.bf16.gmra.mxu0 %v1658
      %v1740 = vpop.f32.mrf.mxu0
      %v1741 = vadd.f32 %v1604, %v1740
      %v1742 = vpop.f32.mrf.mxu0
      %v1743 = vadd.f32 %v1604, %v1742
      %1744 = vmatmul.bf16.gmra.mxu0 %v1661
      %v1745 = vpop.f32.mrf.mxu0
      %v1746 = vadd.f32 %v1604, %v1745
      %v1747 = vpop.f32.mrf.mxu0
      %v1748 = vadd.f32 %v1604, %v1747
      %1749 = vmatmul.bf16.gmra.mxu0 %v1664
      %v1750 = vpop.f32.mrf.mxu0
      %v1751 = vadd.f32 %v1604, %v1750
      %v1752 = vpop.f32.mrf.mxu0
      %v1753 = vadd.f32 %v1604, %v1752
      %1754 = vdwg.mxu0
      %1771 = vrot.lane.b32.xlu0 %v1676, 96
      %v1772 = vpop.permute.xlu0 %1771
      %1773 = vrot.lane.b32.xlu0 %v1678, 96
      %v1774 = vpop.permute.xlu0 %1773
      %1775 = vrot.lane.b32.xlu0 %v1681, 96
      %v1776 = vpop.permute.xlu0 %1775
      %1777 = vrot.lane.b32.xlu0 %v1683, 96
      %v1778 = vpop.permute.xlu0 %1777
      %1779 = vrot.lane.b32.xlu0 %v1686, 96
      %v1780 = vpop.permute.xlu0 %1779
      %1781 = vrot.lane.b32.xlu0 %v1688, 96
      %v1782 = vpop.permute.xlu0 %1781
      %1783 = vrot.lane.b32.xlu0 %v1691, 96
      %v1784 = vpop.permute.xlu0 %1783
      %1785 = vrot.lane.b32.xlu0 %v1693, 96
      %v1786 = vpop.permute.xlu0 %1785
      %1787 = vrot.lane.b32.xlu0 %v1696, 96
      %v1788 = vpop.permute.xlu0 %1787
      %1789 = vrot.lane.b32.xlu0 %v1698, 96
      %v1790 = vpop.permute.xlu0 %1789
      %1791 = vrot.lane.b32.xlu0 %v1701, 96
      %v1792 = vpop.permute.xlu0 %1791
      %1793 = vrot.lane.b32.xlu0 %v1703, 96
      %v1794 = vpop.permute.xlu0 %1793
      %1795 = vrot.lane.b32.xlu0 %v1706, 96
      %v1796 = vpop.permute.xlu0 %1795
      %1797 = vrot.lane.b32.xlu0 %v1708, 96
      %v1798 = vpop.permute.xlu0 %1797
      %1799 = vrot.lane.b32.xlu0 %v1711, 96
      %v1800 = vpop.permute.xlu0 %1799
      %1801 = vrot.lane.b32.xlu0 %v1713, 96
      %v1802 = vpop.permute.xlu0 %1801
      %vm1803 = vcmask 64512
      %v1804 = vsel %vm1803, %v1676, 0
      %v1806 = vsel %vm1803, %v1678, 0
      %v1808 = vsel %vm1803, %v1681, 0
      %v1810 = vsel %vm1803, %v1683, 0
      %v1812 = vsel %vm1803, %v1686, 0
      %v1814 = vsel %vm1803, %v1688, 0
      %v1816 = vsel %vm1803, %v1691, 0
      %v1818 = vsel %vm1803, %v1693, 0
      %v1820 = vsel %vm1803, %v1696, 0
      %v1822 = vsel %vm1803, %v1698, 0
      %v1824 = vsel %vm1803, %v1701, 0
      %v1826 = vsel %vm1803, %v1703, 0
      %v1828 = vsel %vm1803, %v1706, 0
      %v1830 = vsel %vm1803, %v1708, 0
      %v1832 = vsel %vm1803, %v1711, 0
      %v1834 = vsel %vm1803, %v1713, 0
      %v1836 = vsel %vm1803, %v1772, 0
      %v1838 = vsel %vm1803, %v1774, 0
      %v1840 = vsel %vm1803, %v1776, 0
      %v1842 = vsel %vm1803, %v1778, 0
      %v1844 = vsel %vm1803, %v1780, 0
      %v1846 = vsel %vm1803, %v1782, 0
      %v1848 = vsel %vm1803, %v1784, 0
      %v1850 = vsel %vm1803, %v1786, 0
      %v1852 = vsel %vm1803, %v1788, 0
      %v1854 = vsel %vm1803, %v1790, 0
      %v1856 = vsel %vm1803, %v1792, 0
      %v1858 = vsel %vm1803, %v1794, 0
      %v1860 = vsel %vm1803, %v1796, 0
      %v1862 = vsel %vm1803, %v1798, 0
      %v1864 = vsel %vm1803, %v1800, 0
      %v1866 = vsel %vm1803, %v1802, 0
      %1868 = vmatpush.xpose.msra.mxu0 %v1866
      %1869 = vmatpush.xpose.msra.mxu0 %v1864
      %1870 = vmatpush.xpose.msra.mxu0 %v1862
      %1871 = vmatpush.xpose.msra.mxu0 %v1860
      %1872 = vmatpush.xpose.msra.mxu0 %v1858
      %1873 = vmatpush.xpose.msra.mxu0 %v1856
      %1874 = vmatpush.xpose.msra.mxu0 %v1854
      %1875 = vmatpush.xpose.msra.mxu0 %v1852
      %1876 = vmatpush.xpose.msra.mxu0 %v1850
      %1877 = vmatpush.xpose.msra.mxu0 %v1848
      %1878 = vmatpush.xpose.msra.mxu0 %v1846
      %1879 = vmatpush.xpose.msra.mxu0 %v1844
      %1880 = vmatpush.xpose.msra.mxu0 %v1842
      %1881 = vmatpush.xpose.msra.mxu0 %v1840
      %1882 = vmatpush.xpose.msra.mxu0 %v1838
      %1883 = vmatpush.xpose.msra.mxu0 %v1836
      %1884 = vmatmul.f32.gmra.mxu0 %v1804
      %v1885 = vpop.f32.mrf.mxu0
      %v1886 = vadd.f32 %v750, %v1885
      %1887 = vmatmul.f32.gmra.mxu0 %v1806
      %v1888 = vpop.f32.mrf.mxu0
      %v1889 = vadd.f32 %v751, %v1888
      %1890 = vmatmul.f32.gmra.mxu0 %v1808
      %v1891 = vpop.f32.mrf.mxu0
      %v1892 = vadd.f32 %v752, %v1891
      %1893 = vmatmul.f32.gmra.mxu0 %v1810
      %v1894 = vpop.f32.mrf.mxu0
      %v1895 = vadd.f32 %v753, %v1894
      %1896 = vmatmul.f32.gmra.mxu0 %v1812
      %v1897 = vpop.f32.mrf.mxu0
      %v1898 = vadd.f32 %v754, %v1897
      %1899 = vmatmul.f32.gmra.mxu0 %v1814
      %v1900 = vpop.f32.mrf.mxu0
      %v1901 = vadd.f32 %v755, %v1900
      %1902 = vmatmul.f32.gmra.mxu0 %v1816
      %v1903 = vpop.f32.mrf.mxu0
      %v1904 = vadd.f32 %v756, %v1903
      %1905 = vmatmul.f32.gmra.mxu0 %v1818
      %v1906 = vpop.f32.mrf.mxu0
      %v1907 = vadd.f32 %v757, %v1906
      %1908 = vmatmul.f32.gmra.mxu0 %v1820
      %v1909 = vpop.f32.mrf.mxu0
      %v1910 = vadd.f32 %v758, %v1909
      %1911 = vmatmul.f32.gmra.mxu0 %v1822
      %v1912 = vpop.f32.mrf.mxu0
      %v1913 = vadd.f32 %v759, %v1912
      %1914 = vmatmul.f32.gmra.mxu0 %v1824
      %v1915 = vpop.f32.mrf.mxu0
      %v1916 = vadd.f32 %v760, %v1915
      %1917 = vmatmul.f32.gmra.mxu0 %v1826
      %v1918 = vpop.f32.mrf.mxu0
      %v1919 = vadd.f32 %v761, %v1918
      %1920 = vmatmul.f32.gmra.mxu0 %v1828
      %v1921 = vpop.f32.mrf.mxu0
      %v1922 = vadd.f32 %v762, %v1921
      %1923 = vmatmul.f32.gmra.mxu0 %v1830
      %v1924 = vpop.f32.mrf.mxu0
      %v1925 = vadd.f32 %v763, %v1924
      %1926 = vmatmul.f32.gmra.mxu0 %v1832
      %v1927 = vpop.f32.mrf.mxu0
      %v1928 = vadd.f32 %v764, %v1927
      %1929 = vmatmul.f32.gmra.mxu0 %v1834
      %v1930 = vpop.f32.mrf.mxu0
      %v1931 = vadd.f32 %v765, %v1930
      %1932 = vdwg.mxu0
      %1949 = vrot.lane.b32.xlu0 %v1716, 96
      %v1950 = vpop.permute.xlu0 %1949
      %1951 = vrot.lane.b32.xlu0 %v1718, 96
      %v1952 = vpop.permute.xlu0 %1951
      %1953 = vrot.lane.b32.xlu0 %v1721, 96
      %v1954 = vpop.permute.xlu0 %1953
      %1955 = vrot.lane.b32.xlu0 %v1723, 96
      %v1956 = vpop.permute.xlu0 %1955
      %1957 = vrot.lane.b32.xlu0 %v1726, 96
      %v1958 = vpop.permute.xlu0 %1957
      %1959 = vrot.lane.b32.xlu0 %v1728, 96
      %v1960 = vpop.permute.xlu0 %1959
      %1961 = vrot.lane.b32.xlu0 %v1731, 96
      %v1962 = vpop.permute.xlu0 %1961
      %1963 = vrot.lane.b32.xlu0 %v1733, 96
      %v1964 = vpop.permute.xlu0 %1963
      %1965 = vrot.lane.b32.xlu0 %v1736, 96
      %v1966 = vpop.permute.xlu0 %1965
      %1967 = vrot.lane.b32.xlu0 %v1738, 96
      %v1968 = vpop.permute.xlu0 %1967
      %1969 = vrot.lane.b32.xlu0 %v1741, 96
      %v1970 = vpop.permute.xlu0 %1969
      %1971 = vrot.lane.b32.xlu0 %v1743, 96
      %v1972 = vpop.permute.xlu0 %1971
      %1973 = vrot.lane.b32.xlu0 %v1746, 96
      %v1974 = vpop.permute.xlu0 %1973
      %1975 = vrot.lane.b32.xlu0 %v1748, 96
      %v1976 = vpop.permute.xlu0 %1975
      %1977 = vrot.lane.b32.xlu0 %v1751, 96
      %v1978 = vpop.permute.xlu0 %1977
      %1979 = vrot.lane.b32.xlu0 %v1753, 96
      %v1980 = vpop.permute.xlu0 %1979
      %v1981 = vsel %vm1803, %v1716, 0
      %v1983 = vsel %vm1803, %v1718, 0
      %v1985 = vsel %vm1803, %v1721, 0
      %v1987 = vsel %vm1803, %v1723, 0
      %v1989 = vsel %vm1803, %v1726, 0
      %v1991 = vsel %vm1803, %v1728, 0
      %v1993 = vsel %vm1803, %v1731, 0
      %v1995 = vsel %vm1803, %v1733, 0
      %v1997 = vsel %vm1803, %v1736, 0
      %v1999 = vsel %vm1803, %v1738, 0
      %v2001 = vsel %vm1803, %v1741, 0
      %v2003 = vsel %vm1803, %v1743, 0
      %v2005 = vsel %vm1803, %v1746, 0
      %v2007 = vsel %vm1803, %v1748, 0
      %v2009 = vsel %vm1803, %v1751, 0
      %v2011 = vsel %vm1803, %v1753, 0
      %v2013 = vsel %vm1803, %v1950, 0
      %v2015 = vsel %vm1803, %v1952, 0
      %v2017 = vsel %vm1803, %v1954, 0
      %v2019 = vsel %vm1803, %v1956, 0
      %v2021 = vsel %vm1803, %v1958, 0
      %v2023 = vsel %vm1803, %v1960, 0
      %v2025 = vsel %vm1803, %v1962, 0
      %v2027 = vsel %vm1803, %v1964, 0
      %v2029 = vsel %vm1803, %v1966, 0
      %v2031 = vsel %vm1803, %v1968, 0
      %v2033 = vsel %vm1803, %v1970, 0
      %v2035 = vsel %vm1803, %v1972, 0
      %v2037 = vsel %vm1803, %v1974, 0
      %v2039 = vsel %vm1803, %v1976, 0
      %v2041 = vsel %vm1803, %v1978, 0
      %v2043 = vsel %vm1803, %v1980, 0
      %2045 = vmatpush.xpose.msra.mxu0 %v2043
      %2046 = vmatpush.xpose.msra.mxu0 %v2041
      %2047 = vmatpush.xpose.msra.mxu0 %v2039
      %2048 = vmatpush.xpose.msra.mxu0 %v2037
      %2049 = vmatpush.xpose.msra.mxu0 %v2035
      %2050 = vmatpush.xpose.msra.mxu0 %v2033
      %2051 = vmatpush.xpose.msra.mxu0 %v2031
      %2052 = vmatpush.xpose.msra.mxu0 %v2029
      %2053 = vmatpush.xpose.msra.mxu0 %v2027
      %2054 = vmatpush.xpose.msra.mxu0 %v2025
      %2055 = vmatpush.xpose.msra.mxu0 %v2023
      %2056 = vmatpush.xpose.msra.mxu0 %v2021
      %2057 = vmatpush.xpose.msra.mxu0 %v2019
      %2058 = vmatpush.xpose.msra.mxu0 %v2017
      %2059 = vmatpush.xpose.msra.mxu0 %v2015
      %2060 = vmatpush.xpose.msra.mxu0 %v2013
      %2061 = vmatmul.f32.gmra.mxu0 %v1981
      %v2062 = vpop.f32.mrf.mxu0
      %v2063 = vadd.f32 %v750, %v2062
      %2064 = vmatmul.f32.gmra.mxu0 %v1983
      %v2065 = vpop.f32.mrf.mxu0
      %v2066 = vadd.f32 %v751, %v2065
      %2067 = vmatmul.f32.gmra.mxu0 %v1985
      %v2068 = vpop.f32.mrf.mxu0
      %v2069 = vadd.f32 %v752, %v2068
      %2070 = vmatmul.f32.gmra.mxu0 %v1987
      %v2071 = vpop.f32.mrf.mxu0
      %v2072 = vadd.f32 %v753, %v2071
      %2073 = vmatmul.f32.gmra.mxu0 %v1989
      %v2074 = vpop.f32.mrf.mxu0
      %v2075 = vadd.f32 %v754, %v2074
      %2076 = vmatmul.f32.gmra.mxu0 %v1991
      %v2077 = vpop.f32.mrf.mxu0
      %v2078 = vadd.f32 %v755, %v2077
      %2079 = vmatmul.f32.gmra.mxu0 %v1993
      %v2080 = vpop.f32.mrf.mxu0
      %v2081 = vadd.f32 %v756, %v2080
      %2082 = vmatmul.f32.gmra.mxu0 %v1995
      %v2083 = vpop.f32.mrf.mxu0
      %v2084 = vadd.f32 %v757, %v2083
      %2085 = vmatmul.f32.gmra.mxu0 %v1997
      %v2086 = vpop.f32.mrf.mxu0
      %v2087 = vadd.f32 %v758, %v2086
      %2088 = vmatmul.f32.gmra.mxu0 %v1999
      %v2089 = vpop.f32.mrf.mxu0
      %v2090 = vadd.f32 %v759, %v2089
      %2091 = vmatmul.f32.gmra.mxu0 %v2001
      %v2092 = vpop.f32.mrf.mxu0
      %v2093 = vadd.f32 %v760, %v2092
      %2094 = vmatmul.f32.gmra.mxu0 %v2003
      %v2095 = vpop.f32.mrf.mxu0
      %v2096 = vadd.f32 %v761, %v2095
      %2097 = vmatmul.f32.gmra.mxu0 %v2005
      %v2098 = vpop.f32.mrf.mxu0
      %v2099 = vadd.f32 %v762, %v2098
      %2100 = vmatmul.f32.gmra.mxu0 %v2007
      %v2101 = vpop.f32.mrf.mxu0
      %v2102 = vadd.f32 %v763, %v2101
      %2103 = vmatmul.f32.gmra.mxu0 %v2009
      %v2104 = vpop.f32.mrf.mxu0
      %v2105 = vadd.f32 %v764, %v2104
      %2106 = vmatmul.f32.gmra.mxu0 %v2011
      %v2107 = vpop.f32.mrf.mxu0
      %v2108 = vadd.f32 %v765, %v2107
      %2109 = vdwg.mxu0
      %2110 = vmax.xlane.f32.xlu0 %v1886
      %v2111 = vpop.xlane.xlu0 %2110
      %2112 = vmax.xlane.f32.xlu0 %v1889
      %v2113 = vpop.xlane.xlu0 %2112
      %2114 = vmax.xlane.f32.xlu0 %v1892
      %v2115 = vpop.xlane.xlu0 %2114
      %2116 = vmax.xlane.f32.xlu0 %v1895
      %v2117 = vpop.xlane.xlu0 %2116
      %2118 = vmax.xlane.f32.xlu0 %v1898
      %v2119 = vpop.xlane.xlu0 %2118
      %2120 = vmax.xlane.f32.xlu0 %v1901
      %v2121 = vpop.xlane.xlu0 %2120
      %2122 = vmax.xlane.f32.xlu0 %v1904
      %v2123 = vpop.xlane.xlu0 %2122
      %2124 = vmax.xlane.f32.xlu0 %v1907
      %v2125 = vpop.xlane.xlu0 %2124
      %2126 = vmax.xlane.f32.xlu0 %v1910
      %v2127 = vpop.xlane.xlu0 %2126
      %2128 = vmax.xlane.f32.xlu0 %v1913
      %v2129 = vpop.xlane.xlu0 %2128
      %2130 = vmax.xlane.f32.xlu0 %v1916
      %v2131 = vpop.xlane.xlu0 %2130
      %2132 = vmax.xlane.f32.xlu0 %v1919
      %v2133 = vpop.xlane.xlu0 %2132
      %2134 = vmax.xlane.f32.xlu0 %v1922
      %v2135 = vpop.xlane.xlu0 %2134
      %2136 = vmax.xlane.f32.xlu0 %v1925
      %v2137 = vpop.xlane.xlu0 %2136
      %2138 = vmax.xlane.f32.xlu0 %v1928
      %v2139 = vpop.xlane.xlu0 %2138
      %2140 = vmax.xlane.f32.xlu0 %v1931
      %v2141 = vpop.xlane.xlu0 %2140
      %2142 = vmax.xlane.f32.xlu0 %v2063
      %v2143 = vpop.xlane.xlu0 %2142
      %2144 = vmax.xlane.f32.xlu0 %v2066
      %v2145 = vpop.xlane.xlu0 %2144
      %2146 = vmax.xlane.f32.xlu0 %v2069
      %v2147 = vpop.xlane.xlu0 %2146
      %2148 = vmax.xlane.f32.xlu0 %v2072
      %v2149 = vpop.xlane.xlu0 %2148
      %2150 = vmax.xlane.f32.xlu0 %v2075
      %v2151 = vpop.xlane.xlu0 %2150
      %2152 = vmax.xlane.f32.xlu0 %v2078
      %v2153 = vpop.xlane.xlu0 %2152
      %2154 = vmax.xlane.f32.xlu0 %v2081
      %v2155 = vpop.xlane.xlu0 %2154
      %2156 = vmax.xlane.f32.xlu0 %v2084
      %v2157 = vpop.xlane.xlu0 %2156
      %2158 = vmax.xlane.f32.xlu0 %v2087
      %v2159 = vpop.xlane.xlu0 %2158
      %2160 = vmax.xlane.f32.xlu0 %v2090
      %v2161 = vpop.xlane.xlu0 %2160
      %2162 = vmax.xlane.f32.xlu0 %v2093
      %v2163 = vpop.xlane.xlu0 %2162
      %2164 = vmax.xlane.f32.xlu0 %v2096
      %v2165 = vpop.xlane.xlu0 %2164
      %2166 = vmax.xlane.f32.xlu0 %v2099
      %v2167 = vpop.xlane.xlu0 %2166
      %2168 = vmax.xlane.f32.xlu0 %v2102
      %v2169 = vpop.xlane.xlu0 %2168
      %2170 = vmax.xlane.f32.xlu0 %v2105
      %v2171 = vpop.xlane.xlu0 %2170
      %2172 = vmax.xlane.f32.xlu0 %v2108
      %v2173 = vpop.xlane.xlu0 %2172
      %v2174 = vsub.f32 %v1886, %v2111
      %v2175 = vsub.f32 %v1889, %v2113
      %v2176 = vsub.f32 %v1892, %v2115
      %v2177 = vsub.f32 %v1895, %v2117
      %v2178 = vsub.f32 %v1898, %v2119
      %v2179 = vsub.f32 %v1901, %v2121
      %v2180 = vsub.f32 %v1904, %v2123
      %v2181 = vsub.f32 %v1907, %v2125
      %v2182 = vsub.f32 %v1910, %v2127
      %v2183 = vsub.f32 %v1913, %v2129
      %v2184 = vsub.f32 %v1916, %v2131
      %v2185 = vsub.f32 %v1919, %v2133
      %v2186 = vsub.f32 %v1922, %v2135
      %v2187 = vsub.f32 %v1925, %v2137
      %v2188 = vsub.f32 %v1928, %v2139
      %v2189 = vsub.f32 %v1931, %v2141
      %v2190 = vsub.f32 %v2063, %v2143
      %v2191 = vsub.f32 %v2066, %v2145
      %v2192 = vsub.f32 %v2069, %v2147
      %v2193 = vsub.f32 %v2072, %v2149
      %v2194 = vsub.f32 %v2075, %v2151
      %v2195 = vsub.f32 %v2078, %v2153
      %v2196 = vsub.f32 %v2081, %v2155
      %v2197 = vsub.f32 %v2084, %v2157
      %v2198 = vsub.f32 %v2087, %v2159
      %v2199 = vsub.f32 %v2090, %v2161
      %v2200 = vsub.f32 %v2093, %v2163
      %v2201 = vsub.f32 %v2096, %v2165
      %v2202 = vsub.f32 %v2099, %v2167
      %v2203 = vsub.f32 %v2102, %v2169
      %v2204 = vsub.f32 %v2105, %v2171
      %v2205 = vsub.f32 %v2108, %v2173
      %v2206 = vmul.f32 %v2174, 1.442695
      %v2207 = vpow.pop %v2206
      %v2208 = vmul.f32 %v2175, 1.442695
      %v2209 = vpow.pop %v2208
      %v2210 = vmul.f32 %v2176, 1.442695
      %v2211 = vpow.pop %v2210
      %v2212 = vmul.f32 %v2177, 1.442695
      %v2213 = vpow.pop %v2212
      %v2214 = vmul.f32 %v2178, 1.442695
      %v2215 = vpow.pop %v2214
      %v2216 = vmul.f32 %v2179, 1.442695
      %v2217 = vpow.pop %v2216
      %v2218 = vmul.f32 %v2180, 1.442695
      %v2219 = vpow.pop %v2218
      %v2220 = vmul.f32 %v2181, 1.442695
      %v2221 = vpow.pop %v2220
      %v2222 = vmul.f32 %v2182, 1.442695
      %v2223 = vpow.pop %v2222
      %v2224 = vmul.f32 %v2183, 1.442695
      %v2225 = vpow.pop %v2224
      %v2226 = vmul.f32 %v2184, 1.442695
      %v2227 = vpow.pop %v2226
      %v2228 = vmul.f32 %v2185, 1.442695
      %v2229 = vpow.pop %v2228
      %v2230 = vmul.f32 %v2186, 1.442695
      %v2231 = vpow.pop %v2230
      %v2232 = vmul.f32 %v2187, 1.442695
      %v2233 = vpow.pop %v2232
      %v2234 = vmul.f32 %v2188, 1.442695
      %v2235 = vpow.pop %v2234
      %v2236 = vmul.f32 %v2189, 1.442695
      %v2237 = vpow.pop %v2236
      %v2238 = vmul.f32 %v2190, 1.442695
      %v2239 = vpow.pop %v2238
      %v2240 = vmul.f32 %v2191, 1.442695
      %v2241 = vpow.pop %v2240
      %v2242 = vmul.f32 %v2192, 1.442695
      %v2243 = vpow.pop %v2242
      %v2244 = vmul.f32 %v2193, 1.442695
      %v2245 = vpow.pop %v2244
      %v2246 = vmul.f32 %v2194, 1.442695
      %v2247 = vpow.pop %v2246
      %v2248 = vmul.f32 %v2195, 1.442695
      %v2249 = vpow.pop %v2248
      %v2250 = vmul.f32 %v2196, 1.442695
      %v2251 = vpow.pop %v2250
      %v2252 = vmul.f32 %v2197, 1.442695
      %v2253 = vpow.pop %v2252
      %v2254 = vmul.f32 %v2198, 1.442695
      %v2255 = vpow.pop %v2254
      %v2256 = vmul.f32 %v2199, 1.442695
      %v2257 = vpow.pop %v2256
      %v2258 = vmul.f32 %v2200, 1.442695
      %v2259 = vpow.pop %v2258
      %v2260 = vmul.f32 %v2201, 1.442695
      %v2261 = vpow.pop %v2260
      %v2262 = vmul.f32 %v2202, 1.442695
      %v2263 = vpow.pop %v2262
      %v2264 = vmul.f32 %v2203, 1.442695
      %v2265 = vpow.pop %v2264
      %v2266 = vmul.f32 %v2204, 1.442695
      %v2267 = vpow.pop %v2266
      %v2268 = vmul.f32 %v2205, 1.442695
      %v2269 = vpow.pop %v2268
      %2270 = vadd.xlane.f32.xlu0 %v2207
      %v2271 = vpop.xlane.xlu0 %2270
      %2272 = vadd.xlane.f32.xlu0 %v2209
      %v2273 = vpop.xlane.xlu0 %2272
      %2274 = vadd.xlane.f32.xlu0 %v2211
      %v2275 = vpop.xlane.xlu0 %2274
      %2276 = vadd.xlane.f32.xlu0 %v2213
      %v2277 = vpop.xlane.xlu0 %2276
      %2278 = vadd.xlane.f32.xlu0 %v2215
      %v2279 = vpop.xlane.xlu0 %2278
      %2280 = vadd.xlane.f32.xlu0 %v2217
      %v2281 = vpop.xlane.xlu0 %2280
      %2282 = vadd.xlane.f32.xlu0 %v2219
      %v2283 = vpop.xlane.xlu0 %2282
      %2284 = vadd.xlane.f32.xlu0 %v2221
      %v2285 = vpop.xlane.xlu0 %2284
      %2286 = vadd.xlane.f32.xlu0 %v2223
      %v2287 = vpop.xlane.xlu0 %2286
      %2288 = vadd.xlane.f32.xlu0 %v2225
      %v2289 = vpop.xlane.xlu0 %2288
      %2290 = vadd.xlane.f32.xlu0 %v2227
      %v2291 = vpop.xlane.xlu0 %2290
      %2292 = vadd.xlane.f32.xlu0 %v2229
      %v2293 = vpop.xlane.xlu0 %2292
      %2294 = vadd.xlane.f32.xlu0 %v2231
      %v2295 = vpop.xlane.xlu0 %2294
      %2296 = vadd.xlane.f32.xlu0 %v2233
      %v2297 = vpop.xlane.xlu0 %2296
      %2298 = vadd.xlane.f32.xlu0 %v2235
      %v2299 = vpop.xlane.xlu0 %2298
      %2300 = vadd.xlane.f32.xlu0 %v2237
      %v2301 = vpop.xlane.xlu0 %2300
      %2302 = vadd.xlane.f32.xlu0 %v2239
      %v2303 = vpop.xlane.xlu0 %2302
      %2304 = vadd.xlane.f32.xlu0 %v2241
      %v2305 = vpop.xlane.xlu0 %2304
      %2306 = vadd.xlane.f32.xlu0 %v2243
      %v2307 = vpop.xlane.xlu0 %2306
      %2308 = vadd.xlane.f32.xlu0 %v2245
      %v2309 = vpop.xlane.xlu0 %2308
      %2310 = vadd.xlane.f32.xlu0 %v2247
      %v2311 = vpop.xlane.xlu0 %2310
      %2312 = vadd.xlane.f32.xlu0 %v2249
      %v2313 = vpop.xlane.xlu0 %2312
      %2314 = vadd.xlane.f32.xlu0 %v2251
      %v2315 = vpop.xlane.xlu0 %2314
      %2316 = vadd.xlane.f32.xlu0 %v2253
      %v2317 = vpop.xlane.xlu0 %2316
      %2318 = vadd.xlane.f32.xlu0 %v2255
      %v2319 = vpop.xlane.xlu0 %2318
      %2320 = vadd.xlane.f32.xlu0 %v2257
      %v2321 = vpop.xlane.xlu0 %2320
      %2322 = vadd.xlane.f32.xlu0 %v2259
      %v2323 = vpop.xlane.xlu0 %2322
      %2324 = vadd.xlane.f32.xlu0 %v2261
      %v2325 = vpop.xlane.xlu0 %2324
      %2326 = vadd.xlane.f32.xlu0 %v2263
      %v2327 = vpop.xlane.xlu0 %2326
      %2328 = vadd.xlane.f32.xlu0 %v2265
      %v2329 = vpop.xlane.xlu0 %2328
      %2330 = vadd.xlane.f32.xlu0 %v2267
      %v2331 = vpop.xlane.xlu0 %2330
      %2332 = vadd.xlane.f32.xlu0 %v2269
      %v2333 = vpop.xlane.xlu0 %2332
      %v2334 = vrcp.pop %v2271
      %v2335 = vrcp.pop %v2273
      %v2336 = vrcp.pop %v2275
      %v2337 = vrcp.pop %v2277
      %v2338 = vrcp.pop %v2279
      %v2339 = vrcp.pop %v2281
      %v2340 = vrcp.pop %v2283
      %v2341 = vrcp.pop %v2285
      %v2342 = vrcp.pop %v2287
      %v2343 = vrcp.pop %v2289
      %v2344 = vrcp.pop %v2291
      %v2345 = vrcp.pop %v2293
      %v2346 = vrcp.pop %v2295
      %v2347 = vrcp.pop %v2297
      %v2348 = vrcp.pop %v2299
      %v2349 = vrcp.pop %v2301
      %v2350 = vrcp.pop %v2303
      %v2351 = vrcp.pop %v2305
      %v2352 = vrcp.pop %v2307
      %v2353 = vrcp.pop %v2309
      %v2354 = vrcp.pop %v2311
      %v2355 = vrcp.pop %v2313
      %v2356 = vrcp.pop %v2315
      %v2357 = vrcp.pop %v2317
      %v2358 = vrcp.pop %v2319
      %v2359 = vrcp.pop %v2321
      %v2360 = vrcp.pop %v2323
      %v2361 = vrcp.pop %v2325
      %v2362 = vrcp.pop %v2327
      %v2363 = vrcp.pop %v2329
      %v2364 = vrcp.pop %v2331
      %v2365 = vrcp.pop %v2333
      %v2366 = vmul.f32 %v2207, %v2334
      %v2367 = vmul.f32 %v2209, %v2335
      %v2368 = vmul.f32 %v2211, %v2336
      %v2369 = vmul.f32 %v2213, %v2337
      %v2370 = vmul.f32 %v2215, %v2338
      %v2371 = vmul.f32 %v2217, %v2339
      %v2372 = vmul.f32 %v2219, %v2340
      %v2373 = vmul.f32 %v2221, %v2341
      %v2374 = vmul.f32 %v2223, %v2342
      %v2375 = vmul.f32 %v2225, %v2343
      %v2376 = vmul.f32 %v2227, %v2344
      %v2377 = vmul.f32 %v2229, %v2345
      %v2378 = vmul.f32 %v2231, %v2346
      %v2379 = vmul.f32 %v2233, %v2347
      %v2380 = vmul.f32 %v2235, %v2348
      %v2381 = vmul.f32 %v2237, %v2349
      %v2382 = vmul.f32 %v2239, %v2350
      %v2383 = vmul.f32 %v2241, %v2351
      %v2384 = vmul.f32 %v2243, %v2352
      %v2385 = vmul.f32 %v2245, %v2353
      %v2386 = vmul.f32 %v2247, %v2354
      %v2387 = vmul.f32 %v2249, %v2355
      %v2388 = vmul.f32 %v2251, %v2356
      %v2389 = vmul.f32 %v2253, %v2357
      %v2390 = vmul.f32 %v2255, %v2358
      %v2391 = vmul.f32 %v2257, %v2359
      %v2392 = vmul.f32 %v2259, %v2360
      %v2393 = vmul.f32 %v2261, %v2361
      %v2394 = vmul.f32 %v2263, %v2362
      %v2395 = vmul.f32 %v2265, %v2363
      %v2396 = vmul.f32 %v2267, %v2364
      %v2397 = vmul.f32 %v2269, %v2365
      %2398 = vrot.lane.b32.xlu0 %v1676, 64
      %v2399 = vpop.permute.xlu0 %2398
      %2400 = vrot.lane.b32.xlu0 %v1678, 64
      %v2401 = vpop.permute.xlu0 %2400
      %2402 = vrot.lane.b32.xlu0 %v1681, 64
      %v2403 = vpop.permute.xlu0 %2402
      %2404 = vrot.lane.b32.xlu0 %v1683, 64
      %v2405 = vpop.permute.xlu0 %2404
      %2406 = vrot.lane.b32.xlu0 %v1686, 64
      %v2407 = vpop.permute.xlu0 %2406
      %2408 = vrot.lane.b32.xlu0 %v1688, 64
      %v2409 = vpop.permute.xlu0 %2408
      %2410 = vrot.lane.b32.xlu0 %v1691, 64
      %v2411 = vpop.permute.xlu0 %2410
      %2412 = vrot.lane.b32.xlu0 %v1693, 64
      %v2413 = vpop.permute.xlu0 %2412
      %2414 = vrot.lane.b32.xlu0 %v1696, 64
      %v2415 = vpop.permute.xlu0 %2414
      %2416 = vrot.lane.b32.xlu0 %v1698, 64
      %v2417 = vpop.permute.xlu0 %2416
      %2418 = vrot.lane.b32.xlu0 %v1701, 64
      %v2419 = vpop.permute.xlu0 %2418
      %2420 = vrot.lane.b32.xlu0 %v1703, 64
      %v2421 = vpop.permute.xlu0 %2420
      %2422 = vrot.lane.b32.xlu0 %v1706, 64
      %v2423 = vpop.permute.xlu0 %2422
      %2424 = vrot.lane.b32.xlu0 %v1708, 64
      %v2425 = vpop.permute.xlu0 %2424
      %2426 = vrot.lane.b32.xlu0 %v1711, 64
      %v2427 = vpop.permute.xlu0 %2426
      %2428 = vrot.lane.b32.xlu0 %v1713, 64
      %v2429 = vpop.permute.xlu0 %2428
      %2446 = vmatpush.msra.mxu0 %v2429
      %2447 = vmatpush.msra.mxu0 %v2427
      %2448 = vmatpush.msra.mxu0 %v2425
      %2449 = vmatpush.msra.mxu0 %v2423
      %2450 = vmatpush.msra.mxu0 %v2421
      %2451 = vmatpush.msra.mxu0 %v2419
      %2452 = vmatpush.msra.mxu0 %v2417
      %2453 = vmatpush.msra.mxu0 %v2415
      %2454 = vmatpush.msra.mxu0 %v2413
      %2455 = vmatpush.msra.mxu0 %v2411
      %2456 = vmatpush.msra.mxu0 %v2409
      %2457 = vmatpush.msra.mxu0 %v2407
      %2458 = vmatpush.msra.mxu0 %v2405
      %2459 = vmatpush.msra.mxu0 %v2403
      %2460 = vmatpush.msra.mxu0 %v2401
      %2461 = vmatpush.msra.mxu0 %v2399
      %2462 = vmatmul.f32.gmra.mxu0 %v2366
      %v2463 = vpop.f32.mrf.mxu0
      %v2464 = vadd.f32 0.0, %v2463
      %2465 = vmatmul.f32.gmra.mxu0 %v2367
      %v2466 = vpop.f32.mrf.mxu0
      %v2467 = vadd.f32 0.0, %v2466
      %2468 = vmatmul.f32.gmra.mxu0 %v2368
      %v2469 = vpop.f32.mrf.mxu0
      %v2470 = vadd.f32 0.0, %v2469
      %2471 = vmatmul.f32.gmra.mxu0 %v2369
      %v2472 = vpop.f32.mrf.mxu0
      %v2473 = vadd.f32 0.0, %v2472
      %2474 = vmatmul.f32.gmra.mxu0 %v2370
      %v2475 = vpop.f32.mrf.mxu0
      %v2476 = vadd.f32 0.0, %v2475
      %2477 = vmatmul.f32.gmra.mxu0 %v2371
      %v2478 = vpop.f32.mrf.mxu0
      %v2479 = vadd.f32 0.0, %v2478
      %2480 = vmatmul.f32.gmra.mxu0 %v2372
      %v2481 = vpop.f32.mrf.mxu0
      %v2482 = vadd.f32 0.0, %v2481
      %2483 = vmatmul.f32.gmra.mxu0 %v2373
      %v2484 = vpop.f32.mrf.mxu0
      %v2485 = vadd.f32 0.0, %v2484
      %2486 = vmatmul.f32.gmra.mxu0 %v2374
      %v2487 = vpop.f32.mrf.mxu0
      %v2488 = vadd.f32 0.0, %v2487
      %2489 = vmatmul.f32.gmra.mxu0 %v2375
      %v2490 = vpop.f32.mrf.mxu0
      %v2491 = vadd.f32 0.0, %v2490
      %2492 = vmatmul.f32.gmra.mxu0 %v2376
      %v2493 = vpop.f32.mrf.mxu0
      %v2494 = vadd.f32 0.0, %v2493
      %2495 = vmatmul.f32.gmra.mxu0 %v2377
      %v2496 = vpop.f32.mrf.mxu0
      %v2497 = vadd.f32 0.0, %v2496
      %2498 = vmatmul.f32.gmra.mxu0 %v2378
      %v2499 = vpop.f32.mrf.mxu0
      %v2500 = vadd.f32 0.0, %v2499
      %2501 = vmatmul.f32.gmra.mxu0 %v2379
      %v2502 = vpop.f32.mrf.mxu0
      %v2503 = vadd.f32 0.0, %v2502
      %2504 = vmatmul.f32.gmra.mxu0 %v2380
      %v2505 = vpop.f32.mrf.mxu0
      %v2506 = vadd.f32 0.0, %v2505
      %2507 = vmatmul.f32.gmra.mxu0 %v2381
      %v2508 = vpop.f32.mrf.mxu0
      %v2509 = vadd.f32 0.0, %v2508
      %2510 = vdwg.mxu0
      %2511 = vrot.lane.b32.xlu0 %v1716, 64
      %v2512 = vpop.permute.xlu0 %2511
      %2513 = vrot.lane.b32.xlu0 %v1718, 64
      %v2514 = vpop.permute.xlu0 %2513
      %2515 = vrot.lane.b32.xlu0 %v1721, 64
      %v2516 = vpop.permute.xlu0 %2515
      %2517 = vrot.lane.b32.xlu0 %v1723, 64
      %v2518 = vpop.permute.xlu0 %2517
      %2519 = vrot.lane.b32.xlu0 %v1726, 64
      %v2520 = vpop.permute.xlu0 %2519
      %2521 = vrot.lane.b32.xlu0 %v1728, 64
      %v2522 = vpop.permute.xlu0 %2521
      %2523 = vrot.lane.b32.xlu0 %v1731, 64
      %v2524 = vpop.permute.xlu0 %2523
      %2525 = vrot.lane.b32.xlu0 %v1733, 64
      %v2526 = vpop.permute.xlu0 %2525
      %2527 = vrot.lane.b32.xlu0 %v1736, 64
      %v2528 = vpop.permute.xlu0 %2527
      %2529 = vrot.lane.b32.xlu0 %v1738, 64
      %v2530 = vpop.permute.xlu0 %2529
      %2531 = vrot.lane.b32.xlu0 %v1741, 64
      %v2532 = vpop.permute.xlu0 %2531
      %2533 = vrot.lane.b32.xlu0 %v1743, 64
      %v2534 = vpop.permute.xlu0 %2533
      %2535 = vrot.lane.b32.xlu0 %v1746, 64
      %v2536 = vpop.permute.xlu0 %2535
      %2537 = vrot.lane.b32.xlu0 %v1748, 64
      %v2538 = vpop.permute.xlu0 %2537
      %2539 = vrot.lane.b32.xlu0 %v1751, 64
      %v2540 = vpop.permute.xlu0 %2539
      %2541 = vrot.lane.b32.xlu0 %v1753, 64
      %v2542 = vpop.permute.xlu0 %2541
      %2559 = vmatpush.msra.mxu0 %v2542
      %2560 = vmatpush.msra.mxu0 %v2540
      %2561 = vmatpush.msra.mxu0 %v2538
      %2562 = vmatpush.msra.mxu0 %v2536
      %2563 = vmatpush.msra.mxu0 %v2534
      %2564 = vmatpush.msra.mxu0 %v2532
      %2565 = vmatpush.msra.mxu0 %v2530
      %2566 = vmatpush.msra.mxu0 %v2528
      %2567 = vmatpush.msra.mxu0 %v2526
      %2568 = vmatpush.msra.mxu0 %v2524
      %2569 = vmatpush.msra.mxu0 %v2522
      %2570 = vmatpush.msra.mxu0 %v2520
      %2571 = vmatpush.msra.mxu0 %v2518
      %2572 = vmatpush.msra.mxu0 %v2516
      %2573 = vmatpush.msra.mxu0 %v2514
      %2574 = vmatpush.msra.mxu0 %v2512
      %2575 = vmatmul.f32.gmra.mxu0 %v2382
      %v2576 = vpop.f32.mrf.mxu0
      %v2577 = vadd.f32 0.0, %v2576
      %2578 = vmatmul.f32.gmra.mxu0 %v2383
      %v2579 = vpop.f32.mrf.mxu0
      %v2580 = vadd.f32 0.0, %v2579
      %2581 = vmatmul.f32.gmra.mxu0 %v2384
      %v2582 = vpop.f32.mrf.mxu0
      %v2583 = vadd.f32 0.0, %v2582
      %2584 = vmatmul.f32.gmra.mxu0 %v2385
      %v2585 = vpop.f32.mrf.mxu0
      %v2586 = vadd.f32 0.0, %v2585
      %2587 = vmatmul.f32.gmra.mxu0 %v2386
      %v2588 = vpop.f32.mrf.mxu0
      %v2589 = vadd.f32 0.0, %v2588
      %2590 = vmatmul.f32.gmra.mxu0 %v2387
      %v2591 = vpop.f32.mrf.mxu0
      %v2592 = vadd.f32 0.0, %v2591
      %2593 = vmatmul.f32.gmra.mxu0 %v2388
      %v2594 = vpop.f32.mrf.mxu0
      %v2595 = vadd.f32 0.0, %v2594
      %2596 = vmatmul.f32.gmra.mxu0 %v2389
      %v2597 = vpop.f32.mrf.mxu0
      %v2598 = vadd.f32 0.0, %v2597
      %2599 = vmatmul.f32.gmra.mxu0 %v2390
      %v2600 = vpop.f32.mrf.mxu0
      %v2601 = vadd.f32 0.0, %v2600
      %2602 = vmatmul.f32.gmra.mxu0 %v2391
      %v2603 = vpop.f32.mrf.mxu0
      %v2604 = vadd.f32 0.0, %v2603
      %2605 = vmatmul.f32.gmra.mxu0 %v2392
      %v2606 = vpop.f32.mrf.mxu0
      %v2607 = vadd.f32 0.0, %v2606
      %2608 = vmatmul.f32.gmra.mxu0 %v2393
      %v2609 = vpop.f32.mrf.mxu0
      %v2610 = vadd.f32 0.0, %v2609
      %2611 = vmatmul.f32.gmra.mxu0 %v2394
      %v2612 = vpop.f32.mrf.mxu0
      %v2613 = vadd.f32 0.0, %v2612
      %2614 = vmatmul.f32.gmra.mxu0 %v2395
      %v2615 = vpop.f32.mrf.mxu0
      %v2616 = vadd.f32 0.0, %v2615
      %2617 = vmatmul.f32.gmra.mxu0 %v2396
      %v2618 = vpop.f32.mrf.mxu0
      %v2619 = vadd.f32 0.0, %v2618
      %2620 = vmatmul.f32.gmra.mxu0 %v2397
      %v2621 = vpop.f32.mrf.mxu0
      %v2622 = vadd.f32 0.0, %v2621
      %2623 = vdwg.mxu0
      %2624 = vrot.lane.b32.xlu0 %v1676, 120
      %v2625 = vpop.permute.xlu0 %2624
      %2626 = vrot.lane.b32.xlu0 %v1678, 120
      %v2627 = vpop.permute.xlu0 %2626
      %2628 = vrot.lane.b32.xlu0 %v1681, 120
      %v2629 = vpop.permute.xlu0 %2628
      %2630 = vrot.lane.b32.xlu0 %v1683, 120
      %v2631 = vpop.permute.xlu0 %2630
      %2632 = vrot.lane.b32.xlu0 %v1686, 120
      %v2633 = vpop.permute.xlu0 %2632
      %2634 = vrot.lane.b32.xlu0 %v1688, 120
      %v2635 = vpop.permute.xlu0 %2634
      %2636 = vrot.lane.b32.xlu0 %v1691, 120
      %v2637 = vpop.permute.xlu0 %2636
      %2638 = vrot.lane.b32.xlu0 %v1693, 120
      %v2639 = vpop.permute.xlu0 %2638
      %2640 = vrot.lane.b32.xlu0 %v1696, 120
      %v2641 = vpop.permute.xlu0 %2640
      %2642 = vrot.lane.b32.xlu0 %v1698, 120
      %v2643 = vpop.permute.xlu0 %2642
      %2644 = vrot.lane.b32.xlu0 %v1701, 120
      %v2645 = vpop.permute.xlu0 %2644
      %2646 = vrot.lane.b32.xlu0 %v1703, 120
      %v2647 = vpop.permute.xlu0 %2646
      %2648 = vrot.lane.b32.xlu0 %v1706, 120
      %v2649 = vpop.permute.xlu0 %2648
      %2650 = vrot.lane.b32.xlu0 %v1708, 120
      %v2651 = vpop.permute.xlu0 %2650
      %2652 = vrot.lane.b32.xlu0 %v1711, 120
      %v2653 = vpop.permute.xlu0 %2652
      %2654 = vrot.lane.b32.xlu0 %v1713, 120
      %v2655 = vpop.permute.xlu0 %2654
      %2656 = vrot.lane.b32.xlu0 %v1676, 88
      %v2657 = vpop.permute.xlu0 %2656
      %2658 = vrot.lane.b32.xlu0 %v1678, 88
      %v2659 = vpop.permute.xlu0 %2658
      %2660 = vrot.lane.b32.xlu0 %v1681, 88
      %v2661 = vpop.permute.xlu0 %2660
      %2662 = vrot.lane.b32.xlu0 %v1683, 88
      %v2663 = vpop.permute.xlu0 %2662
      %2664 = vrot.lane.b32.xlu0 %v1686, 88
      %v2665 = vpop.permute.xlu0 %2664
      %2666 = vrot.lane.b32.xlu0 %v1688, 88
      %v2667 = vpop.permute.xlu0 %2666
      %2668 = vrot.lane.b32.xlu0 %v1691, 88
      %v2669 = vpop.permute.xlu0 %2668
      %2670 = vrot.lane.b32.xlu0 %v1693, 88
      %v2671 = vpop.permute.xlu0 %2670
      %2672 = vrot.lane.b32.xlu0 %v1696, 88
      %v2673 = vpop.permute.xlu0 %2672
      %2674 = vrot.lane.b32.xlu0 %v1698, 88
      %v2675 = vpop.permute.xlu0 %2674
      %2676 = vrot.lane.b32.xlu0 %v1701, 88
      %v2677 = vpop.permute.xlu0 %2676
      %2678 = vrot.lane.b32.xlu0 %v1703, 88
      %v2679 = vpop.permute.xlu0 %2678
      %2680 = vrot.lane.b32.xlu0 %v1706, 88
      %v2681 = vpop.permute.xlu0 %2680
      %2682 = vrot.lane.b32.xlu0 %v1708, 88
      %v2683 = vpop.permute.xlu0 %2682
      %2684 = vrot.lane.b32.xlu0 %v1711, 88
      %v2685 = vpop.permute.xlu0 %2684
      %2686 = vrot.lane.b32.xlu0 %v1713, 88
      %v2687 = vpop.permute.xlu0 %2686
      %v2688 = vsel %vm1803, %v2625, 0
      %v2690 = vsel %vm1803, %v2627, 0
      %v2692 = vsel %vm1803, %v2629, 0
      %v2694 = vsel %vm1803, %v2631, 0
      %v2696 = vsel %vm1803, %v2633, 0
      %v2698 = vsel %vm1803, %v2635, 0
      %v2700 = vsel %vm1803, %v2637, 0
      %v2702 = vsel %vm1803, %v2639, 0
      %v2704 = vsel %vm1803, %v2641, 0
      %v2706 = vsel %vm1803, %v2643, 0
      %v2708 = vsel %vm1803, %v2645, 0
      %v2710 = vsel %vm1803, %v2647, 0
      %v2712 = vsel %vm1803, %v2649, 0
      %v2714 = vsel %vm1803, %v2651, 0
      %v2716 = vsel %vm1803, %v2653, 0
      %v2718 = vsel %vm1803, %v2655, 0
      %v2720 = vsel %vm1803, %v2657, 0
      %v2722 = vsel %vm1803, %v2659, 0
      %v2724 = vsel %vm1803, %v2661, 0
      %v2726 = vsel %vm1803, %v2663, 0
      %v2728 = vsel %vm1803, %v2665, 0
      %v2730 = vsel %vm1803, %v2667, 0
      %v2732 = vsel %vm1803, %v2669, 0
      %v2734 = vsel %vm1803, %v2671, 0
      %v2736 = vsel %vm1803, %v2673, 0
      %v2738 = vsel %vm1803, %v2675, 0
      %v2740 = vsel %vm1803, %v2677, 0
      %v2742 = vsel %vm1803, %v2679, 0
      %v2744 = vsel %vm1803, %v2681, 0
      %v2746 = vsel %vm1803, %v2683, 0
      %v2748 = vsel %vm1803, %v2685, 0
      %v2750 = vsel %vm1803, %v2687, 0
      %2752 = vmatpush.xpose.msra.mxu0 %v2750
      %2753 = vmatpush.xpose.msra.mxu0 %v2748
      %2754 = vmatpush.xpose.msra.mxu0 %v2746
      %2755 = vmatpush.xpose.msra.mxu0 %v2744
      %2756 = vmatpush.xpose.msra.mxu0 %v2742
      %2757 = vmatpush.xpose.msra.mxu0 %v2740
      %2758 = vmatpush.xpose.msra.mxu0 %v2738
      %2759 = vmatpush.xpose.msra.mxu0 %v2736
      %2760 = vmatpush.xpose.msra.mxu0 %v2734
      %2761 = vmatpush.xpose.msra.mxu0 %v2732
      %2762 = vmatpush.xpose.msra.mxu0 %v2730
      %2763 = vmatpush.xpose.msra.mxu0 %v2728
      %2764 = vmatpush.xpose.msra.mxu0 %v2726
      %2765 = vmatpush.xpose.msra.mxu0 %v2724
      %2766 = vmatpush.xpose.msra.mxu0 %v2722
      %2767 = vmatpush.xpose.msra.mxu0 %v2720
      %2768 = vmatmul.f32.gmra.mxu0 %v2688
      %v2769 = vpop.f32.mrf.mxu0
      %v2770 = vadd.f32 %v750, %v2769
      %2771 = vmatmul.f32.gmra.mxu0 %v2690
      %v2772 = vpop.f32.mrf.mxu0
      %v2773 = vadd.f32 %v751, %v2772
      %2774 = vmatmul.f32.gmra.mxu0 %v2692
      %v2775 = vpop.f32.mrf.mxu0
      %v2776 = vadd.f32 %v752, %v2775
      %2777 = vmatmul.f32.gmra.mxu0 %v2694
      %v2778 = vpop.f32.mrf.mxu0
      %v2779 = vadd.f32 %v753, %v2778
      %2780 = vmatmul.f32.gmra.mxu0 %v2696
      %v2781 = vpop.f32.mrf.mxu0
      %v2782 = vadd.f32 %v754, %v2781
      %2783 = vmatmul.f32.gmra.mxu0 %v2698
      %v2784 = vpop.f32.mrf.mxu0
      %v2785 = vadd.f32 %v755, %v2784
      %2786 = vmatmul.f32.gmra.mxu0 %v2700
      %v2787 = vpop.f32.mrf.mxu0
      %v2788 = vadd.f32 %v756, %v2787
      %2789 = vmatmul.f32.gmra.mxu0 %v2702
      %v2790 = vpop.f32.mrf.mxu0
      %v2791 = vadd.f32 %v757, %v2790
      %2792 = vmatmul.f32.gmra.mxu0 %v2704
      %v2793 = vpop.f32.mrf.mxu0
      %v2794 = vadd.f32 %v758, %v2793
      %2795 = vmatmul.f32.gmra.mxu0 %v2706
      %v2796 = vpop.f32.mrf.mxu0
      %v2797 = vadd.f32 %v759, %v2796
      %2798 = vmatmul.f32.gmra.mxu0 %v2708
      %v2799 = vpop.f32.mrf.mxu0
      %v2800 = vadd.f32 %v760, %v2799
      %2801 = vmatmul.f32.gmra.mxu0 %v2710
      %v2802 = vpop.f32.mrf.mxu0
      %v2803 = vadd.f32 %v761, %v2802
      %2804 = vmatmul.f32.gmra.mxu0 %v2712
      %v2805 = vpop.f32.mrf.mxu0
      %v2806 = vadd.f32 %v762, %v2805
      %2807 = vmatmul.f32.gmra.mxu0 %v2714
      %v2808 = vpop.f32.mrf.mxu0
      %v2809 = vadd.f32 %v763, %v2808
      %2810 = vmatmul.f32.gmra.mxu0 %v2716
      %v2811 = vpop.f32.mrf.mxu0
      %v2812 = vadd.f32 %v764, %v2811
      %2813 = vmatmul.f32.gmra.mxu0 %v2718
      %v2814 = vpop.f32.mrf.mxu0
      %v2815 = vadd.f32 %v765, %v2814
      %2816 = vdwg.mxu0
      %2817 = vrot.lane.b32.xlu0 %v1716, 120
      %v2818 = vpop.permute.xlu0 %2817
      %2819 = vrot.lane.b32.xlu0 %v1718, 120
      %v2820 = vpop.permute.xlu0 %2819
      %2821 = vrot.lane.b32.xlu0 %v1721, 120
      %v2822 = vpop.permute.xlu0 %2821
      %2823 = vrot.lane.b32.xlu0 %v1723, 120
      %v2824 = vpop.permute.xlu0 %2823
      %2825 = vrot.lane.b32.xlu0 %v1726, 120
      %v2826 = vpop.permute.xlu0 %2825
      %2827 = vrot.lane.b32.xlu0 %v1728, 120
      %v2828 = vpop.permute.xlu0 %2827
      %2829 = vrot.lane.b32.xlu0 %v1731, 120
      %v2830 = vpop.permute.xlu0 %2829
      %2831 = vrot.lane.b32.xlu0 %v1733, 120
      %v2832 = vpop.permute.xlu0 %2831
      %2833 = vrot.lane.b32.xlu0 %v1736, 120
      %v2834 = vpop.permute.xlu0 %2833
      %2835 = vrot.lane.b32.xlu0 %v1738, 120
      %v2836 = vpop.permute.xlu0 %2835
      %2837 = vrot.lane.b32.xlu0 %v1741, 120
      %v2838 = vpop.permute.xlu0 %2837
      %2839 = vrot.lane.b32.xlu0 %v1743, 120
      %v2840 = vpop.permute.xlu0 %2839
      %2841 = vrot.lane.b32.xlu0 %v1746, 120
      %v2842 = vpop.permute.xlu0 %2841
      %2843 = vrot.lane.b32.xlu0 %v1748, 120
      %v2844 = vpop.permute.xlu0 %2843
      %2845 = vrot.lane.b32.xlu0 %v1751, 120
      %v2846 = vpop.permute.xlu0 %2845
      %2847 = vrot.lane.b32.xlu0 %v1753, 120
      %v2848 = vpop.permute.xlu0 %2847
      %2849 = vrot.lane.b32.xlu0 %v1716, 88
      %v2850 = vpop.permute.xlu0 %2849
      %2851 = vrot.lane.b32.xlu0 %v1718, 88
      %v2852 = vpop.permute.xlu0 %2851
      %2853 = vrot.lane.b32.xlu0 %v1721, 88
      %v2854 = vpop.permute.xlu0 %2853
      %2855 = vrot.lane.b32.xlu0 %v1723, 88
      %v2856 = vpop.permute.xlu0 %2855
      %2857 = vrot.lane.b32.xlu0 %v1726, 88
      %v2858 = vpop.permute.xlu0 %2857
      %2859 = vrot.lane.b32.xlu0 %v1728, 88
      %v2860 = vpop.permute.xlu0 %2859
      %2861 = vrot.lane.b32.xlu0 %v1731, 88
      %v2862 = vpop.permute.xlu0 %2861
      %2863 = vrot.lane.b32.xlu0 %v1733, 88
      %v2864 = vpop.permute.xlu0 %2863
      %2865 = vrot.lane.b32.xlu0 %v1736, 88
      %v2866 = vpop.permute.xlu0 %2865
      %2867 = vrot.lane.b32.xlu0 %v1738, 88
      %v2868 = vpop.permute.xlu0 %2867
      %2869 = vrot.lane.b32.xlu0 %v1741, 88
      %v2870 = vpop.permute.xlu0 %2869
      %2871 = vrot.lane.b32.xlu0 %v1743, 88
      %v2872 = vpop.permute.xlu0 %2871
      %2873 = vrot.lane.b32.xlu0 %v1746, 88
      %v2874 = vpop.permute.xlu0 %2873
      %2875 = vrot.lane.b32.xlu0 %v1748, 88
      %v2876 = vpop.permute.xlu0 %2875
      %2877 = vrot.lane.b32.xlu0 %v1751, 88
      %v2878 = vpop.permute.xlu0 %2877
      %2879 = vrot.lane.b32.xlu0 %v1753, 88
      %v2880 = vpop.permute.xlu0 %2879
      %v2881 = vsel %vm1803, %v2818, 0
      %v2883 = vsel %vm1803, %v2820, 0
      %v2885 = vsel %vm1803, %v2822, 0
      %v2887 = vsel %vm1803, %v2824, 0
      %v2889 = vsel %vm1803, %v2826, 0
      %v2891 = vsel %vm1803, %v2828, 0
      %v2893 = vsel %vm1803, %v2830, 0
      %v2895 = vsel %vm1803, %v2832, 0
      %v2897 = vsel %vm1803, %v2834, 0
      %v2899 = vsel %vm1803, %v2836, 0
      %v2901 = vsel %vm1803, %v2838, 0
      %v2903 = vsel %vm1803, %v2840, 0
      %v2905 = vsel %vm1803, %v2842, 0
      %v2907 = vsel %vm1803, %v2844, 0
      %v2909 = vsel %vm1803, %v2846, 0
      %v2911 = vsel %vm1803, %v2848, 0
      %v2913 = vsel %vm1803, %v2850, 0
      %v2915 = vsel %vm1803, %v2852, 0
      %v2917 = vsel %vm1803, %v2854, 0
      %v2919 = vsel %vm1803, %v2856, 0
      %v2921 = vsel %vm1803, %v2858, 0
      %v2923 = vsel %vm1803, %v2860, 0
      %v2925 = vsel %vm1803, %v2862, 0
      %v2927 = vsel %vm1803, %v2864, 0
      %v2929 = vsel %vm1803, %v2866, 0
      %v2931 = vsel %vm1803, %v2868, 0
      %v2933 = vsel %vm1803, %v2870, 0
      %v2935 = vsel %vm1803, %v2872, 0
      %v2937 = vsel %vm1803, %v2874, 0
      %v2939 = vsel %vm1803, %v2876, 0
      %v2941 = vsel %vm1803, %v2878, 0
      %v2943 = vsel %vm1803, %v2880, 0
      %2945 = vmatpush.xpose.msra.mxu0 %v2943
      %2946 = vmatpush.xpose.msra.mxu0 %v2941
      %2947 = vmatpush.xpose.msra.mxu0 %v2939
      %2948 = vmatpush.xpose.msra.mxu0 %v2937
      %2949 = vmatpush.xpose.msra.mxu0 %v2935
      %2950 = vmatpush.xpose.msra.mxu0 %v2933
      %2951 = vmatpush.xpose.msra.mxu0 %v2931
      %2952 = vmatpush.xpose.msra.mxu0 %v2929
      %2953 = vmatpush.xpose.msra.mxu0 %v2927
      %2954 = vmatpush.xpose.msra.mxu0 %v2925
      %2955 = vmatpush.xpose.msra.mxu0 %v2923
      %2956 = vmatpush.xpose.msra.mxu0 %v2921
      %2957 = vmatpush.xpose.msra.mxu0 %v2919
      %2958 = vmatpush.xpose.msra.mxu0 %v2917
      %2959 = vmatpush.xpose.msra.mxu0 %v2915
      %2960 = vmatpush.xpose.msra.mxu0 %v2913
      %2961 = vmatmul.f32.gmra.mxu0 %v2881
      %v2962 = vpop.f32.mrf.mxu0
      %v2963 = vadd.f32 %v750, %v2962
      %2964 = vmatmul.f32.gmra.mxu0 %v2883
      %v2965 = vpop.f32.mrf.mxu0
      %v2966 = vadd.f32 %v751, %v2965
      %2967 = vmatmul.f32.gmra.mxu0 %v2885
      %v2968 = vpop.f32.mrf.mxu0
      %v2969 = vadd.f32 %v752, %v2968
      %2970 = vmatmul.f32.gmra.mxu0 %v2887
      %v2971 = vpop.f32.mrf.mxu0
      %v2972 = vadd.f32 %v753, %v2971
      %2973 = vmatmul.f32.gmra.mxu0 %v2889
      %v2974 = vpop.f32.mrf.mxu0
      %v2975 = vadd.f32 %v754, %v2974
      %2976 = vmatmul.f32.gmra.mxu0 %v2891
      %v2977 = vpop.f32.mrf.mxu0
      %v2978 = vadd.f32 %v755, %v2977
      %2979 = vmatmul.f32.gmra.mxu0 %v2893
      %v2980 = vpop.f32.mrf.mxu0
      %v2981 = vadd.f32 %v756, %v2980
      %2982 = vmatmul.f32.gmra.mxu0 %v2895
      %v2983 = vpop.f32.mrf.mxu0
      %v2984 = vadd.f32 %v757, %v2983
      %2985 = vmatmul.f32.gmra.mxu0 %v2897
      %v2986 = vpop.f32.mrf.mxu0
      %v2987 = vadd.f32 %v758, %v2986
      %2988 = vmatmul.f32.gmra.mxu0 %v2899
      %v2989 = vpop.f32.mrf.mxu0
      %v2990 = vadd.f32 %v759, %v2989
      %2991 = vmatmul.f32.gmra.mxu0 %v2901
      %v2992 = vpop.f32.mrf.mxu0
      %v2993 = vadd.f32 %v760, %v2992
      %2994 = vmatmul.f32.gmra.mxu0 %v2903
      %v2995 = vpop.f32.mrf.mxu0
      %v2996 = vadd.f32 %v761, %v2995
      %2997 = vmatmul.f32.gmra.mxu0 %v2905
      %v2998 = vpop.f32.mrf.mxu0
      %v2999 = vadd.f32 %v762, %v2998
      %3000 = vmatmul.f32.gmra.mxu0 %v2907
      %v3001 = vpop.f32.mrf.mxu0
      %v3002 = vadd.f32 %v763, %v3001
      %3003 = vmatmul.f32.gmra.mxu0 %v2909
      %v3004 = vpop.f32.mrf.mxu0
      %v3005 = vadd.f32 %v764, %v3004
      %3006 = vmatmul.f32.gmra.mxu0 %v2911
      %v3007 = vpop.f32.mrf.mxu0
      %v3008 = vadd.f32 %v765, %v3007
      %3009 = vdwg.mxu0
      %3010 = vmax.xlane.f32.xlu0 %v2770
      %v3011 = vpop.xlane.xlu0 %3010
      %3012 = vmax.xlane.f32.xlu0 %v2773
      %v3013 = vpop.xlane.xlu0 %3012
      %3014 = vmax.xlane.f32.xlu0 %v2776
      %v3015 = vpop.xlane.xlu0 %3014
      %3016 = vmax.xlane.f32.xlu0 %v2779
      %v3017 = vpop.xlane.xlu0 %3016
      %3018 = vmax.xlane.f32.xlu0 %v2782
      %v3019 = vpop.xlane.xlu0 %3018
      %3020 = vmax.xlane.f32.xlu0 %v2785
      %v3021 = vpop.xlane.xlu0 %3020
      %3022 = vmax.xlane.f32.xlu0 %v2788
      %v3023 = vpop.xlane.xlu0 %3022
      %3024 = vmax.xlane.f32.xlu0 %v2791
      %v3025 = vpop.xlane.xlu0 %3024
      %3026 = vmax.xlane.f32.xlu0 %v2794
      %v3027 = vpop.xlane.xlu0 %3026
      %3028 = vmax.xlane.f32.xlu0 %v2797
      %v3029 = vpop.xlane.xlu0 %3028
      %3030 = vmax.xlane.f32.xlu0 %v2800
      %v3031 = vpop.xlane.xlu0 %3030
      %3032 = vmax.xlane.f32.xlu0 %v2803
      %v3033 = vpop.xlane.xlu0 %3032
      %3034 = vmax.xlane.f32.xlu0 %v2806
      %v3035 = vpop.xlane.xlu0 %3034
      %3036 = vmax.xlane.f32.xlu0 %v2809
      %v3037 = vpop.xlane.xlu0 %3036
      %3038 = vmax.xlane.f32.xlu0 %v2812
      %v3039 = vpop.xlane.xlu0 %3038
      %3040 = vmax.xlane.f32.xlu0 %v2815
      %v3041 = vpop.xlane.xlu0 %3040
      %3042 = vmax.xlane.f32.xlu0 %v2963
      %v3043 = vpop.xlane.xlu0 %3042
      %3044 = vmax.xlane.f32.xlu0 %v2966
      %v3045 = vpop.xlane.xlu0 %3044
      %3046 = vmax.xlane.f32.xlu0 %v2969
      %v3047 = vpop.xlane.xlu0 %3046
      %3048 = vmax.xlane.f32.xlu0 %v2972
      %v3049 = vpop.xlane.xlu0 %3048
      %3050 = vmax.xlane.f32.xlu0 %v2975
      %v3051 = vpop.xlane.xlu0 %3050
      %3052 = vmax.xlane.f32.xlu0 %v2978
      %v3053 = vpop.xlane.xlu0 %3052
      %3054 = vmax.xlane.f32.xlu0 %v2981
      %v3055 = vpop.xlane.xlu0 %3054
      %3056 = vmax.xlane.f32.xlu0 %v2984
      %v3057 = vpop.xlane.xlu0 %3056
      %3058 = vmax.xlane.f32.xlu0 %v2987
      %v3059 = vpop.xlane.xlu0 %3058
      %3060 = vmax.xlane.f32.xlu0 %v2990
      %v3061 = vpop.xlane.xlu0 %3060
      %3062 = vmax.xlane.f32.xlu0 %v2993
      %v3063 = vpop.xlane.xlu0 %3062
      %3064 = vmax.xlane.f32.xlu0 %v2996
      %v3065 = vpop.xlane.xlu0 %3064
      %3066 = vmax.xlane.f32.xlu0 %v2999
      %v3067 = vpop.xlane.xlu0 %3066
      %3068 = vmax.xlane.f32.xlu0 %v3002
      %v3069 = vpop.xlane.xlu0 %3068
      %3070 = vmax.xlane.f32.xlu0 %v3005
      %v3071 = vpop.xlane.xlu0 %3070
      %3072 = vmax.xlane.f32.xlu0 %v3008
      %v3073 = vpop.xlane.xlu0 %3072
      %v3074 = vsub.f32 %v2770, %v3011
      %v3075 = vsub.f32 %v2773, %v3013
      %v3076 = vsub.f32 %v2776, %v3015
      %v3077 = vsub.f32 %v2779, %v3017
      %v3078 = vsub.f32 %v2782, %v3019
      %v3079 = vsub.f32 %v2785, %v3021
      %v3080 = vsub.f32 %v2788, %v3023
      %v3081 = vsub.f32 %v2791, %v3025
      %v3082 = vsub.f32 %v2794, %v3027
      %v3083 = vsub.f32 %v2797, %v3029
      %v3084 = vsub.f32 %v2800, %v3031
      %v3085 = vsub.f32 %v2803, %v3033
      %v3086 = vsub.f32 %v2806, %v3035
      %v3087 = vsub.f32 %v2809, %v3037
      %v3088 = vsub.f32 %v2812, %v3039
      %v3089 = vsub.f32 %v2815, %v3041
      %v3090 = vsub.f32 %v2963, %v3043
      %v3091 = vsub.f32 %v2966, %v3045
      %v3092 = vsub.f32 %v2969, %v3047
      %v3093 = vsub.f32 %v2972, %v3049
      %v3094 = vsub.f32 %v2975, %v3051
      %v3095 = vsub.f32 %v2978, %v3053
      %v3096 = vsub.f32 %v2981, %v3055
      %v3097 = vsub.f32 %v2984, %v3057
      %v3098 = vsub.f32 %v2987, %v3059
      %v3099 = vsub.f32 %v2990, %v3061
      %v3100 = vsub.f32 %v2993, %v3063
      %v3101 = vsub.f32 %v2996, %v3065
      %v3102 = vsub.f32 %v2999, %v3067
      %v3103 = vsub.f32 %v3002, %v3069
      %v3104 = vsub.f32 %v3005, %v3071
      %v3105 = vsub.f32 %v3008, %v3073
      %v3106 = vmul.f32 %v3074, 1.442695
      %v3107 = vpow.pop %v3106
      %v3108 = vmul.f32 %v3075, 1.442695
      %v3109 = vpow.pop %v3108
      %v3110 = vmul.f32 %v3076, 1.442695
      %v3111 = vpow.pop %v3110
      %v3112 = vmul.f32 %v3077, 1.442695
      %v3113 = vpow.pop %v3112
      %v3114 = vmul.f32 %v3078, 1.442695
      %v3115 = vpow.pop %v3114
      %v3116 = vmul.f32 %v3079, 1.442695
      %v3117 = vpow.pop %v3116
      %v3118 = vmul.f32 %v3080, 1.442695
      %v3119 = vpow.pop %v3118
      %v3120 = vmul.f32 %v3081, 1.442695
      %v3121 = vpow.pop %v3120
      %v3122 = vmul.f32 %v3082, 1.442695
      %v3123 = vpow.pop %v3122
      %v3124 = vmul.f32 %v3083, 1.442695
      %v3125 = vpow.pop %v3124
      %v3126 = vmul.f32 %v3084, 1.442695
      %v3127 = vpow.pop %v3126
      %v3128 = vmul.f32 %v3085, 1.442695
      %v3129 = vpow.pop %v3128
      %v3130 = vmul.f32 %v3086, 1.442695
      %v3131 = vpow.pop %v3130
      %v3132 = vmul.f32 %v3087, 1.442695
      %v3133 = vpow.pop %v3132
      %v3134 = vmul.f32 %v3088, 1.442695
      %v3135 = vpow.pop %v3134
      %v3136 = vmul.f32 %v3089, 1.442695
      %v3137 = vpow.pop %v3136
      %v3138 = vmul.f32 %v3090, 1.442695
      %v3139 = vpow.pop %v3138
      %v3140 = vmul.f32 %v3091, 1.442695
      %v3141 = vpow.pop %v3140
      %v3142 = vmul.f32 %v3092, 1.442695
      %v3143 = vpow.pop %v3142
      %v3144 = vmul.f32 %v3093, 1.442695
      %v3145 = vpow.pop %v3144
      %v3146 = vmul.f32 %v3094, 1.442695
      %v3147 = vpow.pop %v3146
      %v3148 = vmul.f32 %v3095, 1.442695
      %v3149 = vpow.pop %v3148
      %v3150 = vmul.f32 %v3096, 1.442695
      %v3151 = vpow.pop %v3150
      %v3152 = vmul.f32 %v3097, 1.442695
      %v3153 = vpow.pop %v3152
      %v3154 = vmul.f32 %v3098, 1.442695
      %v3155 = vpow.pop %v3154
      %v3156 = vmul.f32 %v3099, 1.442695
      %v3157 = vpow.pop %v3156
      %v3158 = vmul.f32 %v3100, 1.442695
      %v3159 = vpow.pop %v3158
      %v3160 = vmul.f32 %v3101, 1.442695
      %v3161 = vpow.pop %v3160
      %v3162 = vmul.f32 %v3102, 1.442695
      %v3163 = vpow.pop %v3162
      %v3164 = vmul.f32 %v3103, 1.442695
      %v3165 = vpow.pop %v3164
      %v3166 = vmul.f32 %v3104, 1.442695
      %v3167 = vpow.pop %v3166
      %v3168 = vmul.f32 %v3105, 1.442695
      %v3169 = vpow.pop %v3168
      %3170 = vadd.xlane.f32.xlu0 %v3107
      %v3171 = vpop.xlane.xlu0 %3170
      %3172 = vadd.xlane.f32.xlu0 %v3109
      %v3173 = vpop.xlane.xlu0 %3172
      %3174 = vadd.xlane.f32.xlu0 %v3111
      %v3175 = vpop.xlane.xlu0 %3174
      %3176 = vadd.xlane.f32.xlu0 %v3113
      %v3177 = vpop.xlane.xlu0 %3176
      %3178 = vadd.xlane.f32.xlu0 %v3115
      %v3179 = vpop.xlane.xlu0 %3178
      %3180 = vadd.xlane.f32.xlu0 %v3117
      %v3181 = vpop.xlane.xlu0 %3180
      %3182 = vadd.xlane.f32.xlu0 %v3119
      %v3183 = vpop.xlane.xlu0 %3182
      %3184 = vadd.xlane.f32.xlu0 %v3121
      %v3185 = vpop.xlane.xlu0 %3184
      %3186 = vadd.xlane.f32.xlu0 %v3123
      %v3187 = vpop.xlane.xlu0 %3186
      %3188 = vadd.xlane.f32.xlu0 %v3125
      %v3189 = vpop.xlane.xlu0 %3188
      %3190 = vadd.xlane.f32.xlu0 %v3127
      %v3191 = vpop.xlane.xlu0 %3190
      %3192 = vadd.xlane.f32.xlu0 %v3129
      %v3193 = vpop.xlane.xlu0 %3192
      %3194 = vadd.xlane.f32.xlu0 %v3131
      %v3195 = vpop.xlane.xlu0 %3194
      %3196 = vadd.xlane.f32.xlu0 %v3133
      %v3197 = vpop.xlane.xlu0 %3196
      %3198 = vadd.xlane.f32.xlu0 %v3135
      %v3199 = vpop.xlane.xlu0 %3198
      %3200 = vadd.xlane.f32.xlu0 %v3137
      %v3201 = vpop.xlane.xlu0 %3200
      %3202 = vadd.xlane.f32.xlu0 %v3139
      %v3203 = vpop.xlane.xlu0 %3202
      %3204 = vadd.xlane.f32.xlu0 %v3141
      %v3205 = vpop.xlane.xlu0 %3204
      %3206 = vadd.xlane.f32.xlu0 %v3143
      %v3207 = vpop.xlane.xlu0 %3206
      %3208 = vadd.xlane.f32.xlu0 %v3145
      %v3209 = vpop.xlane.xlu0 %3208
      %3210 = vadd.xlane.f32.xlu0 %v3147
      %v3211 = vpop.xlane.xlu0 %3210
      %3212 = vadd.xlane.f32.xlu0 %v3149
      %v3213 = vpop.xlane.xlu0 %3212
      %3214 = vadd.xlane.f32.xlu0 %v3151
      %v3215 = vpop.xlane.xlu0 %3214
      %3216 = vadd.xlane.f32.xlu0 %v3153
      %v3217 = vpop.xlane.xlu0 %3216
      %3218 = vadd.xlane.f32.xlu0 %v3155
      %v3219 = vpop.xlane.xlu0 %3218
      %3220 = vadd.xlane.f32.xlu0 %v3157
      %v3221 = vpop.xlane.xlu0 %3220
      %3222 = vadd.xlane.f32.xlu0 %v3159
      %v3223 = vpop.xlane.xlu0 %3222
      %3224 = vadd.xlane.f32.xlu0 %v3161
      %v3225 = vpop.xlane.xlu0 %3224
      %3226 = vadd.xlane.f32.xlu0 %v3163
      %v3227 = vpop.xlane.xlu0 %3226
      %3228 = vadd.xlane.f32.xlu0 %v3165
      %v3229 = vpop.xlane.xlu0 %3228
      %3230 = vadd.xlane.f32.xlu0 %v3167
      %v3231 = vpop.xlane.xlu0 %3230
      %3232 = vadd.xlane.f32.xlu0 %v3169
      %v3233 = vpop.xlane.xlu0 %3232
      %v3234 = vrcp.pop %v3171
      %v3235 = vrcp.pop %v3173
      %v3236 = vrcp.pop %v3175
      %v3237 = vrcp.pop %v3177
      %v3238 = vrcp.pop %v3179
      %v3239 = vrcp.pop %v3181
      %v3240 = vrcp.pop %v3183
      %v3241 = vrcp.pop %v3185
      %v3242 = vrcp.pop %v3187
      %v3243 = vrcp.pop %v3189
      %v3244 = vrcp.pop %v3191
      %v3245 = vrcp.pop %v3193
      %v3246 = vrcp.pop %v3195
      %v3247 = vrcp.pop %v3197
      %v3248 = vrcp.pop %v3199
      %v3249 = vrcp.pop %v3201
      %v3250 = vrcp.pop %v3203
      %v3251 = vrcp.pop %v3205
      %v3252 = vrcp.pop %v3207
      %v3253 = vrcp.pop %v3209
      %v3254 = vrcp.pop %v3211
      %v3255 = vrcp.pop %v3213
      %v3256 = vrcp.pop %v3215
      %v3257 = vrcp.pop %v3217
      %v3258 = vrcp.pop %v3219
      %v3259 = vrcp.pop %v3221
      %v3260 = vrcp.pop %v3223
      %v3261 = vrcp.pop %v3225
      %v3262 = vrcp.pop %v3227
      %v3263 = vrcp.pop %v3229
      %v3264 = vrcp.pop %v3231
      %v3265 = vrcp.pop %v3233
      %v3266 = vmul.f32 %v3107, %v3234
      %v3267 = vmul.f32 %v3109, %v3235
      %v3268 = vmul.f32 %v3111, %v3236
      %v3269 = vmul.f32 %v3113, %v3237
      %v3270 = vmul.f32 %v3115, %v3238
      %v3271 = vmul.f32 %v3117, %v3239
      %v3272 = vmul.f32 %v3119, %v3240
      %v3273 = vmul.f32 %v3121, %v3241
      %v3274 = vmul.f32 %v3123, %v3242
      %v3275 = vmul.f32 %v3125, %v3243
      %v3276 = vmul.f32 %v3127, %v3244
      %v3277 = vmul.f32 %v3129, %v3245
      %v3278 = vmul.f32 %v3131, %v3246
      %v3279 = vmul.f32 %v3133, %v3247
      %v3280 = vmul.f32 %v3135, %v3248
      %v3281 = vmul.f32 %v3137, %v3249
      %v3282 = vmul.f32 %v3139, %v3250
      %v3283 = vmul.f32 %v3141, %v3251
      %v3284 = vmul.f32 %v3143, %v3252
      %v3285 = vmul.f32 %v3145, %v3253
      %v3286 = vmul.f32 %v3147, %v3254
      %v3287 = vmul.f32 %v3149, %v3255
      %v3288 = vmul.f32 %v3151, %v3256
      %v3289 = vmul.f32 %v3153, %v3257
      %v3290 = vmul.f32 %v3155, %v3258
      %v3291 = vmul.f32 %v3157, %v3259
      %v3292 = vmul.f32 %v3159, %v3260
      %v3293 = vmul.f32 %v3161, %v3261
      %v3294 = vmul.f32 %v3163, %v3262
      %v3295 = vmul.f32 %v3165, %v3263
      %v3296 = vmul.f32 %v3167, %v3264
      %v3297 = vmul.f32 %v3169, %v3265
      %3298 = vrot.lane.b32.xlu0 %v1676, 56
      %v3299 = vpop.permute.xlu0 %3298
      %3300 = vrot.lane.b32.xlu0 %v1678, 56
      %v3301 = vpop.permute.xlu0 %3300
      %3302 = vrot.lane.b32.xlu0 %v1681, 56
      %v3303 = vpop.permute.xlu0 %3302
      %3304 = vrot.lane.b32.xlu0 %v1683, 56
      %v3305 = vpop.permute.xlu0 %3304
      %3306 = vrot.lane.b32.xlu0 %v1686, 56
      %v3307 = vpop.permute.xlu0 %3306
      %3308 = vrot.lane.b32.xlu0 %v1688, 56
      %v3309 = vpop.permute.xlu0 %3308
      %3310 = vrot.lane.b32.xlu0 %v1691, 56
      %v3311 = vpop.permute.xlu0 %3310
      %3312 = vrot.lane.b32.xlu0 %v1693, 56
      %v3313 = vpop.permute.xlu0 %3312
      %3314 = vrot.lane.b32.xlu0 %v1696, 56
      %v3315 = vpop.permute.xlu0 %3314
      %3316 = vrot.lane.b32.xlu0 %v1698, 56
      %v3317 = vpop.permute.xlu0 %3316
      %3318 = vrot.lane.b32.xlu0 %v1701, 56
      %v3319 = vpop.permute.xlu0 %3318
      %3320 = vrot.lane.b32.xlu0 %v1703, 56
      %v3321 = vpop.permute.xlu0 %3320
      %3322 = vrot.lane.b32.xlu0 %v1706, 56
      %v3323 = vpop.permute.xlu0 %3322
      %3324 = vrot.lane.b32.xlu0 %v1708, 56
      %v3325 = vpop.permute.xlu0 %3324
      %3326 = vrot.lane.b32.xlu0 %v1711, 56
      %v3327 = vpop.permute.xlu0 %3326
      %3328 = vrot.lane.b32.xlu0 %v1713, 56
      %v3329 = vpop.permute.xlu0 %3328
      %3346 = vmatpush.msra.mxu0 %v3329
      %3347 = vmatpush.msra.mxu0 %v3327
      %3348 = vmatpush.msra.mxu0 %v3325
      %3349 = vmatpush.msra.mxu0 %v3323
      %3350 = vmatpush.msra.mxu0 %v3321
      %3351 = vmatpush.msra.mxu0 %v3319
      %3352 = vmatpush.msra.mxu0 %v3317
      %3353 = vmatpush.msra.mxu0 %v3315
      %3354 = vmatpush.msra.mxu0 %v3313
      %3355 = vmatpush.msra.mxu0 %v3311
      %3356 = vmatpush.msra.mxu0 %v3309
      %3357 = vmatpush.msra.mxu0 %v3307
      %3358 = vmatpush.msra.mxu0 %v3305
      %3359 = vmatpush.msra.mxu0 %v3303
      %3360 = vmatpush.msra.mxu0 %v3301
      %3361 = vmatpush.msra.mxu0 %v3299
      %3362 = vmatmul.f32.gmra.mxu0 %v3266
      %v3363 = vpop.f32.mrf.mxu0
      %v3364 = vadd.f32 0.0, %v3363
      %3365 = vmatmul.f32.gmra.mxu0 %v3267
      %v3366 = vpop.f32.mrf.mxu0
      %v3367 = vadd.f32 0.0, %v3366
      %3368 = vmatmul.f32.gmra.mxu0 %v3268
      %v3369 = vpop.f32.mrf.mxu0
      %v3370 = vadd.f32 0.0, %v3369
      %3371 = vmatmul.f32.gmra.mxu0 %v3269
      %v3372 = vpop.f32.mrf.mxu0
      %v3373 = vadd.f32 0.0, %v3372
      %3374 = vmatmul.f32.gmra.mxu0 %v3270
      %v3375 = vpop.f32.mrf.mxu0
      %v3376 = vadd.f32 0.0, %v3375
      %3377 = vmatmul.f32.gmra.mxu0 %v3271
      %v3378 = vpop.f32.mrf.mxu0
      %v3379 = vadd.f32 0.0, %v3378
      %3380 = vmatmul.f32.gmra.mxu0 %v3272
      %v3381 = vpop.f32.mrf.mxu0
      %v3382 = vadd.f32 0.0, %v3381
      %3383 = vmatmul.f32.gmra.mxu0 %v3273
      %v3384 = vpop.f32.mrf.mxu0
      %v3385 = vadd.f32 0.0, %v3384
      %3386 = vmatmul.f32.gmra.mxu0 %v3274
      %v3387 = vpop.f32.mrf.mxu0
      %v3388 = vadd.f32 0.0, %v3387
      %3389 = vmatmul.f32.gmra.mxu0 %v3275
      %v3390 = vpop.f32.mrf.mxu0
      %v3391 = vadd.f32 0.0, %v3390
      %3392 = vmatmul.f32.gmra.mxu0 %v3276
      %v3393 = vpop.f32.mrf.mxu0
      %v3394 = vadd.f32 0.0, %v3393
      %3395 = vmatmul.f32.gmra.mxu0 %v3277
      %v3396 = vpop.f32.mrf.mxu0
      %v3397 = vadd.f32 0.0, %v3396
      %3398 = vmatmul.f32.gmra.mxu0 %v3278
      %v3399 = vpop.f32.mrf.mxu0
      %v3400 = vadd.f32 0.0, %v3399
      %3401 = vmatmul.f32.gmra.mxu0 %v3279
      %v3402 = vpop.f32.mrf.mxu0
      %v3403 = vadd.f32 0.0, %v3402
      %3404 = vmatmul.f32.gmra.mxu0 %v3280
      %v3405 = vpop.f32.mrf.mxu0
      %v3406 = vadd.f32 0.0, %v3405
      %3407 = vmatmul.f32.gmra.mxu0 %v3281
      %v3408 = vpop.f32.mrf.mxu0
      %v3409 = vadd.f32 0.0, %v3408
      %3410 = vdwg.mxu0
      %3411 = vrot.lane.b32.xlu0 %v1716, 56
      %v3412 = vpop.permute.xlu0 %3411
      %3413 = vrot.lane.b32.xlu0 %v1718, 56
      %v3414 = vpop.permute.xlu0 %3413
      %3415 = vrot.lane.b32.xlu0 %v1721, 56
      %v3416 = vpop.permute.xlu0 %3415
      %3417 = vrot.lane.b32.xlu0 %v1723, 56
      %v3418 = vpop.permute.xlu0 %3417
      %3419 = vrot.lane.b32.xlu0 %v1726, 56
      %v3420 = vpop.permute.xlu0 %3419
      %3421 = vrot.lane.b32.xlu0 %v1728, 56
      %v3422 = vpop.permute.xlu0 %3421
      %3423 = vrot.lane.b32.xlu0 %v1731, 56
      %v3424 = vpop.permute.xlu0 %3423
      %3425 = vrot.lane.b32.xlu0 %v1733, 56
      %v3426 = vpop.permute.xlu0 %3425
      %3427 = vrot.lane.b32.xlu0 %v1736, 56
      %v3428 = vpop.permute.xlu0 %3427
      %3429 = vrot.lane.b32.xlu0 %v1738, 56
      %v3430 = vpop.permute.xlu0 %3429
      %3431 = vrot.lane.b32.xlu0 %v1741, 56
      %v3432 = vpop.permute.xlu0 %3431
      %3433 = vrot.lane.b32.xlu0 %v1743, 56
      %v3434 = vpop.permute.xlu0 %3433
      %3435 = vrot.lane.b32.xlu0 %v1746, 56
      %v3436 = vpop.permute.xlu0 %3435
      %3437 = vrot.lane.b32.xlu0 %v1748, 56
      %v3438 = vpop.permute.xlu0 %3437
      %3439 = vrot.lane.b32.xlu0 %v1751, 56
      %v3440 = vpop.permute.xlu0 %3439
      %3441 = vrot.lane.b32.xlu0 %v1753, 56
      %v3442 = vpop.permute.xlu0 %3441
      %3459 = vmatpush.msra.mxu0 %v3442
      %3460 = vmatpush.msra.mxu0 %v3440
      %3461 = vmatpush.msra.mxu0 %v3438
      %3462 = vmatpush.msra.mxu0 %v3436
      %3463 = vmatpush.msra.mxu0 %v3434
      %3464 = vmatpush.msra.mxu0 %v3432
      %3465 = vmatpush.msra.mxu0 %v3430
      %3466 = vmatpush.msra.mxu0 %v3428
      %3467 = vmatpush.msra.mxu0 %v3426
      %3468 = vmatpush.msra.mxu0 %v3424
      %3469 = vmatpush.msra.mxu0 %v3422
      %3470 = vmatpush.msra.mxu0 %v3420
      %3471 = vmatpush.msra.mxu0 %v3418
      %3472 = vmatpush.msra.mxu0 %v3416
      %3473 = vmatpush.msra.mxu0 %v3414
      %3474 = vmatpush.msra.mxu0 %v3412
      %3475 = vmatmul.f32.gmra.mxu0 %v3282
      %v3476 = vpop.f32.mrf.mxu0
      %v3477 = vadd.f32 0.0, %v3476
      %3478 = vmatmul.f32.gmra.mxu0 %v3283
      %v3479 = vpop.f32.mrf.mxu0
      %v3480 = vadd.f32 0.0, %v3479
      %3481 = vmatmul.f32.gmra.mxu0 %v3284
      %v3482 = vpop.f32.mrf.mxu0
      %v3483 = vadd.f32 0.0, %v3482
      %3484 = vmatmul.f32.gmra.mxu0 %v3285
      %v3485 = vpop.f32.mrf.mxu0
      %v3486 = vadd.f32 0.0, %v3485
      %3487 = vmatmul.f32.gmra.mxu0 %v3286
      %v3488 = vpop.f32.mrf.mxu0
      %v3489 = vadd.f32 0.0, %v3488
      %3490 = vmatmul.f32.gmra.mxu0 %v3287
      %v3491 = vpop.f32.mrf.mxu0
      %v3492 = vadd.f32 0.0, %v3491
      %3493 = vmatmul.f32.gmra.mxu0 %v3288
      %v3494 = vpop.f32.mrf.mxu0
      %v3495 = vadd.f32 0.0, %v3494
      %3496 = vmatmul.f32.gmra.mxu0 %v3289
      %v3497 = vpop.f32.mrf.mxu0
      %v3498 = vadd.f32 0.0, %v3497
      %3499 = vmatmul.f32.gmra.mxu0 %v3290
      %v3500 = vpop.f32.mrf.mxu0
      %v3501 = vadd.f32 0.0, %v3500
      %3502 = vmatmul.f32.gmra.mxu0 %v3291
      %v3503 = vpop.f32.mrf.mxu0
      %v3504 = vadd.f32 0.0, %v3503
      %3505 = vmatmul.f32.gmra.mxu0 %v3292
      %v3506 = vpop.f32.mrf.mxu0
      %v3507 = vadd.f32 0.0, %v3506
      %3508 = vmatmul.f32.gmra.mxu0 %v3293
      %v3509 = vpop.f32.mrf.mxu0
      %v3510 = vadd.f32 0.0, %v3509
      %3511 = vmatmul.f32.gmra.mxu0 %v3294
      %v3512 = vpop.f32.mrf.mxu0
      %v3513 = vadd.f32 0.0, %v3512
      %3514 = vmatmul.f32.gmra.mxu0 %v3295
      %v3515 = vpop.f32.mrf.mxu0
      %v3516 = vadd.f32 0.0, %v3515
      %3517 = vmatmul.f32.gmra.mxu0 %v3296
      %v3518 = vpop.f32.mrf.mxu0
      %v3519 = vadd.f32 0.0, %v3518
      %3520 = vmatmul.f32.gmra.mxu0 %v3297
      %v3521 = vpop.f32.mrf.mxu0
      %v3522 = vadd.f32 0.0, %v3521
      %3523 = vdwg.mxu0
      %3524 = vrot.lane.b32.xlu0 %v1676, 112
      %v3525 = vpop.permute.xlu0 %3524
      %3526 = vrot.lane.b32.xlu0 %v1678, 112
      %v3527 = vpop.permute.xlu0 %3526
      %3528 = vrot.lane.b32.xlu0 %v1681, 112
      %v3529 = vpop.permute.xlu0 %3528
      %3530 = vrot.lane.b32.xlu0 %v1683, 112
      %v3531 = vpop.permute.xlu0 %3530
      %3532 = vrot.lane.b32.xlu0 %v1686, 112
      %v3533 = vpop.permute.xlu0 %3532
      %3534 = vrot.lane.b32.xlu0 %v1688, 112
      %v3535 = vpop.permute.xlu0 %3534
      %3536 = vrot.lane.b32.xlu0 %v1691, 112
      %v3537 = vpop.permute.xlu0 %3536
      %3538 = vrot.lane.b32.xlu0 %v1693, 112
      %v3539 = vpop.permute.xlu0 %3538
      %3540 = vrot.lane.b32.xlu0 %v1696, 112
      %v3541 = vpop.permute.xlu0 %3540
      %3542 = vrot.lane.b32.xlu0 %v1698, 112
      %v3543 = vpop.permute.xlu0 %3542
      %3544 = vrot.lane.b32.xlu0 %v1701, 112
      %v3545 = vpop.permute.xlu0 %3544
      %3546 = vrot.lane.b32.xlu0 %v1703, 112
      %v3547 = vpop.permute.xlu0 %3546
      %3548 = vrot.lane.b32.xlu0 %v1706, 112
      %v3549 = vpop.permute.xlu0 %3548
      %3550 = vrot.lane.b32.xlu0 %v1708, 112
      %v3551 = vpop.permute.xlu0 %3550
      %3552 = vrot.lane.b32.xlu0 %v1711, 112
      %v3553 = vpop.permute.xlu0 %3552
      %3554 = vrot.lane.b32.xlu0 %v1713, 112
      %v3555 = vpop.permute.xlu0 %3554
      %3556 = vrot.lane.b32.xlu0 %v1676, 80
      %v3557 = vpop.permute.xlu0 %3556
      %3558 = vrot.lane.b32.xlu0 %v1678, 80
      %v3559 = vpop.permute.xlu0 %3558
      %3560 = vrot.lane.b32.xlu0 %v1681, 80
      %v3561 = vpop.permute.xlu0 %3560
      %3562 = vrot.lane.b32.xlu0 %v1683, 80
      %v3563 = vpop.permute.xlu0 %3562
      %3564 = vrot.lane.b32.xlu0 %v1686, 80
      %v3565 = vpop.permute.xlu0 %3564
      %3566 = vrot.lane.b32.xlu0 %v1688, 80
      %v3567 = vpop.permute.xlu0 %3566
      %3568 = vrot.lane.b32.xlu0 %v1691, 80
      %v3569 = vpop.permute.xlu0 %3568
      %3570 = vrot.lane.b32.xlu0 %v1693, 80
      %v3571 = vpop.permute.xlu0 %3570
      %3572 = vrot.lane.b32.xlu0 %v1696, 80
      %v3573 = vpop.permute.xlu0 %3572
      %3574 = vrot.lane.b32.xlu0 %v1698, 80
      %v3575 = vpop.permute.xlu0 %3574
      %3576 = vrot.lane.b32.xlu0 %v1701, 80
      %v3577 = vpop.permute.xlu0 %3576
      %3578 = vrot.lane.b32.xlu0 %v1703, 80
      %v3579 = vpop.permute.xlu0 %3578
      %3580 = vrot.lane.b32.xlu0 %v1706, 80
      %v3581 = vpop.permute.xlu0 %3580
      %3582 = vrot.lane.b32.xlu0 %v1708, 80
      %v3583 = vpop.permute.xlu0 %3582
      %3584 = vrot.lane.b32.xlu0 %v1711, 80
      %v3585 = vpop.permute.xlu0 %3584
      %3586 = vrot.lane.b32.xlu0 %v1713, 80
      %v3587 = vpop.permute.xlu0 %3586
      %v3588 = vsel %vm1803, %v3525, 0
      %v3590 = vsel %vm1803, %v3527, 0
      %v3592 = vsel %vm1803, %v3529, 0
      %v3594 = vsel %vm1803, %v3531, 0
      %v3596 = vsel %vm1803, %v3533, 0
      %v3598 = vsel %vm1803, %v3535, 0
      %v3600 = vsel %vm1803, %v3537, 0
      %v3602 = vsel %vm1803, %v3539, 0
      %v3604 = vsel %vm1803, %v3541, 0
      %v3606 = vsel %vm1803, %v3543, 0
      %v3608 = vsel %vm1803, %v3545, 0
      %v3610 = vsel %vm1803, %v3547, 0
      %v3612 = vsel %vm1803, %v3549, 0
      %v3614 = vsel %vm1803, %v3551, 0
      %v3616 = vsel %vm1803, %v3553, 0
      %v3618 = vsel %vm1803, %v3555, 0
      %v3620 = vsel %vm1803, %v3557, 0
      %v3622 = vsel %vm1803, %v3559, 0
      %v3624 = vsel %vm1803, %v3561, 0
      %v3626 = vsel %vm1803, %v3563, 0
      %v3628 = vsel %vm1803, %v3565, 0
      %v3630 = vsel %vm1803, %v3567, 0
      %v3632 = vsel %vm1803, %v3569, 0
      %v3634 = vsel %vm1803, %v3571, 0
      %v3636 = vsel %vm1803, %v3573, 0
      %v3638 = vsel %vm1803, %v3575, 0
      %v3640 = vsel %vm1803, %v3577, 0
      %v3642 = vsel %vm1803, %v3579, 0
      %v3644 = vsel %vm1803, %v3581, 0
      %v3646 = vsel %vm1803, %v3583, 0
      %v3648 = vsel %vm1803, %v3585, 0
      %v3650 = vsel %vm1803, %v3587, 0
      %3652 = vmatpush.xpose.msra.mxu0 %v3650
      %3653 = vmatpush.xpose.msra.mxu0 %v3648
      %3654 = vmatpush.xpose.msra.mxu0 %v3646
      %3655 = vmatpush.xpose.msra.mxu0 %v3644
      %3656 = vmatpush.xpose.msra.mxu0 %v3642
      %3657 = vmatpush.xpose.msra.mxu0 %v3640
      %3658 = vmatpush.xpose.msra.mxu0 %v3638
      %3659 = vmatpush.xpose.msra.mxu0 %v3636
      %3660 = vmatpush.xpose.msra.mxu0 %v3634
      %3661 = vmatpush.xpose.msra.mxu0 %v3632
      %3662 = vmatpush.xpose.msra.mxu0 %v3630
      %3663 = vmatpush.xpose.msra.mxu0 %v3628
      %3664 = vmatpush.xpose.msra.mxu0 %v3626
      %3665 = vmatpush.xpose.msra.mxu0 %v3624
      %3666 = vmatpush.xpose.msra.mxu0 %v3622
      %3667 = vmatpush.xpose.msra.mxu0 %v3620
      %3668 = vmatmul.f32.gmra.mxu0 %v3588
      %v3669 = vpop.f32.mrf.mxu0
      %v3670 = vadd.f32 %v750, %v3669
      %3671 = vmatmul.f32.gmra.mxu0 %v3590
      %v3672 = vpop.f32.mrf.mxu0
      %v3673 = vadd.f32 %v751, %v3672
      %3674 = vmatmul.f32.gmra.mxu0 %v3592
      %v3675 = vpop.f32.mrf.mxu0
      %v3676 = vadd.f32 %v752, %v3675
      %3677 = vmatmul.f32.gmra.mxu0 %v3594
      %v3678 = vpop.f32.mrf.mxu0
      %v3679 = vadd.f32 %v753, %v3678
      %3680 = vmatmul.f32.gmra.mxu0 %v3596
      %v3681 = vpop.f32.mrf.mxu0
      %v3682 = vadd.f32 %v754, %v3681
      %3683 = vmatmul.f32.gmra.mxu0 %v3598
      %v3684 = vpop.f32.mrf.mxu0
      %v3685 = vadd.f32 %v755, %v3684
      %3686 = vmatmul.f32.gmra.mxu0 %v3600
      %v3687 = vpop.f32.mrf.mxu0
      %v3688 = vadd.f32 %v756, %v3687
      %3689 = vmatmul.f32.gmra.mxu0 %v3602
      %v3690 = vpop.f32.mrf.mxu0
      %v3691 = vadd.f32 %v757, %v3690
      %3692 = vmatmul.f32.gmra.mxu0 %v3604
      %v3693 = vpop.f32.mrf.mxu0
      %v3694 = vadd.f32 %v758, %v3693
      %3695 = vmatmul.f32.gmra.mxu0 %v3606
      %v3696 = vpop.f32.mrf.mxu0
      %v3697 = vadd.f32 %v759, %v3696
      %3698 = vmatmul.f32.gmra.mxu0 %v3608
      %v3699 = vpop.f32.mrf.mxu0
      %v3700 = vadd.f32 %v760, %v3699
      %3701 = vmatmul.f32.gmra.mxu0 %v3610
      %v3702 = vpop.f32.mrf.mxu0
      %v3703 = vadd.f32 %v761, %v3702
      %3704 = vmatmul.f32.gmra.mxu0 %v3612
      %v3705 = vpop.f32.mrf.mxu0
      %v3706 = vadd.f32 %v762, %v3705
      %3707 = vmatmul.f32.gmra.mxu0 %v3614
      %v3708 = vpop.f32.mrf.mxu0
      %v3709 = vadd.f32 %v763, %v3708
      %3710 = vmatmul.f32.gmra.mxu0 %v3616
      %v3711 = vpop.f32.mrf.mxu0
      %v3712 = vadd.f32 %v764, %v3711
      %3713 = vmatmul.f32.gmra.mxu0 %v3618
      %v3714 = vpop.f32.mrf.mxu0
      %v3715 = vadd.f32 %v765, %v3714
      %3716 = vdwg.mxu0
      %3717 = vrot.lane.b32.xlu0 %v1716, 112
      %v3718 = vpop.permute.xlu0 %3717
      %3719 = vrot.lane.b32.xlu0 %v1718, 112
      %v3720 = vpop.permute.xlu0 %3719
      %3721 = vrot.lane.b32.xlu0 %v1721, 112
      %v3722 = vpop.permute.xlu0 %3721
      %3723 = vrot.lane.b32.xlu0 %v1723, 112
      %v3724 = vpop.permute.xlu0 %3723
      %3725 = vrot.lane.b32.xlu0 %v1726, 112
      %v3726 = vpop.permute.xlu0 %3725
      %3727 = vrot.lane.b32.xlu0 %v1728, 112
      %v3728 = vpop.permute.xlu0 %3727
      %3729 = vrot.lane.b32.xlu0 %v1731, 112
      %v3730 = vpop.permute.xlu0 %3729
      %3731 = vrot.lane.b32.xlu0 %v1733, 112
      %v3732 = vpop.permute.xlu0 %3731
      %3733 = vrot.lane.b32.xlu0 %v1736, 112
      %v3734 = vpop.permute.xlu0 %3733
      %3735 = vrot.lane.b32.xlu0 %v1738, 112
      %v3736 = vpop.permute.xlu0 %3735
      %3737 = vrot.lane.b32.xlu0 %v1741, 112
      %v3738 = vpop.permute.xlu0 %3737
      %3739 = vrot.lane.b32.xlu0 %v1743, 112
      %v3740 = vpop.permute.xlu0 %3739
      %3741 = vrot.lane.b32.xlu0 %v1746, 112
      %v3742 = vpop.permute.xlu0 %3741
      %3743 = vrot.lane.b32.xlu0 %v1748, 112
      %v3744 = vpop.permute.xlu0 %3743
      %3745 = vrot.lane.b32.xlu0 %v1751, 112
      %v3746 = vpop.permute.xlu0 %3745
      %3747 = vrot.lane.b32.xlu0 %v1753, 112
      %v3748 = vpop.permute.xlu0 %3747
      %3749 = vrot.lane.b32.xlu0 %v1716, 80
      %v3750 = vpop.permute.xlu0 %3749
      %3751 = vrot.lane.b32.xlu0 %v1718, 80
      %v3752 = vpop.permute.xlu0 %3751
      %3753 = vrot.lane.b32.xlu0 %v1721, 80
      %v3754 = vpop.permute.xlu0 %3753
      %3755 = vrot.lane.b32.xlu0 %v1723, 80
      %v3756 = vpop.permute.xlu0 %3755
      %3757 = vrot.lane.b32.xlu0 %v1726, 80
      %v3758 = vpop.permute.xlu0 %3757
      %3759 = vrot.lane.b32.xlu0 %v1728, 80
      %v3760 = vpop.permute.xlu0 %3759
      %3761 = vrot.lane.b32.xlu0 %v1731, 80
      %v3762 = vpop.permute.xlu0 %3761
      %3763 = vrot.lane.b32.xlu0 %v1733, 80
      %v3764 = vpop.permute.xlu0 %3763
      %3765 = vrot.lane.b32.xlu0 %v1736, 80
      %v3766 = vpop.permute.xlu0 %3765
      %3767 = vrot.lane.b32.xlu0 %v1738, 80
      %v3768 = vpop.permute.xlu0 %3767
      %3769 = vrot.lane.b32.xlu0 %v1741, 80
      %v3770 = vpop.permute.xlu0 %3769
      %3771 = vrot.lane.b32.xlu0 %v1743, 80
      %v3772 = vpop.permute.xlu0 %3771
      %3773 = vrot.lane.b32.xlu0 %v1746, 80
      %v3774 = vpop.permute.xlu0 %3773
      %3775 = vrot.lane.b32.xlu0 %v1748, 80
      %v3776 = vpop.permute.xlu0 %3775
      %3777 = vrot.lane.b32.xlu0 %v1751, 80
      %v3778 = vpop.permute.xlu0 %3777
      %3779 = vrot.lane.b32.xlu0 %v1753, 80
      %v3780 = vpop.permute.xlu0 %3779
      %v3781 = vsel %vm1803, %v3718, 0
      %v3783 = vsel %vm1803, %v3720, 0
      %v3785 = vsel %vm1803, %v3722, 0
      %v3787 = vsel %vm1803, %v3724, 0
      %v3789 = vsel %vm1803, %v3726, 0
      %v3791 = vsel %vm1803, %v3728, 0
      %v3793 = vsel %vm1803, %v3730, 0
      %v3795 = vsel %vm1803, %v3732, 0
      %v3797 = vsel %vm1803, %v3734, 0
      %v3799 = vsel %vm1803, %v3736, 0
      %v3801 = vsel %vm1803, %v3738, 0
      %v3803 = vsel %vm1803, %v3740, 0
      %v3805 = vsel %vm1803, %v3742, 0
      %v3807 = vsel %vm1803, %v3744, 0
      %v3809 = vsel %vm1803, %v3746, 0
      %v3811 = vsel %vm1803, %v3748, 0
      %v3813 = vsel %vm1803, %v3750, 0
      %v3815 = vsel %vm1803, %v3752, 0
      %v3817 = vsel %vm1803, %v3754, 0
      %v3819 = vsel %vm1803, %v3756, 0
      %v3821 = vsel %vm1803, %v3758, 0
      %v3823 = vsel %vm1803, %v3760, 0
      %v3825 = vsel %vm1803, %v3762, 0
      %v3827 = vsel %vm1803, %v3764, 0
      %v3829 = vsel %vm1803, %v3766, 0
      %v3831 = vsel %vm1803, %v3768, 0
      %v3833 = vsel %vm1803, %v3770, 0
      %v3835 = vsel %vm1803, %v3772, 0
      %v3837 = vsel %vm1803, %v3774, 0
      %v3839 = vsel %vm1803, %v3776, 0
      %v3841 = vsel %vm1803, %v3778, 0
      %v3843 = vsel %vm1803, %v3780, 0
      %3845 = vmatpush.xpose.msra.mxu0 %v3843
      %3846 = vmatpush.xpose.msra.mxu0 %v3841
      %3847 = vmatpush.xpose.msra.mxu0 %v3839
      %3848 = vmatpush.xpose.msra.mxu0 %v3837
      %3849 = vmatpush.xpose.msra.mxu0 %v3835
      %3850 = vmatpush.xpose.msra.mxu0 %v3833
      %3851 = vmatpush.xpose.msra.mxu0 %v3831
      %3852 = vmatpush.xpose.msra.mxu0 %v3829
      %3853 = vmatpush.xpose.msra.mxu0 %v3827
      %3854 = vmatpush.xpose.msra.mxu0 %v3825
      %3855 = vmatpush.xpose.msra.mxu0 %v3823
      %3856 = vmatpush.xpose.msra.mxu0 %v3821
      %3857 = vmatpush.xpose.msra.mxu0 %v3819
      %3858 = vmatpush.xpose.msra.mxu0 %v3817
      %3859 = vmatpush.xpose.msra.mxu0 %v3815
      %3860 = vmatpush.xpose.msra.mxu0 %v3813
      %3861 = vmatmul.f32.gmra.mxu0 %v3781
      %v3862 = vpop.f32.mrf.mxu0
      %v3863 = vadd.f32 %v750, %v3862
      %3864 = vmatmul.f32.gmra.mxu0 %v3783
      %v3865 = vpop.f32.mrf.mxu0
      %v3866 = vadd.f32 %v751, %v3865
      %3867 = vmatmul.f32.gmra.mxu0 %v3785
      %v3868 = vpop.f32.mrf.mxu0
      %v3869 = vadd.f32 %v752, %v3868
      %3870 = vmatmul.f32.gmra.mxu0 %v3787
      %v3871 = vpop.f32.mrf.mxu0
      %v3872 = vadd.f32 %v753, %v3871
      %3873 = vmatmul.f32.gmra.mxu0 %v3789
      %v3874 = vpop.f32.mrf.mxu0
      %v3875 = vadd.f32 %v754, %v3874
      %3876 = vmatmul.f32.gmra.mxu0 %v3791
      %v3877 = vpop.f32.mrf.mxu0
      %v3878 = vadd.f32 %v755, %v3877
      %3879 = vmatmul.f32.gmra.mxu0 %v3793
      %v3880 = vpop.f32.mrf.mxu0
      %v3881 = vadd.f32 %v756, %v3880
      %3882 = vmatmul.f32.gmra.mxu0 %v3795
      %v3883 = vpop.f32.mrf.mxu0
      %v3884 = vadd.f32 %v757, %v3883
      %3885 = vmatmul.f32.gmra.mxu0 %v3797
      %v3886 = vpop.f32.mrf.mxu0
      %v3887 = vadd.f32 %v758, %v3886
      %3888 = vmatmul.f32.gmra.mxu0 %v3799
      %v3889 = vpop.f32.mrf.mxu0
      %v3890 = vadd.f32 %v759, %v3889
      %3891 = vmatmul.f32.gmra.mxu0 %v3801
      %v3892 = vpop.f32.mrf.mxu0
      %v3893 = vadd.f32 %v760, %v3892
      %3894 = vmatmul.f32.gmra.mxu0 %v3803
      %v3895 = vpop.f32.mrf.mxu0
      %v3896 = vadd.f32 %v761, %v3895
      %3897 = vmatmul.f32.gmra.mxu0 %v3805
      %v3898 = vpop.f32.mrf.mxu0
      %v3899 = vadd.f32 %v762, %v3898
      %3900 = vmatmul.f32.gmra.mxu0 %v3807
      %v3901 = vpop.f32.mrf.mxu0
      %v3902 = vadd.f32 %v763, %v3901
      %3903 = vmatmul.f32.gmra.mxu0 %v3809
      %v3904 = vpop.f32.mrf.mxu0
      %v3905 = vadd.f32 %v764, %v3904
      %3906 = vmatmul.f32.gmra.mxu0 %v3811
      %v3907 = vpop.f32.mrf.mxu0
      %v3908 = vadd.f32 %v765, %v3907
      %3909 = vdwg.mxu0
      %3910 = vmax.xlane.f32.xlu0 %v3670
      %v3911 = vpop.xlane.xlu0 %3910
      %3912 = vmax.xlane.f32.xlu0 %v3673
      %v3913 = vpop.xlane.xlu0 %3912
      %3914 = vmax.xlane.f32.xlu0 %v3676
      %v3915 = vpop.xlane.xlu0 %3914
      %3916 = vmax.xlane.f32.xlu0 %v3679
      %v3917 = vpop.xlane.xlu0 %3916
      %3918 = vmax.xlane.f32.xlu0 %v3682
      %v3919 = vpop.xlane.xlu0 %3918
      %3920 = vmax.xlane.f32.xlu0 %v3685
      %v3921 = vpop.xlane.xlu0 %3920
      %3922 = vmax.xlane.f32.xlu0 %v3688
      %v3923 = vpop.xlane.xlu0 %3922
      %3924 = vmax.xlane.f32.xlu0 %v3691
      %v3925 = vpop.xlane.xlu0 %3924
      %3926 = vmax.xlane.f32.xlu0 %v3694
      %v3927 = vpop.xlane.xlu0 %3926
      %3928 = vmax.xlane.f32.xlu0 %v3697
      %v3929 = vpop.xlane.xlu0 %3928
      %3930 = vmax.xlane.f32.xlu0 %v3700
      %v3931 = vpop.xlane.xlu0 %3930
      %3932 = vmax.xlane.f32.xlu0 %v3703
      %v3933 = vpop.xlane.xlu0 %3932
      %3934 = vmax.xlane.f32.xlu0 %v3706
      %v3935 = vpop.xlane.xlu0 %3934
      %3936 = vmax.xlane.f32.xlu0 %v3709
      %v3937 = vpop.xlane.xlu0 %3936
      %3938 = vmax.xlane.f32.xlu0 %v3712
      %v3939 = vpop.xlane.xlu0 %3938
      %3940 = vmax.xlane.f32.xlu0 %v3715
      %v3941 = vpop.xlane.xlu0 %3940
      %3942 = vmax.xlane.f32.xlu0 %v3863
      %v3943 = vpop.xlane.xlu0 %3942
      %3944 = vmax.xlane.f32.xlu0 %v3866
      %v3945 = vpop.xlane.xlu0 %3944
      %3946 = vmax.xlane.f32.xlu0 %v3869
      %v3947 = vpop.xlane.xlu0 %3946
      %3948 = vmax.xlane.f32.xlu0 %v3872
      %v3949 = vpop.xlane.xlu0 %3948
      %3950 = vmax.xlane.f32.xlu0 %v3875
      %v3951 = vpop.xlane.xlu0 %3950
      %3952 = vmax.xlane.f32.xlu0 %v3878
      %v3953 = vpop.xlane.xlu0 %3952
      %3954 = vmax.xlane.f32.xlu0 %v3881
      %v3955 = vpop.xlane.xlu0 %3954
      %3956 = vmax.xlane.f32.xlu0 %v3884
      %v3957 = vpop.xlane.xlu0 %3956
      %3958 = vmax.xlane.f32.xlu0 %v3887
      %v3959 = vpop.xlane.xlu0 %3958
      %3960 = vmax.xlane.f32.xlu0 %v3890
      %v3961 = vpop.xlane.xlu0 %3960
      %3962 = vmax.xlane.f32.xlu0 %v3893
      %v3963 = vpop.xlane.xlu0 %3962
      %3964 = vmax.xlane.f32.xlu0 %v3896
      %v3965 = vpop.xlane.xlu0 %3964
      %3966 = vmax.xlane.f32.xlu0 %v3899
      %v3967 = vpop.xlane.xlu0 %3966
      %3968 = vmax.xlane.f32.xlu0 %v3902
      %v3969 = vpop.xlane.xlu0 %3968
      %3970 = vmax.xlane.f32.xlu0 %v3905
      %v3971 = vpop.xlane.xlu0 %3970
      %3972 = vmax.xlane.f32.xlu0 %v3908
      %v3973 = vpop.xlane.xlu0 %3972
      %v3974 = vsub.f32 %v3670, %v3911
      %v3975 = vsub.f32 %v3673, %v3913
      %v3976 = vsub.f32 %v3676, %v3915
      %v3977 = vsub.f32 %v3679, %v3917
      %v3978 = vsub.f32 %v3682, %v3919
      %v3979 = vsub.f32 %v3685, %v3921
      %v3980 = vsub.f32 %v3688, %v3923
      %v3981 = vsub.f32 %v3691, %v3925
      %v3982 = vsub.f32 %v3694, %v3927
      %v3983 = vsub.f32 %v3697, %v3929
      %v3984 = vsub.f32 %v3700, %v3931
      %v3985 = vsub.f32 %v3703, %v3933
      %v3986 = vsub.f32 %v3706, %v3935
      %v3987 = vsub.f32 %v3709, %v3937
      %v3988 = vsub.f32 %v3712, %v3939
      %v3989 = vsub.f32 %v3715, %v3941
      %v3990 = vsub.f32 %v3863, %v3943
      %v3991 = vsub.f32 %v3866, %v3945
      %v3992 = vsub.f32 %v3869, %v3947
      %v3993 = vsub.f32 %v3872, %v3949
      %v3994 = vsub.f32 %v3875, %v3951
      %v3995 = vsub.f32 %v3878, %v3953
      %v3996 = vsub.f32 %v3881, %v3955
      %v3997 = vsub.f32 %v3884, %v3957
      %v3998 = vsub.f32 %v3887, %v3959
      %v3999 = vsub.f32 %v3890, %v3961
      %v4000 = vsub.f32 %v3893, %v3963
      %v4001 = vsub.f32 %v3896, %v3965
      %v4002 = vsub.f32 %v3899, %v3967
      %v4003 = vsub.f32 %v3902, %v3969
      %v4004 = vsub.f32 %v3905, %v3971
      %v4005 = vsub.f32 %v3908, %v3973
      %v4006 = vmul.f32 %v3974, 1.442695
      %v4007 = vpow.pop %v4006
      %v4008 = vmul.f32 %v3975, 1.442695
      %v4009 = vpow.pop %v4008
      %v4010 = vmul.f32 %v3976, 1.442695
      %v4011 = vpow.pop %v4010
      %v4012 = vmul.f32 %v3977, 1.442695
      %v4013 = vpow.pop %v4012
      %v4014 = vmul.f32 %v3978, 1.442695
      %v4015 = vpow.pop %v4014
      %v4016 = vmul.f32 %v3979, 1.442695
      %v4017 = vpow.pop %v4016
      %v4018 = vmul.f32 %v3980, 1.442695
      %v4019 = vpow.pop %v4018
      %v4020 = vmul.f32 %v3981, 1.442695
      %v4021 = vpow.pop %v4020
      %v4022 = vmul.f32 %v3982, 1.442695
      %v4023 = vpow.pop %v4022
      %v4024 = vmul.f32 %v3983, 1.442695
      %v4025 = vpow.pop %v4024
      %v4026 = vmul.f32 %v3984, 1.442695
      %v4027 = vpow.pop %v4026
      %v4028 = vmul.f32 %v3985, 1.442695
      %v4029 = vpow.pop %v4028
      %v4030 = vmul.f32 %v3986, 1.442695
      %v4031 = vpow.pop %v4030
      %v4032 = vmul.f32 %v3987, 1.442695
      %v4033 = vpow.pop %v4032
      %v4034 = vmul.f32 %v3988, 1.442695
      %v4035 = vpow.pop %v4034
      %v4036 = vmul.f32 %v3989, 1.442695
      %v4037 = vpow.pop %v4036
      %v4038 = vmul.f32 %v3990, 1.442695
      %v4039 = vpow.pop %v4038
      %v4040 = vmul.f32 %v3991, 1.442695
      %v4041 = vpow.pop %v4040
      %v4042 = vmul.f32 %v3992, 1.442695
      %v4043 = vpow.pop %v4042
      %v4044 = vmul.f32 %v3993, 1.442695
      %v4045 = vpow.pop %v4044
      %v4046 = vmul.f32 %v3994, 1.442695
      %v4047 = vpow.pop %v4046
      %v4048 = vmul.f32 %v3995, 1.442695
      %v4049 = vpow.pop %v4048
      %v4050 = vmul.f32 %v3996, 1.442695
      %v4051 = vpow.pop %v4050
      %v4052 = vmul.f32 %v3997, 1.442695
      %v4053 = vpow.pop %v4052
      %v4054 = vmul.f32 %v3998, 1.442695
      %v4055 = vpow.pop %v4054
      %v4056 = vmul.f32 %v3999, 1.442695
      %v4057 = vpow.pop %v4056
      %v4058 = vmul.f32 %v4000, 1.442695
      %v4059 = vpow.pop %v4058
      %v4060 = vmul.f32 %v4001, 1.442695
      %v4061 = vpow.pop %v4060
      %v4062 = vmul.f32 %v4002, 1.442695
      %v4063 = vpow.pop %v4062
      %v4064 = vmul.f32 %v4003, 1.442695
      %v4065 = vpow.pop %v4064
      %v4066 = vmul.f32 %v4004, 1.442695
      %v4067 = vpow.pop %v4066
      %v4068 = vmul.f32 %v4005, 1.442695
      %v4069 = vpow.pop %v4068
      %4070 = vadd.xlane.f32.xlu0 %v4007
      %v4071 = vpop.xlane.xlu0 %4070
      %4072 = vadd.xlane.f32.xlu0 %v4009
      %v4073 = vpop.xlane.xlu0 %4072
      %4074 = vadd.xlane.f32.xlu0 %v4011
      %v4075 = vpop.xlane.xlu0 %4074
      %4076 = vadd.xlane.f32.xlu0 %v4013
      %v4077 = vpop.xlane.xlu0 %4076
      %4078 = vadd.xlane.f32.xlu0 %v4015
      %v4079 = vpop.xlane.xlu0 %4078
      %4080 = vadd.xlane.f32.xlu0 %v4017
      %v4081 = vpop.xlane.xlu0 %4080
      %4082 = vadd.xlane.f32.xlu0 %v4019
      %v4083 = vpop.xlane.xlu0 %4082
      %4084 = vadd.xlane.f32.xlu0 %v4021
      %v4085 = vpop.xlane.xlu0 %4084
      %4086 = vadd.xlane.f32.xlu0 %v4023
      %v4087 = vpop.xlane.xlu0 %4086
      %4088 = vadd.xlane.f32.xlu0 %v4025
      %v4089 = vpop.xlane.xlu0 %4088
      %4090 = vadd.xlane.f32.xlu0 %v4027
      %v4091 = vpop.xlane.xlu0 %4090
      %4092 = vadd.xlane.f32.xlu0 %v4029
      %v4093 = vpop.xlane.xlu0 %4092
      %4094 = vadd.xlane.f32.xlu0 %v4031
      %v4095 = vpop.xlane.xlu0 %4094
      %4096 = vadd.xlane.f32.xlu0 %v4033
      %v4097 = vpop.xlane.xlu0 %4096
      %4098 = vadd.xlane.f32.xlu0 %v4035
      %v4099 = vpop.xlane.xlu0 %4098
      %4100 = vadd.xlane.f32.xlu0 %v4037
      %v4101 = vpop.xlane.xlu0 %4100
      %4102 = vadd.xlane.f32.xlu0 %v4039
      %v4103 = vpop.xlane.xlu0 %4102
      %4104 = vadd.xlane.f32.xlu0 %v4041
      %v4105 = vpop.xlane.xlu0 %4104
      %4106 = vadd.xlane.f32.xlu0 %v4043
      %v4107 = vpop.xlane.xlu0 %4106
      %4108 = vadd.xlane.f32.xlu0 %v4045
      %v4109 = vpop.xlane.xlu0 %4108
      %4110 = vadd.xlane.f32.xlu0 %v4047
      %v4111 = vpop.xlane.xlu0 %4110
      %4112 = vadd.xlane.f32.xlu0 %v4049
      %v4113 = vpop.xlane.xlu0 %4112
      %4114 = vadd.xlane.f32.xlu0 %v4051
      %v4115 = vpop.xlane.xlu0 %4114
      %4116 = vadd.xlane.f32.xlu0 %v4053
      %v4117 = vpop.xlane.xlu0 %4116
      %4118 = vadd.xlane.f32.xlu0 %v4055
      %v4119 = vpop.xlane.xlu0 %4118
      %4120 = vadd.xlane.f32.xlu0 %v4057
      %v4121 = vpop.xlane.xlu0 %4120
      %4122 = vadd.xlane.f32.xlu0 %v4059
      %v4123 = vpop.xlane.xlu0 %4122
      %4124 = vadd.xlane.f32.xlu0 %v4061
      %v4125 = vpop.xlane.xlu0 %4124
      %4126 = vadd.xlane.f32.xlu0 %v4063
      %v4127 = vpop.xlane.xlu0 %4126
      %4128 = vadd.xlane.f32.xlu0 %v4065
      %v4129 = vpop.xlane.xlu0 %4128
      %4130 = vadd.xlane.f32.xlu0 %v4067
      %v4131 = vpop.xlane.xlu0 %4130
      %4132 = vadd.xlane.f32.xlu0 %v4069
      %v4133 = vpop.xlane.xlu0 %4132
      %v4134 = vrcp.pop %v4071
      %v4135 = vrcp.pop %v4073
      %v4136 = vrcp.pop %v4075
      %v4137 = vrcp.pop %v4077
      %v4138 = vrcp.pop %v4079
      %v4139 = vrcp.pop %v4081
      %v4140 = vrcp.pop %v4083
      %v4141 = vrcp.pop %v4085
      %v4142 = vrcp.pop %v4087
      %v4143 = vrcp.pop %v4089
      %v4144 = vrcp.pop %v4091
      %v4145 = vrcp.pop %v4093
      %v4146 = vrcp.pop %v4095
      %v4147 = vrcp.pop %v4097
      %v4148 = vrcp.pop %v4099
      %v4149 = vrcp.pop %v4101
      %v4150 = vrcp.pop %v4103
      %v4151 = vrcp.pop %v4105
      %v4152 = vrcp.pop %v4107
      %v4153 = vrcp.pop %v4109
      %v4154 = vrcp.pop %v4111
      %v4155 = vrcp.pop %v4113
      %v4156 = vrcp.pop %v4115
      %v4157 = vrcp.pop %v4117
      %v4158 = vrcp.pop %v4119
      %v4159 = vrcp.pop %v4121
      %v4160 = vrcp.pop %v4123
      %v4161 = vrcp.pop %v4125
      %v4162 = vrcp.pop %v4127
      %v4163 = vrcp.pop %v4129
      %v4164 = vrcp.pop %v4131
      %v4165 = vrcp.pop %v4133
      %v4166 = vmul.f32 %v4007, %v4134
      %v4167 = vmul.f32 %v4009, %v4135
      %v4168 = vmul.f32 %v4011, %v4136
      %v4169 = vmul.f32 %v4013, %v4137
      %v4170 = vmul.f32 %v4015, %v4138
      %v4171 = vmul.f32 %v4017, %v4139
      %v4172 = vmul.f32 %v4019, %v4140
      %v4173 = vmul.f32 %v4021, %v4141
      %v4174 = vmul.f32 %v4023, %v4142
      %v4175 = vmul.f32 %v4025, %v4143
      %v4176 = vmul.f32 %v4027, %v4144
      %v4177 = vmul.f32 %v4029, %v4145
      %v4178 = vmul.f32 %v4031, %v4146
      %v4179 = vmul.f32 %v4033, %v4147
      %v4180 = vmul.f32 %v4035, %v4148
      %v4181 = vmul.f32 %v4037, %v4149
      %v4182 = vmul.f32 %v4039, %v4150
      %v4183 = vmul.f32 %v4041, %v4151
      %v4184 = vmul.f32 %v4043, %v4152
      %v4185 = vmul.f32 %v4045, %v4153
      %v4186 = vmul.f32 %v4047, %v4154
      %v4187 = vmul.f32 %v4049, %v4155
      %v4188 = vmul.f32 %v4051, %v4156
      %v4189 = vmul.f32 %v4053, %v4157
      %v4190 = vmul.f32 %v4055, %v4158
      %v4191 = vmul.f32 %v4057, %v4159
      %v4192 = vmul.f32 %v4059, %v4160
      %v4193 = vmul.f32 %v4061, %v4161
      %v4194 = vmul.f32 %v4063, %v4162
      %v4195 = vmul.f32 %v4065, %v4163
      %v4196 = vmul.f32 %v4067, %v4164
      %v4197 = vmul.f32 %v4069, %v4165
      %4198 = vrot.lane.b32.xlu0 %v1676, 48
      %v4199 = vpop.permute.xlu0 %4198
      %4200 = vrot.lane.b32.xlu0 %v1678, 48
      %v4201 = vpop.permute.xlu0 %4200
      %4202 = vrot.lane.b32.xlu0 %v1681, 48
      %v4203 = vpop.permute.xlu0 %4202
      %4204 = vrot.lane.b32.xlu0 %v1683, 48
      %v4205 = vpop.permute.xlu0 %4204
      %4206 = vrot.lane.b32.xlu0 %v1686, 48
      %v4207 = vpop.permute.xlu0 %4206
      %4208 = vrot.lane.b32.xlu0 %v1688, 48
      %v4209 = vpop.permute.xlu0 %4208
      %4210 = vrot.lane.b32.xlu0 %v1691, 48
      %v4211 = vpop.permute.xlu0 %4210
      %4212 = vrot.lane.b32.xlu0 %v1693, 48
      %v4213 = vpop.permute.xlu0 %4212
      %4214 = vrot.lane.b32.xlu0 %v1696, 48
      %v4215 = vpop.permute.xlu0 %4214
      %4216 = vrot.lane.b32.xlu0 %v1698, 48
      %v4217 = vpop.permute.xlu0 %4216
      %4218 = vrot.lane.b32.xlu0 %v1701, 48
      %v4219 = vpop.permute.xlu0 %4218
      %4220 = vrot.lane.b32.xlu0 %v1703, 48
      %v4221 = vpop.permute.xlu0 %4220
      %4222 = vrot.lane.b32.xlu0 %v1706, 48
      %v4223 = vpop.permute.xlu0 %4222
      %4224 = vrot.lane.b32.xlu0 %v1708, 48
      %v4225 = vpop.permute.xlu0 %4224
      %4226 = vrot.lane.b32.xlu0 %v1711, 48
      %v4227 = vpop.permute.xlu0 %4226
      %4228 = vrot.lane.b32.xlu0 %v1713, 48
      %v4229 = vpop.permute.xlu0 %4228
      %4246 = vmatpush.msra.mxu0 %v4229
      %4247 = vmatpush.msra.mxu0 %v4227
      %4248 = vmatpush.msra.mxu0 %v4225
      %4249 = vmatpush.msra.mxu0 %v4223
      %4250 = vmatpush.msra.mxu0 %v4221
      %4251 = vmatpush.msra.mxu0 %v4219
      %4252 = vmatpush.msra.mxu0 %v4217
      %4253 = vmatpush.msra.mxu0 %v4215
      %4254 = vmatpush.msra.mxu0 %v4213
      %4255 = vmatpush.msra.mxu0 %v4211
      %4256 = vmatpush.msra.mxu0 %v4209
      %4257 = vmatpush.msra.mxu0 %v4207
      %4258 = vmatpush.msra.mxu0 %v4205
      %4259 = vmatpush.msra.mxu0 %v4203
      %4260 = vmatpush.msra.mxu0 %v4201
      %4261 = vmatpush.msra.mxu0 %v4199
      %4262 = vmatmul.f32.gmra.mxu0 %v4166
      %v4263 = vpop.f32.mrf.mxu0
      %v4264 = vadd.f32 0.0, %v4263
      %4265 = vmatmul.f32.gmra.mxu0 %v4167
      %v4266 = vpop.f32.mrf.mxu0
      %v4267 = vadd.f32 0.0, %v4266
      %4268 = vmatmul.f32.gmra.mxu0 %v4168
      %v4269 = vpop.f32.mrf.mxu0
      %v4270 = vadd.f32 0.0, %v4269
      %4271 = vmatmul.f32.gmra.mxu0 %v4169
      %v4272 = vpop.f32.mrf.mxu0
      %v4273 = vadd.f32 0.0, %v4272
      %4274 = vmatmul.f32.gmra.mxu0 %v4170
      %v4275 = vpop.f32.mrf.mxu0
      %v4276 = vadd.f32 0.0, %v4275
      %4277 = vmatmul.f32.gmra.mxu0 %v4171
      %v4278 = vpop.f32.mrf.mxu0
      %v4279 = vadd.f32 0.0, %v4278
      %4280 = vmatmul.f32.gmra.mxu0 %v4172
      %v4281 = vpop.f32.mrf.mxu0
      %v4282 = vadd.f32 0.0, %v4281
      %4283 = vmatmul.f32.gmra.mxu0 %v4173
      %v4284 = vpop.f32.mrf.mxu0
      %v4285 = vadd.f32 0.0, %v4284
      %4286 = vmatmul.f32.gmra.mxu0 %v4174
      %v4287 = vpop.f32.mrf.mxu0
      %v4288 = vadd.f32 0.0, %v4287
      %4289 = vmatmul.f32.gmra.mxu0 %v4175
      %v4290 = vpop.f32.mrf.mxu0
      %v4291 = vadd.f32 0.0, %v4290
      %4292 = vmatmul.f32.gmra.mxu0 %v4176
      %v4293 = vpop.f32.mrf.mxu0
      %v4294 = vadd.f32 0.0, %v4293
      %4295 = vmatmul.f32.gmra.mxu0 %v4177
      %v4296 = vpop.f32.mrf.mxu0
      %v4297 = vadd.f32 0.0, %v4296
      %4298 = vmatmul.f32.gmra.mxu0 %v4178
      %v4299 = vpop.f32.mrf.mxu0
      %v4300 = vadd.f32 0.0, %v4299
      %4301 = vmatmul.f32.gmra.mxu0 %v4179
      %v4302 = vpop.f32.mrf.mxu0
      %v4303 = vadd.f32 0.0, %v4302
      %4304 = vmatmul.f32.gmra.mxu0 %v4180
      %v4305 = vpop.f32.mrf.mxu0
      %v4306 = vadd.f32 0.0, %v4305
      %4307 = vmatmul.f32.gmra.mxu0 %v4181
      %v4308 = vpop.f32.mrf.mxu0
      %v4309 = vadd.f32 0.0, %v4308
      %4310 = vdwg.mxu0
      %4311 = vrot.lane.b32.xlu0 %v1716, 48
      %v4312 = vpop.permute.xlu0 %4311
      %4313 = vrot.lane.b32.xlu0 %v1718, 48
      %v4314 = vpop.permute.xlu0 %4313
      %4315 = vrot.lane.b32.xlu0 %v1721, 48
      %v4316 = vpop.permute.xlu0 %4315
      %4317 = vrot.lane.b32.xlu0 %v1723, 48
      %v4318 = vpop.permute.xlu0 %4317
      %4319 = vrot.lane.b32.xlu0 %v1726, 48
      %v4320 = vpop.permute.xlu0 %4319
      %4321 = vrot.lane.b32.xlu0 %v1728, 48
      %v4322 = vpop.permute.xlu0 %4321
      %4323 = vrot.lane.b32.xlu0 %v1731, 48
      %v4324 = vpop.permute.xlu0 %4323
      %4325 = vrot.lane.b32.xlu0 %v1733, 48
      %v4326 = vpop.permute.xlu0 %4325
      %4327 = vrot.lane.b32.xlu0 %v1736, 48
      %v4328 = vpop.permute.xlu0 %4327
      %4329 = vrot.lane.b32.xlu0 %v1738, 48
      %v4330 = vpop.permute.xlu0 %4329
      %4331 = vrot.lane.b32.xlu0 %v1741, 48
      %v4332 = vpop.permute.xlu0 %4331
      %4333 = vrot.lane.b32.xlu0 %v1743, 48
      %v4334 = vpop.permute.xlu0 %4333
      %4335 = vrot.lane.b32.xlu0 %v1746, 48
      %v4336 = vpop.permute.xlu0 %4335
      %4337 = vrot.lane.b32.xlu0 %v1748, 48
      %v4338 = vpop.permute.xlu0 %4337
      %4339 = vrot.lane.b32.xlu0 %v1751, 48
      %v4340 = vpop.permute.xlu0 %4339
      %4341 = vrot.lane.b32.xlu0 %v1753, 48
      %v4342 = vpop.permute.xlu0 %4341
      %4359 = vmatpush.msra.mxu0 %v4342
      %4360 = vmatpush.msra.mxu0 %v4340
      %4361 = vmatpush.msra.mxu0 %v4338
      %4362 = vmatpush.msra.mxu0 %v4336
      %4363 = vmatpush.msra.mxu0 %v4334
      %4364 = vmatpush.msra.mxu0 %v4332
      %4365 = vmatpush.msra.mxu0 %v4330
      %4366 = vmatpush.msra.mxu0 %v4328
      %4367 = vmatpush.msra.mxu0 %v4326
      %4368 = vmatpush.msra.mxu0 %v4324
      %4369 = vmatpush.msra.mxu0 %v4322
      %4370 = vmatpush.msra.mxu0 %v4320
      %4371 = vmatpush.msra.mxu0 %v4318
      %4372 = vmatpush.msra.mxu0 %v4316
      %4373 = vmatpush.msra.mxu0 %v4314
      %4374 = vmatpush.msra.mxu0 %v4312
      %4375 = vmatmul.f32.gmra.mxu0 %v4182
      %v4376 = vpop.f32.mrf.mxu0
      %v4377 = vadd.f32 0.0, %v4376
      %4378 = vmatmul.f32.gmra.mxu0 %v4183
      %v4379 = vpop.f32.mrf.mxu0
      %v4380 = vadd.f32 0.0, %v4379
      %4381 = vmatmul.f32.gmra.mxu0 %v4184
      %v4382 = vpop.f32.mrf.mxu0
      %v4383 = vadd.f32 0.0, %v4382
      %4384 = vmatmul.f32.gmra.mxu0 %v4185
      %v4385 = vpop.f32.mrf.mxu0
      %v4386 = vadd.f32 0.0, %v4385
      %4387 = vmatmul.f32.gmra.mxu0 %v4186
      %v4388 = vpop.f32.mrf.mxu0
      %v4389 = vadd.f32 0.0, %v4388
      %4390 = vmatmul.f32.gmra.mxu0 %v4187
      %v4391 = vpop.f32.mrf.mxu0
      %v4392 = vadd.f32 0.0, %v4391
      %4393 = vmatmul.f32.gmra.mxu0 %v4188
      %v4394 = vpop.f32.mrf.mxu0
      %v4395 = vadd.f32 0.0, %v4394
      %4396 = vmatmul.f32.gmra.mxu0 %v4189
      %v4397 = vpop.f32.mrf.mxu0
      %v4398 = vadd.f32 0.0, %v4397
      %4399 = vmatmul.f32.gmra.mxu0 %v4190
      %v4400 = vpop.f32.mrf.mxu0
      %v4401 = vadd.f32 0.0, %v4400
      %4402 = vmatmul.f32.gmra.mxu0 %v4191
      %v4403 = vpop.f32.mrf.mxu0
      %v4404 = vadd.f32 0.0, %v4403
      %4405 = vmatmul.f32.gmra.mxu0 %v4192
      %v4406 = vpop.f32.mrf.mxu0
      %v4407 = vadd.f32 0.0, %v4406
      %4408 = vmatmul.f32.gmra.mxu0 %v4193
      %v4409 = vpop.f32.mrf.mxu0
      %v4410 = vadd.f32 0.0, %v4409
      %4411 = vmatmul.f32.gmra.mxu0 %v4194
      %v4412 = vpop.f32.mrf.mxu0
      %v4413 = vadd.f32 0.0, %v4412
      %4414 = vmatmul.f32.gmra.mxu0 %v4195
      %v4415 = vpop.f32.mrf.mxu0
      %v4416 = vadd.f32 0.0, %v4415
      %4417 = vmatmul.f32.gmra.mxu0 %v4196
      %v4418 = vpop.f32.mrf.mxu0
      %v4419 = vadd.f32 0.0, %v4418
      %4420 = vmatmul.f32.gmra.mxu0 %v4197
      %v4421 = vpop.f32.mrf.mxu0
      %v4422 = vadd.f32 0.0, %v4421
      %4423 = vdwg.mxu0
      %4424 = vrot.lane.b32.xlu0 %v1676, 104
      %v4425 = vpop.permute.xlu0 %4424
      %4426 = vrot.lane.b32.xlu0 %v1678, 104
      %v4427 = vpop.permute.xlu0 %4426
      %4428 = vrot.lane.b32.xlu0 %v1681, 104
      %v4429 = vpop.permute.xlu0 %4428
      %4430 = vrot.lane.b32.xlu0 %v1683, 104
      %v4431 = vpop.permute.xlu0 %4430
      %4432 = vrot.lane.b32.xlu0 %v1686, 104
      %v4433 = vpop.permute.xlu0 %4432
      %4434 = vrot.lane.b32.xlu0 %v1688, 104
      %v4435 = vpop.permute.xlu0 %4434
      %4436 = vrot.lane.b32.xlu0 %v1691, 104
      %v4437 = vpop.permute.xlu0 %4436
      %4438 = vrot.lane.b32.xlu0 %v1693, 104
      %v4439 = vpop.permute.xlu0 %4438
      %4440 = vrot.lane.b32.xlu0 %v1696, 104
      %v4441 = vpop.permute.xlu0 %4440
      %4442 = vrot.lane.b32.xlu0 %v1698, 104
      %v4443 = vpop.permute.xlu0 %4442
      %4444 = vrot.lane.b32.xlu0 %v1701, 104
      %v4445 = vpop.permute.xlu0 %4444
      %4446 = vrot.lane.b32.xlu0 %v1703, 104
      %v4447 = vpop.permute.xlu0 %4446
      %4448 = vrot.lane.b32.xlu0 %v1706, 104
      %v4449 = vpop.permute.xlu0 %4448
      %4450 = vrot.lane.b32.xlu0 %v1708, 104
      %v4451 = vpop.permute.xlu0 %4450
      %4452 = vrot.lane.b32.xlu0 %v1711, 104
      %v4453 = vpop.permute.xlu0 %4452
      %4454 = vrot.lane.b32.xlu0 %v1713, 104
      %v4455 = vpop.permute.xlu0 %4454
      %4456 = vrot.lane.b32.xlu0 %v1676, 72
      %v4457 = vpop.permute.xlu0 %4456
      %4458 = vrot.lane.b32.xlu0 %v1678, 72
      %v4459 = vpop.permute.xlu0 %4458
      %4460 = vrot.lane.b32.xlu0 %v1681, 72
      %v4461 = vpop.permute.xlu0 %4460
      %4462 = vrot.lane.b32.xlu0 %v1683, 72
      %v4463 = vpop.permute.xlu0 %4462
      %4464 = vrot.lane.b32.xlu0 %v1686, 72
      %v4465 = vpop.permute.xlu0 %4464
      %4466 = vrot.lane.b32.xlu0 %v1688, 72
      %v4467 = vpop.permute.xlu0 %4466
      %4468 = vrot.lane.b32.xlu0 %v1691, 72
      %v4469 = vpop.permute.xlu0 %4468
      %4470 = vrot.lane.b32.xlu0 %v1693, 72
      %v4471 = vpop.permute.xlu0 %4470
      %4472 = vrot.lane.b32.xlu0 %v1696, 72
      %v4473 = vpop.permute.xlu0 %4472
      %4474 = vrot.lane.b32.xlu0 %v1698, 72
      %v4475 = vpop.permute.xlu0 %4474
      %4476 = vrot.lane.b32.xlu0 %v1701, 72
      %v4477 = vpop.permute.xlu0 %4476
      %4478 = vrot.lane.b32.xlu0 %v1703, 72
      %v4479 = vpop.permute.xlu0 %4478
      %4480 = vrot.lane.b32.xlu0 %v1706, 72
      %v4481 = vpop.permute.xlu0 %4480
      %4482 = vrot.lane.b32.xlu0 %v1708, 72
      %v4483 = vpop.permute.xlu0 %4482
      %4484 = vrot.lane.b32.xlu0 %v1711, 72
      %v4485 = vpop.permute.xlu0 %4484
      %4486 = vrot.lane.b32.xlu0 %v1713, 72
      %v4487 = vpop.permute.xlu0 %4486
      %v4488 = vsel %vm1803, %v4425, 0
      %v4490 = vsel %vm1803, %v4427, 0
      %v4492 = vsel %vm1803, %v4429, 0
      %v4494 = vsel %vm1803, %v4431, 0
      %v4496 = vsel %vm1803, %v4433, 0
      %v4498 = vsel %vm1803, %v4435, 0
      %v4500 = vsel %vm1803, %v4437, 0
      %v4502 = vsel %vm1803, %v4439, 0
      %v4504 = vsel %vm1803, %v4441, 0
      %v4506 = vsel %vm1803, %v4443, 0
      %v4508 = vsel %vm1803, %v4445, 0
      %v4510 = vsel %vm1803, %v4447, 0
      %v4512 = vsel %vm1803, %v4449, 0
      %v4514 = vsel %vm1803, %v4451, 0
      %v4516 = vsel %vm1803, %v4453, 0
      %v4518 = vsel %vm1803, %v4455, 0
      %v4520 = vsel %vm1803, %v4457, 0
      %v4522 = vsel %vm1803, %v4459, 0
      %v4524 = vsel %vm1803, %v4461, 0
      %v4526 = vsel %vm1803, %v4463, 0
      %v4528 = vsel %vm1803, %v4465, 0
      %v4530 = vsel %vm1803, %v4467, 0
      %v4532 = vsel %vm1803, %v4469, 0
      %v4534 = vsel %vm1803, %v4471, 0
      %v4536 = vsel %vm1803, %v4473, 0
      %v4538 = vsel %vm1803, %v4475, 0
      %v4540 = vsel %vm1803, %v4477, 0
      %v4542 = vsel %vm1803, %v4479, 0
      %v4544 = vsel %vm1803, %v4481, 0
      %v4546 = vsel %vm1803, %v4483, 0
      %v4548 = vsel %vm1803, %v4485, 0
      %v4550 = vsel %vm1803, %v4487, 0
      %4552 = vmatpush.xpose.msra.mxu0 %v4550
      %4553 = vmatpush.xpose.msra.mxu0 %v4548
      %4554 = vmatpush.xpose.msra.mxu0 %v4546
      %4555 = vmatpush.xpose.msra.mxu0 %v4544
      %4556 = vmatpush.xpose.msra.mxu0 %v4542
      %4557 = vmatpush.xpose.msra.mxu0 %v4540
      %4558 = vmatpush.xpose.msra.mxu0 %v4538
      %4559 = vmatpush.xpose.msra.mxu0 %v4536
      %4560 = vmatpush.xpose.msra.mxu0 %v4534
      %4561 = vmatpush.xpose.msra.mxu0 %v4532
      %4562 = vmatpush.xpose.msra.mxu0 %v4530
      %4563 = vmatpush.xpose.msra.mxu0 %v4528
      %4564 = vmatpush.xpose.msra.mxu0 %v4526
      %4565 = vmatpush.xpose.msra.mxu0 %v4524
      %4566 = vmatpush.xpose.msra.mxu0 %v4522
      %4567 = vmatpush.xpose.msra.mxu0 %v4520
      %4568 = vmatmul.f32.gmra.mxu0 %v4488
      %v4569 = vpop.f32.mrf.mxu0
      %v4570 = vadd.f32 %v750, %v4569
      %4571 = vmatmul.f32.gmra.mxu0 %v4490
      %v4572 = vpop.f32.mrf.mxu0
      %v4573 = vadd.f32 %v751, %v4572
      %4574 = vmatmul.f32.gmra.mxu0 %v4492
      %v4575 = vpop.f32.mrf.mxu0
      %v4576 = vadd.f32 %v752, %v4575
      %4577 = vmatmul.f32.gmra.mxu0 %v4494
      %v4578 = vpop.f32.mrf.mxu0
      %v4579 = vadd.f32 %v753, %v4578
      %4580 = vmatmul.f32.gmra.mxu0 %v4496
      %v4581 = vpop.f32.mrf.mxu0
      %v4582 = vadd.f32 %v754, %v4581
      %4583 = vmatmul.f32.gmra.mxu0 %v4498
      %v4584 = vpop.f32.mrf.mxu0
      %v4585 = vadd.f32 %v755, %v4584
      %4586 = vmatmul.f32.gmra.mxu0 %v4500
      %v4587 = vpop.f32.mrf.mxu0
      %v4588 = vadd.f32 %v756, %v4587
      %4589 = vmatmul.f32.gmra.mxu0 %v4502
      %v4590 = vpop.f32.mrf.mxu0
      %v4591 = vadd.f32 %v757, %v4590
      %4592 = vmatmul.f32.gmra.mxu0 %v4504
      %v4593 = vpop.f32.mrf.mxu0
      %v4594 = vadd.f32 %v758, %v4593
      %4595 = vmatmul.f32.gmra.mxu0 %v4506
      %v4596 = vpop.f32.mrf.mxu0
      %v4597 = vadd.f32 %v759, %v4596
      %4598 = vmatmul.f32.gmra.mxu0 %v4508
      %v4599 = vpop.f32.mrf.mxu0
      %v4600 = vadd.f32 %v760, %v4599
      %4601 = vmatmul.f32.gmra.mxu0 %v4510
      %v4602 = vpop.f32.mrf.mxu0
      %v4603 = vadd.f32 %v761, %v4602
      %4604 = vmatmul.f32.gmra.mxu0 %v4512
      %v4605 = vpop.f32.mrf.mxu0
      %v4606 = vadd.f32 %v762, %v4605
      %4607 = vmatmul.f32.gmra.mxu0 %v4514
      %v4608 = vpop.f32.mrf.mxu0
      %v4609 = vadd.f32 %v763, %v4608
      %4610 = vmatmul.f32.gmra.mxu0 %v4516
      %v4611 = vpop.f32.mrf.mxu0
      %v4612 = vadd.f32 %v764, %v4611
      %4613 = vmatmul.f32.gmra.mxu0 %v4518
      %v4614 = vpop.f32.mrf.mxu0
      %v4615 = vadd.f32 %v765, %v4614
      %4616 = vdwg.mxu0
      %4617 = vrot.lane.b32.xlu0 %v1716, 104
      %v4618 = vpop.permute.xlu0 %4617
      %4619 = vrot.lane.b32.xlu0 %v1718, 104
      %v4620 = vpop.permute.xlu0 %4619
      %4621 = vrot.lane.b32.xlu0 %v1721, 104
      %v4622 = vpop.permute.xlu0 %4621
      %4623 = vrot.lane.b32.xlu0 %v1723, 104
      %v4624 = vpop.permute.xlu0 %4623
      %4625 = vrot.lane.b32.xlu0 %v1726, 104
      %v4626 = vpop.permute.xlu0 %4625
      %4627 = vrot.lane.b32.xlu0 %v1728, 104
      %v4628 = vpop.permute.xlu0 %4627
      %4629 = vrot.lane.b32.xlu0 %v1731, 104
      %v4630 = vpop.permute.xlu0 %4629
      %4631 = vrot.lane.b32.xlu0 %v1733, 104
      %v4632 = vpop.permute.xlu0 %4631
      %4633 = vrot.lane.b32.xlu0 %v1736, 104
      %v4634 = vpop.permute.xlu0 %4633
      %4635 = vrot.lane.b32.xlu0 %v1738, 104
      %v4636 = vpop.permute.xlu0 %4635
      %4637 = vrot.lane.b32.xlu0 %v1741, 104
      %v4638 = vpop.permute.xlu0 %4637
      %4639 = vrot.lane.b32.xlu0 %v1743, 104
      %v4640 = vpop.permute.xlu0 %4639
      %4641 = vrot.lane.b32.xlu0 %v1746, 104
      %v4642 = vpop.permute.xlu0 %4641
      %4643 = vrot.lane.b32.xlu0 %v1748, 104
      %v4644 = vpop.permute.xlu0 %4643
      %4645 = vrot.lane.b32.xlu0 %v1751, 104
      %v4646 = vpop.permute.xlu0 %4645
      %4647 = vrot.lane.b32.xlu0 %v1753, 104
      %v4648 = vpop.permute.xlu0 %4647
      %4649 = vrot.lane.b32.xlu0 %v1716, 72
      %v4650 = vpop.permute.xlu0 %4649
      %4651 = vrot.lane.b32.xlu0 %v1718, 72
      %v4652 = vpop.permute.xlu0 %4651
      %4653 = vrot.lane.b32.xlu0 %v1721, 72
      %v4654 = vpop.permute.xlu0 %4653
      %4655 = vrot.lane.b32.xlu0 %v1723, 72
      %v4656 = vpop.permute.xlu0 %4655
      %4657 = vrot.lane.b32.xlu0 %v1726, 72
      %v4658 = vpop.permute.xlu0 %4657
      %4659 = vrot.lane.b32.xlu0 %v1728, 72
      %v4660 = vpop.permute.xlu0 %4659
      %4661 = vrot.lane.b32.xlu0 %v1731, 72
      %v4662 = vpop.permute.xlu0 %4661
      %4663 = vrot.lane.b32.xlu0 %v1733, 72
      %v4664 = vpop.permute.xlu0 %4663
      %4665 = vrot.lane.b32.xlu0 %v1736, 72
      %v4666 = vpop.permute.xlu0 %4665
      %4667 = vrot.lane.b32.xlu0 %v1738, 72
      %v4668 = vpop.permute.xlu0 %4667
      %4669 = vrot.lane.b32.xlu0 %v1741, 72
      %v4670 = vpop.permute.xlu0 %4669
      %4671 = vrot.lane.b32.xlu0 %v1743, 72
      %v4672 = vpop.permute.xlu0 %4671
      %4673 = vrot.lane.b32.xlu0 %v1746, 72
      %v4674 = vpop.permute.xlu0 %4673
      %4675 = vrot.lane.b32.xlu0 %v1748, 72
      %v4676 = vpop.permute.xlu0 %4675
      %4677 = vrot.lane.b32.xlu0 %v1751, 72
      %v4678 = vpop.permute.xlu0 %4677
      %4679 = vrot.lane.b32.xlu0 %v1753, 72
      %v4680 = vpop.permute.xlu0 %4679
      %v4681 = vsel %vm1803, %v4618, 0
      %v4683 = vsel %vm1803, %v4620, 0
      %v4685 = vsel %vm1803, %v4622, 0
      %v4687 = vsel %vm1803, %v4624, 0
      %v4689 = vsel %vm1803, %v4626, 0
      %v4691 = vsel %vm1803, %v4628, 0
      %v4693 = vsel %vm1803, %v4630, 0
      %v4695 = vsel %vm1803, %v4632, 0
      %v4697 = vsel %vm1803, %v4634, 0
      %v4699 = vsel %vm1803, %v4636, 0
      %v4701 = vsel %vm1803, %v4638, 0
      %v4703 = vsel %vm1803, %v4640, 0
      %v4705 = vsel %vm1803, %v4642, 0
      %v4707 = vsel %vm1803, %v4644, 0
      %v4709 = vsel %vm1803, %v4646, 0
      %v4711 = vsel %vm1803, %v4648, 0
      %v4713 = vsel %vm1803, %v4650, 0
      %v4715 = vsel %vm1803, %v4652, 0
      %v4717 = vsel %vm1803, %v4654, 0
      %v4719 = vsel %vm1803, %v4656, 0
      %v4721 = vsel %vm1803, %v4658, 0
      %v4723 = vsel %vm1803, %v4660, 0
      %v4725 = vsel %vm1803, %v4662, 0
      %v4727 = vsel %vm1803, %v4664, 0
      %v4729 = vsel %vm1803, %v4666, 0
      %v4731 = vsel %vm1803, %v4668, 0
      %v4733 = vsel %vm1803, %v4670, 0
      %v4735 = vsel %vm1803, %v4672, 0
      %v4737 = vsel %vm1803, %v4674, 0
      %v4739 = vsel %vm1803, %v4676, 0
      %v4741 = vsel %vm1803, %v4678, 0
      %v4743 = vsel %vm1803, %v4680, 0
      %4745 = vmatpush.xpose.msra.mxu0 %v4743
      %4746 = vmatpush.xpose.msra.mxu0 %v4741
      %4747 = vmatpush.xpose.msra.mxu0 %v4739
      %4748 = vmatpush.xpose.msra.mxu0 %v4737
      %4749 = vmatpush.xpose.msra.mxu0 %v4735
      %4750 = vmatpush.xpose.msra.mxu0 %v4733
      %4751 = vmatpush.xpose.msra.mxu0 %v4731
      %4752 = vmatpush.xpose.msra.mxu0 %v4729
      %4753 = vmatpush.xpose.msra.mxu0 %v4727
      %4754 = vmatpush.xpose.msra.mxu0 %v4725
      %4755 = vmatpush.xpose.msra.mxu0 %v4723
      %4756 = vmatpush.xpose.msra.mxu0 %v4721
      %4757 = vmatpush.xpose.msra.mxu0 %v4719
      %4758 = vmatpush.xpose.msra.mxu0 %v4717
      %4759 = vmatpush.xpose.msra.mxu0 %v4715
      %4760 = vmatpush.xpose.msra.mxu0 %v4713
      %4761 = vmatmul.f32.gmra.mxu0 %v4681
      %v4762 = vpop.f32.mrf.mxu0
      %v4763 = vadd.f32 %v750, %v4762
      %4764 = vmatmul.f32.gmra.mxu0 %v4683
      %v4765 = vpop.f32.mrf.mxu0
      %v4766 = vadd.f32 %v751, %v4765
      %4767 = vmatmul.f32.gmra.mxu0 %v4685
      %v4768 = vpop.f32.mrf.mxu0
      %v4769 = vadd.f32 %v752, %v4768
      %4770 = vmatmul.f32.gmra.mxu0 %v4687
      %v4771 = vpop.f32.mrf.mxu0
      %v4772 = vadd.f32 %v753, %v4771
      %4773 = vmatmul.f32.gmra.mxu0 %v4689
      %v4774 = vpop.f32.mrf.mxu0
      %v4775 = vadd.f32 %v754, %v4774
      %4776 = vmatmul.f32.gmra.mxu0 %v4691
      %v4777 = vpop.f32.mrf.mxu0
      %v4778 = vadd.f32 %v755, %v4777
      %4779 = vmatmul.f32.gmra.mxu0 %v4693
      %v4780 = vpop.f32.mrf.mxu0
      %v4781 = vadd.f32 %v756, %v4780
      %4782 = vmatmul.f32.gmra.mxu0 %v4695
      %v4783 = vpop.f32.mrf.mxu0
      %v4784 = vadd.f32 %v757, %v4783
      %4785 = vmatmul.f32.gmra.mxu0 %v4697
      %v4786 = vpop.f32.mrf.mxu0
      %v4787 = vadd.f32 %v758, %v4786
      %4788 = vmatmul.f32.gmra.mxu0 %v4699
      %v4789 = vpop.f32.mrf.mxu0
      %v4790 = vadd.f32 %v759, %v4789
      %4791 = vmatmul.f32.gmra.mxu0 %v4701
      %v4792 = vpop.f32.mrf.mxu0
      %v4793 = vadd.f32 %v760, %v4792
      %4794 = vmatmul.f32.gmra.mxu0 %v4703
      %v4795 = vpop.f32.mrf.mxu0
      %v4796 = vadd.f32 %v761, %v4795
      %4797 = vmatmul.f32.gmra.mxu0 %v4705
      %v4798 = vpop.f32.mrf.mxu0
      %v4799 = vadd.f32 %v762, %v4798
      %4800 = vmatmul.f32.gmra.mxu0 %v4707
      %v4801 = vpop.f32.mrf.mxu0
      %v4802 = vadd.f32 %v763, %v4801
      %4803 = vmatmul.f32.gmra.mxu0 %v4709
      %v4804 = vpop.f32.mrf.mxu0
      %v4805 = vadd.f32 %v764, %v4804
      %4806 = vmatmul.f32.gmra.mxu0 %v4711
      %v4807 = vpop.f32.mrf.mxu0
      %v4808 = vadd.f32 %v765, %v4807
      %4809 = vdwg.mxu0
      %4810 = vmax.xlane.f32.xlu0 %v4570
      %v4811 = vpop.xlane.xlu0 %4810
      %4812 = vmax.xlane.f32.xlu0 %v4573
      %v4813 = vpop.xlane.xlu0 %4812
      %4814 = vmax.xlane.f32.xlu0 %v4576
      %v4815 = vpop.xlane.xlu0 %4814
      %4816 = vmax.xlane.f32.xlu0 %v4579
      %v4817 = vpop.xlane.xlu0 %4816
      %4818 = vmax.xlane.f32.xlu0 %v4582
      %v4819 = vpop.xlane.xlu0 %4818
      %4820 = vmax.xlane.f32.xlu0 %v4585
      %v4821 = vpop.xlane.xlu0 %4820
      %4822 = vmax.xlane.f32.xlu0 %v4588
      %v4823 = vpop.xlane.xlu0 %4822
      %4824 = vmax.xlane.f32.xlu0 %v4591
      %v4825 = vpop.xlane.xlu0 %4824
      %4826 = vmax.xlane.f32.xlu0 %v4594
      %v4827 = vpop.xlane.xlu0 %4826
      %4828 = vmax.xlane.f32.xlu0 %v4597
      %v4829 = vpop.xlane.xlu0 %4828
      %4830 = vmax.xlane.f32.xlu0 %v4600
      %v4831 = vpop.xlane.xlu0 %4830
      %4832 = vmax.xlane.f32.xlu0 %v4603
      %v4833 = vpop.xlane.xlu0 %4832
      %4834 = vmax.xlane.f32.xlu0 %v4606
      %v4835 = vpop.xlane.xlu0 %4834
      %4836 = vmax.xlane.f32.xlu0 %v4609
      %v4837 = vpop.xlane.xlu0 %4836
      %4838 = vmax.xlane.f32.xlu0 %v4612
      %v4839 = vpop.xlane.xlu0 %4838
      %4840 = vmax.xlane.f32.xlu0 %v4615
      %v4841 = vpop.xlane.xlu0 %4840
      %4842 = vmax.xlane.f32.xlu0 %v4763
      %v4843 = vpop.xlane.xlu0 %4842
      %4844 = vmax.xlane.f32.xlu0 %v4766
      %v4845 = vpop.xlane.xlu0 %4844
      %4846 = vmax.xlane.f32.xlu0 %v4769
      %v4847 = vpop.xlane.xlu0 %4846
      %4848 = vmax.xlane.f32.xlu0 %v4772
      %v4849 = vpop.xlane.xlu0 %4848
      %4850 = vmax.xlane.f32.xlu0 %v4775
      %v4851 = vpop.xlane.xlu0 %4850
      %4852 = vmax.xlane.f32.xlu0 %v4778
      %v4853 = vpop.xlane.xlu0 %4852
      %4854 = vmax.xlane.f32.xlu0 %v4781
      %v4855 = vpop.xlane.xlu0 %4854
      %4856 = vmax.xlane.f32.xlu0 %v4784
      %v4857 = vpop.xlane.xlu0 %4856
      %4858 = vmax.xlane.f32.xlu0 %v4787
      %v4859 = vpop.xlane.xlu0 %4858
      %4860 = vmax.xlane.f32.xlu0 %v4790
      %v4861 = vpop.xlane.xlu0 %4860
      %4862 = vmax.xlane.f32.xlu0 %v4793
      %v4863 = vpop.xlane.xlu0 %4862
      %4864 = vmax.xlane.f32.xlu0 %v4796
      %v4865 = vpop.xlane.xlu0 %4864
      %4866 = vmax.xlane.f32.xlu0 %v4799
      %v4867 = vpop.xlane.xlu0 %4866
      %4868 = vmax.xlane.f32.xlu0 %v4802
      %v4869 = vpop.xlane.xlu0 %4868
      %4870 = vmax.xlane.f32.xlu0 %v4805
      %v4871 = vpop.xlane.xlu0 %4870
      %4872 = vmax.xlane.f32.xlu0 %v4808
      %v4873 = vpop.xlane.xlu0 %4872
      %v4874 = vsub.f32 %v4570, %v4811
      %v4875 = vsub.f32 %v4573, %v4813
      %v4876 = vsub.f32 %v4576, %v4815
      %v4877 = vsub.f32 %v4579, %v4817
      %v4878 = vsub.f32 %v4582, %v4819
      %v4879 = vsub.f32 %v4585, %v4821
      %v4880 = vsub.f32 %v4588, %v4823
      %v4881 = vsub.f32 %v4591, %v4825
      %v4882 = vsub.f32 %v4594, %v4827
      %v4883 = vsub.f32 %v4597, %v4829
      %v4884 = vsub.f32 %v4600, %v4831
      %v4885 = vsub.f32 %v4603, %v4833
      %v4886 = vsub.f32 %v4606, %v4835
      %v4887 = vsub.f32 %v4609, %v4837
      %v4888 = vsub.f32 %v4612, %v4839
      %v4889 = vsub.f32 %v4615, %v4841
      %v4890 = vsub.f32 %v4763, %v4843
      %v4891 = vsub.f32 %v4766, %v4845
      %v4892 = vsub.f32 %v4769, %v4847
      %v4893 = vsub.f32 %v4772, %v4849
      %v4894 = vsub.f32 %v4775, %v4851
      %v4895 = vsub.f32 %v4778, %v4853
      %v4896 = vsub.f32 %v4781, %v4855
      %v4897 = vsub.f32 %v4784, %v4857
      %v4898 = vsub.f32 %v4787, %v4859
      %v4899 = vsub.f32 %v4790, %v4861
      %v4900 = vsub.f32 %v4793, %v4863
      %v4901 = vsub.f32 %v4796, %v4865
      %v4902 = vsub.f32 %v4799, %v4867
      %v4903 = vsub.f32 %v4802, %v4869
      %v4904 = vsub.f32 %v4805, %v4871
      %v4905 = vsub.f32 %v4808, %v4873
      %v4906 = vmul.f32 %v4874, 1.442695
      %v4907 = vpow.pop %v4906
      %v4908 = vmul.f32 %v4875, 1.442695
      %v4909 = vpow.pop %v4908
      %v4910 = vmul.f32 %v4876, 1.442695
      %v4911 = vpow.pop %v4910
      %v4912 = vmul.f32 %v4877, 1.442695
      %v4913 = vpow.pop %v4912
      %v4914 = vmul.f32 %v4878, 1.442695
      %v4915 = vpow.pop %v4914
      %v4916 = vmul.f32 %v4879, 1.442695
      %v4917 = vpow.pop %v4916
      %v4918 = vmul.f32 %v4880, 1.442695
      %v4919 = vpow.pop %v4918
      %v4920 = vmul.f32 %v4881, 1.442695
      %v4921 = vpow.pop %v4920
      %v4922 = vmul.f32 %v4882, 1.442695
      %v4923 = vpow.pop %v4922
      %v4924 = vmul.f32 %v4883, 1.442695
      %v4925 = vpow.pop %v4924
      %v4926 = vmul.f32 %v4884, 1.442695
      %v4927 = vpow.pop %v4926
      %v4928 = vmul.f32 %v4885, 1.442695
      %v4929 = vpow.pop %v4928
      %v4930 = vmul.f32 %v4886, 1.442695
      %v4931 = vpow.pop %v4930
      %v4932 = vmul.f32 %v4887, 1.442695
      %v4933 = vpow.pop %v4932
      %v4934 = vmul.f32 %v4888, 1.442695
      %v4935 = vpow.pop %v4934
      %v4936 = vmul.f32 %v4889, 1.442695
      %v4937 = vpow.pop %v4936
      %v4938 = vmul.f32 %v4890, 1.442695
      %v4939 = vpow.pop %v4938
      %v4940 = vmul.f32 %v4891, 1.442695
      %v4941 = vpow.pop %v4940
      %v4942 = vmul.f32 %v4892, 1.442695
      %v4943 = vpow.pop %v4942
      %v4944 = vmul.f32 %v4893, 1.442695
      %v4945 = vpow.pop %v4944
      %v4946 = vmul.f32 %v4894, 1.442695
      %v4947 = vpow.pop %v4946
      %v4948 = vmul.f32 %v4895, 1.442695
      %v4949 = vpow.pop %v4948
      %v4950 = vmul.f32 %v4896, 1.442695
      %v4951 = vpow.pop %v4950
      %v4952 = vmul.f32 %v4897, 1.442695
      %v4953 = vpow.pop %v4952
      %v4954 = vmul.f32 %v4898, 1.442695
      %v4955 = vpow.pop %v4954
      %v4956 = vmul.f32 %v4899, 1.442695
      %v4957 = vpow.pop %v4956
      %v4958 = vmul.f32 %v4900, 1.442695
      %v4959 = vpow.pop %v4958
      %v4960 = vmul.f32 %v4901, 1.442695
      %v4961 = vpow.pop %v4960
      %v4962 = vmul.f32 %v4902, 1.442695
      %v4963 = vpow.pop %v4962
      %v4964 = vmul.f32 %v4903, 1.442695
      %v4965 = vpow.pop %v4964
      %v4966 = vmul.f32 %v4904, 1.442695
      %v4967 = vpow.pop %v4966
      %v4968 = vmul.f32 %v4905, 1.442695
      %v4969 = vpow.pop %v4968
      %4970 = vadd.xlane.f32.xlu0 %v4907
      %v4971 = vpop.xlane.xlu0 %4970
      %4972 = vadd.xlane.f32.xlu0 %v4909
      %v4973 = vpop.xlane.xlu0 %4972
      %4974 = vadd.xlane.f32.xlu0 %v4911
      %v4975 = vpop.xlane.xlu0 %4974
      %4976 = vadd.xlane.f32.xlu0 %v4913
      %v4977 = vpop.xlane.xlu0 %4976
      %4978 = vadd.xlane.f32.xlu0 %v4915
      %v4979 = vpop.xlane.xlu0 %4978
      %4980 = vadd.xlane.f32.xlu0 %v4917
      %v4981 = vpop.xlane.xlu0 %4980
      %4982 = vadd.xlane.f32.xlu0 %v4919
      %v4983 = vpop.xlane.xlu0 %4982
      %4984 = vadd.xlane.f32.xlu0 %v4921
      %v4985 = vpop.xlane.xlu0 %4984
      %4986 = vadd.xlane.f32.xlu0 %v4923
      %v4987 = vpop.xlane.xlu0 %4986
      %4988 = vadd.xlane.f32.xlu0 %v4925
      %v4989 = vpop.xlane.xlu0 %4988
      %4990 = vadd.xlane.f32.xlu0 %v4927
      %v4991 = vpop.xlane.xlu0 %4990
      %4992 = vadd.xlane.f32.xlu0 %v4929
      %v4993 = vpop.xlane.xlu0 %4992
      %4994 = vadd.xlane.f32.xlu0 %v4931
      %v4995 = vpop.xlane.xlu0 %4994
      %4996 = vadd.xlane.f32.xlu0 %v4933
      %v4997 = vpop.xlane.xlu0 %4996
      %4998 = vadd.xlane.f32.xlu0 %v4935
      %v4999 = vpop.xlane.xlu0 %4998
      %5000 = vadd.xlane.f32.xlu0 %v4937
      %v5001 = vpop.xlane.xlu0 %5000
      %5002 = vadd.xlane.f32.xlu0 %v4939
      %v5003 = vpop.xlane.xlu0 %5002
      %5004 = vadd.xlane.f32.xlu0 %v4941
      %v5005 = vpop.xlane.xlu0 %5004
      %5006 = vadd.xlane.f32.xlu0 %v4943
      %v5007 = vpop.xlane.xlu0 %5006
      %5008 = vadd.xlane.f32.xlu0 %v4945
      %v5009 = vpop.xlane.xlu0 %5008
      %5010 = vadd.xlane.f32.xlu0 %v4947
      %v5011 = vpop.xlane.xlu0 %5010
      %5012 = vadd.xlane.f32.xlu0 %v4949
      %v5013 = vpop.xlane.xlu0 %5012
      %5014 = vadd.xlane.f32.xlu0 %v4951
      %v5015 = vpop.xlane.xlu0 %5014
      %5016 = vadd.xlane.f32.xlu0 %v4953
      %v5017 = vpop.xlane.xlu0 %5016
      %5018 = vadd.xlane.f32.xlu0 %v4955
      %v5019 = vpop.xlane.xlu0 %5018
      %5020 = vadd.xlane.f32.xlu0 %v4957
      %v5021 = vpop.xlane.xlu0 %5020
      %5022 = vadd.xlane.f32.xlu0 %v4959
      %v5023 = vpop.xlane.xlu0 %5022
      %5024 = vadd.xlane.f32.xlu0 %v4961
      %v5025 = vpop.xlane.xlu0 %5024
      %5026 = vadd.xlane.f32.xlu0 %v4963
      %v5027 = vpop.xlane.xlu0 %5026
      %5028 = vadd.xlane.f32.xlu0 %v4965
      %v5029 = vpop.xlane.xlu0 %5028
      %5030 = vadd.xlane.f32.xlu0 %v4967
      %v5031 = vpop.xlane.xlu0 %5030
      %5032 = vadd.xlane.f32.xlu0 %v4969
      %v5033 = vpop.xlane.xlu0 %5032
      %v5034 = vrcp.pop %v4971
      %v5035 = vrcp.pop %v4973
      %v5036 = vrcp.pop %v4975
      %v5037 = vrcp.pop %v4977
      %v5038 = vrcp.pop %v4979
      %v5039 = vrcp.pop %v4981
      %v5040 = vrcp.pop %v4983
      %v5041 = vrcp.pop %v4985
      %v5042 = vrcp.pop %v4987
      %v5043 = vrcp.pop %v4989
      %v5044 = vrcp.pop %v4991
      %v5045 = vrcp.pop %v4993
      %v5046 = vrcp.pop %v4995
      %v5047 = vrcp.pop %v4997
      %v5048 = vrcp.pop %v4999
      %v5049 = vrcp.pop %v5001
      %v5050 = vrcp.pop %v5003
      %v5051 = vrcp.pop %v5005
      %v5052 = vrcp.pop %v5007
      %v5053 = vrcp.pop %v5009
      %v5054 = vrcp.pop %v5011
      %v5055 = vrcp.pop %v5013
      %v5056 = vrcp.pop %v5015
      %v5057 = vrcp.pop %v5017
      %v5058 = vrcp.pop %v5019
      %v5059 = vrcp.pop %v5021
      %v5060 = vrcp.pop %v5023
      %v5061 = vrcp.pop %v5025
      %v5062 = vrcp.pop %v5027
      %v5063 = vrcp.pop %v5029
      %v5064 = vrcp.pop %v5031
      %v5065 = vrcp.pop %v5033
      %v5066 = vmul.f32 %v4907, %v5034
      %v5067 = vmul.f32 %v4909, %v5035
      %v5068 = vmul.f32 %v4911, %v5036
      %v5069 = vmul.f32 %v4913, %v5037
      %v5070 = vmul.f32 %v4915, %v5038
      %v5071 = vmul.f32 %v4917, %v5039
      %v5072 = vmul.f32 %v4919, %v5040
      %v5073 = vmul.f32 %v4921, %v5041
      %v5074 = vmul.f32 %v4923, %v5042
      %v5075 = vmul.f32 %v4925, %v5043
      %v5076 = vmul.f32 %v4927, %v5044
      %v5077 = vmul.f32 %v4929, %v5045
      %v5078 = vmul.f32 %v4931, %v5046
      %v5079 = vmul.f32 %v4933, %v5047
      %v5080 = vmul.f32 %v4935, %v5048
      %v5081 = vmul.f32 %v4937, %v5049
      %v5082 = vmul.f32 %v4939, %v5050
      %v5083 = vmul.f32 %v4941, %v5051
      %v5084 = vmul.f32 %v4943, %v5052
      %v5085 = vmul.f32 %v4945, %v5053
      %v5086 = vmul.f32 %v4947, %v5054
      %v5087 = vmul.f32 %v4949, %v5055
      %v5088 = vmul.f32 %v4951, %v5056
      %v5089 = vmul.f32 %v4953, %v5057
      %v5090 = vmul.f32 %v4955, %v5058
      %v5091 = vmul.f32 %v4957, %v5059
      %v5092 = vmul.f32 %v4959, %v5060
      %v5093 = vmul.f32 %v4961, %v5061
      %v5094 = vmul.f32 %v4963, %v5062
      %v5095 = vmul.f32 %v4965, %v5063
      %v5096 = vmul.f32 %v4967, %v5064
      %v5097 = vmul.f32 %v4969, %v5065
      %5098 = vrot.lane.b32.xlu0 %v1676, 40
      %v5099 = vpop.permute.xlu0 %5098
      %5100 = vrot.lane.b32.xlu0 %v1678, 40
      %v5101 = vpop.permute.xlu0 %5100
      %5102 = vrot.lane.b32.xlu0 %v1681, 40
      %v5103 = vpop.permute.xlu0 %5102
      %5104 = vrot.lane.b32.xlu0 %v1683, 40
      %v5105 = vpop.permute.xlu0 %5104
      %5106 = vrot.lane.b32.xlu0 %v1686, 40
      %v5107 = vpop.permute.xlu0 %5106
      %5108 = vrot.lane.b32.xlu0 %v1688, 40
      %v5109 = vpop.permute.xlu0 %5108
      %5110 = vrot.lane.b32.xlu0 %v1691, 40
      %v5111 = vpop.permute.xlu0 %5110
      %5112 = vrot.lane.b32.xlu0 %v1693, 40
      %v5113 = vpop.permute.xlu0 %5112
      %5114 = vrot.lane.b32.xlu0 %v1696, 40
      %v5115 = vpop.permute.xlu0 %5114
      %5116 = vrot.lane.b32.xlu0 %v1698, 40
      %v5117 = vpop.permute.xlu0 %5116
      %5118 = vrot.lane.b32.xlu0 %v1701, 40
      %v5119 = vpop.permute.xlu0 %5118
      %5120 = vrot.lane.b32.xlu0 %v1703, 40
      %v5121 = vpop.permute.xlu0 %5120
      %5122 = vrot.lane.b32.xlu0 %v1706, 40
      %v5123 = vpop.permute.xlu0 %5122
      %5124 = vrot.lane.b32.xlu0 %v1708, 40
      %v5125 = vpop.permute.xlu0 %5124
      %5126 = vrot.lane.b32.xlu0 %v1711, 40
      %v5127 = vpop.permute.xlu0 %5126
      %5128 = vrot.lane.b32.xlu0 %v1713, 40
      %v5129 = vpop.permute.xlu0 %5128
      %5146 = vmatpush.msra.mxu0 %v5129
      %5147 = vmatpush.msra.mxu0 %v5127
      %5148 = vmatpush.msra.mxu0 %v5125
      %5149 = vmatpush.msra.mxu0 %v5123
      %5150 = vmatpush.msra.mxu0 %v5121
      %5151 = vmatpush.msra.mxu0 %v5119
      %5152 = vmatpush.msra.mxu0 %v5117
      %5153 = vmatpush.msra.mxu0 %v5115
      %5154 = vmatpush.msra.mxu0 %v5113
      %5155 = vmatpush.msra.mxu0 %v5111
      %5156 = vmatpush.msra.mxu0 %v5109
      %5157 = vmatpush.msra.mxu0 %v5107
      %5158 = vmatpush.msra.mxu0 %v5105
      %5159 = vmatpush.msra.mxu0 %v5103
      %5160 = vmatpush.msra.mxu0 %v5101
      %5161 = vmatpush.msra.mxu0 %v5099
      %5162 = vmatmul.f32.gmra.mxu0 %v5066
      %v5163 = vpop.f32.mrf.mxu0
      %v5164 = vadd.f32 0.0, %v5163
      %5165 = vmatmul.f32.gmra.mxu0 %v5067
      %v5166 = vpop.f32.mrf.mxu0
      %v5167 = vadd.f32 0.0, %v5166
      %5168 = vmatmul.f32.gmra.mxu0 %v5068
      %v5169 = vpop.f32.mrf.mxu0
      %v5170 = vadd.f32 0.0, %v5169
      %5171 = vmatmul.f32.gmra.mxu0 %v5069
      %v5172 = vpop.f32.mrf.mxu0
      %v5173 = vadd.f32 0.0, %v5172
      %5174 = vmatmul.f32.gmra.mxu0 %v5070
      %v5175 = vpop.f32.mrf.mxu0
      %v5176 = vadd.f32 0.0, %v5175
      %5177 = vmatmul.f32.gmra.mxu0 %v5071
      %v5178 = vpop.f32.mrf.mxu0
      %v5179 = vadd.f32 0.0, %v5178
      %5180 = vmatmul.f32.gmra.mxu0 %v5072
      %v5181 = vpop.f32.mrf.mxu0
      %v5182 = vadd.f32 0.0, %v5181
      %5183 = vmatmul.f32.gmra.mxu0 %v5073
      %v5184 = vpop.f32.mrf.mxu0
      %v5185 = vadd.f32 0.0, %v5184
      %5186 = vmatmul.f32.gmra.mxu0 %v5074
      %v5187 = vpop.f32.mrf.mxu0
      %v5188 = vadd.f32 0.0, %v5187
      %5189 = vmatmul.f32.gmra.mxu0 %v5075
      %v5190 = vpop.f32.mrf.mxu0
      %v5191 = vadd.f32 0.0, %v5190
      %5192 = vmatmul.f32.gmra.mxu0 %v5076
      %v5193 = vpop.f32.mrf.mxu0
      %v5194 = vadd.f32 0.0, %v5193
      %5195 = vmatmul.f32.gmra.mxu0 %v5077
      %v5196 = vpop.f32.mrf.mxu0
      %v5197 = vadd.f32 0.0, %v5196
      %5198 = vmatmul.f32.gmra.mxu0 %v5078
      %v5199 = vpop.f32.mrf.mxu0
      %v5200 = vadd.f32 0.0, %v5199
      %5201 = vmatmul.f32.gmra.mxu0 %v5079
      %v5202 = vpop.f32.mrf.mxu0
      %v5203 = vadd.f32 0.0, %v5202
      %5204 = vmatmul.f32.gmra.mxu0 %v5080
      %v5205 = vpop.f32.mrf.mxu0
      %v5206 = vadd.f32 0.0, %v5205
      %5207 = vmatmul.f32.gmra.mxu0 %v5081
      %v5208 = vpop.f32.mrf.mxu0
      %v5209 = vadd.f32 0.0, %v5208
      %5210 = vdwg.mxu0
      %5211 = vrot.lane.b32.xlu0 %v1716, 40
      %v5212 = vpop.permute.xlu0 %5211
      %5213 = vrot.lane.b32.xlu0 %v1718, 40
      %v5214 = vpop.permute.xlu0 %5213
      %5215 = vrot.lane.b32.xlu0 %v1721, 40
      %v5216 = vpop.permute.xlu0 %5215
      %5217 = vrot.lane.b32.xlu0 %v1723, 40
      %v5218 = vpop.permute.xlu0 %5217
      %5219 = vrot.lane.b32.xlu0 %v1726, 40
      %v5220 = vpop.permute.xlu0 %5219
      %5221 = vrot.lane.b32.xlu0 %v1728, 40
      %v5222 = vpop.permute.xlu0 %5221
      %5223 = vrot.lane.b32.xlu0 %v1731, 40
      %v5224 = vpop.permute.xlu0 %5223
      %5225 = vrot.lane.b32.xlu0 %v1733, 40
      %v5226 = vpop.permute.xlu0 %5225
      %5227 = vrot.lane.b32.xlu0 %v1736, 40
      %v5228 = vpop.permute.xlu0 %5227
      %5229 = vrot.lane.b32.xlu0 %v1738, 40
      %v5230 = vpop.permute.xlu0 %5229
      %5231 = vrot.lane.b32.xlu0 %v1741, 40
      %v5232 = vpop.permute.xlu0 %5231
      %5233 = vrot.lane.b32.xlu0 %v1743, 40
      %v5234 = vpop.permute.xlu0 %5233
      %5235 = vrot.lane.b32.xlu0 %v1746, 40
      %v5236 = vpop.permute.xlu0 %5235
      %5237 = vrot.lane.b32.xlu0 %v1748, 40
      %v5238 = vpop.permute.xlu0 %5237
      %5239 = vrot.lane.b32.xlu0 %v1751, 40
      %v5240 = vpop.permute.xlu0 %5239
      %5241 = vrot.lane.b32.xlu0 %v1753, 40
      %v5242 = vpop.permute.xlu0 %5241
      %5259 = vmatpush.msra.mxu0 %v5242
      %5260 = vmatpush.msra.mxu0 %v5240
      %5261 = vmatpush.msra.mxu0 %v5238
      %5262 = vmatpush.msra.mxu0 %v5236
      %5263 = vmatpush.msra.mxu0 %v5234
      %5264 = vmatpush.msra.mxu0 %v5232
      %5265 = vmatpush.msra.mxu0 %v5230
      %5266 = vmatpush.msra.mxu0 %v5228
      %5267 = vmatpush.msra.mxu0 %v5226
      %5268 = vmatpush.msra.mxu0 %v5224
      %5269 = vmatpush.msra.mxu0 %v5222
      %5270 = vmatpush.msra.mxu0 %v5220
      %5271 = vmatpush.msra.mxu0 %v5218
      %5272 = vmatpush.msra.mxu0 %v5216
      %5273 = vmatpush.msra.mxu0 %v5214
      %5274 = vmatpush.msra.mxu0 %v5212
      %5275 = vmatmul.f32.gmra.mxu0 %v5082
      %v5276 = vpop.f32.mrf.mxu0
      %v5277 = vadd.f32 0.0, %v5276
      %5278 = vmatmul.f32.gmra.mxu0 %v5083
      %v5279 = vpop.f32.mrf.mxu0
      %v5280 = vadd.f32 0.0, %v5279
      %5281 = vmatmul.f32.gmra.mxu0 %v5084
      %v5282 = vpop.f32.mrf.mxu0
      %v5283 = vadd.f32 0.0, %v5282
      %5284 = vmatmul.f32.gmra.mxu0 %v5085
      %v5285 = vpop.f32.mrf.mxu0
      %v5286 = vadd.f32 0.0, %v5285
      %5287 = vmatmul.f32.gmra.mxu0 %v5086
      %v5288 = vpop.f32.mrf.mxu0
      %v5289 = vadd.f32 0.0, %v5288
      %5290 = vmatmul.f32.gmra.mxu0 %v5087
      %v5291 = vpop.f32.mrf.mxu0
      %v5292 = vadd.f32 0.0, %v5291
      %5293 = vmatmul.f32.gmra.mxu0 %v5088
      %v5294 = vpop.f32.mrf.mxu0
      %v5295 = vadd.f32 0.0, %v5294
      %5296 = vmatmul.f32.gmra.mxu0 %v5089
      %v5297 = vpop.f32.mrf.mxu0
      %v5298 = vadd.f32 0.0, %v5297
      %5299 = vmatmul.f32.gmra.mxu0 %v5090
      %v5300 = vpop.f32.mrf.mxu0
      %v5301 = vadd.f32 0.0, %v5300
      %5302 = vmatmul.f32.gmra.mxu0 %v5091
      %v5303 = vpop.f32.mrf.mxu0
      %v5304 = vadd.f32 0.0, %v5303
      %5305 = vmatmul.f32.gmra.mxu0 %v5092
      %v5306 = vpop.f32.mrf.mxu0
      %v5307 = vadd.f32 0.0, %v5306
      %5308 = vmatmul.f32.gmra.mxu0 %v5093
      %v5309 = vpop.f32.mrf.mxu0
      %v5310 = vadd.f32 0.0, %v5309
      %5311 = vmatmul.f32.gmra.mxu0 %v5094
      %v5312 = vpop.f32.mrf.mxu0
      %v5313 = vadd.f32 0.0, %v5312
      %5314 = vmatmul.f32.gmra.mxu0 %v5095
      %v5315 = vpop.f32.mrf.mxu0
      %v5316 = vadd.f32 0.0, %v5315
      %5317 = vmatmul.f32.gmra.mxu0 %v5096
      %v5318 = vpop.f32.mrf.mxu0
      %v5319 = vadd.f32 0.0, %v5318
      %5320 = vmatmul.f32.gmra.mxu0 %v5097
      %v5321 = vpop.f32.mrf.mxu0
      %v5322 = vadd.f32 0.0, %v5321
      %5323 = vdwg.mxu0
      %5356 = vrot.lane.b32.xlu0 %v3364, 8
      %v5357 = vpop.permute.xlu0 %5356
      %5358 = vrot.lane.b32.xlu0 %v3367, 8
      %v5359 = vpop.permute.xlu0 %5358
      %5360 = vrot.lane.b32.xlu0 %v3370, 8
      %v5361 = vpop.permute.xlu0 %5360
      %5362 = vrot.lane.b32.xlu0 %v3373, 8
      %v5363 = vpop.permute.xlu0 %5362
      %5364 = vrot.lane.b32.xlu0 %v3376, 8
      %v5365 = vpop.permute.xlu0 %5364
      %5366 = vrot.lane.b32.xlu0 %v3379, 8
      %v5367 = vpop.permute.xlu0 %5366
      %5368 = vrot.lane.b32.xlu0 %v3382, 8
      %v5369 = vpop.permute.xlu0 %5368
      %5370 = vrot.lane.b32.xlu0 %v3385, 8
      %v5371 = vpop.permute.xlu0 %5370
      %5372 = vrot.lane.b32.xlu0 %v3388, 8
      %v5373 = vpop.permute.xlu0 %5372
      %5374 = vrot.lane.b32.xlu0 %v3391, 8
      %v5375 = vpop.permute.xlu0 %5374
      %5376 = vrot.lane.b32.xlu0 %v3394, 8
      %v5377 = vpop.permute.xlu0 %5376
      %5378 = vrot.lane.b32.xlu0 %v3397, 8
      %v5379 = vpop.permute.xlu0 %5378
      %5380 = vrot.lane.b32.xlu0 %v3400, 8
      %v5381 = vpop.permute.xlu0 %5380
      %5382 = vrot.lane.b32.xlu0 %v3403, 8
      %v5383 = vpop.permute.xlu0 %5382
      %5384 = vrot.lane.b32.xlu0 %v3406, 8
      %v5385 = vpop.permute.xlu0 %5384
      %5386 = vrot.lane.b32.xlu0 %v3409, 8
      %v5387 = vpop.permute.xlu0 %5386
      %5388 = vrot.lane.b32.xlu0 %v3477, 8
      %v5389 = vpop.permute.xlu0 %5388
      %5390 = vrot.lane.b32.xlu0 %v3480, 8
      %v5391 = vpop.permute.xlu0 %5390
      %5392 = vrot.lane.b32.xlu0 %v3483, 8
      %v5393 = vpop.permute.xlu0 %5392
      %5394 = vrot.lane.b32.xlu0 %v3486, 8
      %v5395 = vpop.permute.xlu0 %5394
      %5396 = vrot.lane.b32.xlu0 %v3489, 8
      %v5397 = vpop.permute.xlu0 %5396
      %5398 = vrot.lane.b32.xlu0 %v3492, 8
      %v5399 = vpop.permute.xlu0 %5398
      %5400 = vrot.lane.b32.xlu0 %v3495, 8
      %v5401 = vpop.permute.xlu0 %5400
      %5402 = vrot.lane.b32.xlu0 %v3498, 8
      %v5403 = vpop.permute.xlu0 %5402
      %5404 = vrot.lane.b32.xlu0 %v3501, 8
      %v5405 = vpop.permute.xlu0 %5404
      %5406 = vrot.lane.b32.xlu0 %v3504, 8
      %v5407 = vpop.permute.xlu0 %5406
      %5408 = vrot.lane.b32.xlu0 %v3507, 8
      %v5409 = vpop.permute.xlu0 %5408
      %5410 = vrot.lane.b32.xlu0 %v3510, 8
      %v5411 = vpop.permute.xlu0 %5410
      %5412 = vrot.lane.b32.xlu0 %v3513, 8
      %v5413 = vpop.permute.xlu0 %5412
      %5414 = vrot.lane.b32.xlu0 %v3516, 8
      %v5415 = vpop.permute.xlu0 %5414
      %5416 = vrot.lane.b32.xlu0 %v3519, 8
      %v5417 = vpop.permute.xlu0 %5416
      %5418 = vrot.lane.b32.xlu0 %v3522, 8
      %v5419 = vpop.permute.xlu0 %5418
      %5484 = vrot.lane.b32.xlu0 %v4264, 16
      %v5485 = vpop.permute.xlu0 %5484
      %5486 = vrot.lane.b32.xlu0 %v4267, 16
      %v5487 = vpop.permute.xlu0 %5486
      %5488 = vrot.lane.b32.xlu0 %v4270, 16
      %v5489 = vpop.permute.xlu0 %5488
      %5490 = vrot.lane.b32.xlu0 %v4273, 16
      %v5491 = vpop.permute.xlu0 %5490
      %5492 = vrot.lane.b32.xlu0 %v4276, 16
      %v5493 = vpop.permute.xlu0 %5492
      %5494 = vrot.lane.b32.xlu0 %v4279, 16
      %v5495 = vpop.permute.xlu0 %5494
      %5496 = vrot.lane.b32.xlu0 %v4282, 16
      %v5497 = vpop.permute.xlu0 %5496
      %5498 = vrot.lane.b32.xlu0 %v4285, 16
      %v5499 = vpop.permute.xlu0 %5498
      %5500 = vrot.lane.b32.xlu0 %v4288, 16
      %v5501 = vpop.permute.xlu0 %5500
      %5502 = vrot.lane.b32.xlu0 %v4291, 16
      %v5503 = vpop.permute.xlu0 %5502
      %5504 = vrot.lane.b32.xlu0 %v4294, 16
      %v5505 = vpop.permute.xlu0 %5504
      %5506 = vrot.lane.b32.xlu0 %v4297, 16
      %v5507 = vpop.permute.xlu0 %5506
      %5508 = vrot.lane.b32.xlu0 %v4300, 16
      %v5509 = vpop.permute.xlu0 %5508
      %5510 = vrot.lane.b32.xlu0 %v4303, 16
      %v5511 = vpop.permute.xlu0 %5510
      %5512 = vrot.lane.b32.xlu0 %v4306, 16
      %v5513 = vpop.permute.xlu0 %5512
      %5514 = vrot.lane.b32.xlu0 %v4309, 16
      %v5515 = vpop.permute.xlu0 %5514
      %5516 = vrot.lane.b32.xlu0 %v4377, 16
      %v5517 = vpop.permute.xlu0 %5516
      %5518 = vrot.lane.b32.xlu0 %v4380, 16
      %v5519 = vpop.permute.xlu0 %5518
      %5520 = vrot.lane.b32.xlu0 %v4383, 16
      %v5521 = vpop.permute.xlu0 %5520
      %5522 = vrot.lane.b32.xlu0 %v4386, 16
      %v5523 = vpop.permute.xlu0 %5522
      %5524 = vrot.lane.b32.xlu0 %v4389, 16
      %v5525 = vpop.permute.xlu0 %5524
      %5526 = vrot.lane.b32.xlu0 %v4392, 16
      %v5527 = vpop.permute.xlu0 %5526
      %5528 = vrot.lane.b32.xlu0 %v4395, 16
      %v5529 = vpop.permute.xlu0 %5528
      %5530 = vrot.lane.b32.xlu0 %v4398, 16
      %v5531 = vpop.permute.xlu0 %5530
      %5532 = vrot.lane.b32.xlu0 %v4401, 16
      %v5533 = vpop.permute.xlu0 %5532
      %5534 = vrot.lane.b32.xlu0 %v4404, 16
      %v5535 = vpop.permute.xlu0 %5534
      %5536 = vrot.lane.b32.xlu0 %v4407, 16
      %v5537 = vpop.permute.xlu0 %5536
      %5538 = vrot.lane.b32.xlu0 %v4410, 16
      %v5539 = vpop.permute.xlu0 %5538
      %5540 = vrot.lane.b32.xlu0 %v4413, 16
      %v5541 = vpop.permute.xlu0 %5540
      %5542 = vrot.lane.b32.xlu0 %v4416, 16
      %v5543 = vpop.permute.xlu0 %5542
      %5544 = vrot.lane.b32.xlu0 %v4419, 16
      %v5545 = vpop.permute.xlu0 %5544
      %5546 = vrot.lane.b32.xlu0 %v4422, 16
      %v5547 = vpop.permute.xlu0 %5546
      %5612 = vrot.lane.b32.xlu0 %v5164, 24
      %v5613 = vpop.permute.xlu0 %5612
      %5614 = vrot.lane.b32.xlu0 %v5167, 24
      %v5615 = vpop.permute.xlu0 %5614
      %5616 = vrot.lane.b32.xlu0 %v5170, 24
      %v5617 = vpop.permute.xlu0 %5616
      %5618 = vrot.lane.b32.xlu0 %v5173, 24
      %v5619 = vpop.permute.xlu0 %5618
      %5620 = vrot.lane.b32.xlu0 %v5176, 24
      %v5621 = vpop.permute.xlu0 %5620
      %5622 = vrot.lane.b32.xlu0 %v5179, 24
      %v5623 = vpop.permute.xlu0 %5622
      %5624 = vrot.lane.b32.xlu0 %v5182, 24
      %v5625 = vpop.permute.xlu0 %5624
      %5626 = vrot.lane.b32.xlu0 %v5185, 24
      %v5627 = vpop.permute.xlu0 %5626
      %5628 = vrot.lane.b32.xlu0 %v5188, 24
      %v5629 = vpop.permute.xlu0 %5628
      %5630 = vrot.lane.b32.xlu0 %v5191, 24
      %v5631 = vpop.permute.xlu0 %5630
      %5632 = vrot.lane.b32.xlu0 %v5194, 24
      %v5633 = vpop.permute.xlu0 %5632
      %5634 = vrot.lane.b32.xlu0 %v5197, 24
      %v5635 = vpop.permute.xlu0 %5634
      %5636 = vrot.lane.b32.xlu0 %v5200, 24
      %v5637 = vpop.permute.xlu0 %5636
      %5638 = vrot.lane.b32.xlu0 %v5203, 24
      %v5639 = vpop.permute.xlu0 %5638
      %5640 = vrot.lane.b32.xlu0 %v5206, 24
      %v5641 = vpop.permute.xlu0 %5640
      %5642 = vrot.lane.b32.xlu0 %v5209, 24
      %v5643 = vpop.permute.xlu0 %5642
      %5644 = vrot.lane.b32.xlu0 %v5277, 24
      %v5645 = vpop.permute.xlu0 %5644
      %5646 = vrot.lane.b32.xlu0 %v5280, 24
      %v5647 = vpop.permute.xlu0 %5646
      %5648 = vrot.lane.b32.xlu0 %v5283, 24
      %v5649 = vpop.permute.xlu0 %5648
      %5650 = vrot.lane.b32.xlu0 %v5286, 24
      %v5651 = vpop.permute.xlu0 %5650
      %5652 = vrot.lane.b32.xlu0 %v5289, 24
      %v5653 = vpop.permute.xlu0 %5652
      %5654 = vrot.lane.b32.xlu0 %v5292, 24
      %v5655 = vpop.permute.xlu0 %5654
      %5656 = vrot.lane.b32.xlu0 %v5295, 24
      %v5657 = vpop.permute.xlu0 %5656
      %5658 = vrot.lane.b32.xlu0 %v5298, 24
      %v5659 = vpop.permute.xlu0 %5658
      %5660 = vrot.lane.b32.xlu0 %v5301, 24
      %v5661 = vpop.permute.xlu0 %5660
      %5662 = vrot.lane.b32.xlu0 %v5304, 24
      %v5663 = vpop.permute.xlu0 %5662
      %5664 = vrot.lane.b32.xlu0 %v5307, 24
      %v5665 = vpop.permute.xlu0 %5664
      %5666 = vrot.lane.b32.xlu0 %v5310, 24
      %v5667 = vpop.permute.xlu0 %5666
      %5668 = vrot.lane.b32.xlu0 %v5313, 24
      %v5669 = vpop.permute.xlu0 %5668
      %5670 = vrot.lane.b32.xlu0 %v5316, 24
      %v5671 = vpop.permute.xlu0 %5670
      %5672 = vrot.lane.b32.xlu0 %v5319, 24
      %v5673 = vpop.permute.xlu0 %5672
      %5674 = vrot.lane.b32.xlu0 %v5322, 24
      %v5675 = vpop.permute.xlu0 %5674
      %v5708 = vsel %vm1803, %v2464, %v5357
      %v5709 = vsel %vm1803, %v2467, %v5359
      %v5710 = vsel %vm1803, %v2470, %v5361
      %v5711 = vsel %vm1803, %v2473, %v5363
      %v5712 = vsel %vm1803, %v2476, %v5365
      %v5713 = vsel %vm1803, %v2479, %v5367
      %v5714 = vsel %vm1803, %v2482, %v5369
      %v5715 = vsel %vm1803, %v2485, %v5371
      %v5716 = vsel %vm1803, %v2488, %v5373
      %v5717 = vsel %vm1803, %v2491, %v5375
      %v5718 = vsel %vm1803, %v2494, %v5377
      %v5719 = vsel %vm1803, %v2497, %v5379
      %v5720 = vsel %vm1803, %v2500, %v5381
      %v5721 = vsel %vm1803, %v2503, %v5383
      %v5722 = vsel %vm1803, %v2506, %v5385
      %v5723 = vsel %vm1803, %v2509, %v5387
      %v5724 = vsel %vm1803, %v2577, %v5389
      %v5725 = vsel %vm1803, %v2580, %v5391
      %v5726 = vsel %vm1803, %v2583, %v5393
      %v5727 = vsel %vm1803, %v2586, %v5395
      %v5728 = vsel %vm1803, %v2589, %v5397
      %v5729 = vsel %vm1803, %v2592, %v5399
      %v5730 = vsel %vm1803, %v2595, %v5401
      %v5731 = vsel %vm1803, %v2598, %v5403
      %v5732 = vsel %vm1803, %v2601, %v5405
      %v5733 = vsel %vm1803, %v2604, %v5407
      %v5734 = vsel %vm1803, %v2607, %v5409
      %v5735 = vsel %vm1803, %v2610, %v5411
      %v5736 = vsel %vm1803, %v2613, %v5413
      %v5737 = vsel %vm1803, %v2616, %v5415
      %v5738 = vsel %vm1803, %v2619, %v5417
      %v5739 = vsel %vm1803, %v2622, %v5419
      %vm5740 = vcmask 130048
      %v5741 = vsel %vm5740, %v5708, %v5485
      %v5742 = vsel %vm5740, %v5709, %v5487
      %v5743 = vsel %vm5740, %v5710, %v5489
      %v5744 = vsel %vm5740, %v5711, %v5491
      %v5745 = vsel %vm5740, %v5712, %v5493
      %v5746 = vsel %vm5740, %v5713, %v5495
      %v5747 = vsel %vm5740, %v5714, %v5497
      %v5748 = vsel %vm5740, %v5715, %v5499
      %v5749 = vsel %vm5740, %v5716, %v5501
      %v5750 = vsel %vm5740, %v5717, %v5503
      %v5751 = vsel %vm5740, %v5718, %v5505
      %v5752 = vsel %vm5740, %v5719, %v5507
      %v5753 = vsel %vm5740, %v5720, %v5509
      %v5754 = vsel %vm5740, %v5721, %v5511
      %v5755 = vsel %vm5740, %v5722, %v5513
      %v5756 = vsel %vm5740, %v5723, %v5515
      %v5757 = vsel %vm5740, %v5724, %v5517
      %v5758 = vsel %vm5740, %v5725, %v5519
      %v5759 = vsel %vm5740, %v5726, %v5521
      %v5760 = vsel %vm5740, %v5727, %v5523
      %v5761 = vsel %vm5740, %v5728, %v5525
      %v5762 = vsel %vm5740, %v5729, %v5527
      %v5763 = vsel %vm5740, %v5730, %v5529
      %v5764 = vsel %vm5740, %v5731, %v5531
      %v5765 = vsel %vm5740, %v5732, %v5533
      %v5766 = vsel %vm5740, %v5733, %v5535
      %v5767 = vsel %vm5740, %v5734, %v5537
      %v5768 = vsel %vm5740, %v5735, %v5539
      %v5769 = vsel %vm5740, %v5736, %v5541
      %v5770 = vsel %vm5740, %v5737, %v5543
      %v5771 = vsel %vm5740, %v5738, %v5545
      %v5772 = vsel %vm5740, %v5739, %v5547
      %vm5773 = vcmask 195584
      %v5774 = vsel %vm5773, %v5741, %v5613
      %v5775 = vsel %vm5773, %v5742, %v5615
      %v5776 = vsel %vm5773, %v5743, %v5617
      %v5777 = vsel %vm5773, %v5744, %v5619
      %v5778 = vsel %vm5773, %v5745, %v5621
      %v5779 = vsel %vm5773, %v5746, %v5623
      %v5780 = vsel %vm5773, %v5747, %v5625
      %v5781 = vsel %vm5773, %v5748, %v5627
      %v5782 = vsel %vm5773, %v5749, %v5629
      %v5783 = vsel %vm5773, %v5750, %v5631
      %v5784 = vsel %vm5773, %v5751, %v5633
      %v5785 = vsel %vm5773, %v5752, %v5635
      %v5786 = vsel %vm5773, %v5753, %v5637
      %v5787 = vsel %vm5773, %v5754, %v5639
      %v5788 = vsel %vm5773, %v5755, %v5641
      %v5789 = vsel %vm5773, %v5756, %v5643
      %v5790 = vsel %vm5773, %v5757, %v5645
      %v5791 = vsel %vm5773, %v5758, %v5647
      %v5792 = vsel %vm5773, %v5759, %v5649
      %v5793 = vsel %vm5773, %v5760, %v5651
      %v5794 = vsel %vm5773, %v5761, %v5653
      %v5795 = vsel %vm5773, %v5762, %v5655
      %v5796 = vsel %vm5773, %v5763, %v5657
      %v5797 = vsel %vm5773, %v5764, %v5659
      %v5798 = vsel %vm5773, %v5765, %v5661
      %v5799 = vsel %vm5773, %v5766, %v5663
      %v5800 = vsel %vm5773, %v5767, %v5665
      %v5801 = vsel %vm5773, %v5768, %v5667
      %v5802 = vsel %vm5773, %v5769, %v5669
      %v5803 = vsel %vm5773, %v5770, %v5671
      %v5804 = vsel %vm5773, %v5771, %v5673
      %v5805 = vsel %vm5773, %v5772, %v5675
      %v5806 = vpack.c.bf16 %v5775, %v5774
      %v5807 = vpack.c.bf16 %v5777, %v5776
      %v5808 = vpack.c.bf16 %v5779, %v5778
      %v5809 = vpack.c.bf16 %v5781, %v5780
      %v5810 = vpack.c.bf16 %v5783, %v5782
      %v5811 = vpack.c.bf16 %v5785, %v5784
      %v5812 = vpack.c.bf16 %v5787, %v5786
      %v5813 = vpack.c.bf16 %v5789, %v5788
      %v5814 = vpack.c.bf16 %v5791, %v5790
      %v5815 = vpack.c.bf16 %v5793, %v5792
      %v5816 = vpack.c.bf16 %v5795, %v5794
      %v5817 = vpack.c.bf16 %v5797, %v5796
      %v5818 = vpack.c.bf16 %v5799, %v5798
      %v5819 = vpack.c.bf16 %v5801, %v5800
      %v5820 = vpack.c.bf16 %v5803, %v5802
      %v5821 = vpack.c.bf16 %v5805, %v5804
      %v5822 = vld [vmem:[%s647] sm:$0xf]
      %v5823 = vld [vmem:[%s647 + $0x4] sm:$0xf]
      %v5824 = vld [vmem:[%s647 + $0x8] sm:$0xf]
      %v5825 = vld [vmem:[%s647 + $0xc] sm:$0xf]
      %v5826 = vld [vmem:[%s650] sm:$0x1]
      %v5828 = vperm.slane %v5826, 0
      %v5834 = vunpack.c.l.b16 %v5822
      %v5835 = vunpack.c.l.b16 %v5823
      %v5836 = vunpack.c.l.b16 %v5824
      %v5837 = vunpack.c.l.b16 %v5825
      %v5838 = vpack.c.b16 %v5835, %v5834
      %v5839 = vpack.c.b16 %v5837, %v5836
      %v5843 = vsel %vm800, %v5806, 0
      %v5846 = vsel %vm800, %v5807, 0
      %v5849 = vsel %vm800, %v5808, 0
      %v5852 = vsel %vm800, %v5809, 0
      %v5855 = vsel %vm800, %v5810, 0
      %v5858 = vsel %vm800, %v5811, 0
      %v5861 = vsel %vm800, %v5812, 0
      %v5864 = vsel %vm800, %v5813, 0
      %v5867 = vsel %vm800, %v5814, 0
      %v5870 = vsel %vm800, %v5815, 0
      %v5873 = vsel %vm800, %v5816, 0
      %v5876 = vsel %vm800, %v5817, 0
      %v5879 = vsel %vm800, %v5818, 0
      %v5882 = vsel %vm800, %v5819, 0
      %v5885 = vsel %vm800, %v5820, 0
      %v5888 = vsel %vm800, %v5821, 0
      %5890 = vmatpush.bf16.msra.mxu0 0
      %5891 = vmatpush.bf16.msra.mxu0 0
      %5892 = vmatpush.bf16.msra.mxu0 0
      %5893 = vmatpush.bf16.msra.mxu0 0
      %5894 = vmatpush.bf16.msra.mxu0 0
      %5895 = vmatpush.bf16.msra.mxu0 0
      %5896 = vmatpush.bf16.msra.mxu0 %v5839
      %5897 = vmatpush.bf16.msra.mxu0 %v5838
      %5898 = vmatmul.bf16.gmra.mxu0 %v5843
      %v5899 = vpop.f32.mrf.mxu0
      %v5900 = vadd.f32 %v5828, %v5899
      %v5901 = vpop.f32.mrf.mxu0
      %v5902 = vadd.f32 %v5828, %v5901
      %5903 = vmatmul.bf16.gmra.mxu0 %v5846
      %v5904 = vpop.f32.mrf.mxu0
      %v5905 = vadd.f32 %v5828, %v5904
      %v5906 = vpop.f32.mrf.mxu0
      %v5907 = vadd.f32 %v5828, %v5906
      %5908 = vmatmul.bf16.gmra.mxu0 %v5849
      %v5909 = vpop.f32.mrf.mxu0
      %v5910 = vadd.f32 %v5828, %v5909
      %v5911 = vpop.f32.mrf.mxu0
      %v5912 = vadd.f32 %v5828, %v5911
      %5913 = vmatmul.bf16.gmra.mxu0 %v5852
      %v5914 = vpop.f32.mrf.mxu0
      %v5915 = vadd.f32 %v5828, %v5914
      %v5916 = vpop.f32.mrf.mxu0
      %v5917 = vadd.f32 %v5828, %v5916
      %5918 = vmatmul.bf16.gmra.mxu0 %v5855
      %v5919 = vpop.f32.mrf.mxu0
      %v5920 = vadd.f32 %v5828, %v5919
      %v5921 = vpop.f32.mrf.mxu0
      %v5922 = vadd.f32 %v5828, %v5921
      %5923 = vmatmul.bf16.gmra.mxu0 %v5858
      %v5924 = vpop.f32.mrf.mxu0
      %v5925 = vadd.f32 %v5828, %v5924
      %v5926 = vpop.f32.mrf.mxu0
      %v5927 = vadd.f32 %v5828, %v5926
      %5928 = vmatmul.bf16.gmra.mxu0 %v5861
      %v5929 = vpop.f32.mrf.mxu0
      %v5930 = vadd.f32 %v5828, %v5929
      %v5931 = vpop.f32.mrf.mxu0
      %v5932 = vadd.f32 %v5828, %v5931
      %5933 = vmatmul.bf16.gmra.mxu0 %v5864
      %v5934 = vpop.f32.mrf.mxu0
      %v5935 = vadd.f32 %v5828, %v5934
      %v5936 = vpop.f32.mrf.mxu0
      %v5937 = vadd.f32 %v5828, %v5936
      %5938 = vmatmul.bf16.gmra.mxu0 %v5867
      %v5939 = vpop.f32.mrf.mxu0
      %v5940 = vadd.f32 %v5828, %v5939
      %v5941 = vpop.f32.mrf.mxu0
      %v5942 = vadd.f32 %v5828, %v5941
      %5943 = vmatmul.bf16.gmra.mxu0 %v5870
      %v5944 = vpop.f32.mrf.mxu0
      %v5945 = vadd.f32 %v5828, %v5944
      %v5946 = vpop.f32.mrf.mxu0
      %v5947 = vadd.f32 %v5828, %v5946
      %5948 = vmatmul.bf16.gmra.mxu0 %v5873
      %v5949 = vpop.f32.mrf.mxu0
      %v5950 = vadd.f32 %v5828, %v5949
      %v5951 = vpop.f32.mrf.mxu0
      %v5952 = vadd.f32 %v5828, %v5951
      %5953 = vmatmul.bf16.gmra.mxu0 %v5876
      %v5954 = vpop.f32.mrf.mxu0
      %v5955 = vadd.f32 %v5828, %v5954
      %v5956 = vpop.f32.mrf.mxu0
      %v5957 = vadd.f32 %v5828, %v5956
      %5958 = vmatmul.bf16.gmra.mxu0 %v5879
      %v5959 = vpop.f32.mrf.mxu0
      %v5960 = vadd.f32 %v5828, %v5959
      %v5961 = vpop.f32.mrf.mxu0
      %v5962 = vadd.f32 %v5828, %v5961
      %5963 = vmatmul.bf16.gmra.mxu0 %v5882
      %v5964 = vpop.f32.mrf.mxu0
      %v5965 = vadd.f32 %v5828, %v5964
      %v5966 = vpop.f32.mrf.mxu0
      %v5967 = vadd.f32 %v5828, %v5966
      %5968 = vmatmul.bf16.gmra.mxu0 %v5885
      %v5969 = vpop.f32.mrf.mxu0
      %v5970 = vadd.f32 %v5828, %v5969
      %v5971 = vpop.f32.mrf.mxu0
      %v5972 = vadd.f32 %v5828, %v5971
      %5973 = vmatmul.bf16.gmra.mxu0 %v5888
      %v5974 = vpop.f32.mrf.mxu0
      %v5975 = vadd.f32 %v5828, %v5974
      %v5976 = vpop.f32.mrf.mxu0
      %v5977 = vadd.f32 %v5828, %v5976
      %5978 = vdwg.mxu0
      %v5979 = vadd.f32 %v766, %v5900
      %v5980 = vadd.f32 %v767, %v5902
      %v5981 = vadd.f32 %v768, %v5905
      %v5982 = vadd.f32 %v769, %v5907
      %v5983 = vadd.f32 %v770, %v5910
      %v5984 = vadd.f32 %v771, %v5912
      %v5985 = vadd.f32 %v772, %v5915
      %v5986 = vadd.f32 %v773, %v5917
      %v5987 = vadd.f32 %v774, %v5920
      %v5988 = vadd.f32 %v775, %v5922
      %v5989 = vadd.f32 %v776, %v5925
      %v5990 = vadd.f32 %v777, %v5927
      %v5991 = vadd.f32 %v778, %v5930
      %v5992 = vadd.f32 %v779, %v5932
      %v5993 = vadd.f32 %v780, %v5935
      %v5994 = vadd.f32 %v781, %v5937
      %v5995 = vadd.f32 %v782, %v5940
      %v5996 = vadd.f32 %v783, %v5942
      %v5997 = vadd.f32 %v784, %v5945
      %v5998 = vadd.f32 %v785, %v5947
      %v5999 = vadd.f32 %v786, %v5950
      %v6000 = vadd.f32 %v787, %v5952
      %v6001 = vadd.f32 %v788, %v5955
      %v6002 = vadd.f32 %v789, %v5957
      %v6003 = vadd.f32 %v790, %v5960
      %v6004 = vadd.f32 %v791, %v5962
      %v6005 = vadd.f32 %v792, %v5965
      %v6006 = vadd.f32 %v793, %v5967
      %v6007 = vadd.f32 %v794, %v5970
      %v6008 = vadd.f32 %v795, %v5972
      %v6009 = vadd.f32 %v796, %v5975
      %v6010 = vadd.f32 %v797, %v5977
      %v6011 = vld [vmem:[%s653] sm:$0x1]
      %v6012 = vld [vmem:[%s656] sm:$0x1]
      %v6013 = vsel %vm800, %v5979, 0.0
      %6014 = vadd.xlane.f32.xlu0 %v6013
      %v6015 = vpop.xlane.xlu0 %6014
      %v6016 = vsel %vm800, %v5980, 0.0
      %6017 = vadd.xlane.f32.xlu0 %v6016
      %v6018 = vpop.xlane.xlu0 %6017
      %v6019 = vsel %vm800, %v5981, 0.0
      %6020 = vadd.xlane.f32.xlu0 %v6019
      %v6021 = vpop.xlane.xlu0 %6020
      %v6022 = vsel %vm800, %v5982, 0.0
      %6023 = vadd.xlane.f32.xlu0 %v6022
      %v6024 = vpop.xlane.xlu0 %6023
      %v6025 = vsel %vm800, %v5983, 0.0
      %6026 = vadd.xlane.f32.xlu0 %v6025
      %v6027 = vpop.xlane.xlu0 %6026
      %v6028 = vsel %vm800, %v5984, 0.0
      %6029 = vadd.xlane.f32.xlu0 %v6028
      %v6030 = vpop.xlane.xlu0 %6029
      %v6031 = vsel %vm800, %v5985, 0.0
      %6032 = vadd.xlane.f32.xlu0 %v6031
      %v6033 = vpop.xlane.xlu0 %6032
      %v6034 = vsel %vm800, %v5986, 0.0
      %6035 = vadd.xlane.f32.xlu0 %v6034
      %v6036 = vpop.xlane.xlu0 %6035
      %v6037 = vsel %vm800, %v5987, 0.0
      %6038 = vadd.xlane.f32.xlu0 %v6037
      %v6039 = vpop.xlane.xlu0 %6038
      %v6040 = vsel %vm800, %v5988, 0.0
      %6041 = vadd.xlane.f32.xlu0 %v6040
      %v6042 = vpop.xlane.xlu0 %6041
      %v6043 = vsel %vm800, %v5989, 0.0
      %6044 = vadd.xlane.f32.xlu0 %v6043
      %v6045 = vpop.xlane.xlu0 %6044
      %v6046 = vsel %vm800, %v5990, 0.0
      %6047 = vadd.xlane.f32.xlu0 %v6046
      %v6048 = vpop.xlane.xlu0 %6047
      %v6049 = vsel %vm800, %v5991, 0.0
      %6050 = vadd.xlane.f32.xlu0 %v6049
      %v6051 = vpop.xlane.xlu0 %6050
      %v6052 = vsel %vm800, %v5992, 0.0
      %6053 = vadd.xlane.f32.xlu0 %v6052
      %v6054 = vpop.xlane.xlu0 %6053
      %v6055 = vsel %vm800, %v5993, 0.0
      %6056 = vadd.xlane.f32.xlu0 %v6055
      %v6057 = vpop.xlane.xlu0 %6056
      %v6058 = vsel %vm800, %v5994, 0.0
      %6059 = vadd.xlane.f32.xlu0 %v6058
      %v6060 = vpop.xlane.xlu0 %6059
      %v6061 = vsel %vm800, %v5995, 0.0
      %6062 = vadd.xlane.f32.xlu0 %v6061
      %v6063 = vpop.xlane.xlu0 %6062
      %v6064 = vsel %vm800, %v5996, 0.0
      %6065 = vadd.xlane.f32.xlu0 %v6064
      %v6066 = vpop.xlane.xlu0 %6065
      %v6067 = vsel %vm800, %v5997, 0.0
      %6068 = vadd.xlane.f32.xlu0 %v6067
      %v6069 = vpop.xlane.xlu0 %6068
      %v6070 = vsel %vm800, %v5998, 0.0
      %6071 = vadd.xlane.f32.xlu0 %v6070
      %v6072 = vpop.xlane.xlu0 %6071
      %v6073 = vsel %vm800, %v5999, 0.0
      %6074 = vadd.xlane.f32.xlu0 %v6073
      %v6075 = vpop.xlane.xlu0 %6074
      %v6076 = vsel %vm800, %v6000, 0.0
      %6077 = vadd.xlane.f32.xlu0 %v6076
      %v6078 = vpop.xlane.xlu0 %6077
      %v6079 = vsel %vm800, %v6001, 0.0
      %6080 = vadd.xlane.f32.xlu0 %v6079
      %v6081 = vpop.xlane.xlu0 %6080
      %v6082 = vsel %vm800, %v6002, 0.0
      %6083 = vadd.xlane.f32.xlu0 %v6082
      %v6084 = vpop.xlane.xlu0 %6083
      %v6085 = vsel %vm800, %v6003, 0.0
      %6086 = vadd.xlane.f32.xlu0 %v6085
      %v6087 = vpop.xlane.xlu0 %6086
      %v6088 = vsel %vm800, %v6004, 0.0
      %6089 = vadd.xlane.f32.xlu0 %v6088
      %v6090 = vpop.xlane.xlu0 %6089
      %v6091 = vsel %vm800, %v6005, 0.0
      %6092 = vadd.xlane.f32.xlu0 %v6091
      %v6093 = vpop.xlane.xlu0 %6092
      %v6094 = vsel %vm800, %v6006, 0.0
      %6095 = vadd.xlane.f32.xlu0 %v6094
      %v6096 = vpop.xlane.xlu0 %6095
      %v6097 = vsel %vm800, %v6007, 0.0
      %6098 = vadd.xlane.f32.xlu0 %v6097
      %v6099 = vpop.xlane.xlu0 %6098
      %v6100 = vsel %vm800, %v6008, 0.0
      %6101 = vadd.xlane.f32.xlu0 %v6100
      %v6102 = vpop.xlane.xlu0 %6101
      %v6103 = vsel %vm800, %v6009, 0.0
      %6104 = vadd.xlane.f32.xlu0 %v6103
      %v6105 = vpop.xlane.xlu0 %6104
      %v6106 = vsel %vm800, %v6010, 0.0
      %6107 = vadd.xlane.f32.xlu0 %v6106
      %v6108 = vpop.xlane.xlu0 %6107
      %v6109 = vmul.f32 %v6015, %v903
      %v6110 = vmul.f32 %v6018, %v903
      %v6111 = vmul.f32 %v6021, %v903
      %v6112 = vmul.f32 %v6024, %v903
      %v6113 = vmul.f32 %v6027, %v903
      %v6114 = vmul.f32 %v6030, %v903
      %v6115 = vmul.f32 %v6033, %v903
      %v6116 = vmul.f32 %v6036, %v903
      %v6117 = vmul.f32 %v6039, %v903
      %v6118 = vmul.f32 %v6042, %v903
      %v6119 = vmul.f32 %v6045, %v903
      %v6120 = vmul.f32 %v6048, %v903
      %v6121 = vmul.f32 %v6051, %v903
      %v6122 = vmul.f32 %v6054, %v903
      %v6123 = vmul.f32 %v6057, %v903
      %v6124 = vmul.f32 %v6060, %v903
      %v6125 = vmul.f32 %v6063, %v903
      %v6126 = vmul.f32 %v6066, %v903
      %v6127 = vmul.f32 %v6069, %v903
      %v6128 = vmul.f32 %v6072, %v903
      %v6129 = vmul.f32 %v6075, %v903
      %v6130 = vmul.f32 %v6078, %v903
      %v6131 = vmul.f32 %v6081, %v903
      %v6132 = vmul.f32 %v6084, %v903
      %v6133 = vmul.f32 %v6087, %v903
      %v6134 = vmul.f32 %v6090, %v903
      %v6135 = vmul.f32 %v6093, %v903
      %v6136 = vmul.f32 %v6096, %v903
      %v6137 = vmul.f32 %v6099, %v903
      %v6138 = vmul.f32 %v6102, %v903
      %v6139 = vmul.f32 %v6105, %v903
      %v6140 = vmul.f32 %v6108, %v903
      %v6141 = vsub.f32 %v5979, %v6109
      %v6142 = vsub.f32 %v5980, %v6110
      %v6143 = vsub.f32 %v5981, %v6111
      %v6144 = vsub.f32 %v5982, %v6112
      %v6145 = vsub.f32 %v5983, %v6113
      %v6146 = vsub.f32 %v5984, %v6114
      %v6147 = vsub.f32 %v5985, %v6115
      %v6148 = vsub.f32 %v5986, %v6116
      %v6149 = vsub.f32 %v5987, %v6117
      %v6150 = vsub.f32 %v5988, %v6118
      %v6151 = vsub.f32 %v5989, %v6119
      %v6152 = vsub.f32 %v5990, %v6120
      %v6153 = vsub.f32 %v5991, %v6121
      %v6154 = vsub.f32 %v5992, %v6122
      %v6155 = vsub.f32 %v5993, %v6123
      %v6156 = vsub.f32 %v5994, %v6124
      %v6157 = vsub.f32 %v5995, %v6125
      %v6158 = vsub.f32 %v5996, %v6126
      %v6159 = vsub.f32 %v5997, %v6127
      %v6160 = vsub.f32 %v5998, %v6128
      %v6161 = vsub.f32 %v5999, %v6129
      %v6162 = vsub.f32 %v6000, %v6130
      %v6163 = vsub.f32 %v6001, %v6131
      %v6164 = vsub.f32 %v6002, %v6132
      %v6165 = vsub.f32 %v6003, %v6133
      %v6166 = vsub.f32 %v6004, %v6134
      %v6167 = vsub.f32 %v6005, %v6135
      %v6168 = vsub.f32 %v6006, %v6136
      %v6169 = vsub.f32 %v6007, %v6137
      %v6170 = vsub.f32 %v6008, %v6138
      %v6171 = vsub.f32 %v6009, %v6139
      %v6172 = vsub.f32 %v6010, %v6140
      %v6173 = vmul.f32 %v6141, %v6141
      %v6174 = vmul.f32 %v6142, %v6142
      %v6175 = vmul.f32 %v6143, %v6143
      %v6176 = vmul.f32 %v6144, %v6144
      %v6177 = vmul.f32 %v6145, %v6145
      %v6178 = vmul.f32 %v6146, %v6146
      %v6179 = vmul.f32 %v6147, %v6147
      %v6180 = vmul.f32 %v6148, %v6148
      %v6181 = vmul.f32 %v6149, %v6149
      %v6182 = vmul.f32 %v6150, %v6150
      %v6183 = vmul.f32 %v6151, %v6151
      %v6184 = vmul.f32 %v6152, %v6152
      %v6185 = vmul.f32 %v6153, %v6153
      %v6186 = vmul.f32 %v6154, %v6154
      %v6187 = vmul.f32 %v6155, %v6155
      %v6188 = vmul.f32 %v6156, %v6156
      %v6189 = vmul.f32 %v6157, %v6157
      %v6190 = vmul.f32 %v6158, %v6158
      %v6191 = vmul.f32 %v6159, %v6159
      %v6192 = vmul.f32 %v6160, %v6160
      %v6193 = vmul.f32 %v6161, %v6161
      %v6194 = vmul.f32 %v6162, %v6162
      %v6195 = vmul.f32 %v6163, %v6163
      %v6196 = vmul.f32 %v6164, %v6164
      %v6197 = vmul.f32 %v6165, %v6165
      %v6198 = vmul.f32 %v6166, %v6166
      %v6199 = vmul.f32 %v6167, %v6167
      %v6200 = vmul.f32 %v6168, %v6168
      %v6201 = vmul.f32 %v6169, %v6169
      %v6202 = vmul.f32 %v6170, %v6170
      %v6203 = vmul.f32 %v6171, %v6171
      %v6204 = vmul.f32 %v6172, %v6172
      %v6205 = vsel %vm800, %v6173, 0.0
      %6206 = vadd.xlane.f32.xlu0 %v6205
      %v6207 = vpop.xlane.xlu0 %6206
      %v6208 = vsel %vm800, %v6174, 0.0
      %6209 = vadd.xlane.f32.xlu0 %v6208
      %v6210 = vpop.xlane.xlu0 %6209
      %v6211 = vsel %vm800, %v6175, 0.0
      %6212 = vadd.xlane.f32.xlu0 %v6211
      %v6213 = vpop.xlane.xlu0 %6212
      %v6214 = vsel %vm800, %v6176, 0.0
      %6215 = vadd.xlane.f32.xlu0 %v6214
      %v6216 = vpop.xlane.xlu0 %6215
      %v6217 = vsel %vm800, %v6177, 0.0
      %6218 = vadd.xlane.f32.xlu0 %v6217
      %v6219 = vpop.xlane.xlu0 %6218
      %v6220 = vsel %vm800, %v6178, 0.0
      %6221 = vadd.xlane.f32.xlu0 %v6220
      %v6222 = vpop.xlane.xlu0 %6221
      %v6223 = vsel %vm800, %v6179, 0.0
      %6224 = vadd.xlane.f32.xlu0 %v6223
      %v6225 = vpop.xlane.xlu0 %6224
      %v6226 = vsel %vm800, %v6180, 0.0
      %6227 = vadd.xlane.f32.xlu0 %v6226
      %v6228 = vpop.xlane.xlu0 %6227
      %v6229 = vsel %vm800, %v6181, 0.0
      %6230 = vadd.xlane.f32.xlu0 %v6229
      %v6231 = vpop.xlane.xlu0 %6230
      %v6232 = vsel %vm800, %v6182, 0.0
      %6233 = vadd.xlane.f32.xlu0 %v6232
      %v6234 = vpop.xlane.xlu0 %6233
      %v6235 = vsel %vm800, %v6183, 0.0
      %6236 = vadd.xlane.f32.xlu0 %v6235
      %v6237 = vpop.xlane.xlu0 %6236
      %v6238 = vsel %vm800, %v6184, 0.0
      %6239 = vadd.xlane.f32.xlu0 %v6238
      %v6240 = vpop.xlane.xlu0 %6239
      %v6241 = vsel %vm800, %v6185, 0.0
      %6242 = vadd.xlane.f32.xlu0 %v6241
      %v6243 = vpop.xlane.xlu0 %6242
      %v6244 = vsel %vm800, %v6186, 0.0
      %6245 = vadd.xlane.f32.xlu0 %v6244
      %v6246 = vpop.xlane.xlu0 %6245
      %v6247 = vsel %vm800, %v6187, 0.0
      %6248 = vadd.xlane.f32.xlu0 %v6247
      %v6249 = vpop.xlane.xlu0 %6248
      %v6250 = vsel %vm800, %v6188, 0.0
      %6251 = vadd.xlane.f32.xlu0 %v6250
      %v6252 = vpop.xlane.xlu0 %6251
      %v6253 = vsel %vm800, %v6189, 0.0
      %6254 = vadd.xlane.f32.xlu0 %v6253
      %v6255 = vpop.xlane.xlu0 %6254
      %v6256 = vsel %vm800, %v6190, 0.0
      %6257 = vadd.xlane.f32.xlu0 %v6256
      %v6258 = vpop.xlane.xlu0 %6257
      %v6259 = vsel %vm800, %v6191, 0.0
      %6260 = vadd.xlane.f32.xlu0 %v6259
      %v6261 = vpop.xlane.xlu0 %6260
      %v6262 = vsel %vm800, %v6192, 0.0
      %6263 = vadd.xlane.f32.xlu0 %v6262
      %v6264 = vpop.xlane.xlu0 %6263
      %v6265 = vsel %vm800, %v6193, 0.0
      %6266 = vadd.xlane.f32.xlu0 %v6265
      %v6267 = vpop.xlane.xlu0 %6266
      %v6268 = vsel %vm800, %v6194, 0.0
      %6269 = vadd.xlane.f32.xlu0 %v6268
      %v6270 = vpop.xlane.xlu0 %6269
      %v6271 = vsel %vm800, %v6195, 0.0
      %6272 = vadd.xlane.f32.xlu0 %v6271
      %v6273 = vpop.xlane.xlu0 %6272
      %v6274 = vsel %vm800, %v6196, 0.0
      %6275 = vadd.xlane.f32.xlu0 %v6274
      %v6276 = vpop.xlane.xlu0 %6275
      %v6277 = vsel %vm800, %v6197, 0.0
      %6278 = vadd.xlane.f32.xlu0 %v6277
      %v6279 = vpop.xlane.xlu0 %6278
      %v6280 = vsel %vm800, %v6198, 0.0
      %6281 = vadd.xlane.f32.xlu0 %v6280
      %v6282 = vpop.xlane.xlu0 %6281
      %v6283 = vsel %vm800, %v6199, 0.0
      %6284 = vadd.xlane.f32.xlu0 %v6283
      %v6285 = vpop.xlane.xlu0 %6284
      %v6286 = vsel %vm800, %v6200, 0.0
      %6287 = vadd.xlane.f32.xlu0 %v6286
      %v6288 = vpop.xlane.xlu0 %6287
      %v6289 = vsel %vm800, %v6201, 0.0
      %6290 = vadd.xlane.f32.xlu0 %v6289
      %v6291 = vpop.xlane.xlu0 %6290
      %v6292 = vsel %vm800, %v6202, 0.0
      %6293 = vadd.xlane.f32.xlu0 %v6292
      %v6294 = vpop.xlane.xlu0 %6293
      %v6295 = vsel %vm800, %v6203, 0.0
      %6296 = vadd.xlane.f32.xlu0 %v6295
      %v6297 = vpop.xlane.xlu0 %6296
      %v6298 = vsel %vm800, %v6204, 0.0
      %6299 = vadd.xlane.f32.xlu0 %v6298
      %v6300 = vpop.xlane.xlu0 %6299
      %v6301 = vmul.f32 %v6207, %v903
      %v6302 = vmul.f32 %v6210, %v903
      %v6303 = vmul.f32 %v6213, %v903
      %v6304 = vmul.f32 %v6216, %v903
      %v6305 = vmul.f32 %v6219, %v903
      %v6306 = vmul.f32 %v6222, %v903
      %v6307 = vmul.f32 %v6225, %v903
      %v6308 = vmul.f32 %v6228, %v903
      %v6309 = vmul.f32 %v6231, %v903
      %v6310 = vmul.f32 %v6234, %v903
      %v6311 = vmul.f32 %v6237, %v903
      %v6312 = vmul.f32 %v6240, %v903
      %v6313 = vmul.f32 %v6243, %v903
      %v6314 = vmul.f32 %v6246, %v903
      %v6315 = vmul.f32 %v6249, %v903
      %v6316 = vmul.f32 %v6252, %v903
      %v6317 = vmul.f32 %v6255, %v903
      %v6318 = vmul.f32 %v6258, %v903
      %v6319 = vmul.f32 %v6261, %v903
      %v6320 = vmul.f32 %v6264, %v903
      %v6321 = vmul.f32 %v6267, %v903
      %v6322 = vmul.f32 %v6270, %v903
      %v6323 = vmul.f32 %v6273, %v903
      %v6324 = vmul.f32 %v6276, %v903
      %v6325 = vmul.f32 %v6279, %v903
      %v6326 = vmul.f32 %v6282, %v903
      %v6327 = vmul.f32 %v6285, %v903
      %v6328 = vmul.f32 %v6288, %v903
      %v6329 = vmul.f32 %v6291, %v903
      %v6330 = vmul.f32 %v6294, %v903
      %v6331 = vmul.f32 %v6297, %v903
      %v6332 = vmul.f32 %v6300, %v903
      %v6333 = vadd.f32 %v6301, 1e-05
      %v6334 = vadd.f32 %v6302, 1e-05
      %v6335 = vadd.f32 %v6303, 1e-05
      %v6336 = vadd.f32 %v6304, 1e-05
      %v6337 = vadd.f32 %v6305, 1e-05
      %v6338 = vadd.f32 %v6306, 1e-05
      %v6339 = vadd.f32 %v6307, 1e-05
      %v6340 = vadd.f32 %v6308, 1e-05
      %v6341 = vadd.f32 %v6309, 1e-05
      %v6342 = vadd.f32 %v6310, 1e-05
      %v6343 = vadd.f32 %v6311, 1e-05
      %v6344 = vadd.f32 %v6312, 1e-05
      %v6345 = vadd.f32 %v6313, 1e-05
      %v6346 = vadd.f32 %v6314, 1e-05
      %v6347 = vadd.f32 %v6315, 1e-05
      %v6348 = vadd.f32 %v6316, 1e-05
      %v6349 = vadd.f32 %v6317, 1e-05
      %v6350 = vadd.f32 %v6318, 1e-05
      %v6351 = vadd.f32 %v6319, 1e-05
      %v6352 = vadd.f32 %v6320, 1e-05
      %v6353 = vadd.f32 %v6321, 1e-05
      %v6354 = vadd.f32 %v6322, 1e-05
      %v6355 = vadd.f32 %v6323, 1e-05
      %v6356 = vadd.f32 %v6324, 1e-05
      %v6357 = vadd.f32 %v6325, 1e-05
      %v6358 = vadd.f32 %v6326, 1e-05
      %v6359 = vadd.f32 %v6327, 1e-05
      %v6360 = vadd.f32 %v6328, 1e-05
      %v6361 = vadd.f32 %v6329, 1e-05
      %v6362 = vadd.f32 %v6330, 1e-05
      %v6363 = vadd.f32 %v6331, 1e-05
      %v6364 = vadd.f32 %v6332, 1e-05
      %v6365 = vrsqrt.pop %v6333
      %v6366 = vmul.f32 %v6365, %v6333
      %v6367 = vmul.f32 %v6366, %v6365
      %v6368 = vmul.f32 0.5, %v6367
      %v6369 = vsub.f32 1.5, %v6368
      %v6370 = vmul.f32 %v6365, %v6369
      %vm6371 = vweird.f32 %v6333
      %vm6372 = vweird.f32 %v6365
      %vm6373 = vmor %vm6371, %vm6372
      %v6374 = vsel %vm6373, %v6365, %v6370
      %v6375 = vrsqrt.pop %v6334
      %v6376 = vmul.f32 %v6375, %v6334
      %v6377 = vmul.f32 %v6376, %v6375
      %v6378 = vmul.f32 0.5, %v6377
      %v6379 = vsub.f32 1.5, %v6378
      %v6380 = vmul.f32 %v6375, %v6379
      %vm6381 = vweird.f32 %v6334
      %vm6382 = vweird.f32 %v6375
      %vm6383 = vmor %vm6381, %vm6382
      %v6384 = vsel %vm6383, %v6375, %v6380
      %v6385 = vrsqrt.pop %v6335
      %v6386 = vmul.f32 %v6385, %v6335
      %v6387 = vmul.f32 %v6386, %v6385
      %v6388 = vmul.f32 0.5, %v6387
      %v6389 = vsub.f32 1.5, %v6388
      %v6390 = vmul.f32 %v6385, %v6389
      %vm6391 = vweird.f32 %v6335
      %vm6392 = vweird.f32 %v6385
      %vm6393 = vmor %vm6391, %vm6392
      %v6394 = vsel %vm6393, %v6385, %v6390
      %v6395 = vrsqrt.pop %v6336
      %v6396 = vmul.f32 %v6395, %v6336
      %v6397 = vmul.f32 %v6396, %v6395
      %v6398 = vmul.f32 0.5, %v6397
      %v6399 = vsub.f32 1.5, %v6398
      %v6400 = vmul.f32 %v6395, %v6399
      %vm6401 = vweird.f32 %v6336
      %vm6402 = vweird.f32 %v6395
      %vm6403 = vmor %vm6401, %vm6402
      %v6404 = vsel %vm6403, %v6395, %v6400
      %v6405 = vrsqrt.pop %v6337
      %v6406 = vmul.f32 %v6405, %v6337
      %v6407 = vmul.f32 %v6406, %v6405
      %v6408 = vmul.f32 0.5, %v6407
      %v6409 = vsub.f32 1.5, %v6408
      %v6410 = vmul.f32 %v6405, %v6409
      %vm6411 = vweird.f32 %v6337
      %vm6412 = vweird.f32 %v6405
      %vm6413 = vmor %vm6411, %vm6412
      %v6414 = vsel %vm6413, %v6405, %v6410
      %v6415 = vrsqrt.pop %v6338
      %v6416 = vmul.f32 %v6415, %v6338
      %v6417 = vmul.f32 %v6416, %v6415
      %v6418 = vmul.f32 0.5, %v6417
      %v6419 = vsub.f32 1.5, %v6418
      %v6420 = vmul.f32 %v6415, %v6419
      %vm6421 = vweird.f32 %v6338
      %vm6422 = vweird.f32 %v6415
      %vm6423 = vmor %vm6421, %vm6422
      %v6424 = vsel %vm6423, %v6415, %v6420
      %v6425 = vrsqrt.pop %v6339
      %v6426 = vmul.f32 %v6425, %v6339
      %v6427 = vmul.f32 %v6426, %v6425
      %v6428 = vmul.f32 0.5, %v6427
      %v6429 = vsub.f32 1.5, %v6428
      %v6430 = vmul.f32 %v6425, %v6429
      %vm6431 = vweird.f32 %v6339
      %vm6432 = vweird.f32 %v6425
      %vm6433 = vmor %vm6431, %vm6432
      %v6434 = vsel %vm6433, %v6425, %v6430
      %v6435 = vrsqrt.pop %v6340
      %v6436 = vmul.f32 %v6435, %v6340
      %v6437 = vmul.f32 %v6436, %v6435
      %v6438 = vmul.f32 0.5, %v6437
      %v6439 = vsub.f32 1.5, %v6438
      %v6440 = vmul.f32 %v6435, %v6439
      %vm6441 = vweird.f32 %v6340
      %vm6442 = vweird.f32 %v6435
      %vm6443 = vmor %vm6441, %vm6442
      %v6444 = vsel %vm6443, %v6435, %v6440
      %v6445 = vrsqrt.pop %v6341
      %v6446 = vmul.f32 %v6445, %v6341
      %v6447 = vmul.f32 %v6446, %v6445
      %v6448 = vmul.f32 0.5, %v6447
      %v6449 = vsub.f32 1.5, %v6448
      %v6450 = vmul.f32 %v6445, %v6449
      %vm6451 = vweird.f32 %v6341
      %vm6452 = vweird.f32 %v6445
      %vm6453 = vmor %vm6451, %vm6452
      %v6454 = vsel %vm6453, %v6445, %v6450
      %v6455 = vrsqrt.pop %v6342
      %v6456 = vmul.f32 %v6455, %v6342
      %v6457 = vmul.f32 %v6456, %v6455
      %v6458 = vmul.f32 0.5, %v6457
      %v6459 = vsub.f32 1.5, %v6458
      %v6460 = vmul.f32 %v6455, %v6459
      %vm6461 = vweird.f32 %v6342
      %vm6462 = vweird.f32 %v6455
      %vm6463 = vmor %vm6461, %vm6462
      %v6464 = vsel %vm6463, %v6455, %v6460
      %v6465 = vrsqrt.pop %v6343
      %v6466 = vmul.f32 %v6465, %v6343
      %v6467 = vmul.f32 %v6466, %v6465
      %v6468 = vmul.f32 0.5, %v6467
      %v6469 = vsub.f32 1.5, %v6468
      %v6470 = vmul.f32 %v6465, %v6469
      %vm6471 = vweird.f32 %v6343
      %vm6472 = vweird.f32 %v6465
      %vm6473 = vmor %vm6471, %vm6472
      %v6474 = vsel %vm6473, %v6465, %v6470
      %v6475 = vrsqrt.pop %v6344
      %v6476 = vmul.f32 %v6475, %v6344
      %v6477 = vmul.f32 %v6476, %v6475
      %v6478 = vmul.f32 0.5, %v6477
      %v6479 = vsub.f32 1.5, %v6478
      %v6480 = vmul.f32 %v6475, %v6479
      %vm6481 = vweird.f32 %v6344
      %vm6482 = vweird.f32 %v6475
      %vm6483 = vmor %vm6481, %vm6482
      %v6484 = vsel %vm6483, %v6475, %v6480
      %v6485 = vrsqrt.pop %v6345
      %v6486 = vmul.f32 %v6485, %v6345
      %v6487 = vmul.f32 %v6486, %v6485
      %v6488 = vmul.f32 0.5, %v6487
      %v6489 = vsub.f32 1.5, %v6488
      %v6490 = vmul.f32 %v6485, %v6489
      %vm6491 = vweird.f32 %v6345
      %vm6492 = vweird.f32 %v6485
      %vm6493 = vmor %vm6491, %vm6492
      %v6494 = vsel %vm6493, %v6485, %v6490
      %v6495 = vrsqrt.pop %v6346
      %v6496 = vmul.f32 %v6495, %v6346
      %v6497 = vmul.f32 %v6496, %v6495
      %v6498 = vmul.f32 0.5, %v6497
      %v6499 = vsub.f32 1.5, %v6498
      %v6500 = vmul.f32 %v6495, %v6499
      %vm6501 = vweird.f32 %v6346
      %vm6502 = vweird.f32 %v6495
      %vm6503 = vmor %vm6501, %vm6502
      %v6504 = vsel %vm6503, %v6495, %v6500
      %v6505 = vrsqrt.pop %v6347
      %v6506 = vmul.f32 %v6505, %v6347
      %v6507 = vmul.f32 %v6506, %v6505
      %v6508 = vmul.f32 0.5, %v6507
      %v6509 = vsub.f32 1.5, %v6508
      %v6510 = vmul.f32 %v6505, %v6509
      %vm6511 = vweird.f32 %v6347
      %vm6512 = vweird.f32 %v6505
      %vm6513 = vmor %vm6511, %vm6512
      %v6514 = vsel %vm6513, %v6505, %v6510
      %v6515 = vrsqrt.pop %v6348
      %v6516 = vmul.f32 %v6515, %v6348
      %v6517 = vmul.f32 %v6516, %v6515
      %v6518 = vmul.f32 0.5, %v6517
      %v6519 = vsub.f32 1.5, %v6518
      %v6520 = vmul.f32 %v6515, %v6519
      %vm6521 = vweird.f32 %v6348
      %vm6522 = vweird.f32 %v6515
      %vm6523 = vmor %vm6521, %vm6522
      %v6524 = vsel %vm6523, %v6515, %v6520
      %v6525 = vrsqrt.pop %v6349
      %v6526 = vmul.f32 %v6525, %v6349
      %v6527 = vmul.f32 %v6526, %v6525
      %v6528 = vmul.f32 0.5, %v6527
      %v6529 = vsub.f32 1.5, %v6528
      %v6530 = vmul.f32 %v6525, %v6529
      %vm6531 = vweird.f32 %v6349
      %vm6532 = vweird.f32 %v6525
      %vm6533 = vmor %vm6531, %vm6532
      %v6534 = vsel %vm6533, %v6525, %v6530
      %v6535 = vrsqrt.pop %v6350
      %v6536 = vmul.f32 %v6535, %v6350
      %v6537 = vmul.f32 %v6536, %v6535
      %v6538 = vmul.f32 0.5, %v6537
      %v6539 = vsub.f32 1.5, %v6538
      %v6540 = vmul.f32 %v6535, %v6539
      %vm6541 = vweird.f32 %v6350
      %vm6542 = vweird.f32 %v6535
      %vm6543 = vmor %vm6541, %vm6542
      %v6544 = vsel %vm6543, %v6535, %v6540
      %v6545 = vrsqrt.pop %v6351
      %v6546 = vmul.f32 %v6545, %v6351
      %v6547 = vmul.f32 %v6546, %v6545
      %v6548 = vmul.f32 0.5, %v6547
      %v6549 = vsub.f32 1.5, %v6548
      %v6550 = vmul.f32 %v6545, %v6549
      %vm6551 = vweird.f32 %v6351
      %vm6552 = vweird.f32 %v6545
      %vm6553 = vmor %vm6551, %vm6552
      %v6554 = vsel %vm6553, %v6545, %v6550
      %v6555 = vrsqrt.pop %v6352
      %v6556 = vmul.f32 %v6555, %v6352
      %v6557 = vmul.f32 %v6556, %v6555
      %v6558 = vmul.f32 0.5, %v6557
      %v6559 = vsub.f32 1.5, %v6558
      %v6560 = vmul.f32 %v6555, %v6559
      %vm6561 = vweird.f32 %v6352
      %vm6562 = vweird.f32 %v6555
      %vm6563 = vmor %vm6561, %vm6562
      %v6564 = vsel %vm6563, %v6555, %v6560
      %v6565 = vrsqrt.pop %v6353
      %v6566 = vmul.f32 %v6565, %v6353
      %v6567 = vmul.f32 %v6566, %v6565
      %v6568 = vmul.f32 0.5, %v6567
      %v6569 = vsub.f32 1.5, %v6568
      %v6570 = vmul.f32 %v6565, %v6569
      %vm6571 = vweird.f32 %v6353
      %vm6572 = vweird.f32 %v6565
      %vm6573 = vmor %vm6571, %vm6572
      %v6574 = vsel %vm6573, %v6565, %v6570
      %v6575 = vrsqrt.pop %v6354
      %v6576 = vmul.f32 %v6575, %v6354
      %v6577 = vmul.f32 %v6576, %v6575
      %v6578 = vmul.f32 0.5, %v6577
      %v6579 = vsub.f32 1.5, %v6578
      %v6580 = vmul.f32 %v6575, %v6579
      %vm6581 = vweird.f32 %v6354
      %vm6582 = vweird.f32 %v6575
      %vm6583 = vmor %vm6581, %vm6582
      %v6584 = vsel %vm6583, %v6575, %v6580
      %v6585 = vrsqrt.pop %v6355
      %v6586 = vmul.f32 %v6585, %v6355
      %v6587 = vmul.f32 %v6586, %v6585
      %v6588 = vmul.f32 0.5, %v6587
      %v6589 = vsub.f32 1.5, %v6588
      %v6590 = vmul.f32 %v6585, %v6589
      %vm6591 = vweird.f32 %v6355
      %vm6592 = vweird.f32 %v6585
      %vm6593 = vmor %vm6591, %vm6592
      %v6594 = vsel %vm6593, %v6585, %v6590
      %v6595 = vrsqrt.pop %v6356
      %v6596 = vmul.f32 %v6595, %v6356
      %v6597 = vmul.f32 %v6596, %v6595
      %v6598 = vmul.f32 0.5, %v6597
      %v6599 = vsub.f32 1.5, %v6598
      %v6600 = vmul.f32 %v6595, %v6599
      %vm6601 = vweird.f32 %v6356
      %vm6602 = vweird.f32 %v6595
      %vm6603 = vmor %vm6601, %vm6602
      %v6604 = vsel %vm6603, %v6595, %v6600
      %v6605 = vrsqrt.pop %v6357
      %v6606 = vmul.f32 %v6605, %v6357
      %v6607 = vmul.f32 %v6606, %v6605
      %v6608 = vmul.f32 0.5, %v6607
      %v6609 = vsub.f32 1.5, %v6608
      %v6610 = vmul.f32 %v6605, %v6609
      %vm6611 = vweird.f32 %v6357
      %vm6612 = vweird.f32 %v6605
      %vm6613 = vmor %vm6611, %vm6612
      %v6614 = vsel %vm6613, %v6605, %v6610
      %v6615 = vrsqrt.pop %v6358
      %v6616 = vmul.f32 %v6615, %v6358
      %v6617 = vmul.f32 %v6616, %v6615
      %v6618 = vmul.f32 0.5, %v6617
      %v6619 = vsub.f32 1.5, %v6618
      %v6620 = vmul.f32 %v6615, %v6619
      %vm6621 = vweird.f32 %v6358
      %vm6622 = vweird.f32 %v6615
      %vm6623 = vmor %vm6621, %vm6622
      %v6624 = vsel %vm6623, %v6615, %v6620
      %v6625 = vrsqrt.pop %v6359
      %v6626 = vmul.f32 %v6625, %v6359
      %v6627 = vmul.f32 %v6626, %v6625
      %v6628 = vmul.f32 0.5, %v6627
      %v6629 = vsub.f32 1.5, %v6628
      %v6630 = vmul.f32 %v6625, %v6629
      %vm6631 = vweird.f32 %v6359
      %vm6632 = vweird.f32 %v6625
      %vm6633 = vmor %vm6631, %vm6632
      %v6634 = vsel %vm6633, %v6625, %v6630
      %v6635 = vrsqrt.pop %v6360
      %v6636 = vmul.f32 %v6635, %v6360
      %v6637 = vmul.f32 %v6636, %v6635
      %v6638 = vmul.f32 0.5, %v6637
      %v6639 = vsub.f32 1.5, %v6638
      %v6640 = vmul.f32 %v6635, %v6639
      %vm6641 = vweird.f32 %v6360
      %vm6642 = vweird.f32 %v6635
      %vm6643 = vmor %vm6641, %vm6642
      %v6644 = vsel %vm6643, %v6635, %v6640
      %v6645 = vrsqrt.pop %v6361
      %v6646 = vmul.f32 %v6645, %v6361
      %v6647 = vmul.f32 %v6646, %v6645
      %v6648 = vmul.f32 0.5, %v6647
      %v6649 = vsub.f32 1.5, %v6648
      %v6650 = vmul.f32 %v6645, %v6649
      %vm6651 = vweird.f32 %v6361
      %vm6652 = vweird.f32 %v6645
      %vm6653 = vmor %vm6651, %vm6652
      %v6654 = vsel %vm6653, %v6645, %v6650
      %v6655 = vrsqrt.pop %v6362
      %v6656 = vmul.f32 %v6655, %v6362
      %v6657 = vmul.f32 %v6656, %v6655
      %v6658 = vmul.f32 0.5, %v6657
      %v6659 = vsub.f32 1.5, %v6658
      %v6660 = vmul.f32 %v6655, %v6659
      %vm6661 = vweird.f32 %v6362
      %vm6662 = vweird.f32 %v6655
      %vm6663 = vmor %vm6661, %vm6662
      %v6664 = vsel %vm6663, %v6655, %v6660
      %v6665 = vrsqrt.pop %v6363
      %v6666 = vmul.f32 %v6665, %v6363
      %v6667 = vmul.f32 %v6666, %v6665
      %v6668 = vmul.f32 0.5, %v6667
      %v6669 = vsub.f32 1.5, %v6668
      %v6670 = vmul.f32 %v6665, %v6669
      %vm6671 = vweird.f32 %v6363
      %vm6672 = vweird.f32 %v6665
      %vm6673 = vmor %vm6671, %vm6672
      %v6674 = vsel %vm6673, %v6665, %v6670
      %v6675 = vrsqrt.pop %v6364
      %v6676 = vmul.f32 %v6675, %v6364
      %v6677 = vmul.f32 %v6676, %v6675
      %v6678 = vmul.f32 0.5, %v6677
      %v6679 = vsub.f32 1.5, %v6678
      %v6680 = vmul.f32 %v6675, %v6679
      %vm6681 = vweird.f32 %v6364
      %vm6682 = vweird.f32 %v6675
      %vm6683 = vmor %vm6681, %vm6682
      %v6684 = vsel %vm6683, %v6675, %v6680
      %v6685 = vmul.f32 %v6141, %v6374
      %v6686 = vmul.f32 %v6142, %v6384
      %v6687 = vmul.f32 %v6143, %v6394
      %v6688 = vmul.f32 %v6144, %v6404
      %v6689 = vmul.f32 %v6145, %v6414
      %v6690 = vmul.f32 %v6146, %v6424
      %v6691 = vmul.f32 %v6147, %v6434
      %v6692 = vmul.f32 %v6148, %v6444
      %v6693 = vmul.f32 %v6149, %v6454
      %v6694 = vmul.f32 %v6150, %v6464
      %v6695 = vmul.f32 %v6151, %v6474
      %v6696 = vmul.f32 %v6152, %v6484
      %v6697 = vmul.f32 %v6153, %v6494
      %v6698 = vmul.f32 %v6154, %v6504
      %v6699 = vmul.f32 %v6155, %v6514
      %v6700 = vmul.f32 %v6156, %v6524
      %v6701 = vmul.f32 %v6157, %v6534
      %v6702 = vmul.f32 %v6158, %v6544
      %v6703 = vmul.f32 %v6159, %v6554
      %v6704 = vmul.f32 %v6160, %v6564
      %v6705 = vmul.f32 %v6161, %v6574
      %v6706 = vmul.f32 %v6162, %v6584
      %v6707 = vmul.f32 %v6163, %v6594
      %v6708 = vmul.f32 %v6164, %v6604
      %v6709 = vmul.f32 %v6165, %v6614
      %v6710 = vmul.f32 %v6166, %v6624
      %v6711 = vmul.f32 %v6167, %v6634
      %v6712 = vmul.f32 %v6168, %v6644
      %v6713 = vmul.f32 %v6169, %v6654
      %v6714 = vmul.f32 %v6170, %v6664
      %v6715 = vmul.f32 %v6171, %v6674
      %v6716 = vmul.f32 %v6172, %v6684
      %v6718 = vperm.slane %v6011, 0
      %v6720 = vmul.f32 %v6685, %v6718
      %v6721 = vmul.f32 %v6686, %v6718
      %v6722 = vmul.f32 %v6687, %v6718
      %v6723 = vmul.f32 %v6688, %v6718
      %v6724 = vmul.f32 %v6689, %v6718
      %v6725 = vmul.f32 %v6690, %v6718
      %v6726 = vmul.f32 %v6691, %v6718
      %v6727 = vmul.f32 %v6692, %v6718
      %v6728 = vmul.f32 %v6693, %v6718
      %v6729 = vmul.f32 %v6694, %v6718
      %v6730 = vmul.f32 %v6695, %v6718
      %v6731 = vmul.f32 %v6696, %v6718
      %v6732 = vmul.f32 %v6697, %v6718
      %v6733 = vmul.f32 %v6698, %v6718
      %v6734 = vmul.f32 %v6699, %v6718
      %v6735 = vmul.f32 %v6700, %v6718
      %v6736 = vmul.f32 %v6701, %v6718
      %v6737 = vmul.f32 %v6702, %v6718
      %v6738 = vmul.f32 %v6703, %v6718
      %v6739 = vmul.f32 %v6704, %v6718
      %v6740 = vmul.f32 %v6705, %v6718
      %v6741 = vmul.f32 %v6706, %v6718
      %v6742 = vmul.f32 %v6707, %v6718
      %v6743 = vmul.f32 %v6708, %v6718
      %v6744 = vmul.f32 %v6709, %v6718
      %v6745 = vmul.f32 %v6710, %v6718
      %v6746 = vmul.f32 %v6711, %v6718
      %v6747 = vmul.f32 %v6712, %v6718
      %v6748 = vmul.f32 %v6713, %v6718
      %v6749 = vmul.f32 %v6714, %v6718
      %v6750 = vmul.f32 %v6715, %v6718
      %v6751 = vmul.f32 %v6716, %v6718
      %v6753 = vperm.slane %v6012, 0
      %v6755 = vadd.f32 %v6720, %v6753
      %v6756 = vadd.f32 %v6721, %v6753
      %v6757 = vadd.f32 %v6722, %v6753
      %v6758 = vadd.f32 %v6723, %v6753
      %v6759 = vadd.f32 %v6724, %v6753
      %v6760 = vadd.f32 %v6725, %v6753
      %v6761 = vadd.f32 %v6726, %v6753
      %v6762 = vadd.f32 %v6727, %v6753
      %v6763 = vadd.f32 %v6728, %v6753
      %v6764 = vadd.f32 %v6729, %v6753
      %v6765 = vadd.f32 %v6730, %v6753
      %v6766 = vadd.f32 %v6731, %v6753
      %v6767 = vadd.f32 %v6732, %v6753
      %v6768 = vadd.f32 %v6733, %v6753
      %v6769 = vadd.f32 %v6734, %v6753
      %v6770 = vadd.f32 %v6735, %v6753
      %v6771 = vadd.f32 %v6736, %v6753
      %v6772 = vadd.f32 %v6737, %v6753
      %v6773 = vadd.f32 %v6738, %v6753
      %v6774 = vadd.f32 %v6739, %v6753
      %v6775 = vadd.f32 %v6740, %v6753
      %v6776 = vadd.f32 %v6741, %v6753
      %v6777 = vadd.f32 %v6742, %v6753
      %v6778 = vadd.f32 %v6743, %v6753
      %v6779 = vadd.f32 %v6744, %v6753
      %v6780 = vadd.f32 %v6745, %v6753
      %v6781 = vadd.f32 %v6746, %v6753
      %v6782 = vadd.f32 %v6747, %v6753
      %v6783 = vadd.f32 %v6748, %v6753
      %v6784 = vadd.f32 %v6749, %v6753
      %v6785 = vadd.f32 %v6750, %v6753
      %v6786 = vadd.f32 %v6751, %v6753
      %v6787 = vpack.c.bf16 %v6756, %v6755
      %v6788 = vpack.c.bf16 %v6758, %v6757
      %v6789 = vpack.c.bf16 %v6760, %v6759
      %v6790 = vpack.c.bf16 %v6762, %v6761
      %v6791 = vpack.c.bf16 %v6764, %v6763
      %v6792 = vpack.c.bf16 %v6766, %v6765
      %v6793 = vpack.c.bf16 %v6768, %v6767
      %v6794 = vpack.c.bf16 %v6770, %v6769
      %v6795 = vpack.c.bf16 %v6772, %v6771
      %v6796 = vpack.c.bf16 %v6774, %v6773
      %v6797 = vpack.c.bf16 %v6776, %v6775
      %v6798 = vpack.c.bf16 %v6778, %v6777
      %v6799 = vpack.c.bf16 %v6780, %v6779
      %v6800 = vpack.c.bf16 %v6782, %v6781
      %v6801 = vpack.c.bf16 %v6784, %v6783
      %v6802 = vpack.c.bf16 %v6786, %v6785
      %v6803 = vld [vmem:[%s661] sm:$0xf]
      %v6804 = vld [vmem:[%s661 + $0x4] sm:$0xf]
      %v6805 = vld [vmem:[%s661 + $0x8] sm:$0xf]
      %v6806 = vld [vmem:[%s661 + $0xc] sm:$0xf]
      %v6807 = vld [vmem:[%s664] sm:$0x1]
      %v6809 = vperm.slane %v6807, 0
      %v6815 = vunpack.c.l.b16 %v6803
      %v6816 = vunpack.c.l.b16 %v6804
      %v6817 = vunpack.c.l.b16 %v6805
      %v6818 = vunpack.c.l.b16 %v6806
      %v6819 = vpack.c.b16 %v6816, %v6815
      %v6820 = vpack.c.b16 %v6818, %v6817
      %v6824 = vsel %vm800, %v6787, 0
      %v6827 = vsel %vm800, %v6788, 0
      %v6830 = vsel %vm800, %v6789, 0
      %v6833 = vsel %vm800, %v6790, 0
      %v6836 = vsel %vm800, %v6791, 0
      %v6839 = vsel %vm800, %v6792, 0
      %v6842 = vsel %vm800, %v6793, 0
      %v6845 = vsel %vm800, %v6794, 0
      %v6848 = vsel %vm800, %v6795, 0
      %v6851 = vsel %vm800, %v6796, 0
      %v6854 = vsel %vm800, %v6797, 0
      %v6857 = vsel %vm800, %v6798, 0
      %v6860 = vsel %vm800, %v6799, 0
      %v6863 = vsel %vm800, %v6800, 0
      %v6866 = vsel %vm800, %v6801, 0
      %v6869 = vsel %vm800, %v6802, 0
      %6871 = vmatpush.bf16.msra.mxu0 0
      %6872 = vmatpush.bf16.msra.mxu0 0
      %6873 = vmatpush.bf16.msra.mxu0 0
      %6874 = vmatpush.bf16.msra.mxu0 0
      %6875 = vmatpush.bf16.msra.mxu0 0
      %6876 = vmatpush.bf16.msra.mxu0 0
      %6877 = vmatpush.bf16.msra.mxu0 %v6820
      %6878 = vmatpush.bf16.msra.mxu0 %v6819
      %6879 = vmatmul.bf16.gmra.mxu0 %v6824
      %v6880 = vpop.f32.mrf.mxu0
      %v6881 = vadd.f32 %v6809, %v6880
      %v6882 = vpop.f32.mrf.mxu0
      %v6883 = vadd.f32 %v6809, %v6882
      %6884 = vmatmul.bf16.gmra.mxu0 %v6827
      %v6885 = vpop.f32.mrf.mxu0
      %v6886 = vadd.f32 %v6809, %v6885
      %v6887 = vpop.f32.mrf.mxu0
      %v6888 = vadd.f32 %v6809, %v6887
      %6889 = vmatmul.bf16.gmra.mxu0 %v6830
      %v6890 = vpop.f32.mrf.mxu0
      %v6891 = vadd.f32 %v6809, %v6890
      %v6892 = vpop.f32.mrf.mxu0
      %v6893 = vadd.f32 %v6809, %v6892
      %6894 = vmatmul.bf16.gmra.mxu0 %v6833
      %v6895 = vpop.f32.mrf.mxu0
      %v6896 = vadd.f32 %v6809, %v6895
      %v6897 = vpop.f32.mrf.mxu0
      %v6898 = vadd.f32 %v6809, %v6897
      %6899 = vmatmul.bf16.gmra.mxu0 %v6836
      %v6900 = vpop.f32.mrf.mxu0
      %v6901 = vadd.f32 %v6809, %v6900
      %v6902 = vpop.f32.mrf.mxu0
      %v6903 = vadd.f32 %v6809, %v6902
      %6904 = vmatmul.bf16.gmra.mxu0 %v6839
      %v6905 = vpop.f32.mrf.mxu0
      %v6906 = vadd.f32 %v6809, %v6905
      %v6907 = vpop.f32.mrf.mxu0
      %v6908 = vadd.f32 %v6809, %v6907
      %6909 = vmatmul.bf16.gmra.mxu0 %v6842
      %v6910 = vpop.f32.mrf.mxu0
      %v6911 = vadd.f32 %v6809, %v6910
      %v6912 = vpop.f32.mrf.mxu0
      %v6913 = vadd.f32 %v6809, %v6912
      %6914 = vmatmul.bf16.gmra.mxu0 %v6845
      %v6915 = vpop.f32.mrf.mxu0
      %v6916 = vadd.f32 %v6809, %v6915
      %v6917 = vpop.f32.mrf.mxu0
      %v6918 = vadd.f32 %v6809, %v6917
      %6919 = vmatmul.bf16.gmra.mxu0 %v6848
      %v6920 = vpop.f32.mrf.mxu0
      %v6921 = vadd.f32 %v6809, %v6920
      %v6922 = vpop.f32.mrf.mxu0
      %v6923 = vadd.f32 %v6809, %v6922
      %6924 = vmatmul.bf16.gmra.mxu0 %v6851
      %v6925 = vpop.f32.mrf.mxu0
      %v6926 = vadd.f32 %v6809, %v6925
      %v6927 = vpop.f32.mrf.mxu0
      %v6928 = vadd.f32 %v6809, %v6927
      %6929 = vmatmul.bf16.gmra.mxu0 %v6854
      %v6930 = vpop.f32.mrf.mxu0
      %v6931 = vadd.f32 %v6809, %v6930
      %v6932 = vpop.f32.mrf.mxu0
      %v6933 = vadd.f32 %v6809, %v6932
      %6934 = vmatmul.bf16.gmra.mxu0 %v6857
      %v6935 = vpop.f32.mrf.mxu0
      %v6936 = vadd.f32 %v6809, %v6935
      %v6937 = vpop.f32.mrf.mxu0
      %v6938 = vadd.f32 %v6809, %v6937
      %6939 = vmatmul.bf16.gmra.mxu0 %v6860
      %v6940 = vpop.f32.mrf.mxu0
      %v6941 = vadd.f32 %v6809, %v6940
      %v6942 = vpop.f32.mrf.mxu0
      %v6943 = vadd.f32 %v6809, %v6942
      %6944 = vmatmul.bf16.gmra.mxu0 %v6863
      %v6945 = vpop.f32.mrf.mxu0
      %v6946 = vadd.f32 %v6809, %v6945
      %v6947 = vpop.f32.mrf.mxu0
      %v6948 = vadd.f32 %v6809, %v6947
      %6949 = vmatmul.bf16.gmra.mxu0 %v6866
      %v6950 = vpop.f32.mrf.mxu0
      %v6951 = vadd.f32 %v6809, %v6950
      %v6952 = vpop.f32.mrf.mxu0
      %v6953 = vadd.f32 %v6809, %v6952
      %6954 = vmatmul.bf16.gmra.mxu0 %v6869
      %v6955 = vpop.f32.mrf.mxu0
      %v6956 = vadd.f32 %v6809, %v6955
      %v6957 = vpop.f32.mrf.mxu0
      %v6958 = vadd.f32 %v6809, %v6957
      %6959 = vdwg.mxu0
      %v6960 = vmul.f32 %v6881, 1.702
      %v6961 = vmul.f32 %v6883, 1.702
      %v6962 = vmul.f32 %v6886, 1.702
      %v6963 = vmul.f32 %v6888, 1.702
      %v6964 = vmul.f32 %v6891, 1.702
      %v6965 = vmul.f32 %v6893, 1.702
      %v6966 = vmul.f32 %v6896, 1.702
      %v6967 = vmul.f32 %v6898, 1.702
      %v6968 = vmul.f32 %v6901, 1.702
      %v6969 = vmul.f32 %v6903, 1.702
      %v6970 = vmul.f32 %v6906, 1.702
      %v6971 = vmul.f32 %v6908, 1.702
      %v6972 = vmul.f32 %v6911, 1.702
      %v6973 = vmul.f32 %v6913, 1.702
      %v6974 = vmul.f32 %v6916, 1.702
      %v6975 = vmul.f32 %v6918, 1.702
      %v6976 = vmul.f32 %v6921, 1.702
      %v6977 = vmul.f32 %v6923, 1.702
      %v6978 = vmul.f32 %v6926, 1.702
      %v6979 = vmul.f32 %v6928, 1.702
      %v6980 = vmul.f32 %v6931, 1.702
      %v6981 = vmul.f32 %v6933, 1.702
      %v6982 = vmul.f32 %v6936, 1.702
      %v6983 = vmul.f32 %v6938, 1.702
      %v6984 = vmul.f32 %v6941, 1.702
      %v6985 = vmul.f32 %v6943, 1.702
      %v6986 = vmul.f32 %v6946, 1.702
      %v6987 = vmul.f32 %v6948, 1.702
      %v6988 = vmul.f32 %v6951, 1.702
      %v6989 = vmul.f32 %v6953, 1.702
      %v6990 = vmul.f32 %v6956, 1.702
      %v6991 = vmul.f32 %v6958, 1.702
      %v6992 = vxor.u32 %v6960, 2147483648
      %v6993 = vxor.u32 %v6961, 2147483648
      %v6994 = vxor.u32 %v6962, 2147483648
      %v6995 = vxor.u32 %v6963, 2147483648
      %v6996 = vxor.u32 %v6964, 2147483648
      %v6997 = vxor.u32 %v6965, 2147483648
      %v6998 = vxor.u32 %v6966, 2147483648
      %v6999 = vxor.u32 %v6967, 2147483648
      %v7000 = vxor.u32 %v6968, 2147483648
      %v7001 = vxor.u32 %v6969, 2147483648
      %v7002 = vxor.u32 %v6970, 2147483648
      %v7003 = vxor.u32 %v6971, 2147483648
      %v7004 = vxor.u32 %v6972, 2147483648
      %v7005 = vxor.u32 %v6973, 2147483648
      %v7006 = vxor.u32 %v6974, 2147483648
      %v7007 = vxor.u32 %v6975, 2147483648
      %v7008 = vxor.u32 %v6976, 2147483648
      %v7009 = vxor.u32 %v6977, 2147483648
      %v7010 = vxor.u32 %v6978, 2147483648
      %v7011 = vxor.u32 %v6979, 2147483648
      %v7012 = vxor.u32 %v6980, 2147483648
      %v7013 = vxor.u32 %v6981, 2147483648
      %v7014 = vxor.u32 %v6982, 2147483648
      %v7015 = vxor.u32 %v6983, 2147483648
      %v7016 = vxor.u32 %v6984, 2147483648
      %v7017 = vxor.u32 %v6985, 2147483648
      %v7018 = vxor.u32 %v6986, 2147483648
      %v7019 = vxor.u32 %v6987, 2147483648
      %v7020 = vxor.u32 %v6988, 2147483648
      %v7021 = vxor.u32 %v6989, 2147483648
      %v7022 = vxor.u32 %v6990, 2147483648
      %v7023 = vxor.u32 %v6991, 2147483648
      %v7024 = vmul.f32 %v6992, 1.442695
      %v7025 = vpow.pop %v7024
      %v7026 = vmul.f32 %v6993, 1.442695
      %v7027 = vpow.pop %v7026
      %v7028 = vmul.f32 %v6994, 1.442695
      %v7029 = vpow.pop %v7028
      %v7030 = vmul.f32 %v6995, 1.442695
      %v7031 = vpow.pop %v7030
      %v7032 = vmul.f32 %v6996, 1.442695
      %v7033 = vpow.pop %v7032
      %v7034 = vmul.f32 %v6997, 1.442695
      %v7035 = vpow.pop %v7034
      %v7036 = vmul.f32 %v6998, 1.442695
      %v7037 = vpow.pop %v7036
      %v7038 = vmul.f32 %v6999, 1.442695
      %v7039 = vpow.pop %v7038
      %v7040 = vmul.f32 %v7000, 1.442695
      %v7041 = vpow.pop %v7040
      %v7042 = vmul.f32 %v7001, 1.442695
      %v7043 = vpow.pop %v7042
      %v7044 = vmul.f32 %v7002, 1.442695
      %v7045 = vpow.pop %v7044
      %v7046 = vmul.f32 %v7003, 1.442695
      %v7047 = vpow.pop %v7046
      %v7048 = vmul.f32 %v7004, 1.442695
      %v7049 = vpow.pop %v7048
      %v7050 = vmul.f32 %v7005, 1.442695
      %v7051 = vpow.pop %v7050
      %v7052 = vmul.f32 %v7006, 1.442695
      %v7053 = vpow.pop %v7052
      %v7054 = vmul.f32 %v7007, 1.442695
      %v7055 = vpow.pop %v7054
      %v7056 = vmul.f32 %v7008, 1.442695
      %v7057 = vpow.pop %v7056
      %v7058 = vmul.f32 %v7009, 1.442695
      %v7059 = vpow.pop %v7058
      %v7060 = vmul.f32 %v7010, 1.442695
      %v7061 = vpow.pop %v7060
      %v7062 = vmul.f32 %v7011, 1.442695
      %v7063 = vpow.pop %v7062
      %v7064 = vmul.f32 %v7012, 1.442695
      %v7065 = vpow.pop %v7064
      %v7066 = vmul.f32 %v7013, 1.442695
      %v7067 = vpow.pop %v7066
      %v7068 = vmul.f32 %v7014, 1.442695
      %v7069 = vpow.pop %v7068
      %v7070 = vmul.f32 %v7015, 1.442695
      %v7071 = vpow.pop %v7070
      %v7072 = vmul.f32 %v7016, 1.442695
      %v7073 = vpow.pop %v7072
      %v7074 = vmul.f32 %v7017, 1.442695
      %v7075 = vpow.pop %v7074
      %v7076 = vmul.f32 %v7018, 1.442695
      %v7077 = vpow.pop %v7076
      %v7078 = vmul.f32 %v7019, 1.442695
      %v7079 = vpow.pop %v7078
      %v7080 = vmul.f32 %v7020, 1.442695
      %v7081 = vpow.pop %v7080
      %v7082 = vmul.f32 %v7021, 1.442695
      %v7083 = vpow.pop %v7082
      %v7084 = vmul.f32 %v7022, 1.442695
      %v7085 = vpow.pop %v7084
      %v7086 = vmul.f32 %v7023, 1.442695
      %v7087 = vpow.pop %v7086
      %v7088 = vadd.f32 %v7025, 1.0
      %v7089 = vadd.f32 %v7027, 1.0
      %v7090 = vadd.f32 %v7029, 1.0
      %v7091 = vadd.f32 %v7031, 1.0
      %v7092 = vadd.f32 %v7033, 1.0
      %v7093 = vadd.f32 %v7035, 1.0
      %v7094 = vadd.f32 %v7037, 1.0
      %v7095 = vadd.f32 %v7039, 1.0
      %v7096 = vadd.f32 %v7041, 1.0
      %v7097 = vadd.f32 %v7043, 1.0
      %v7098 = vadd.f32 %v7045, 1.0
      %v7099 = vadd.f32 %v7047, 1.0
      %v7100 = vadd.f32 %v7049, 1.0
      %v7101 = vadd.f32 %v7051, 1.0
      %v7102 = vadd.f32 %v7053, 1.0
      %v7103 = vadd.f32 %v7055, 1.0
      %v7104 = vadd.f32 %v7057, 1.0
      %v7105 = vadd.f32 %v7059, 1.0
      %v7106 = vadd.f32 %v7061, 1.0
      %v7107 = vadd.f32 %v7063, 1.0
      %v7108 = vadd.f32 %v7065, 1.0
      %v7109 = vadd.f32 %v7067, 1.0
      %v7110 = vadd.f32 %v7069, 1.0
      %v7111 = vadd.f32 %v7071, 1.0
      %v7112 = vadd.f32 %v7073, 1.0
      %v7113 = vadd.f32 %v7075, 1.0
      %v7114 = vadd.f32 %v7077, 1.0
      %v7115 = vadd.f32 %v7079, 1.0
      %v7116 = vadd.f32 %v7081, 1.0
      %v7117 = vadd.f32 %v7083, 1.0
      %v7118 = vadd.f32 %v7085, 1.0
      %v7119 = vadd.f32 %v7087, 1.0
      %v7120 = vrcp.pop %v7088
      %v7121 = vmul.f32 %v7088, %v7120
      %v7122 = vsub.f32 1.0, %v7121
      %v7123 = vmul.f32 %v7120, %v7122
      %v7124 = vadd.f32 %v7120, %v7123
      %vm7125 = vweird.f32 %v7088
      %vm7126 = vweird.f32 %v7120
      %vm7127 = vmor %vm7125, %vm7126
      %v7128 = vsel %vm7127, %v7120, %v7124
      %v7129 = vand.u32 2147483647, %v7088
      %vm7130 = vcmp.eq.f32.partialorder %v7129, 8.507059e+37
      %v7131 = vand.u32 %v7088, 2147483648
      %v7132 = vor.u32 1.1754944e-38, %v7131
      %v7133 = vsel %vm7130, %v7132, %v7128
      %v7134 = vmul.f32 1.0, %v7133
      %v7135 = vrcp.pop %v7089
      %v7136 = vmul.f32 %v7089, %v7135
      %v7137 = vsub.f32 1.0, %v7136
      %v7138 = vmul.f32 %v7135, %v7137
      %v7139 = vadd.f32 %v7135, %v7138
      %vm7140 = vweird.f32 %v7089
      %vm7141 = vweird.f32 %v7135
      %vm7142 = vmor %vm7140, %vm7141
      %v7143 = vsel %vm7142, %v7135, %v7139
      %v7144 = vand.u32 2147483647, %v7089
      %vm7145 = vcmp.eq.f32.partialorder %v7144, 8.507059e+37
      %v7146 = vand.u32 %v7089, 2147483648
      %v7147 = vor.u32 1.1754944e-38, %v7146
      %v7148 = vsel %vm7145, %v7147, %v7143
      %v7149 = vmul.f32 1.0, %v7148
      %v7150 = vrcp.pop %v7090
      %v7151 = vmul.f32 %v7090, %v7150
      %v7152 = vsub.f32 1.0, %v7151
      %v7153 = vmul.f32 %v7150, %v7152
      %v7154 = vadd.f32 %v7150, %v7153
      %vm7155 = vweird.f32 %v7090
      %vm7156 = vweird.f32 %v7150
      %vm7157 = vmor %vm7155, %vm7156
      %v7158 = vsel %vm7157, %v7150, %v7154
      %v7159 = vand.u32 2147483647, %v7090
      %vm7160 = vcmp.eq.f32.partialorder %v7159, 8.507059e+37
      %v7161 = vand.u32 %v7090, 2147483648
      %v7162 = vor.u32 1.1754944e-38, %v7161
      %v7163 = vsel %vm7160, %v7162, %v7158
      %v7164 = vmul.f32 1.0, %v7163
      %v7165 = vrcp.pop %v7091
      %v7166 = vmul.f32 %v7091, %v7165
      %v7167 = vsub.f32 1.0, %v7166
      %v7168 = vmul.f32 %v7165, %v7167
      %v7169 = vadd.f32 %v7165, %v7168
      %vm7170 = vweird.f32 %v7091
      %vm7171 = vweird.f32 %v7165
      %vm7172 = vmor %vm7170, %vm7171
      %v7173 = vsel %vm7172, %v7165, %v7169
      %v7174 = vand.u32 2147483647, %v7091
      %vm7175 = vcmp.eq.f32.partialorder %v7174, 8.507059e+37
      %v7176 = vand.u32 %v7091, 2147483648
      %v7177 = vor.u32 1.1754944e-38, %v7176
      %v7178 = vsel %vm7175, %v7177, %v7173
      %v7179 = vmul.f32 1.0, %v7178
      %v7180 = vrcp.pop %v7092
      %v7181 = vmul.f32 %v7092, %v7180
      %v7182 = vsub.f32 1.0, %v7181
      %v7183 = vmul.f32 %v7180, %v7182
      %v7184 = vadd.f32 %v7180, %v7183
      %vm7185 = vweird.f32 %v7092
      %vm7186 = vweird.f32 %v7180
      %vm7187 = vmor %vm7185, %vm7186
      %v7188 = vsel %vm7187, %v7180, %v7184
      %v7189 = vand.u32 2147483647, %v7092
      %vm7190 = vcmp.eq.f32.partialorder %v7189, 8.507059e+37
      %v7191 = vand.u32 %v7092, 2147483648
      %v7192 = vor.u32 1.1754944e-38, %v7191
      %v7193 = vsel %vm7190, %v7192, %v7188
      %v7194 = vmul.f32 1.0, %v7193
      %v7195 = vrcp.pop %v7093
      %v7196 = vmul.f32 %v7093, %v7195
      %v7197 = vsub.f32 1.0, %v7196
      %v7198 = vmul.f32 %v7195, %v7197
      %v7199 = vadd.f32 %v7195, %v7198
      %vm7200 = vweird.f32 %v7093
      %vm7201 = vweird.f32 %v7195
      %vm7202 = vmor %vm7200, %vm7201
      %v7203 = vsel %vm7202, %v7195, %v7199
      %v7204 = vand.u32 2147483647, %v7093
      %vm7205 = vcmp.eq.f32.partialorder %v7204, 8.507059e+37
      %v7206 = vand.u32 %v7093, 2147483648
      %v7207 = vor.u32 1.1754944e-38, %v7206
      %v7208 = vsel %vm7205, %v7207, %v7203
      %v7209 = vmul.f32 1.0, %v7208
      %v7210 = vrcp.pop %v7094
      %v7211 = vmul.f32 %v7094, %v7210
      %v7212 = vsub.f32 1.0, %v7211
      %v7213 = vmul.f32 %v7210, %v7212
      %v7214 = vadd.f32 %v7210, %v7213
      %vm7215 = vweird.f32 %v7094
      %vm7216 = vweird.f32 %v7210
      %vm7217 = vmor %vm7215, %vm7216
      %v7218 = vsel %vm7217, %v7210, %v7214
      %v7219 = vand.u32 2147483647, %v7094
      %vm7220 = vcmp.eq.f32.partialorder %v7219, 8.507059e+37
      %v7221 = vand.u32 %v7094, 2147483648
      %v7222 = vor.u32 1.1754944e-38, %v7221
      %v7223 = vsel %vm7220, %v7222, %v7218
      %v7224 = vmul.f32 1.0, %v7223
      %v7225 = vrcp.pop %v7095
      %v7226 = vmul.f32 %v7095, %v7225
      %v7227 = vsub.f32 1.0, %v7226
      %v7228 = vmul.f32 %v7225, %v7227
      %v7229 = vadd.f32 %v7225, %v7228
      %vm7230 = vweird.f32 %v7095
      %vm7231 = vweird.f32 %v7225
      %vm7232 = vmor %vm7230, %vm7231
      %v7233 = vsel %vm7232, %v7225, %v7229
      %v7234 = vand.u32 2147483647, %v7095
      %vm7235 = vcmp.eq.f32.partialorder %v7234, 8.507059e+37
      %v7236 = vand.u32 %v7095, 2147483648
      %v7237 = vor.u32 1.1754944e-38, %v7236
      %v7238 = vsel %vm7235, %v7237, %v7233
      %v7239 = vmul.f32 1.0, %v7238
      %v7240 = vrcp.pop %v7096
      %v7241 = vmul.f32 %v7096, %v7240
      %v7242 = vsub.f32 1.0, %v7241
      %v7243 = vmul.f32 %v7240, %v7242
      %v7244 = vadd.f32 %v7240, %v7243
      %vm7245 = vweird.f32 %v7096
      %vm7246 = vweird.f32 %v7240
      %vm7247 = vmor %vm7245, %vm7246
      %v7248 = vsel %vm7247, %v7240, %v7244
      %v7249 = vand.u32 2147483647, %v7096
      %vm7250 = vcmp.eq.f32.partialorder %v7249, 8.507059e+37
      %v7251 = vand.u32 %v7096, 2147483648
      %v7252 = vor.u32 1.1754944e-38, %v7251
      %v7253 = vsel %vm7250, %v7252, %v7248
      %v7254 = vmul.f32 1.0, %v7253
      %v7255 = vrcp.pop %v7097
      %v7256 = vmul.f32 %v7097, %v7255
      %v7257 = vsub.f32 1.0, %v7256
      %v7258 = vmul.f32 %v7255, %v7257
      %v7259 = vadd.f32 %v7255, %v7258
      %vm7260 = vweird.f32 %v7097
      %vm7261 = vweird.f32 %v7255
      %vm7262 = vmor %vm7260, %vm7261
      %v7263 = vsel %vm7262, %v7255, %v7259
      %v7264 = vand.u32 2147483647, %v7097
      %vm7265 = vcmp.eq.f32.partialorder %v7264, 8.507059e+37
      %v7266 = vand.u32 %v7097, 2147483648
      %v7267 = vor.u32 1.1754944e-38, %v7266
      %v7268 = vsel %vm7265, %v7267, %v7263
      %v7269 = vmul.f32 1.0, %v7268
      %v7270 = vrcp.pop %v7098
      %v7271 = vmul.f32 %v7098, %v7270
      %v7272 = vsub.f32 1.0, %v7271
      %v7273 = vmul.f32 %v7270, %v7272
      %v7274 = vadd.f32 %v7270, %v7273
      %vm7275 = vweird.f32 %v7098
      %vm7276 = vweird.f32 %v7270
      %vm7277 = vmor %vm7275, %vm7276
      %v7278 = vsel %vm7277, %v7270, %v7274
      %v7279 = vand.u32 2147483647, %v7098
      %vm7280 = vcmp.eq.f32.partialorder %v7279, 8.507059e+37
      %v7281 = vand.u32 %v7098, 2147483648
      %v7282 = vor.u32 1.1754944e-38, %v7281
      %v7283 = vsel %vm7280, %v7282, %v7278
      %v7284 = vmul.f32 1.0, %v7283
      %v7285 = vrcp.pop %v7099
      %v7286 = vmul.f32 %v7099, %v7285
      %v7287 = vsub.f32 1.0, %v7286
      %v7288 = vmul.f32 %v7285, %v7287
      %v7289 = vadd.f32 %v7285, %v7288
      %vm7290 = vweird.f32 %v7099
      %vm7291 = vweird.f32 %v7285
      %vm7292 = vmor %vm7290, %vm7291
      %v7293 = vsel %vm7292, %v7285, %v7289
      %v7294 = vand.u32 2147483647, %v7099
      %vm7295 = vcmp.eq.f32.partialorder %v7294, 8.507059e+37
      %v7296 = vand.u32 %v7099, 2147483648
      %v7297 = vor.u32 1.1754944e-38, %v7296
      %v7298 = vsel %vm7295, %v7297, %v7293
      %v7299 = vmul.f32 1.0, %v7298
      %v7300 = vrcp.pop %v7100
      %v7301 = vmul.f32 %v7100, %v7300
      %v7302 = vsub.f32 1.0, %v7301
      %v7303 = vmul.f32 %v7300, %v7302
      %v7304 = vadd.f32 %v7300, %v7303
      %vm7305 = vweird.f32 %v7100
      %vm7306 = vweird.f32 %v7300
      %vm7307 = vmor %vm7305, %vm7306
      %v7308 = vsel %vm7307, %v7300, %v7304
      %v7309 = vand.u32 2147483647, %v7100
      %vm7310 = vcmp.eq.f32.partialorder %v7309, 8.507059e+37
      %v7311 = vand.u32 %v7100, 2147483648
      %v7312 = vor.u32 1.1754944e-38, %v7311
      %v7313 = vsel %vm7310, %v7312, %v7308
      %v7314 = vmul.f32 1.0, %v7313
      %v7315 = vrcp.pop %v7101
      %v7316 = vmul.f32 %v7101, %v7315
      %v7317 = vsub.f32 1.0, %v7316
      %v7318 = vmul.f32 %v7315, %v7317
      %v7319 = vadd.f32 %v7315, %v7318
      %vm7320 = vweird.f32 %v7101
      %vm7321 = vweird.f32 %v7315
      %vm7322 = vmor %vm7320, %vm7321
      %v7323 = vsel %vm7322, %v7315, %v7319
      %v7324 = vand.u32 2147483647, %v7101
      %vm7325 = vcmp.eq.f32.partialorder %v7324, 8.507059e+37
      %v7326 = vand.u32 %v7101, 2147483648
      %v7327 = vor.u32 1.1754944e-38, %v7326
      %v7328 = vsel %vm7325, %v7327, %v7323
      %v7329 = vmul.f32 1.0, %v7328
      %v7330 = vrcp.pop %v7102
      %v7331 = vmul.f32 %v7102, %v7330
      %v7332 = vsub.f32 1.0, %v7331
      %v7333 = vmul.f32 %v7330, %v7332
      %v7334 = vadd.f32 %v7330, %v7333
      %vm7335 = vweird.f32 %v7102
      %vm7336 = vweird.f32 %v7330
      %vm7337 = vmor %vm7335, %vm7336
      %v7338 = vsel %vm7337, %v7330, %v7334
      %v7339 = vand.u32 2147483647, %v7102
      %vm7340 = vcmp.eq.f32.partialorder %v7339, 8.507059e+37
      %v7341 = vand.u32 %v7102, 2147483648
      %v7342 = vor.u32 1.1754944e-38, %v7341
      %v7343 = vsel %vm7340, %v7342, %v7338
      %v7344 = vmul.f32 1.0, %v7343
      %v7345 = vrcp.pop %v7103
      %v7346 = vmul.f32 %v7103, %v7345
      %v7347 = vsub.f32 1.0, %v7346
      %v7348 = vmul.f32 %v7345, %v7347
      %v7349 = vadd.f32 %v7345, %v7348
      %vm7350 = vweird.f32 %v7103
      %vm7351 = vweird.f32 %v7345
      %vm7352 = vmor %vm7350, %vm7351
      %v7353 = vsel %vm7352, %v7345, %v7349
      %v7354 = vand.u32 2147483647, %v7103
      %vm7355 = vcmp.eq.f32.partialorder %v7354, 8.507059e+37
      %v7356 = vand.u32 %v7103, 2147483648
      %v7357 = vor.u32 1.1754944e-38, %v7356
      %v7358 = vsel %vm7355, %v7357, %v7353
      %v7359 = vmul.f32 1.0, %v7358
      %v7360 = vrcp.pop %v7104
      %v7361 = vmul.f32 %v7104, %v7360
      %v7362 = vsub.f32 1.0, %v7361
      %v7363 = vmul.f32 %v7360, %v7362
      %v7364 = vadd.f32 %v7360, %v7363
      %vm7365 = vweird.f32 %v7104
      %vm7366 = vweird.f32 %v7360
      %vm7367 = vmor %vm7365, %vm7366
      %v7368 = vsel %vm7367, %v7360, %v7364
      %v7369 = vand.u32 2147483647, %v7104
      %vm7370 = vcmp.eq.f32.partialorder %v7369, 8.507059e+37
      %v7371 = vand.u32 %v7104, 2147483648
      %v7372 = vor.u32 1.1754944e-38, %v7371
      %v7373 = vsel %vm7370, %v7372, %v7368
      %v7374 = vmul.f32 1.0, %v7373
      %v7375 = vrcp.pop %v7105
      %v7376 = vmul.f32 %v7105, %v7375
      %v7377 = vsub.f32 1.0, %v7376
      %v7378 = vmul.f32 %v7375, %v7377
      %v7379 = vadd.f32 %v7375, %v7378
      %vm7380 = vweird.f32 %v7105
      %vm7381 = vweird.f32 %v7375
      %vm7382 = vmor %vm7380, %vm7381
      %v7383 = vsel %vm7382, %v7375, %v7379
      %v7384 = vand.u32 2147483647, %v7105
      %vm7385 = vcmp.eq.f32.partialorder %v7384, 8.507059e+37
      %v7386 = vand.u32 %v7105, 2147483648
      %v7387 = vor.u32 1.1754944e-38, %v7386
      %v7388 = vsel %vm7385, %v7387, %v7383
      %v7389 = vmul.f32 1.0, %v7388
      %v7390 = vrcp.pop %v7106
      %v7391 = vmul.f32 %v7106, %v7390
      %v7392 = vsub.f32 1.0, %v7391
      %v7393 = vmul.f32 %v7390, %v7392
      %v7394 = vadd.f32 %v7390, %v7393
      %vm7395 = vweird.f32 %v7106
      %vm7396 = vweird.f32 %v7390
      %vm7397 = vmor %vm7395, %vm7396
      %v7398 = vsel %vm7397, %v7390, %v7394
      %v7399 = vand.u32 2147483647, %v7106
      %vm7400 = vcmp.eq.f32.partialorder %v7399, 8.507059e+37
      %v7401 = vand.u32 %v7106, 2147483648
      %v7402 = vor.u32 1.1754944e-38, %v7401
      %v7403 = vsel %vm7400, %v7402, %v7398
      %v7404 = vmul.f32 1.0, %v7403
      %v7405 = vrcp.pop %v7107
      %v7406 = vmul.f32 %v7107, %v7405
      %v7407 = vsub.f32 1.0, %v7406
      %v7408 = vmul.f32 %v7405, %v7407
      %v7409 = vadd.f32 %v7405, %v7408
      %vm7410 = vweird.f32 %v7107
      %vm7411 = vweird.f32 %v7405
      %vm7412 = vmor %vm7410, %vm7411
      %v7413 = vsel %vm7412, %v7405, %v7409
      %v7414 = vand.u32 2147483647, %v7107
      %vm7415 = vcmp.eq.f32.partialorder %v7414, 8.507059e+37
      %v7416 = vand.u32 %v7107, 2147483648
      %v7417 = vor.u32 1.1754944e-38, %v7416
      %v7418 = vsel %vm7415, %v7417, %v7413
      %v7419 = vmul.f32 1.0, %v7418
      %v7420 = vrcp.pop %v7108
      %v7421 = vmul.f32 %v7108, %v7420
      %v7422 = vsub.f32 1.0, %v7421
      %v7423 = vmul.f32 %v7420, %v7422
      %v7424 = vadd.f32 %v7420, %v7423
      %vm7425 = vweird.f32 %v7108
      %vm7426 = vweird.f32 %v7420
      %vm7427 = vmor %vm7425, %vm7426
      %v7428 = vsel %vm7427, %v7420, %v7424
      %v7429 = vand.u32 2147483647, %v7108
      %vm7430 = vcmp.eq.f32.partialorder %v7429, 8.507059e+37
      %v7431 = vand.u32 %v7108, 2147483648
      %v7432 = vor.u32 1.1754944e-38, %v7431
      %v7433 = vsel %vm7430, %v7432, %v7428
      %v7434 = vmul.f32 1.0, %v7433
      %v7435 = vrcp.pop %v7109
      %v7436 = vmul.f32 %v7109, %v7435
      %v7437 = vsub.f32 1.0, %v7436
      %v7438 = vmul.f32 %v7435, %v7437
      %v7439 = vadd.f32 %v7435, %v7438
      %vm7440 = vweird.f32 %v7109
      %vm7441 = vweird.f32 %v7435
      %vm7442 = vmor %vm7440, %vm7441
      %v7443 = vsel %vm7442, %v7435, %v7439
      %v7444 = vand.u32 2147483647, %v7109
      %vm7445 = vcmp.eq.f32.partialorder %v7444, 8.507059e+37
      %v7446 = vand.u32 %v7109, 2147483648
      %v7447 = vor.u32 1.1754944e-38, %v7446
      %v7448 = vsel %vm7445, %v7447, %v7443
      %v7449 = vmul.f32 1.0, %v7448
      %v7450 = vrcp.pop %v7110
      %v7451 = vmul.f32 %v7110, %v7450
      %v7452 = vsub.f32 1.0, %v7451
      %v7453 = vmul.f32 %v7450, %v7452
      %v7454 = vadd.f32 %v7450, %v7453
      %vm7455 = vweird.f32 %v7110
      %vm7456 = vweird.f32 %v7450
      %vm7457 = vmor %vm7455, %vm7456
      %v7458 = vsel %vm7457, %v7450, %v7454
      %v7459 = vand.u32 2147483647, %v7110
      %vm7460 = vcmp.eq.f32.partialorder %v7459, 8.507059e+37
      %v7461 = vand.u32 %v7110, 2147483648
      %v7462 = vor.u32 1.1754944e-38, %v7461
      %v7463 = vsel %vm7460, %v7462, %v7458
      %v7464 = vmul.f32 1.0, %v7463
      %v7465 = vrcp.pop %v7111
      %v7466 = vmul.f32 %v7111, %v7465
      %v7467 = vsub.f32 1.0, %v7466
      %v7468 = vmul.f32 %v7465, %v7467
      %v7469 = vadd.f32 %v7465, %v7468
      %vm7470 = vweird.f32 %v7111
      %vm7471 = vweird.f32 %v7465
      %vm7472 = vmor %vm7470, %vm7471
      %v7473 = vsel %vm7472, %v7465, %v7469
      %v7474 = vand.u32 2147483647, %v7111
      %vm7475 = vcmp.eq.f32.partialorder %v7474, 8.507059e+37
      %v7476 = vand.u32 %v7111, 2147483648
      %v7477 = vor.u32 1.1754944e-38, %v7476
      %v7478 = vsel %vm7475, %v7477, %v7473
      %v7479 = vmul.f32 1.0, %v7478
      %v7480 = vrcp.pop %v7112
      %v7481 = vmul.f32 %v7112, %v7480
      %v7482 = vsub.f32 1.0, %v7481
      %v7483 = vmul.f32 %v7480, %v7482
      %v7484 = vadd.f32 %v7480, %v7483
      %vm7485 = vweird.f32 %v7112
      %vm7486 = vweird.f32 %v7480
      %vm7487 = vmor %vm7485, %vm7486
      %v7488 = vsel %vm7487, %v7480, %v7484
      %v7489 = vand.u32 2147483647, %v7112
      %vm7490 = vcmp.eq.f32.partialorder %v7489, 8.507059e+37
      %v7491 = vand.u32 %v7112, 2147483648
      %v7492 = vor.u32 1.1754944e-38, %v7491
      %v7493 = vsel %vm7490, %v7492, %v7488
      %v7494 = vmul.f32 1.0, %v7493
      %v7495 = vrcp.pop %v7113
      %v7496 = vmul.f32 %v7113, %v7495
      %v7497 = vsub.f32 1.0, %v7496
      %v7498 = vmul.f32 %v7495, %v7497
      %v7499 = vadd.f32 %v7495, %v7498
      %vm7500 = vweird.f32 %v7113
      %vm7501 = vweird.f32 %v7495
      %vm7502 = vmor %vm7500, %vm7501
      %v7503 = vsel %vm7502, %v7495, %v7499
      %v7504 = vand.u32 2147483647, %v7113
      %vm7505 = vcmp.eq.f32.partialorder %v7504, 8.507059e+37
      %v7506 = vand.u32 %v7113, 2147483648
      %v7507 = vor.u32 1.1754944e-38, %v7506
      %v7508 = vsel %vm7505, %v7507, %v7503
      %v7509 = vmul.f32 1.0, %v7508
      %v7510 = vrcp.pop %v7114
      %v7511 = vmul.f32 %v7114, %v7510
      %v7512 = vsub.f32 1.0, %v7511
      %v7513 = vmul.f32 %v7510, %v7512
      %v7514 = vadd.f32 %v7510, %v7513
      %vm7515 = vweird.f32 %v7114
      %vm7516 = vweird.f32 %v7510
      %vm7517 = vmor %vm7515, %vm7516
      %v7518 = vsel %vm7517, %v7510, %v7514
      %v7519 = vand.u32 2147483647, %v7114
      %vm7520 = vcmp.eq.f32.partialorder %v7519, 8.507059e+37
      %v7521 = vand.u32 %v7114, 2147483648
      %v7522 = vor.u32 1.1754944e-38, %v7521
      %v7523 = vsel %vm7520, %v7522, %v7518
      %v7524 = vmul.f32 1.0, %v7523
      %v7525 = vrcp.pop %v7115
      %v7526 = vmul.f32 %v7115, %v7525
      %v7527 = vsub.f32 1.0, %v7526
      %v7528 = vmul.f32 %v7525, %v7527
      %v7529 = vadd.f32 %v7525, %v7528
      %vm7530 = vweird.f32 %v7115
      %vm7531 = vweird.f32 %v7525
      %vm7532 = vmor %vm7530, %vm7531
      %v7533 = vsel %vm7532, %v7525, %v7529
      %v7534 = vand.u32 2147483647, %v7115
      %vm7535 = vcmp.eq.f32.partialorder %v7534, 8.507059e+37
      %v7536 = vand.u32 %v7115, 2147483648
      %v7537 = vor.u32 1.1754944e-38, %v7536
      %v7538 = vsel %vm7535, %v7537, %v7533
      %v7539 = vmul.f32 1.0, %v7538
      %v7540 = vrcp.pop %v7116
      %v7541 = vmul.f32 %v7116, %v7540
      %v7542 = vsub.f32 1.0, %v7541
      %v7543 = vmul.f32 %v7540, %v7542
      %v7544 = vadd.f32 %v7540, %v7543
      %vm7545 = vweird.f32 %v7116
      %vm7546 = vweird.f32 %v7540
      %vm7547 = vmor %vm7545, %vm7546
      %v7548 = vsel %vm7547, %v7540, %v7544
      %v7549 = vand.u32 2147483647, %v7116
      %vm7550 = vcmp.eq.f32.partialorder %v7549, 8.507059e+37
      %v7551 = vand.u32 %v7116, 2147483648
      %v7552 = vor.u32 1.1754944e-38, %v7551
      %v7553 = vsel %vm7550, %v7552, %v7548
      %v7554 = vmul.f32 1.0, %v7553
      %v7555 = vrcp.pop %v7117
      %v7556 = vmul.f32 %v7117, %v7555
      %v7557 = vsub.f32 1.0, %v7556
      %v7558 = vmul.f32 %v7555, %v7557
      %v7559 = vadd.f32 %v7555, %v7558
      %vm7560 = vweird.f32 %v7117
      %vm7561 = vweird.f32 %v7555
      %vm7562 = vmor %vm7560, %vm7561
      %v7563 = vsel %vm7562, %v7555, %v7559
      %v7564 = vand.u32 2147483647, %v7117
      %vm7565 = vcmp.eq.f32.partialorder %v7564, 8.507059e+37
      %v7566 = vand.u32 %v7117, 2147483648
      %v7567 = vor.u32 1.1754944e-38, %v7566
      %v7568 = vsel %vm7565, %v7567, %v7563
      %v7569 = vmul.f32 1.0, %v7568
      %v7570 = vrcp.pop %v7118
      %v7571 = vmul.f32 %v7118, %v7570
      %v7572 = vsub.f32 1.0, %v7571
      %v7573 = vmul.f32 %v7570, %v7572
      %v7574 = vadd.f32 %v7570, %v7573
      %vm7575 = vweird.f32 %v7118
      %vm7576 = vweird.f32 %v7570
      %vm7577 = vmor %vm7575, %vm7576
      %v7578 = vsel %vm7577, %v7570, %v7574
      %v7579 = vand.u32 2147483647, %v7118
      %vm7580 = vcmp.eq.f32.partialorder %v7579, 8.507059e+37
      %v7581 = vand.u32 %v7118, 2147483648
      %v7582 = vor.u32 1.1754944e-38, %v7581
      %v7583 = vsel %vm7580, %v7582, %v7578
      %v7584 = vmul.f32 1.0, %v7583
      %v7585 = vrcp.pop %v7119
      %v7586 = vmul.f32 %v7119, %v7585
      %v7587 = vsub.f32 1.0, %v7586
      %v7588 = vmul.f32 %v7585, %v7587
      %v7589 = vadd.f32 %v7585, %v7588
      %vm7590 = vweird.f32 %v7119
      %vm7591 = vweird.f32 %v7585
      %vm7592 = vmor %vm7590, %vm7591
      %v7593 = vsel %vm7592, %v7585, %v7589
      %v7594 = vand.u32 2147483647, %v7119
      %vm7595 = vcmp.eq.f32.partialorder %v7594, 8.507059e+37
      %v7596 = vand.u32 %v7119, 2147483648
      %v7597 = vor.u32 1.1754944e-38, %v7596
      %v7598 = vsel %vm7595, %v7597, %v7593
      %v7599 = vmul.f32 1.0, %v7598
      %v7600 = vmul.f32 %v6881, %v7134
      %v7601 = vmul.f32 %v6883, %v7149
      %v7602 = vmul.f32 %v6886, %v7164
      %v7603 = vmul.f32 %v6888, %v7179
      %v7604 = vmul.f32 %v6891, %v7194
      %v7605 = vmul.f32 %v6893, %v7209
      %v7606 = vmul.f32 %v6896, %v7224
      %v7607 = vmul.f32 %v6898, %v7239
      %v7608 = vmul.f32 %v6901, %v7254
      %v7609 = vmul.f32 %v6903, %v7269
      %v7610 = vmul.f32 %v6906, %v7284
      %v7611 = vmul.f32 %v6908, %v7299
      %v7612 = vmul.f32 %v6911, %v7314
      %v7613 = vmul.f32 %v6913, %v7329
      %v7614 = vmul.f32 %v6916, %v7344
      %v7615 = vmul.f32 %v6918, %v7359
      %v7616 = vmul.f32 %v6921, %v7374
      %v7617 = vmul.f32 %v6923, %v7389
      %v7618 = vmul.f32 %v6926, %v7404
      %v7619 = vmul.f32 %v6928, %v7419
      %v7620 = vmul.f32 %v6931, %v7434
      %v7621 = vmul.f32 %v6933, %v7449
      %v7622 = vmul.f32 %v6936, %v7464
      %v7623 = vmul.f32 %v6938, %v7479
      %v7624 = vmul.f32 %v6941, %v7494
      %v7625 = vmul.f32 %v6943, %v7509
      %v7626 = vmul.f32 %v6946, %v7524
      %v7627 = vmul.f32 %v6948, %v7539
      %v7628 = vmul.f32 %v6951, %v7554
      %v7629 = vmul.f32 %v6953, %v7569
      %v7630 = vmul.f32 %v6956, %v7584
      %v7631 = vmul.f32 %v6958, %v7599
      %v7632 = vpack.c.bf16 %v7601, %v7600
      %v7633 = vpack.c.bf16 %v7603, %v7602
      %v7634 = vpack.c.bf16 %v7605, %v7604
      %v7635 = vpack.c.bf16 %v7607, %v7606
      %v7636 = vpack.c.bf16 %v7609, %v7608
      %v7637 = vpack.c.bf16 %v7611, %v7610
      %v7638 = vpack.c.bf16 %v7613, %v7612
      %v7639 = vpack.c.bf16 %v7615, %v7614
      %v7640 = vpack.c.bf16 %v7617, %v7616
      %v7641 = vpack.c.bf16 %v7619, %v7618
      %v7642 = vpack.c.bf16 %v7621, %v7620
      %v7643 = vpack.c.bf16 %v7623, %v7622
      %v7644 = vpack.c.bf16 %v7625, %v7624
      %v7645 = vpack.c.bf16 %v7627, %v7626
      %v7646 = vpack.c.bf16 %v7629, %v7628
      %v7647 = vpack.c.bf16 %v7631, %v7630
      %v7648 = vld [vmem:[%s669] sm:$0xf]
      %v7649 = vld [vmem:[%s669 + $0x4] sm:$0xf]
      %v7650 = vld [vmem:[%s669 + $0x8] sm:$0xf]
      %v7651 = vld [vmem:[%s669 + $0xc] sm:$0xf]
      %v7652 = vld [vmem:[%s669 + $0x10] sm:$0xf]
      %v7653 = vld [vmem:[%s669 + $0x14] sm:$0xf]
      %v7654 = vld [vmem:[%s669 + $0x18] sm:$0xf]
      %v7655 = vld [vmem:[%s669 + $0x1c] sm:$0xf]
      %v7656 = vld [vmem:[%s669 + $0x20] sm:$0xf]
      %v7657 = vld [vmem:[%s669 + $0x24] sm:$0xf]
      %v7658 = vld [vmem:[%s669 + $0x28] sm:$0xf]
      %v7659 = vld [vmem:[%s669 + $0x2c] sm:$0xf]
      %v7660 = vld [vmem:[%s669 + $0x30] sm:$0xf]
      %v7661 = vld [vmem:[%s669 + $0x34] sm:$0xf]
      %v7662 = vld [vmem:[%s669 + $0x38] sm:$0xf]
      %v7663 = vld [vmem:[%s669 + $0x3c] sm:$0xf]
      %v7664 = vld [vmem:[%s672] sm:$0x1]
      %v7666 = vperm.slane %v7664, 0
      %v7684 = vunpack.c.l.b16 %v7648
      %v7685 = vunpack.c.l.b16 %v7649
      %v7686 = vunpack.c.l.b16 %v7650
      %v7687 = vunpack.c.l.b16 %v7651
      %v7688 = vunpack.c.l.b16 %v7652
      %v7689 = vunpack.c.l.b16 %v7653
      %v7690 = vunpack.c.l.b16 %v7654
      %v7691 = vunpack.c.l.b16 %v7655
      %v7692 = vunpack.c.l.b16 %v7656
      %v7693 = vunpack.c.l.b16 %v7657
      %v7694 = vunpack.c.l.b16 %v7658
      %v7695 = vunpack.c.l.b16 %v7659
      %v7696 = vunpack.c.l.b16 %v7660
      %v7697 = vunpack.c.l.b16 %v7661
      %v7698 = vunpack.c.l.b16 %v7662
      %v7699 = vunpack.c.l.b16 %v7663
      %v7700 = vpack.c.b16 %v7685, %v7684
      %v7701 = vpack.c.b16 %v7687, %v7686
      %v7702 = vpack.c.b16 %v7689, %v7688
      %v7703 = vpack.c.b16 %v7691, %v7690
      %v7704 = vpack.c.b16 %v7693, %v7692
      %v7705 = vpack.c.b16 %v7695, %v7694
      %v7706 = vpack.c.b16 %v7697, %v7696
      %v7707 = vpack.c.b16 %v7699, %v7698
      %7716 = vmatpush.bf16.msra.mxu0 %v7707
      %7717 = vmatpush.bf16.msra.mxu0 %v7706
      %7718 = vmatpush.bf16.msra.mxu0 %v7705
      %7719 = vmatpush.bf16.msra.mxu0 %v7704
      %7720 = vmatpush.bf16.msra.mxu0 %v7703
      %7721 = vmatpush.bf16.msra.mxu0 %v7702
      %7722 = vmatpush.bf16.msra.mxu0 %v7701
      %7723 = vmatpush.bf16.msra.mxu0 %v7700
      %7724 = vmatmul.bf16.gmra.mxu0 %v7632
      %v7725 = vpop.f32.mrf.mxu0
      %v7726 = vadd.f32 %v7666, %v7725
      %v7727 = vpop.f32.mrf.mxu0
      %v7728 = vadd.f32 %v7666, %v7727
      %7729 = vmatmul.bf16.gmra.mxu0 %v7633
      %v7730 = vpop.f32.mrf.mxu0
      %v7731 = vadd.f32 %v7666, %v7730
      %v7732 = vpop.f32.mrf.mxu0
      %v7733 = vadd.f32 %v7666, %v7732
      %7734 = vmatmul.bf16.gmra.mxu0 %v7634
      %v7735 = vpop.f32.mrf.mxu0
      %v7736 = vadd.f32 %v7666, %v7735
      %v7737 = vpop.f32.mrf.mxu0
      %v7738 = vadd.f32 %v7666, %v7737
      %7739 = vmatmul.bf16.gmra.mxu0 %v7635
      %v7740 = vpop.f32.mrf.mxu0
      %v7741 = vadd.f32 %v7666, %v7740
      %v7742 = vpop.f32.mrf.mxu0
      %v7743 = vadd.f32 %v7666, %v7742
      %7744 = vmatmul.bf16.gmra.mxu0 %v7636
      %v7745 = vpop.f32.mrf.mxu0
      %v7746 = vadd.f32 %v7666, %v7745
      %v7747 = vpop.f32.mrf.mxu0
      %v7748 = vadd.f32 %v7666, %v7747
      %7749 = vmatmul.bf16.gmra.mxu0 %v7637
      %v7750 = vpop.f32.mrf.mxu0
      %v7751 = vadd.f32 %v7666, %v7750
      %v7752 = vpop.f32.mrf.mxu0
      %v7753 = vadd.f32 %v7666, %v7752
      %7754 = vmatmul.bf16.gmra.mxu0 %v7638
      %v7755 = vpop.f32.mrf.mxu0
      %v7756 = vadd.f32 %v7666, %v7755
      %v7757 = vpop.f32.mrf.mxu0
      %v7758 = vadd.f32 %v7666, %v7757
      %7759 = vmatmul.bf16.gmra.mxu0 %v7639
      %v7760 = vpop.f32.mrf.mxu0
      %v7761 = vadd.f32 %v7666, %v7760
      %v7762 = vpop.f32.mrf.mxu0
      %v7763 = vadd.f32 %v7666, %v7762
      %7764 = vmatmul.bf16.gmra.mxu0 %v7640
      %v7765 = vpop.f32.mrf.mxu0
      %v7766 = vadd.f32 %v7666, %v7765
      %v7767 = vpop.f32.mrf.mxu0
      %v7768 = vadd.f32 %v7666, %v7767
      %7769 = vmatmul.bf16.gmra.mxu0 %v7641
      %v7770 = vpop.f32.mrf.mxu0
      %v7771 = vadd.f32 %v7666, %v7770
      %v7772 = vpop.f32.mrf.mxu0
      %v7773 = vadd.f32 %v7666, %v7772
      %7774 = vmatmul.bf16.gmra.mxu0 %v7642
      %v7775 = vpop.f32.mrf.mxu0
      %v7776 = vadd.f32 %v7666, %v7775
      %v7777 = vpop.f32.mrf.mxu0
      %v7778 = vadd.f32 %v7666, %v7777
      %7779 = vmatmul.bf16.gmra.mxu0 %v7643
      %v7780 = vpop.f32.mrf.mxu0
      %v7781 = vadd.f32 %v7666, %v7780
      %v7782 = vpop.f32.mrf.mxu0
      %v7783 = vadd.f32 %v7666, %v7782
      %7784 = vmatmul.bf16.gmra.mxu0 %v7644
      %v7785 = vpop.f32.mrf.mxu0
      %v7786 = vadd.f32 %v7666, %v7785
      %v7787 = vpop.f32.mrf.mxu0
      %v7788 = vadd.f32 %v7666, %v7787
      %7789 = vmatmul.bf16.gmra.mxu0 %v7645
      %v7790 = vpop.f32.mrf.mxu0
      %v7791 = vadd.f32 %v7666, %v7790
      %v7792 = vpop.f32.mrf.mxu0
      %v7793 = vadd.f32 %v7666, %v7792
      %7794 = vmatmul.bf16.gmra.mxu0 %v7646
      %v7795 = vpop.f32.mrf.mxu0
      %v7796 = vadd.f32 %v7666, %v7795
      %v7797 = vpop.f32.mrf.mxu0
      %v7798 = vadd.f32 %v7666, %v7797
      %7799 = vmatmul.bf16.gmra.mxu0 %v7647
      %v7800 = vpop.f32.mrf.mxu0
      %v7801 = vadd.f32 %v7666, %v7800
      %v7802 = vpop.f32.mrf.mxu0
      %v7803 = vadd.f32 %v7666, %v7802
      %7804 = vdwg.mxu0
      %v7805 = vadd.f32 %v5979, %v7726
      %v7806 = vadd.f32 %v5980, %v7728
      %v7807 = vadd.f32 %v5981, %v7731
      %v7808 = vadd.f32 %v5982, %v7733
      %v7809 = vadd.f32 %v5983, %v7736
      %v7810 = vadd.f32 %v5984, %v7738
      %v7811 = vadd.f32 %v5985, %v7741
      %v7812 = vadd.f32 %v5986, %v7743
      %v7813 = vadd.f32 %v5987, %v7746
      %v7814 = vadd.f32 %v5988, %v7748
      %v7815 = vadd.f32 %v5989, %v7751
      %v7816 = vadd.f32 %v5990, %v7753
      %v7817 = vadd.f32 %v5991, %v7756
      %v7818 = vadd.f32 %v5992, %v7758
      %v7819 = vadd.f32 %v5993, %v7761
      %v7820 = vadd.f32 %v5994, %v7763
      %v7821 = vadd.f32 %v5995, %v7766
      %v7822 = vadd.f32 %v5996, %v7768
      %v7823 = vadd.f32 %v5997, %v7771
      %v7824 = vadd.f32 %v5998, %v7773
      %v7825 = vadd.f32 %v5999, %v7776
      %v7826 = vadd.f32 %v6000, %v7778
      %v7827 = vadd.f32 %v6001, %v7781
      %v7828 = vadd.f32 %v6002, %v7783
      %v7829 = vadd.f32 %v6003, %v7786
      %v7830 = vadd.f32 %v6004, %v7788
      %v7831 = vadd.f32 %v6005, %v7791
      %v7832 = vadd.f32 %v6006, %v7793
      %v7833 = vadd.f32 %v6007, %v7796
      %v7834 = vadd.f32 %v6008, %v7798
      %v7835 = vadd.f32 %v6009, %v7801
      %v7836 = vadd.f32 %v6010, %v7803
      %7837 = vst.msk [vmem:[%s678] sm:$0xff] %vm800, %v7805
      %7838 = vst.msk [vmem:[%s678 + $0x8] sm:$0xff] %vm800, %v7806
      %7839 = vst.msk [vmem:[%s678 + $0x10] sm:$0xff] %vm800, %v7807
      %7840 = vst.msk [vmem:[%s678 + $0x18] sm:$0xff] %vm800, %v7808
      %7841 = vst.msk [vmem:[%s678 + $0x20] sm:$0xff] %vm800, %v7809
      %7842 = vst.msk [vmem:[%s678 + $0x28] sm:$0xff] %vm800, %v7810
      %7843 = vst.msk [vmem:[%s678 + $0x30] sm:$0xff] %vm800, %v7811
      %7844 = vst.msk [vmem:[%s678 + $0x38] sm:$0xff] %vm800, %v7812
      %7845 = vst.msk [vmem:[%s678 + $0x40] sm:$0xff] %vm800, %v7813
      %7846 = vst.msk [vmem:[%s678 + $0x48] sm:$0xff] %vm800, %v7814
      %7847 = vst.msk [vmem:[%s678 + $0x50] sm:$0xff] %vm800, %v7815
      %7848 = vst.msk [vmem:[%s678 + $0x58] sm:$0xff] %vm800, %v7816
      %7849 = vst.msk [vmem:[%s678 + $0x60] sm:$0xff] %vm800, %v7817
      %7850 = vst.msk [vmem:[%s678 + $0x68] sm:$0xff] %vm800, %v7818
      %7851 = vst.msk [vmem:[%s678 + $0x70] sm:$0xff] %vm800, %v7819
      %7852 = vst.msk [vmem:[%s678 + $0x78] sm:$0xff] %vm800, %v7820
      %7853 = vst.msk [vmem:[%s678 + $0x80] sm:$0xff] %vm800, %v7821
      %7854 = vst.msk [vmem:[%s678 + $0x88] sm:$0xff] %vm800, %v7822
      %7855 = vst.msk [vmem:[%s678 + $0x90] sm:$0xff] %vm800, %v7823
      %7856 = vst.msk [vmem:[%s678 + $0x98] sm:$0xff] %vm800, %v7824
      %7857 = vst.msk [vmem:[%s678 + $0xa0] sm:$0xff] %vm800, %v7825
      %7858 = vst.msk [vmem:[%s678 + $0xa8] sm:$0xff] %vm800, %v7826
      %7859 = vst.msk [vmem:[%s678 + $0xb0] sm:$0xff] %vm800, %v7827
      %7860 = vst.msk [vmem:[%s678 + $0xb8] sm:$0xff] %vm800, %v7828
      %7861 = vst.msk [vmem:[%s678 + $0xc0] sm:$0xff] %vm800, %v7829
      %7862 = vst.msk [vmem:[%s678 + $0xc8] sm:$0xff] %vm800, %v7830
      %7863 = vst.msk [vmem:[%s678 + $0xd0] sm:$0xff] %vm800, %v7831
      %7864 = vst.msk [vmem:[%s678 + $0xd8] sm:$0xff] %vm800, %v7832
      %7865 = vst.msk [vmem:[%s678 + $0xe0] sm:$0xff] %vm800, %v7833
      %7866 = vst.msk [vmem:[%s678 + $0xe8] sm:$0xff] %vm800, %v7834
      %7867 = vst.msk [vmem:[%s678 + $0xf0] sm:$0xff] %vm800, %v7835
      %7868 = vst.msk [vmem:[%s678 + $0xf8] sm:$0xff] %vm800, %v7836
      %s7869 = smul.u32 2, %s29
      %p7870 = scmp.lt.s32.totalorder %s7869, 1
      %s7871 = scalar_select %p7870, %s7869, 1
      %s7872 = smul.addr %s7871, 16
      %s7873 = smul.addr %s7872, 8
      %s7874 = scalar_lea.vmem %s14, %s7873
      // Predicated region
      $region81: #{tpu_custom_call.1} parent=75 // pred_check
        %p7875 = pneg %p414
      $region82: #{tpu_custom_call.1} parent=75 // pred_check_branch
        %7877 = sbr.rel (%p7875) target = $region84
      $region83: #{tpu_custom_call.1} parent=75 // pred_region
        %s7878 = smul.u32 2, %s29
      $region84: #{tpu_custom_call.1} parent=75 // pred_fallthru
        _
      // Predicated region
      $region85: #{tpu_custom_call.1} parent=75 // pred_check
        %p7879 = pneg %p414
      $region86: #{tpu_custom_call.1} parent=75 // pred_check_branch
        %7881 = sbr.rel (%p7879) target = $region88
      $region87: #{tpu_custom_call.1} parent=75 // pred_region
        %s7882 = smul.u32 2, %s29
        %p7883 = scmp.lt.s32.totalorder %s7882, 1
        %s7884 = scalar_select %p7883, %s7882, 1
        %s7885 = smul.addr %s7884, 16
        %s7886 = smul.addr %s7885, 8
        %s7887 = scalar_lea.vmem %s14, %s7886
      $region88: #{tpu_custom_call.1} parent=75 // pred_fallthru
        _
    $region76: #{tpu_custom_call.1} parent=5 // pred_fallthru
      _
    %p7888 = scmp.le.s32.totalorder 2, %s20
    // Predicated region
    $region89: #{tpu_custom_call.1} parent=5 // pred_check
      %p7889 = pneg %p7888
    $region90: #{tpu_custom_call.1} parent=5 // pred_check_branch
      %7891 = sbr.rel (%p7889) target = $region92
    $region91: #{tpu_custom_call.1} parent=5 // pred_region
      %s7892 = ssub.s32 %s20, 2
    $region92: #{tpu_custom_call.1} parent=5 // pred_fallthru
      _
  $region6: #{tpu_custom_call.1} parent=0 // loop_footer
    %s24 = sadd.s32 1, %s20
  $region7: #{tpu_custom_call.1} parent=0 // loop_footer_branch
    %19 = sbr.rel target = $region3
  $region8: #{tpu_custom_call.1} parent=0 // loop_exit
    _

</llo_original>
